<compile_context>
chip_gen: v6e
topology: v6e:2x2x1
jax: 0.10.0
libtpu: 0.0.40
codegen_flags: <defaults>
</compile_context>

<pallas_src>
import functools

import jax
import jax.numpy as jnp
from jax import lax
from jax.experimental import pallas as pl
from jax.experimental.pallas import tpu as pltpu

EPS = 1e-5


def convblockup_kernel(x_ref, w_ref, bias_ref, gmat_ref, gmatT_ref,
                       gamma_ref, beta_ref, uwT_ref, uh_ref,
                       o_ref, zs_ref, *, H, W, Cin, Cout, inv_n):
    """One batch sample per grid step: conv3x3 -> GroupNorm -> ReLU -> bilinear x2."""
    HW = H * W
    Wo = 2 * W

    # --- Conv2d(3x3, stride=1, pad=1): on-chip patch extraction, 9 accumulated GEMMs ---
    y = jnp.zeros((HW, Cout), jnp.float32)
    for idx in range(9):
        ky, kx = idx // 3, idx % 3
        # (H, W, Cin) shifted window of the padded NHWC tile -> (H*W, Cin)
        s = x_ref[0, ky:ky + H, kx:kx + W, :].reshape(HW, Cin)
        y = y + jnp.dot(s, w_ref[idx], preferred_element_type=jnp.float32)
    y = y + bias_ref[...]                                       # (H*W, Cout)

    # --- GroupNorm(num_groups=8): fused group stats (2 tiny matmuls, biased var) ---
    ch_sum = jnp.sum(y, axis=0, keepdims=True)                  # (1, Cout)
    ch_sq = jnp.sum(y * y, axis=0, keepdims=True)               # (1, Cout)
    stats = jnp.concatenate([ch_sum, ch_sq], axis=0)            # (2, Cout)
    g = jnp.dot(stats, gmat_ref[...],
                preferred_element_type=jnp.float32) * inv_n     # (2, G): [E[x], E[x^2]]
    cstats = jnp.dot(g, gmatT_ref[...],
                     preferred_element_type=jnp.float32)        # (2, Cout), per-channel
    mean_c = cstats[0:1, :]
    var_c = cstats[1:2, :] - mean_c * mean_c
    scale = gamma_ref[...] * lax.rsqrt(var_c + EPS)             # (1, Cout)
    shift = beta_ref[...] - mean_c * scale                      # (1, Cout)

    # --- ReLU ---
    yr = jnp.maximum(y * scale + shift, 0.0)                    # (H*W, Cout)

    # --- separable bilinear x2 upsample (align_corners=True) ---
    # stage 1: interpolate along W with a single GEMM.
    r1 = yr.reshape(H, W, Cout)                                 # (H, W, Cout)
    # (H, W, Cout) -> (H, Cout, W) via per-row 2D transposes (safe minor swap).
    r2 = jnp.stack([r1[h].T for h in range(H)], axis=0)         # (H, Cout, W)
    z = jnp.dot(r2.reshape(H * Cout, W), uwT_ref[...],
                preferred_element_type=jnp.float32)             # (H*Cout, Wo)
    zs_ref[...] = z.reshape(H, Cout, Wo)                        # park in VMEM scratch

    # stage 2: interpolate along H, one small GEMM per output channel, writing the
    # result straight into the NCHW output block.
    uh = uh_ref[...]                                            # (Ho, H)
    for c in range(Cout):
        zc = zs_ref[:, c, :]                                    # (H, Wo)
        oc = jnp.dot(uh, zc, preferred_element_type=jnp.float32)  # (Ho, Wo)
        o_ref[0, c] = oc.astype(o_ref.dtype)


def interp_matrix(n_in, n_out):
    """Linear interpolation matrix (n_out, n_in), align_corners=True semantics."""
    out_idx = jnp.arange(n_out, dtype=jnp.float32)
    src = out_idx * (n_in - 1) / (n_out - 1)
    i0 = jnp.clip(jnp.floor(src), 0, n_in - 1).astype(jnp.int32)
    i1 = jnp.minimum(i0 + 1, n_in - 1)
    w1 = src - i0.astype(jnp.float32)
    w0 = 1.0 - w1
    return (w0[:, None] * jax.nn.one_hot(i0, n_in, dtype=jnp.float32)
            + w1[:, None] * jax.nn.one_hot(i1, n_in, dtype=jnp.float32))


def conv_block_up(x_nchw, conv_w, conv_b, gamma, beta, *, num_groups=8):
    N, Cin, H, W = x_nchw.shape
    Cout = conv_w.shape[0]
    Ho, Wo = 2 * H, 2 * W
    Hp, Wp = H + 2, W + 2
    cg = Cout // num_groups

    # glue: pad the input spatially (channels-last so the kernel's patch slices are
    # cheap); this is the only HBM-side data prep (no im2col, no kron matrix).
    x_nhwc = jnp.transpose(x_nchw, (0, 2, 3, 1))
    xpad = jnp.pad(x_nhwc, ((0, 0), (1, 1), (1, 1), (0, 0)))          # (N, Hp, Wp, Cin)

    # parameter packing: per-tap weights (9, Cin, Cout) in (ky, kx) order.
    wstack = jnp.transpose(conv_w, (2, 3, 1, 0)).reshape(9, Cin, Cout)
    bias = conv_b.reshape(1, Cout).astype(jnp.float32)
    gmat = jnp.repeat(jnp.eye(num_groups, dtype=jnp.float32), cg, axis=0)  # (Cout, G)
    gmatT = gmat.T
    uwT = interp_matrix(W, Wo).T        # (W, Wo)
    uh = interp_matrix(H, Ho)           # (Ho, H)

    kernel = functools.partial(convblockup_kernel, H=H, W=W, Cin=Cin, Cout=Cout,
                               inv_n=1.0 / float(H * W * cg))

    # Constant operands total <10 KB, so default double-buffering costs nothing and
    # per-step VMEM is ~1 MiB (no vmem_limit_bytes override needed at these sizes).
    out = pl.pallas_call(
        kernel,
        out_shape=jax.ShapeDtypeStruct((N, Cout, Ho, Wo), jnp.float32),
        grid_spec=pltpu.PrefetchScalarGridSpec(
            num_scalar_prefetch=0,
            grid=(N,),
            in_specs=[
                pl.BlockSpec((1, Hp, Wp, Cin), lambda n: (n, 0, 0, 0)),  # padded input
                pl.BlockSpec((9, Cin, Cout), lambda n: (0, 0, 0)),       # conv weights
                pl.BlockSpec((1, Cout), lambda n: (0, 0)),               # conv bias
                pl.BlockSpec((Cout, num_groups), lambda n: (0, 0)),      # group map
                pl.BlockSpec((num_groups, Cout), lambda n: (0, 0)),      # group map^T
                pl.BlockSpec((1, Cout), lambda n: (0, 0)),               # gamma
                pl.BlockSpec((1, Cout), lambda n: (0, 0)),               # beta
                pl.BlockSpec((W, Wo), lambda n: (0, 0)),                 # Uw^T
                pl.BlockSpec((Ho, H), lambda n: (0, 0)),                 # Uh
            ],
            out_specs=pl.BlockSpec((1, Cout, Ho, Wo), lambda n: (n, 0, 0, 0)),
            scratch_shapes=[pltpu.VMEM((H, Cout, Wo), jnp.float32)],
        ),
        compiler_params=pltpu.CompilerParams(dimension_semantics=("parallel",)),
    )(xpad, wstack, bias, gmat, gmatT,
      gamma.reshape(1, Cout), beta.reshape(1, Cout), uwT, uh)

    return out  # already NCHW: (N, Cout, 2H, 2W)


def reference(x, w, b, gamma, beta, num_groups=8):
    """Pure-JAX reference of ConvBlockUp forward (conv -> groupnorm -> relu -> bilinear x2)."""
    y = lax.conv_general_dilated(
        x, w, window_strides=(1, 1), padding=((1, 1), (1, 1)),
        dimension_numbers=('NCHW', 'OIHW', 'NCHW')) + b[None, :, None, None]
    N, C, H, W = y.shape
    yg = y.reshape(N, num_groups, -1)
    mean = yg.mean(-1, keepdims=True)
    var = yg.var(-1, keepdims=True)
    yn = ((yg - mean) / jnp.sqrt(var + EPS)).reshape(N, C, H, W)
    yn = yn * gamma[None, :, None, None] + beta[None, :, None, None]
    yr = jnp.maximum(yn, 0.0)
    Uh = interp_matrix(H, 2 * H)
    Uw = interp_matrix(W, 2 * W)
    return jnp.einsum('ph,nchw,qw->ncpq', Uh, yr, Uw)


if __name__ == "__main__":
    N, Cin, Cout, H, W = 2, 4, 16, 16, 16
    key = jax.random.PRNGKey(0)
    k1, k2, k3, k4, k5 = jax.random.split(key, 5)
    x = jax.random.normal(k1, (N, Cin, H, W), jnp.float32)
    conv_w = 0.1 * jax.random.normal(k2, (Cout, Cin, 3, 3), jnp.float32)
    conv_b = 0.1 * jax.random.normal(k3, (Cout,), jnp.float32)
    gamma = 1.0 + 0.1 * jax.random.normal(k4, (Cout,), jnp.float32)
    beta = 0.1 * jax.random.normal(k5, (Cout,), jnp.float32)

    out = conv_block_up(x, conv_w, conv_b, gamma, beta)
    out = jax.block_until_ready(out)

    ref = reference(x, conv_w, conv_b, gamma, beta)
    assert out.shape == (N, Cout, 2 * H, 2 * W), out.shape
    err = float(jnp.max(jnp.abs(out - ref)))
    assert jnp.allclose(out, ref, atol=2e-4, rtol=2e-4), err
    print("KERNEL_OK")
</pallas_src>

<mosaic_0001>
module attributes {stable_mosaic.version = 11 : i64} {
  func.func @convblockup_kernel(%arg0: i32, %arg1: memref<1x18x18x4xf32, #tpu.memory_space<vmem>>, %arg2: memref<9x4x16xf32, #tpu.memory_space<vmem>>, %arg3: memref<1x16xf32, #tpu.memory_space<vmem>>, %arg4: memref<16x8xf32, #tpu.memory_space<vmem>>, %arg5: memref<8x16xf32, #tpu.memory_space<vmem>>, %arg6: memref<1x16xf32, #tpu.memory_space<vmem>>, %arg7: memref<1x16xf32, #tpu.memory_space<vmem>>, %arg8: memref<16x32xf32, #tpu.memory_space<vmem>>, %arg9: memref<32x16xf32, #tpu.memory_space<vmem>>, %arg10: memref<1x16x32x32xf32, #tpu.memory_space<vmem>>, %arg11: memref<16x16x32xf32, #tpu.memory_space<vmem>>) attributes {dimension_semantics = [#tpu.dimension_semantics<parallel>], iteration_bounds = array<i64: 2>, scalar_prefetch = 0 : i64, scratch_operands = 1 : i64, tpu.core_type = #tpu.core_type<tc>, window_params = [{transform_indices = @transform_0, window_bounds = array<i64: 1, 18, 18, 4>}, {pipeline_mode = #tpu.pipeline_mode<synchronous>, transform_indices = @transform_1, window_bounds = array<i64: 9, 4, 16>}, {pipeline_mode = #tpu.pipeline_mode<synchronous>, transform_indices = @transform_2, window_bounds = array<i64: 1, 16>}, {pipeline_mode = #tpu.pipeline_mode<synchronous>, transform_indices = @transform_3, window_bounds = array<i64: 16, 8>}, {pipeline_mode = #tpu.pipeline_mode<synchronous>, transform_indices = @transform_4, window_bounds = array<i64: 8, 16>}, {pipeline_mode = #tpu.pipeline_mode<synchronous>, transform_indices = @transform_5, window_bounds = array<i64: 1, 16>}, {pipeline_mode = #tpu.pipeline_mode<synchronous>, transform_indices = @transform_6, window_bounds = array<i64: 1, 16>}, {pipeline_mode = #tpu.pipeline_mode<synchronous>, transform_indices = @transform_7, window_bounds = array<i64: 16, 32>}, {pipeline_mode = #tpu.pipeline_mode<synchronous>, transform_indices = @transform_8, window_bounds = array<i64: 32, 16>}, {transform_indices = @transform_9, window_bounds = array<i64: 1, 16, 32, 32>}]} {
    %cst = arith.constant 0.000000e+00 : f32
    %0 = vector.broadcast %cst : f32 to vector<256x16xf32>
    %c0 = arith.constant 0 : index
    %c0_0 = arith.constant 0 : index
    %c0_1 = arith.constant 0 : index
    %c0_2 = arith.constant 0 : index
    %1 = vector.load %arg1[%c0, %c0_0, %c0_1, %c0_2] : memref<1x18x18x4xf32, #tpu.memory_space<vmem>>, vector<1x16x16x4xf32>
    %2 = vector.shape_cast %1 : vector<1x16x16x4xf32> to vector<16x16x4xf32>
    %3 = vector.shape_cast %2 : vector<16x16x4xf32> to vector<256x4xf32>
    %c0_3 = arith.constant 0 : index
    %c0_4 = arith.constant 0 : index
    %c0_5 = arith.constant 0 : index
    %4 = vector.load %arg2[%c0_3, %c0_4, %c0_5] : memref<9x4x16xf32, #tpu.memory_space<vmem>>, vector<1x4x16xf32>
    %5 = vector.shape_cast %4 : vector<1x4x16xf32> to vector<4x16xf32>
    %cst_6 = arith.constant dense<0.000000e+00> : vector<256x16xf32>
    %6 = tpu.matmul %3, %5, %cst_6 {dimension_numbers = #tpu.dot_dimension_numbers<[1], [0], [0], [1], [0, 0, 1, 1], [], []>} : vector<256x4xf32>, vector<4x16xf32>, vector<256x16xf32> -> vector<256x16xf32>
    %7 = arith.addf %0, %6 : vector<256x16xf32>
    %c0_7 = arith.constant 0 : index
    %c0_8 = arith.constant 0 : index
    %c1 = arith.constant 1 : index
    %c0_9 = arith.constant 0 : index
    %8 = vector.load %arg1[%c0_7, %c0_8, %c1, %c0_9] : memref<1x18x18x4xf32, #tpu.memory_space<vmem>>, vector<1x16x16x4xf32>
    %9 = vector.shape_cast %8 : vector<1x16x16x4xf32> to vector<16x16x4xf32>
    %10 = vector.shape_cast %9 : vector<16x16x4xf32> to vector<256x4xf32>
    %c1_10 = arith.constant 1 : index
    %c0_11 = arith.constant 0 : index
    %c0_12 = arith.constant 0 : index
    %11 = vector.load %arg2[%c1_10, %c0_11, %c0_12] : memref<9x4x16xf32, #tpu.memory_space<vmem>>, vector<1x4x16xf32>
    %12 = vector.shape_cast %11 : vector<1x4x16xf32> to vector<4x16xf32>
    %cst_13 = arith.constant dense<0.000000e+00> : vector<256x16xf32>
    %13 = tpu.matmul %10, %12, %cst_13 {dimension_numbers = #tpu.dot_dimension_numbers<[1], [0], [0], [1], [0, 0, 1, 1], [], []>} : vector<256x4xf32>, vector<4x16xf32>, vector<256x16xf32> -> vector<256x16xf32>
    %14 = arith.addf %7, %13 : vector<256x16xf32>
    %c0_14 = arith.constant 0 : index
    %c0_15 = arith.constant 0 : index
    %c2 = arith.constant 2 : index
    %c0_16 = arith.constant 0 : index
    %15 = vector.load %arg1[%c0_14, %c0_15, %c2, %c0_16] : memref<1x18x18x4xf32, #tpu.memory_space<vmem>>, vector<1x16x16x4xf32>
    %16 = vector.shape_cast %15 : vector<1x16x16x4xf32> to vector<16x16x4xf32>
    %17 = vector.shape_cast %16 : vector<16x16x4xf32> to vector<256x4xf32>
    %c2_17 = arith.constant 2 : index
    %c0_18 = arith.constant 0 : index
    %c0_19 = arith.constant 0 : index
    %18 = vector.load %arg2[%c2_17, %c0_18, %c0_19] : memref<9x4x16xf32, #tpu.memory_space<vmem>>, vector<1x4x16xf32>
    %19 = vector.shape_cast %18 : vector<1x4x16xf32> to vector<4x16xf32>
    %cst_20 = arith.constant dense<0.000000e+00> : vector<256x16xf32>
    %20 = tpu.matmul %17, %19, %cst_20 {dimension_numbers = #tpu.dot_dimension_numbers<[1], [0], [0], [1], [0, 0, 1, 1], [], []>} : vector<256x4xf32>, vector<4x16xf32>, vector<256x16xf32> -> vector<256x16xf32>
    %21 = arith.addf %14, %20 : vector<256x16xf32>
    %c0_21 = arith.constant 0 : index
    %c1_22 = arith.constant 1 : index
    %c0_23 = arith.constant 0 : index
    %c0_24 = arith.constant 0 : index
    %22 = vector.load %arg1[%c0_21, %c1_22, %c0_23, %c0_24] : memref<1x18x18x4xf32, #tpu.memory_space<vmem>>, vector<1x16x16x4xf32>
    %23 = vector.shape_cast %22 : vector<1x16x16x4xf32> to vector<16x16x4xf32>
    %24 = vector.shape_cast %23 : vector<16x16x4xf32> to vector<256x4xf32>
    %c3 = arith.constant 3 : index
    %c0_25 = arith.constant 0 : index
    %c0_26 = arith.constant 0 : index
    %25 = vector.load %arg2[%c3, %c0_25, %c0_26] : memref<9x4x16xf32, #tpu.memory_space<vmem>>, vector<1x4x16xf32>
    %26 = vector.shape_cast %25 : vector<1x4x16xf32> to vector<4x16xf32>
    %cst_27 = arith.constant dense<0.000000e+00> : vector<256x16xf32>
    %27 = tpu.matmul %24, %26, %cst_27 {dimension_numbers = #tpu.dot_dimension_numbers<[1], [0], [0], [1], [0, 0, 1, 1], [], []>} : vector<256x4xf32>, vector<4x16xf32>, vector<256x16xf32> -> vector<256x16xf32>
    %28 = arith.addf %21, %27 : vector<256x16xf32>
    %c0_28 = arith.constant 0 : index
    %c1_29 = arith.constant 1 : index
    %c1_30 = arith.constant 1 : index
    %c0_31 = arith.constant 0 : index
    %29 = vector.load %arg1[%c0_28, %c1_29, %c1_30, %c0_31] : memref<1x18x18x4xf32, #tpu.memory_space<vmem>>, vector<1x16x16x4xf32>
    %30 = vector.shape_cast %29 : vector<1x16x16x4xf32> to vector<16x16x4xf32>
    %31 = vector.shape_cast %30 : vector<16x16x4xf32> to vector<256x4xf32>
    %c4 = arith.constant 4 : index
    %c0_32 = arith.constant 0 : index
    %c0_33 = arith.constant 0 : index
    %32 = vector.load %arg2[%c4, %c0_32, %c0_33] : memref<9x4x16xf32, #tpu.memory_space<vmem>>, vector<1x4x16xf32>
    %33 = vector.shape_cast %32 : vector<1x4x16xf32> to vector<4x16xf32>
    %cst_34 = arith.constant dense<0.000000e+00> : vector<256x16xf32>
    %34 = tpu.matmul %31, %33, %cst_34 {dimension_numbers = #tpu.dot_dimension_numbers<[1], [0], [0], [1], [0, 0, 1, 1], [], []>} : vector<256x4xf32>, vector<4x16xf32>, vector<256x16xf32> -> vector<256x16xf32>
    %35 = arith.addf %28, %34 : vector<256x16xf32>
    %c0_35 = arith.constant 0 : index
    %c1_36 = arith.constant 1 : index
    %c2_37 = arith.constant 2 : index
    %c0_38 = arith.constant 0 : index
    %36 = vector.load %arg1[%c0_35, %c1_36, %c2_37, %c0_38] : memref<1x18x18x4xf32, #tpu.memory_space<vmem>>, vector<1x16x16x4xf32>
    %37 = vector.shape_cast %36 : vector<1x16x16x4xf32> to vector<16x16x4xf32>
    %38 = vector.shape_cast %37 : vector<16x16x4xf32> to vector<256x4xf32>
    %c5 = arith.constant 5 : index
    %c0_39 = arith.constant 0 : index
    %c0_40 = arith.constant 0 : index
    %39 = vector.load %arg2[%c5, %c0_39, %c0_40] : memref<9x4x16xf32, #tpu.memory_space<vmem>>, vector<1x4x16xf32>
    %40 = vector.shape_cast %39 : vector<1x4x16xf32> to vector<4x16xf32>
    %cst_41 = arith.constant dense<0.000000e+00> : vector<256x16xf32>
    %41 = tpu.matmul %38, %40, %cst_41 {dimension_numbers = #tpu.dot_dimension_numbers<[1], [0], [0], [1], [0, 0, 1, 1], [], []>} : vector<256x4xf32>, vector<4x16xf32>, vector<256x16xf32> -> vector<256x16xf32>
    %42 = arith.addf %35, %41 : vector<256x16xf32>
    %c0_42 = arith.constant 0 : index
    %c2_43 = arith.constant 2 : index
    %c0_44 = arith.constant 0 : index
    %c0_45 = arith.constant 0 : index
    %43 = vector.load %arg1[%c0_42, %c2_43, %c0_44, %c0_45] : memref<1x18x18x4xf32, #tpu.memory_space<vmem>>, vector<1x16x16x4xf32>
    %44 = vector.shape_cast %43 : vector<1x16x16x4xf32> to vector<16x16x4xf32>
    %45 = vector.shape_cast %44 : vector<16x16x4xf32> to vector<256x4xf32>
    %c6 = arith.constant 6 : index
    %c0_46 = arith.constant 0 : index
    %c0_47 = arith.constant 0 : index
    %46 = vector.load %arg2[%c6, %c0_46, %c0_47] : memref<9x4x16xf32, #tpu.memory_space<vmem>>, vector<1x4x16xf32>
    %47 = vector.shape_cast %46 : vector<1x4x16xf32> to vector<4x16xf32>
    %cst_48 = arith.constant dense<0.000000e+00> : vector<256x16xf32>
    %48 = tpu.matmul %45, %47, %cst_48 {dimension_numbers = #tpu.dot_dimension_numbers<[1], [0], [0], [1], [0, 0, 1, 1], [], []>} : vector<256x4xf32>, vector<4x16xf32>, vector<256x16xf32> -> vector<256x16xf32>
    %49 = arith.addf %42, %48 : vector<256x16xf32>
    %c0_49 = arith.constant 0 : index
    %c2_50 = arith.constant 2 : index
    %c1_51 = arith.constant 1 : index
    %c0_52 = arith.constant 0 : index
    %50 = vector.load %arg1[%c0_49, %c2_50, %c1_51, %c0_52] : memref<1x18x18x4xf32, #tpu.memory_space<vmem>>, vector<1x16x16x4xf32>
    %51 = vector.shape_cast %50 : vector<1x16x16x4xf32> to vector<16x16x4xf32>
    %52 = vector.shape_cast %51 : vector<16x16x4xf32> to vector<256x4xf32>
    %c7 = arith.constant 7 : index
    %c0_53 = arith.constant 0 : index
    %c0_54 = arith.constant 0 : index
    %53 = vector.load %arg2[%c7, %c0_53, %c0_54] : memref<9x4x16xf32, #tpu.memory_space<vmem>>, vector<1x4x16xf32>
    %54 = vector.shape_cast %53 : vector<1x4x16xf32> to vector<4x16xf32>
    %cst_55 = arith.constant dense<0.000000e+00> : vector<256x16xf32>
    %55 = tpu.matmul %52, %54, %cst_55 {dimension_numbers = #tpu.dot_dimension_numbers<[1], [0], [0], [1], [0, 0, 1, 1], [], []>} : vector<256x4xf32>, vector<4x16xf32>, vector<256x16xf32> -> vector<256x16xf32>
    %56 = arith.addf %49, %55 : vector<256x16xf32>
    %c0_56 = arith.constant 0 : index
    %c2_57 = arith.constant 2 : index
    %c2_58 = arith.constant 2 : index
    %c0_59 = arith.constant 0 : index
    %57 = vector.load %arg1[%c0_56, %c2_57, %c2_58, %c0_59] : memref<1x18x18x4xf32, #tpu.memory_space<vmem>>, vector<1x16x16x4xf32>
    %58 = vector.shape_cast %57 : vector<1x16x16x4xf32> to vector<16x16x4xf32>
    %59 = vector.shape_cast %58 : vector<16x16x4xf32> to vector<256x4xf32>
    %c8 = arith.constant 8 : index
    %c0_60 = arith.constant 0 : index
    %c0_61 = arith.constant 0 : index
    %60 = vector.load %arg2[%c8, %c0_60, %c0_61] : memref<9x4x16xf32, #tpu.memory_space<vmem>>, vector<1x4x16xf32>
    %61 = vector.shape_cast %60 : vector<1x4x16xf32> to vector<4x16xf32>
    %cst_62 = arith.constant dense<0.000000e+00> : vector<256x16xf32>
    %62 = tpu.matmul %59, %61, %cst_62 {dimension_numbers = #tpu.dot_dimension_numbers<[1], [0], [0], [1], [0, 0, 1, 1], [], []>} : vector<256x4xf32>, vector<4x16xf32>, vector<256x16xf32> -> vector<256x16xf32>
    %63 = arith.addf %56, %62 : vector<256x16xf32>
    %c0_63 = arith.constant 0 : index
    %c0_64 = arith.constant 0 : index
    %64 = vector.load %arg3[%c0_63, %c0_64] : memref<1x16xf32, #tpu.memory_space<vmem>>, vector<1x16xf32>
    %65 = vector.broadcast %64 : vector<1x16xf32> to vector<256x16xf32>
    %66 = arith.addf %63, %65 : vector<256x16xf32>
    %cst_65 = arith.constant dense<0.000000e+00> : vector<16xf32>
    %67 = vector.multi_reduction <add>, %66, %cst_65 [0] : vector<256x16xf32> to vector<16xf32>
    %68 = vector.shape_cast %67 : vector<16xf32> to vector<1x16xf32>
    %69 = arith.mulf %66, %66 : vector<256x16xf32>
    %cst_66 = arith.constant dense<0.000000e+00> : vector<16xf32>
    %70 = vector.multi_reduction <add>, %69, %cst_66 [0] : vector<256x16xf32> to vector<16xf32>
    %71 = vector.shape_cast %70 : vector<16xf32> to vector<1x16xf32>
    %72 = tpu.concatenate %68, %71 in 0 : vector<1x16xf32>, vector<1x16xf32> -> vector<2x16xf32>
    %c0_67 = arith.constant 0 : index
    %c0_68 = arith.constant 0 : index
    %73 = vector.load %arg4[%c0_67, %c0_68] : memref<16x8xf32, #tpu.memory_space<vmem>>, vector<16x8xf32>
    %cst_69 = arith.constant dense<0.000000e+00> : vector<2x8xf32>
    %74 = tpu.matmul %72, %73, %cst_69 {dimension_numbers = #tpu.dot_dimension_numbers<[1], [0], [0], [1], [0, 0, 1, 1], [], []>} : vector<2x16xf32>, vector<16x8xf32>, vector<2x8xf32> -> vector<2x8xf32>
    %cst_70 = arith.constant 0.001953125 : f32
    %75 = vector.broadcast %cst_70 : f32 to vector<2x8xf32>
    %76 = arith.mulf %74, %75 : vector<2x8xf32>
    %c0_71 = arith.constant 0 : index
    %c0_72 = arith.constant 0 : index
    %77 = vector.load %arg5[%c0_71, %c0_72] : memref<8x16xf32, #tpu.memory_space<vmem>>, vector<8x16xf32>
    %cst_73 = arith.constant dense<0.000000e+00> : vector<2x16xf32>
    %78 = tpu.matmul %76, %77, %cst_73 {dimension_numbers = #tpu.dot_dimension_numbers<[1], [0], [0], [1], [0, 0, 1, 1], [], []>} : vector<2x8xf32>, vector<8x16xf32>, vector<2x16xf32> -> vector<2x16xf32>
    %79 = vector.extract_strided_slice %78 {offsets = [0, 0], sizes = [1, 16], strides = [1, 1]} : vector<2x16xf32> to vector<1x16xf32>
    %80 = vector.extract_strided_slice %78 {offsets = [1, 0], sizes = [1, 16], strides = [1, 1]} : vector<2x16xf32> to vector<1x16xf32>
    %81 = arith.mulf %79, %79 : vector<1x16xf32>
    %82 = arith.subf %80, %81 : vector<1x16xf32>
    %c0_74 = arith.constant 0 : index
    %c0_75 = arith.constant 0 : index
    %83 = vector.load %arg6[%c0_74, %c0_75] : memref<1x16xf32, #tpu.memory_space<vmem>>, vector<1x16xf32>
    %cst_76 = arith.constant 9.99999974E-6 : f32
    %84 = vector.broadcast %cst_76 : f32 to vector<1x16xf32>
    %85 = arith.addf %82, %84 : vector<1x16xf32>
    %86 = math.rsqrt %85 : vector<1x16xf32>
    %87 = arith.mulf %83, %86 : vector<1x16xf32>
    %c0_77 = arith.constant 0 : index
    %c0_78 = arith.constant 0 : index
    %88 = vector.load %arg7[%c0_77, %c0_78] : memref<1x16xf32, #tpu.memory_space<vmem>>, vector<1x16xf32>
    %89 = arith.mulf %79, %87 : vector<1x16xf32>
    %90 = arith.subf %88, %89 : vector<1x16xf32>
    %91 = vector.broadcast %87 : vector<1x16xf32> to vector<256x16xf32>
    %92 = arith.mulf %66, %91 : vector<256x16xf32>
    %93 = vector.broadcast %90 : vector<1x16xf32> to vector<256x16xf32>
    %94 = arith.addf %92, %93 : vector<256x16xf32>
    %cst_79 = arith.constant 0.000000e+00 : f32
    %95 = vector.broadcast %cst_79 : f32 to vector<256x16xf32>
    %96 = arith.maximumf %94, %95 : vector<256x16xf32>
    %97 = vector.shape_cast %96 : vector<256x16xf32> to vector<16x16x16xf32>
    %98 = vector.extract_strided_slice %97 {offsets = [0, 0, 0], sizes = [1, 16, 16], strides = [1, 1, 1]} : vector<16x16x16xf32> to vector<1x16x16xf32>
    %99 = vector.shape_cast %98 : vector<1x16x16xf32> to vector<16x16xf32>
    %100 = tpu.transpose %99, [1, 0] : vector<16x16xf32> -> vector<16x16xf32>
    %101 = vector.extract_strided_slice %97 {offsets = [1, 0, 0], sizes = [1, 16, 16], strides = [1, 1, 1]} : vector<16x16x16xf32> to vector<1x16x16xf32>
    %102 = vector.shape_cast %101 : vector<1x16x16xf32> to vector<16x16xf32>
    %103 = tpu.transpose %102, [1, 0] : vector<16x16xf32> -> vector<16x16xf32>
    %104 = vector.extract_strided_slice %97 {offsets = [2, 0, 0], sizes = [1, 16, 16], strides = [1, 1, 1]} : vector<16x16x16xf32> to vector<1x16x16xf32>
    %105 = vector.shape_cast %104 : vector<1x16x16xf32> to vector<16x16xf32>
    %106 = tpu.transpose %105, [1, 0] : vector<16x16xf32> -> vector<16x16xf32>
    %107 = vector.extract_strided_slice %97 {offsets = [3, 0, 0], sizes = [1, 16, 16], strides = [1, 1, 1]} : vector<16x16x16xf32> to vector<1x16x16xf32>
    %108 = vector.shape_cast %107 : vector<1x16x16xf32> to vector<16x16xf32>
    %109 = tpu.transpose %108, [1, 0] : vector<16x16xf32> -> vector<16x16xf32>
    %110 = vector.extract_strided_slice %97 {offsets = [4, 0, 0], sizes = [1, 16, 16], strides = [1, 1, 1]} : vector<16x16x16xf32> to vector<1x16x16xf32>
    %111 = vector.shape_cast %110 : vector<1x16x16xf32> to vector<16x16xf32>
    %112 = tpu.transpose %111, [1, 0] : vector<16x16xf32> -> vector<16x16xf32>
    %113 = vector.extract_strided_slice %97 {offsets = [5, 0, 0], sizes = [1, 16, 16], strides = [1, 1, 1]} : vector<16x16x16xf32> to vector<1x16x16xf32>
    %114 = vector.shape_cast %113 : vector<1x16x16xf32> to vector<16x16xf32>
    %115 = tpu.transpose %114, [1, 0] : vector<16x16xf32> -> vector<16x16xf32>
    %116 = vector.extract_strided_slice %97 {offsets = [6, 0, 0], sizes = [1, 16, 16], strides = [1, 1, 1]} : vector<16x16x16xf32> to vector<1x16x16xf32>
    %117 = vector.shape_cast %116 : vector<1x16x16xf32> to vector<16x16xf32>
    %118 = tpu.transpose %117, [1, 0] : vector<16x16xf32> -> vector<16x16xf32>
    %119 = vector.extract_strided_slice %97 {offsets = [7, 0, 0], sizes = [1, 16, 16], strides = [1, 1, 1]} : vector<16x16x16xf32> to vector<1x16x16xf32>
    %120 = vector.shape_cast %119 : vector<1x16x16xf32> to vector<16x16xf32>
    %121 = tpu.transpose %120, [1, 0] : vector<16x16xf32> -> vector<16x16xf32>
    %122 = vector.extract_strided_slice %97 {offsets = [8, 0, 0], sizes = [1, 16, 16], strides = [1, 1, 1]} : vector<16x16x16xf32> to vector<1x16x16xf32>
    %123 = vector.shape_cast %122 : vector<1x16x16xf32> to vector<16x16xf32>
    %124 = tpu.transpose %123, [1, 0] : vector<16x16xf32> -> vector<16x16xf32>
    %125 = vector.extract_strided_slice %97 {offsets = [9, 0, 0], sizes = [1, 16, 16], strides = [1, 1, 1]} : vector<16x16x16xf32> to vector<1x16x16xf32>
    %126 = vector.shape_cast %125 : vector<1x16x16xf32> to vector<16x16xf32>
    %127 = tpu.transpose %126, [1, 0] : vector<16x16xf32> -> vector<16x16xf32>
    %128 = vector.extract_strided_slice %97 {offsets = [10, 0, 0], sizes = [1, 16, 16], strides = [1, 1, 1]} : vector<16x16x16xf32> to vector<1x16x16xf32>
    %129 = vector.shape_cast %128 : vector<1x16x16xf32> to vector<16x16xf32>
    %130 = tpu.transpose %129, [1, 0] : vector<16x16xf32> -> vector<16x16xf32>
    %131 = vector.extract_strided_slice %97 {offsets = [11, 0, 0], sizes = [1, 16, 16], strides = [1, 1, 1]} : vector<16x16x16xf32> to vector<1x16x16xf32>
    %132 = vector.shape_cast %131 : vector<1x16x16xf32> to vector<16x16xf32>
    %133 = tpu.transpose %132, [1, 0] : vector<16x16xf32> -> vector<16x16xf32>
    %134 = vector.extract_strided_slice %97 {offsets = [12, 0, 0], sizes = [1, 16, 16], strides = [1, 1, 1]} : vector<16x16x16xf32> to vector<1x16x16xf32>
    %135 = vector.shape_cast %134 : vector<1x16x16xf32> to vector<16x16xf32>
    %136 = tpu.transpose %135, [1, 0] : vector<16x16xf32> -> vector<16x16xf32>
    %137 = vector.extract_strided_slice %97 {offsets = [13, 0, 0], sizes = [1, 16, 16], strides = [1, 1, 1]} : vector<16x16x16xf32> to vector<1x16x16xf32>
    %138 = vector.shape_cast %137 : vector<1x16x16xf32> to vector<16x16xf32>
    %139 = tpu.transpose %138, [1, 0] : vector<16x16xf32> -> vector<16x16xf32>
    %140 = vector.extract_strided_slice %97 {offsets = [14, 0, 0], sizes = [1, 16, 16], strides = [1, 1, 1]} : vector<16x16x16xf32> to vector<1x16x16xf32>
    %141 = vector.shape_cast %140 : vector<1x16x16xf32> to vector<16x16xf32>
    %142 = tpu.transpose %141, [1, 0] : vector<16x16xf32> -> vector<16x16xf32>
    %143 = vector.extract_strided_slice %97 {offsets = [15, 0, 0], sizes = [1, 16, 16], strides = [1, 1, 1]} : vector<16x16x16xf32> to vector<1x16x16xf32>
    %144 = vector.shape_cast %143 : vector<1x16x16xf32> to vector<16x16xf32>
    %145 = tpu.transpose %144, [1, 0] : vector<16x16xf32> -> vector<16x16xf32>
    %146 = vector.shape_cast %100 : vector<16x16xf32> to vector<1x16x16xf32>
    %147 = vector.shape_cast %103 : vector<16x16xf32> to vector<1x16x16xf32>
    %148 = vector.shape_cast %106 : vector<16x16xf32> to vector<1x16x16xf32>
    %149 = vector.shape_cast %109 : vector<16x16xf32> to vector<1x16x16xf32>
    %150 = vector.shape_cast %112 : vector<16x16xf32> to vector<1x16x16xf32>
    %151 = vector.shape_cast %115 : vector<16x16xf32> to vector<1x16x16xf32>
    %152 = vector.shape_cast %118 : vector<16x16xf32> to vector<1x16x16xf32>
    %153 = vector.shape_cast %121 : vector<16x16xf32> to vector<1x16x16xf32>
    %154 = vector.shape_cast %124 : vector<16x16xf32> to vector<1x16x16xf32>
    %155 = vector.shape_cast %127 : vector<16x16xf32> to vector<1x16x16xf32>
    %156 = vector.shape_cast %130 : vector<16x16xf32> to vector<1x16x16xf32>
    %157 = vector.shape_cast %133 : vector<16x16xf32> to vector<1x16x16xf32>
    %158 = vector.shape_cast %136 : vector<16x16xf32> to vector<1x16x16xf32>
    %159 = vector.shape_cast %139 : vector<16x16xf32> to vector<1x16x16xf32>
    %160 = vector.shape_cast %142 : vector<16x16xf32> to vector<1x16x16xf32>
    %161 = vector.shape_cast %145 : vector<16x16xf32> to vector<1x16x16xf32>
    %162 = tpu.concatenate %146, %147, %148, %149, %150, %151, %152, %153, %154, %155, %156, %157, %158, %159, %160, %161 in 0 : vector<1x16x16xf32>, vector<1x16x16xf32>, vector<1x16x16xf32>, vector<1x16x16xf32>, vector<1x16x16xf32>, vector<1x16x16xf32>, vector<1x16x16xf32>, vector<1x16x16xf32>, vector<1x16x16xf32>, vector<1x16x16xf32>, vector<1x16x16xf32>, vector<1x16x16xf32>, vector<1x16x16xf32>, vector<1x16x16xf32>, vector<1x16x16xf32>, vector<1x16x16xf32> -> vector<16x16x16xf32>
    %163 = vector.shape_cast %162 : vector<16x16x16xf32> to vector<256x16xf32>
    %c0_80 = arith.constant 0 : index
    %c0_81 = arith.constant 0 : index
    %164 = vector.load %arg8[%c0_80, %c0_81] : memref<16x32xf32, #tpu.memory_space<vmem>>, vector<16x32xf32>
    %cst_82 = arith.constant dense<0.000000e+00> : vector<256x32xf32>
    %165 = tpu.matmul %163, %164, %cst_82 {dimension_numbers = #tpu.dot_dimension_numbers<[1], [0], [0], [1], [0, 0, 1, 1], [], []>} : vector<256x16xf32>, vector<16x32xf32>, vector<256x32xf32> -> vector<256x32xf32>
    %166 = vector.shape_cast %165 : vector<256x32xf32> to vector<16x16x32xf32>
    %c0_83 = arith.constant 0 : index
    %c0_84 = arith.constant 0 : index
    %c0_85 = arith.constant 0 : index
    %167 = vector.load %arg11[%c0_83, %c0_84, %c0_85] : memref<16x16x32xf32, #tpu.memory_space<vmem>>, vector<16x16x32xf32>
    tpu.vector_store %arg11[%c0_83, %c0_84, %c0_85], %166 {strides = array<i32>} : memref<16x16x32xf32, #tpu.memory_space<vmem>>, vector<16x16x32xf32>,
    %c0_86 = arith.constant 0 : index
    %c0_87 = arith.constant 0 : index
    %168 = vector.load %arg9[%c0_86, %c0_87] : memref<32x16xf32, #tpu.memory_space<vmem>>, vector<32x16xf32>
    %c0_88 = arith.constant 0 : index
    %c0_89 = arith.constant 0 : index
    %c0_90 = arith.constant 0 : index
    %169 = vector.load %arg11[%c0_88, %c0_89, %c0_90] : memref<16x16x32xf32, #tpu.memory_space<vmem>>, vector<16x1x32xf32>
    %170 = vector.shape_cast %169 : vector<16x1x32xf32> to vector<16x32xf32>
    %cst_91 = arith.constant dense<0.000000e+00> : vector<32x32xf32>
    %171 = tpu.matmul %168, %170, %cst_91 {dimension_numbers = #tpu.dot_dimension_numbers<[1], [0], [0], [1], [0, 0, 1, 1], [], []>} : vector<32x16xf32>, vector<16x32xf32>, vector<32x32xf32> -> vector<32x32xf32>
    %c0_92 = arith.constant 0 : index
    %c0_93 = arith.constant 0 : index
    %c0_94 = arith.constant 0 : index
    %c0_95 = arith.constant 0 : index
    %172 = vector.load %arg10[%c0_92, %c0_93, %c0_94, %c0_95] : memref<1x16x32x32xf32, #tpu.memory_space<vmem>>, vector<1x1x32x32xf32>
    %173 = vector.shape_cast %172 : vector<1x1x32x32xf32> to vector<32x32xf32>
    %174 = vector.shape_cast %171 : vector<32x32xf32> to vector<1x1x32x32xf32>
    tpu.vector_store %arg10[%c0_92, %c0_93, %c0_94, %c0_95], %174 {strides = array<i32>} : memref<1x16x32x32xf32, #tpu.memory_space<vmem>>, vector<1x1x32x32xf32>,
    %c0_96 = arith.constant 0 : index
    %c1_97 = arith.constant 1 : index
    %c0_98 = arith.constant 0 : index
    %175 = vector.load %arg11[%c0_96, %c1_97, %c0_98] : memref<16x16x32xf32, #tpu.memory_space<vmem>>, vector<16x1x32xf32>
    %176 = vector.shape_cast %175 : vector<16x1x32xf32> to vector<16x32xf32>
    %cst_99 = arith.constant dense<0.000000e+00> : vector<32x32xf32>
    %177 = tpu.matmul %168, %176, %cst_99 {dimension_numbers = #tpu.dot_dimension_numbers<[1], [0], [0], [1], [0, 0, 1, 1], [], []>} : vector<32x16xf32>, vector<16x32xf32>, vector<32x32xf32> -> vector<32x32xf32>
    %c0_100 = arith.constant 0 : index
    %c1_101 = arith.constant 1 : index
    %c0_102 = arith.constant 0 : index
    %c0_103 = arith.constant 0 : index
    %178 = vector.load %arg10[%c0_100, %c1_101, %c0_102, %c0_103] : memref<1x16x32x32xf32, #tpu.memory_space<vmem>>, vector<1x1x32x32xf32>
    %179 = vector.shape_cast %178 : vector<1x1x32x32xf32> to vector<32x32xf32>
    %180 = vector.shape_cast %177 : vector<32x32xf32> to vector<1x1x32x32xf32>
    tpu.vector_store %arg10[%c0_100, %c1_101, %c0_102, %c0_103], %180 {strides = array<i32>} : memref<1x16x32x32xf32, #tpu.memory_space<vmem>>, vector<1x1x32x32xf32>,
    %c0_104 = arith.constant 0 : index
    %c2_105 = arith.constant 2 : index
    %c0_106 = arith.constant 0 : index
    %181 = vector.load %arg11[%c0_104, %c2_105, %c0_106] : memref<16x16x32xf32, #tpu.memory_space<vmem>>, vector<16x1x32xf32>
    %182 = vector.shape_cast %181 : vector<16x1x32xf32> to vector<16x32xf32>
    %cst_107 = arith.constant dense<0.000000e+00> : vector<32x32xf32>
    %183 = tpu.matmul %168, %182, %cst_107 {dimension_numbers = #tpu.dot_dimension_numbers<[1], [0], [0], [1], [0, 0, 1, 1], [], []>} : vector<32x16xf32>, vector<16x32xf32>, vector<32x32xf32> -> vector<32x32xf32>
    %c0_108 = arith.constant 0 : index
    %c2_109 = arith.constant 2 : index
    %c0_110 = arith.constant 0 : index
    %c0_111 = arith.constant 0 : index
    %184 = vector.load %arg10[%c0_108, %c2_109, %c0_110, %c0_111] : memref<1x16x32x32xf32, #tpu.memory_space<vmem>>, vector<1x1x32x32xf32>
    %185 = vector.shape_cast %184 : vector<1x1x32x32xf32> to vector<32x32xf32>
    %186 = vector.shape_cast %183 : vector<32x32xf32> to vector<1x1x32x32xf32>
    tpu.vector_store %arg10[%c0_108, %c2_109, %c0_110, %c0_111], %186 {strides = array<i32>} : memref<1x16x32x32xf32, #tpu.memory_space<vmem>>, vector<1x1x32x32xf32>,
    %c0_112 = arith.constant 0 : index
    %c3_113 = arith.constant 3 : index
    %c0_114 = arith.constant 0 : index
    %187 = vector.load %arg11[%c0_112, %c3_113, %c0_114] : memref<16x16x32xf32, #tpu.memory_space<vmem>>, vector<16x1x32xf32>
    %188 = vector.shape_cast %187 : vector<16x1x32xf32> to vector<16x32xf32>
    %cst_115 = arith.constant dense<0.000000e+00> : vector<32x32xf32>
    %189 = tpu.matmul %168, %188, %cst_115 {dimension_numbers = #tpu.dot_dimension_numbers<[1], [0], [0], [1], [0, 0, 1, 1], [], []>} : vector<32x16xf32>, vector<16x32xf32>, vector<32x32xf32> -> vector<32x32xf32>
    %c0_116 = arith.constant 0 : index
    %c3_117 = arith.constant 3 : index
    %c0_118 = arith.constant 0 : index
    %c0_119 = arith.constant 0 : index
    %190 = vector.load %arg10[%c0_116, %c3_117, %c0_118, %c0_119] : memref<1x16x32x32xf32, #tpu.memory_space<vmem>>, vector<1x1x32x32xf32>
    %191 = vector.shape_cast %190 : vector<1x1x32x32xf32> to vector<32x32xf32>
    %192 = vector.shape_cast %189 : vector<32x32xf32> to vector<1x1x32x32xf32>
    tpu.vector_store %arg10[%c0_116, %c3_117, %c0_118, %c0_119], %192 {strides = array<i32>} : memref<1x16x32x32xf32, #tpu.memory_space<vmem>>, vector<1x1x32x32xf32>,
    %c0_120 = arith.constant 0 : index
    %c4_121 = arith.constant 4 : index
    %c0_122 = arith.constant 0 : index
    %193 = vector.load %arg11[%c0_120, %c4_121, %c0_122] : memref<16x16x32xf32, #tpu.memory_space<vmem>>, vector<16x1x32xf32>
    %194 = vector.shape_cast %193 : vector<16x1x32xf32> to vector<16x32xf32>
    %cst_123 = arith.constant dense<0.000000e+00> : vector<32x32xf32>
    %195 = tpu.matmul %168, %194, %cst_123 {dimension_numbers = #tpu.dot_dimension_numbers<[1], [0], [0], [1], [0, 0, 1, 1], [], []>} : vector<32x16xf32>, vector<16x32xf32>, vector<32x32xf32> -> vector<32x32xf32>
    %c0_124 = arith.constant 0 : index
    %c4_125 = arith.constant 4 : index
    %c0_126 = arith.constant 0 : index
    %c0_127 = arith.constant 0 : index
    %196 = vector.load %arg10[%c0_124, %c4_125, %c0_126, %c0_127] : memref<1x16x32x32xf32, #tpu.memory_space<vmem>>, vector<1x1x32x32xf32>
    %197 = vector.shape_cast %196 : vector<1x1x32x32xf32> to vector<32x32xf32>
    %198 = vector.shape_cast %195 : vector<32x32xf32> to vector<1x1x32x32xf32>
    tpu.vector_store %arg10[%c0_124, %c4_125, %c0_126, %c0_127], %198 {strides = array<i32>} : memref<1x16x32x32xf32, #tpu.memory_space<vmem>>, vector<1x1x32x32xf32>,
    %c0_128 = arith.constant 0 : index
    %c5_129 = arith.constant 5 : index
    %c0_130 = arith.constant 0 : index
    %199 = vector.load %arg11[%c0_128, %c5_129, %c0_130] : memref<16x16x32xf32, #tpu.memory_space<vmem>>, vector<16x1x32xf32>
    %200 = vector.shape_cast %199 : vector<16x1x32xf32> to vector<16x32xf32>
    %cst_131 = arith.constant dense<0.000000e+00> : vector<32x32xf32>
    %201 = tpu.matmul %168, %200, %cst_131 {dimension_numbers = #tpu.dot_dimension_numbers<[1], [0], [0], [1], [0, 0, 1, 1], [], []>} : vector<32x16xf32>, vector<16x32xf32>, vector<32x32xf32> -> vector<32x32xf32>
    %c0_132 = arith.constant 0 : index
    %c5_133 = arith.constant 5 : index
    %c0_134 = arith.constant 0 : index
    %c0_135 = arith.constant 0 : index
    %202 = vector.load %arg10[%c0_132, %c5_133, %c0_134, %c0_135] : memref<1x16x32x32xf32, #tpu.memory_space<vmem>>, vector<1x1x32x32xf32>
    %203 = vector.shape_cast %202 : vector<1x1x32x32xf32> to vector<32x32xf32>
    %204 = vector.shape_cast %201 : vector<32x32xf32> to vector<1x1x32x32xf32>
    tpu.vector_store %arg10[%c0_132, %c5_133, %c0_134, %c0_135], %204 {strides = array<i32>} : memref<1x16x32x32xf32, #tpu.memory_space<vmem>>, vector<1x1x32x32xf32>,
    %c0_136 = arith.constant 0 : index
    %c6_137 = arith.constant 6 : index
    %c0_138 = arith.constant 0 : index
    %205 = vector.load %arg11[%c0_136, %c6_137, %c0_138] : memref<16x16x32xf32, #tpu.memory_space<vmem>>, vector<16x1x32xf32>
    %206 = vector.shape_cast %205 : vector<16x1x32xf32> to vector<16x32xf32>
    %cst_139 = arith.constant dense<0.000000e+00> : vector<32x32xf32>
    %207 = tpu.matmul %168, %206, %cst_139 {dimension_numbers = #tpu.dot_dimension_numbers<[1], [0], [0], [1], [0, 0, 1, 1], [], []>} : vector<32x16xf32>, vector<16x32xf32>, vector<32x32xf32> -> vector<32x32xf32>
    %c0_140 = arith.constant 0 : index
    %c6_141 = arith.constant 6 : index
    %c0_142 = arith.constant 0 : index
    %c0_143 = arith.constant 0 : index
    %208 = vector.load %arg10[%c0_140, %c6_141, %c0_142, %c0_143] : memref<1x16x32x32xf32, #tpu.memory_space<vmem>>, vector<1x1x32x32xf32>
    %209 = vector.shape_cast %208 : vector<1x1x32x32xf32> to vector<32x32xf32>
    %210 = vector.shape_cast %207 : vector<32x32xf32> to vector<1x1x32x32xf32>
    tpu.vector_store %arg10[%c0_140, %c6_141, %c0_142, %c0_143], %210 {strides = array<i32>} : memref<1x16x32x32xf32, #tpu.memory_space<vmem>>, vector<1x1x32x32xf32>,
    %c0_144 = arith.constant 0 : index
    %c7_145 = arith.constant 7 : index
    %c0_146 = arith.constant 0 : index
    %211 = vector.load %arg11[%c0_144, %c7_145, %c0_146] : memref<16x16x32xf32, #tpu.memory_space<vmem>>, vector<16x1x32xf32>
    %212 = vector.shape_cast %211 : vector<16x1x32xf32> to vector<16x32xf32>
    %cst_147 = arith.constant dense<0.000000e+00> : vector<32x32xf32>
    %213 = tpu.matmul %168, %212, %cst_147 {dimension_numbers = #tpu.dot_dimension_numbers<[1], [0], [0], [1], [0, 0, 1, 1], [], []>} : vector<32x16xf32>, vector<16x32xf32>, vector<32x32xf32> -> vector<32x32xf32>
    %c0_148 = arith.constant 0 : index
    %c7_149 = arith.constant 7 : index
    %c0_150 = arith.constant 0 : index
    %c0_151 = arith.constant 0 : index
    %214 = vector.load %arg10[%c0_148, %c7_149, %c0_150, %c0_151] : memref<1x16x32x32xf32, #tpu.memory_space<vmem>>, vector<1x1x32x32xf32>
    %215 = vector.shape_cast %214 : vector<1x1x32x32xf32> to vector<32x32xf32>
    %216 = vector.shape_cast %213 : vector<32x32xf32> to vector<1x1x32x32xf32>
    tpu.vector_store %arg10[%c0_148, %c7_149, %c0_150, %c0_151], %216 {strides = array<i32>} : memref<1x16x32x32xf32, #tpu.memory_space<vmem>>, vector<1x1x32x32xf32>,
    %c0_152 = arith.constant 0 : index
    %c8_153 = arith.constant 8 : index
    %c0_154 = arith.constant 0 : index
    %217 = vector.load %arg11[%c0_152, %c8_153, %c0_154] : memref<16x16x32xf32, #tpu.memory_space<vmem>>, vector<16x1x32xf32>
    %218 = vector.shape_cast %217 : vector<16x1x32xf32> to vector<16x32xf32>
    %cst_155 = arith.constant dense<0.000000e+00> : vector<32x32xf32>
    %219 = tpu.matmul %168, %218, %cst_155 {dimension_numbers = #tpu.dot_dimension_numbers<[1], [0], [0], [1], [0, 0, 1, 1], [], []>} : vector<32x16xf32>, vector<16x32xf32>, vector<32x32xf32> -> vector<32x32xf32>
    %c0_156 = arith.constant 0 : index
    %c8_157 = arith.constant 8 : index
    %c0_158 = arith.constant 0 : index
    %c0_159 = arith.constant 0 : index
    %220 = vector.load %arg10[%c0_156, %c8_157, %c0_158, %c0_159] : memref<1x16x32x32xf32, #tpu.memory_space<vmem>>, vector<1x1x32x32xf32>
    %221 = vector.shape_cast %220 : vector<1x1x32x32xf32> to vector<32x32xf32>
    %222 = vector.shape_cast %219 : vector<32x32xf32> to vector<1x1x32x32xf32>
    tpu.vector_store %arg10[%c0_156, %c8_157, %c0_158, %c0_159], %222 {strides = array<i32>} : memref<1x16x32x32xf32, #tpu.memory_space<vmem>>, vector<1x1x32x32xf32>,
    %c0_160 = arith.constant 0 : index
    %c9 = arith.constant 9 : index
    %c0_161 = arith.constant 0 : index
    %223 = vector.load %arg11[%c0_160, %c9, %c0_161] : memref<16x16x32xf32, #tpu.memory_space<vmem>>, vector<16x1x32xf32>
    %224 = vector.shape_cast %223 : vector<16x1x32xf32> to vector<16x32xf32>
    %cst_162 = arith.constant dense<0.000000e+00> : vector<32x32xf32>
    %225 = tpu.matmul %168, %224, %cst_162 {dimension_numbers = #tpu.dot_dimension_numbers<[1], [0], [0], [1], [0, 0, 1, 1], [], []>} : vector<32x16xf32>, vector<16x32xf32>, vector<32x32xf32> -> vector<32x32xf32>
    %c0_163 = arith.constant 0 : index
    %c9_164 = arith.constant 9 : index
    %c0_165 = arith.constant 0 : index
    %c0_166 = arith.constant 0 : index
    %226 = vector.load %arg10[%c0_163, %c9_164, %c0_165, %c0_166] : memref<1x16x32x32xf32, #tpu.memory_space<vmem>>, vector<1x1x32x32xf32>
    %227 = vector.shape_cast %226 : vector<1x1x32x32xf32> to vector<32x32xf32>
    %228 = vector.shape_cast %225 : vector<32x32xf32> to vector<1x1x32x32xf32>
    tpu.vector_store %arg10[%c0_163, %c9_164, %c0_165, %c0_166], %228 {strides = array<i32>} : memref<1x16x32x32xf32, #tpu.memory_space<vmem>>, vector<1x1x32x32xf32>,
    %c0_167 = arith.constant 0 : index
    %c10 = arith.constant 10 : index
    %c0_168 = arith.constant 0 : index
    %229 = vector.load %arg11[%c0_167, %c10, %c0_168] : memref<16x16x32xf32, #tpu.memory_space<vmem>>, vector<16x1x32xf32>
    %230 = vector.shape_cast %229 : vector<16x1x32xf32> to vector<16x32xf32>
    %cst_169 = arith.constant dense<0.000000e+00> : vector<32x32xf32>
    %231 = tpu.matmul %168, %230, %cst_169 {dimension_numbers = #tpu.dot_dimension_numbers<[1], [0], [0], [1], [0, 0, 1, 1], [], []>} : vector<32x16xf32>, vector<16x32xf32>, vector<32x32xf32> -> vector<32x32xf32>
    %c0_170 = arith.constant 0 : index
    %c10_171 = arith.constant 10 : index
    %c0_172 = arith.constant 0 : index
    %c0_173 = arith.constant 0 : index
    %232 = vector.load %arg10[%c0_170, %c10_171, %c0_172, %c0_173] : memref<1x16x32x32xf32, #tpu.memory_space<vmem>>, vector<1x1x32x32xf32>
    %233 = vector.shape_cast %232 : vector<1x1x32x32xf32> to vector<32x32xf32>
    %234 = vector.shape_cast %231 : vector<32x32xf32> to vector<1x1x32x32xf32>
    tpu.vector_store %arg10[%c0_170, %c10_171, %c0_172, %c0_173], %234 {strides = array<i32>} : memref<1x16x32x32xf32, #tpu.memory_space<vmem>>, vector<1x1x32x32xf32>,
    %c0_174 = arith.constant 0 : index
    %c11 = arith.constant 11 : index
    %c0_175 = arith.constant 0 : index
    %235 = vector.load %arg11[%c0_174, %c11, %c0_175] : memref<16x16x32xf32, #tpu.memory_space<vmem>>, vector<16x1x32xf32>
    %236 = vector.shape_cast %235 : vector<16x1x32xf32> to vector<16x32xf32>
    %cst_176 = arith.constant dense<0.000000e+00> : vector<32x32xf32>
    %237 = tpu.matmul %168, %236, %cst_176 {dimension_numbers = #tpu.dot_dimension_numbers<[1], [0], [0], [1], [0, 0, 1, 1], [], []>} : vector<32x16xf32>, vector<16x32xf32>, vector<32x32xf32> -> vector<32x32xf32>
    %c0_177 = arith.constant 0 : index
    %c11_178 = arith.constant 11 : index
    %c0_179 = arith.constant 0 : index
    %c0_180 = arith.constant 0 : index
    %238 = vector.load %arg10[%c0_177, %c11_178, %c0_179, %c0_180] : memref<1x16x32x32xf32, #tpu.memory_space<vmem>>, vector<1x1x32x32xf32>
    %239 = vector.shape_cast %238 : vector<1x1x32x32xf32> to vector<32x32xf32>
    %240 = vector.shape_cast %237 : vector<32x32xf32> to vector<1x1x32x32xf32>
    tpu.vector_store %arg10[%c0_177, %c11_178, %c0_179, %c0_180], %240 {strides = array<i32>} : memref<1x16x32x32xf32, #tpu.memory_space<vmem>>, vector<1x1x32x32xf32>,
    %c0_181 = arith.constant 0 : index
    %c12 = arith.constant 12 : index
    %c0_182 = arith.constant 0 : index
    %241 = vector.load %arg11[%c0_181, %c12, %c0_182] : memref<16x16x32xf32, #tpu.memory_space<vmem>>, vector<16x1x32xf32>
    %242 = vector.shape_cast %241 : vector<16x1x32xf32> to vector<16x32xf32>
    %cst_183 = arith.constant dense<0.000000e+00> : vector<32x32xf32>
    %243 = tpu.matmul %168, %242, %cst_183 {dimension_numbers = #tpu.dot_dimension_numbers<[1], [0], [0], [1], [0, 0, 1, 1], [], []>} : vector<32x16xf32>, vector<16x32xf32>, vector<32x32xf32> -> vector<32x32xf32>
    %c0_184 = arith.constant 0 : index
    %c12_185 = arith.constant 12 : index
    %c0_186 = arith.constant 0 : index
    %c0_187 = arith.constant 0 : index
    %244 = vector.load %arg10[%c0_184, %c12_185, %c0_186, %c0_187] : memref<1x16x32x32xf32, #tpu.memory_space<vmem>>, vector<1x1x32x32xf32>
    %245 = vector.shape_cast %244 : vector<1x1x32x32xf32> to vector<32x32xf32>
    %246 = vector.shape_cast %243 : vector<32x32xf32> to vector<1x1x32x32xf32>
    tpu.vector_store %arg10[%c0_184, %c12_185, %c0_186, %c0_187], %246 {strides = array<i32>} : memref<1x16x32x32xf32, #tpu.memory_space<vmem>>, vector<1x1x32x32xf32>,
    %c0_188 = arith.constant 0 : index
    %c13 = arith.constant 13 : index
    %c0_189 = arith.constant 0 : index
    %247 = vector.load %arg11[%c0_188, %c13, %c0_189] : memref<16x16x32xf32, #tpu.memory_space<vmem>>, vector<16x1x32xf32>
    %248 = vector.shape_cast %247 : vector<16x1x32xf32> to vector<16x32xf32>
    %cst_190 = arith.constant dense<0.000000e+00> : vector<32x32xf32>
    %249 = tpu.matmul %168, %248, %cst_190 {dimension_numbers = #tpu.dot_dimension_numbers<[1], [0], [0], [1], [0, 0, 1, 1], [], []>} : vector<32x16xf32>, vector<16x32xf32>, vector<32x32xf32> -> vector<32x32xf32>
    %c0_191 = arith.constant 0 : index
    %c13_192 = arith.constant 13 : index
    %c0_193 = arith.constant 0 : index
    %c0_194 = arith.constant 0 : index
    %250 = vector.load %arg10[%c0_191, %c13_192, %c0_193, %c0_194] : memref<1x16x32x32xf32, #tpu.memory_space<vmem>>, vector<1x1x32x32xf32>
    %251 = vector.shape_cast %250 : vector<1x1x32x32xf32> to vector<32x32xf32>
    %252 = vector.shape_cast %249 : vector<32x32xf32> to vector<1x1x32x32xf32>
    tpu.vector_store %arg10[%c0_191, %c13_192, %c0_193, %c0_194], %252 {strides = array<i32>} : memref<1x16x32x32xf32, #tpu.memory_space<vmem>>, vector<1x1x32x32xf32>,
    %c0_195 = arith.constant 0 : index
    %c14 = arith.constant 14 : index
    %c0_196 = arith.constant 0 : index
    %253 = vector.load %arg11[%c0_195, %c14, %c0_196] : memref<16x16x32xf32, #tpu.memory_space<vmem>>, vector<16x1x32xf32>
    %254 = vector.shape_cast %253 : vector<16x1x32xf32> to vector<16x32xf32>
    %cst_197 = arith.constant dense<0.000000e+00> : vector<32x32xf32>
    %255 = tpu.matmul %168, %254, %cst_197 {dimension_numbers = #tpu.dot_dimension_numbers<[1], [0], [0], [1], [0, 0, 1, 1], [], []>} : vector<32x16xf32>, vector<16x32xf32>, vector<32x32xf32> -> vector<32x32xf32>
    %c0_198 = arith.constant 0 : index
    %c14_199 = arith.constant 14 : index
    %c0_200 = arith.constant 0 : index
    %c0_201 = arith.constant 0 : index
    %256 = vector.load %arg10[%c0_198, %c14_199, %c0_200, %c0_201] : memref<1x16x32x32xf32, #tpu.memory_space<vmem>>, vector<1x1x32x32xf32>
    %257 = vector.shape_cast %256 : vector<1x1x32x32xf32> to vector<32x32xf32>
    %258 = vector.shape_cast %255 : vector<32x32xf32> to vector<1x1x32x32xf32>
    tpu.vector_store %arg10[%c0_198, %c14_199, %c0_200, %c0_201], %258 {strides = array<i32>} : memref<1x16x32x32xf32, #tpu.memory_space<vmem>>, vector<1x1x32x32xf32>,
    %c0_202 = arith.constant 0 : index
    %c15 = arith.constant 15 : index
    %c0_203 = arith.constant 0 : index
    %259 = vector.load %arg11[%c0_202, %c15, %c0_203] : memref<16x16x32xf32, #tpu.memory_space<vmem>>, vector<16x1x32xf32>
    %260 = vector.shape_cast %259 : vector<16x1x32xf32> to vector<16x32xf32>
    %cst_204 = arith.constant dense<0.000000e+00> : vector<32x32xf32>
    %261 = tpu.matmul %168, %260, %cst_204 {dimension_numbers = #tpu.dot_dimension_numbers<[1], [0], [0], [1], [0, 0, 1, 1], [], []>} : vector<32x16xf32>, vector<16x32xf32>, vector<32x32xf32> -> vector<32x32xf32>
    %c0_205 = arith.constant 0 : index
    %c15_206 = arith.constant 15 : index
    %c0_207 = arith.constant 0 : index
    %c0_208 = arith.constant 0 : index
    %262 = vector.load %arg10[%c0_205, %c15_206, %c0_207, %c0_208] : memref<1x16x32x32xf32, #tpu.memory_space<vmem>>, vector<1x1x32x32xf32>
    %263 = vector.shape_cast %262 : vector<1x1x32x32xf32> to vector<32x32xf32>
    %264 = vector.shape_cast %261 : vector<32x32xf32> to vector<1x1x32x32xf32>
    tpu.vector_store %arg10[%c0_205, %c15_206, %c0_207, %c0_208], %264 {strides = array<i32>} : memref<1x16x32x32xf32, #tpu.memory_space<vmem>>, vector<1x1x32x32xf32>,
    return
  }
  func.func @transform_0(%arg0: i32) -> (i32, i32, i32, i32) {
    %c0_i32 = arith.constant 0 : i32
    %c0_i32_0 = arith.constant 0 : i32
    %c0_i32_1 = arith.constant 0 : i32
    %c0_i32_2 = arith.constant 0 : i32
    return %arg0, %c0_i32, %c0_i32_0, %c0_i32_1 : i32, i32, i32, i32
  }
  func.func @transform_1(%arg0: i32) -> (i32, i32, i32) {
    %c0_i32 = arith.constant 0 : i32
    %c0_i32_0 = arith.constant 0 : i32
    %c0_i32_1 = arith.constant 0 : i32
    %c0_i32_2 = arith.constant 0 : i32
    return %c0_i32, %c0_i32_0, %c0_i32_1 : i32, i32, i32
  }
  func.func @transform_2(%arg0: i32) -> (i32, i32) {
    %c0_i32 = arith.constant 0 : i32
    %c0_i32_0 = arith.constant 0 : i32
    %c0_i32_1 = arith.constant 0 : i32
    return %c0_i32, %c0_i32_0 : i32, i32
  }
  func.func @transform_3(%arg0: i32) -> (i32, i32) {
    %c0_i32 = arith.constant 0 : i32
    %c0_i32_0 = arith.constant 0 : i32
    %c0_i32_1 = arith.constant 0 : i32
    return %c0_i32, %c0_i32_0 : i32, i32
  }
  func.func @transform_4(%arg0: i32) -> (i32, i32) {
    %c0_i32 = arith.constant 0 : i32
    %c0_i32_0 = arith.constant 0 : i32
    %c0_i32_1 = arith.constant 0 : i32
    return %c0_i32, %c0_i32_0 : i32, i32
  }
  func.func @transform_5(%arg0: i32) -> (i32, i32) {
    %c0_i32 = arith.constant 0 : i32
    %c0_i32_0 = arith.constant 0 : i32
    %c0_i32_1 = arith.constant 0 : i32
    return %c0_i32, %c0_i32_0 : i32, i32
  }
  func.func @transform_6(%arg0: i32) -> (i32, i32) {
    %c0_i32 = arith.constant 0 : i32
    %c0_i32_0 = arith.constant 0 : i32
    %c0_i32_1 = arith.constant 0 : i32
    return %c0_i32, %c0_i32_0 : i32, i32
  }
  func.func @transform_7(%arg0: i32) -> (i32, i32) {
    %c0_i32 = arith.constant 0 : i32
    %c0_i32_0 = arith.constant 0 : i32
    %c0_i32_1 = arith.constant 0 : i32
    return %c0_i32, %c0_i32_0 : i32, i32
  }
  func.func @transform_8(%arg0: i32) -> (i32, i32) {
    %c0_i32 = arith.constant 0 : i32
    %c0_i32_0 = arith.constant 0 : i32
    %c0_i32_1 = arith.constant 0 : i32
    return %c0_i32, %c0_i32_0 : i32, i32
  }
  func.func @transform_9(%arg0: i32) -> (i32, i32, i32, i32) {
    %c0_i32 = arith.constant 0 : i32
    %c0_i32_0 = arith.constant 0 : i32
    %c0_i32_1 = arith.constant 0 : i32
    %c0_i32_2 = arith.constant 0 : i32
    return %arg0, %c0_i32, %c0_i32_0, %c0_i32_1 : i32, i32, i32, i32
  }
}

</mosaic_0001>

<llo_original>
// kernel: tpu_custom_call.1
$region0: #{tpu_custom_call.1}
  #allocation0 [shape = 'u32[]', space=smem, size = 0x4, offset = 0x4, fixed_abs, tag = 'smem constant byte address 0x4 - core index']
  #allocation1 [shape = 'u32[144,128]{1,0:T(1,128)}', space=vmem, size = 0x12000, scoped, tag = 'internal scratch']
  #allocation2 [shape = 'f32[16,16,32]{2,1,0:T(8,128)}', space=vmem, size = 0x20000, scoped, tag = 'scratch operand']
  %s0 = inlined_call_operand.vmem [shape: f32[2,18,18,4], index: 0, kind: input, shape index: {}]
  %s1 = inlined_call_operand.vmem [shape: f32[9,4,16], index: 1, kind: input, shape index: {}]
  %s2 = inlined_call_operand.vmem [shape: f32[1,16], index: 2, kind: input, shape index: {}]
  %s3 = inlined_call_operand.vmem [shape: f32[16,8], index: 3, kind: input, shape index: {}]
  %s4 = inlined_call_operand.vmem [shape: f32[8,16], index: 4, kind: input, shape index: {}]
  %s5 = inlined_call_operand.vmem [shape: f32[1,16], index: 5, kind: input, shape index: {}]
  %s6 = inlined_call_operand.vmem [shape: f32[1,16], index: 6, kind: input, shape index: {}]
  %s7 = inlined_call_operand.vmem [shape: f32[16,32], index: 7, kind: input, shape index: {}]
  %s8 = inlined_call_operand.vmem [shape: f32[32,16], index: 8, kind: input, shape index: {}]
  %s9 = inlined_call_operand.hbm [shape: f32[2,16,32,32], index: 9, kind: output, shape index: {}]
  %s10 = sld [smem:[#allocation0]]
  $region69: #{tpu_custom_call.1} parent=0
    _
  %s12 = ssub.s32 1, %s10
  %s13 = scalar_select 0, %s12, %s10
  $region1: #{tpu_custom_call.1} parent=0
    #allocation3 [shape = 'u8[524288]{0}', space=vmem, size = 0x80000, scoped, tag = 'output window, operand 0']
    #allocation4 [shape = 's32[2]{0}', space=sflag, size = 0x8, scoped, tag = 'scoped memory for tpu_custom_call.1']
    %14 = vsyncpa [#allocation4], 0
    %s15 = scalar_lea.sflag [#allocation4], 1
    %16 = vsyncpa %s15, 0
    loop: start=0, step=1, limit=4
    $region2: #{tpu_custom_call.1} parent=1 // loop_pre_header
      _
    $region3: #{tpu_custom_call.1} parent=1 // loop_header
      %s18 = sphi 0, %s22
      %p19 = scmp.ge.s32.totalorder %s18, 4
      %s28 = sphi 0, %s30
      %s31 = sphi 0, %s28
      %s32 = sphi 0, %s31
      %s48 = sphi 0, %s32
      %s52 = sphi 0, %s52
      %s54 = sphi 0, %s52
      %s55 = sphi 0, %s54
      %s69 = sphi 0, %s55
      %s73 = sphi 0, %s73
      %s75 = sphi 0, %s73
      %s76 = sphi 0, %s75
      %s90 = sphi 0, %s76
      %s94 = sphi 0, %s94
      %s96 = sphi 0, %s94
      %s97 = sphi 0, %s96
      %s111 = sphi 0, %s97
      %s115 = sphi 0, %s115
      %s117 = sphi 0, %s115
      %s118 = sphi 0, %s117
      %s132 = sphi 0, %s118
      %s136 = sphi 0, %s136
      %s138 = sphi 0, %s136
      %s139 = sphi 0, %s138
      %s153 = sphi 0, %s139
      %s157 = sphi 0, %s157
      %s159 = sphi 0, %s157
      %s160 = sphi 0, %s159
      %s174 = sphi 0, %s160
      %s178 = sphi 0, %s178
      %s180 = sphi 0, %s178
      %s181 = sphi 0, %s180
      %s195 = sphi 0, %s181
      %s199 = sphi 0, %s199
      %s201 = sphi 0, %s199
      %s202 = sphi 0, %s201
      %s216 = sphi 0, %s202
      %s222 = sphi 0, %s224
      %s225 = sphi 0, %s222
      %s226 = sphi 0, %s225
      %s242 = sphi 0, %s226
    $region4: #{tpu_custom_call.1} parent=1 // loop_header_branch
      %21 = sbr.rel (%p19) target = $region8
    $region5: #{tpu_custom_call.1} parent=1 // loop_body
      %s23 = ssub.s32 %s18, 1
      %s24 = ssub.s32 %s18, 2
      %s25 = sadd.s32 %s18, 1
      %s26 = ssub.s32 %s18, %s25
      %p27 = scmp.eq.s32.totalorder %s26, 0
      %s29 = sadd.s32 %s28, 1
      %s30 = scalar_select %p27, %s28, %s29
      %p33 = pneg %p27
      %p34 = scmp.eq.s32.totalorder %s18, 1
      %p35 = por %p33, %p34
      %p36 = scmp.ne.s32.totalorder %s28, %s31
      %p37 = scmp.eq.s32.totalorder %s18, 0
      %p38 = por %p36, %p37
      %p39 = scmp.ne.s32.totalorder %s28, %s31
      %p40 = scmp.eq.s32.totalorder %s23, 1
      %p41 = por %p39, %p40
      %p42 = scmp.ne.s32.totalorder %s31, %s32
      %p43 = scmp.eq.s32.totalorder %s23, 0
      %p44 = por %p42, %p43
      %p45 = scmp.ne.s32.totalorder %s31, %s32
      %p46 = scmp.eq.s32.totalorder %s24, 1
      %p47 = por %p45, %p46
      %p49 = scmp.ne.s32.totalorder %s32, %s48
      %p50 = scmp.eq.s32.totalorder %s24, 0
      %p51 = por %p49, %p50
      %s53 = sadd.s32 %s52, 1
      %p56 = scmp.eq.s32.totalorder %s18, 1
      %p57 = scmp.ne.s32.totalorder %s52, %s54
      %p58 = scmp.eq.s32.totalorder %s18, 0
      %p59 = por %p57, %p58
      %p60 = scmp.ne.s32.totalorder %s52, %s54
      %p61 = scmp.eq.s32.totalorder %s23, 1
      %p62 = por %p60, %p61
      %p63 = scmp.ne.s32.totalorder %s54, %s55
      %p64 = scmp.eq.s32.totalorder %s23, 0
      %p65 = por %p63, %p64
      %p66 = scmp.ne.s32.totalorder %s54, %s55
      %p67 = scmp.eq.s32.totalorder %s24, 1
      %p68 = por %p66, %p67
      %p70 = scmp.ne.s32.totalorder %s55, %s69
      %p71 = scmp.eq.s32.totalorder %s24, 0
      %p72 = por %p70, %p71
      %s74 = sadd.s32 %s73, 1
      %p77 = scmp.eq.s32.totalorder %s18, 1
      %p78 = scmp.ne.s32.totalorder %s73, %s75
      %p79 = scmp.eq.s32.totalorder %s18, 0
      %p80 = por %p78, %p79
      %p81 = scmp.ne.s32.totalorder %s73, %s75
      %p82 = scmp.eq.s32.totalorder %s23, 1
      %p83 = por %p81, %p82
      %p84 = scmp.ne.s32.totalorder %s75, %s76
      %p85 = scmp.eq.s32.totalorder %s23, 0
      %p86 = por %p84, %p85
      %p87 = scmp.ne.s32.totalorder %s75, %s76
      %p88 = scmp.eq.s32.totalorder %s24, 1
      %p89 = por %p87, %p88
      %p91 = scmp.ne.s32.totalorder %s76, %s90
      %p92 = scmp.eq.s32.totalorder %s24, 0
      %p93 = por %p91, %p92
      %s95 = sadd.s32 %s94, 1
      %p98 = scmp.eq.s32.totalorder %s18, 1
      %p99 = scmp.ne.s32.totalorder %s94, %s96
      %p100 = scmp.eq.s32.totalorder %s18, 0
      %p101 = por %p99, %p100
      %p102 = scmp.ne.s32.totalorder %s94, %s96
      %p103 = scmp.eq.s32.totalorder %s23, 1
      %p104 = por %p102, %p103
      %p105 = scmp.ne.s32.totalorder %s96, %s97
      %p106 = scmp.eq.s32.totalorder %s23, 0
      %p107 = por %p105, %p106
      %p108 = scmp.ne.s32.totalorder %s96, %s97
      %p109 = scmp.eq.s32.totalorder %s24, 1
      %p110 = por %p108, %p109
      %p112 = scmp.ne.s32.totalorder %s97, %s111
      %p113 = scmp.eq.s32.totalorder %s24, 0
      %p114 = por %p112, %p113
      %s116 = sadd.s32 %s115, 1
      %p119 = scmp.eq.s32.totalorder %s18, 1
      %p120 = scmp.ne.s32.totalorder %s115, %s117
      %p121 = scmp.eq.s32.totalorder %s18, 0
      %p122 = por %p120, %p121
      %p123 = scmp.ne.s32.totalorder %s115, %s117
      %p124 = scmp.eq.s32.totalorder %s23, 1
      %p125 = por %p123, %p124
      %p126 = scmp.ne.s32.totalorder %s117, %s118
      %p127 = scmp.eq.s32.totalorder %s23, 0
      %p128 = por %p126, %p127
      %p129 = scmp.ne.s32.totalorder %s117, %s118
      %p130 = scmp.eq.s32.totalorder %s24, 1
      %p131 = por %p129, %p130
      %p133 = scmp.ne.s32.totalorder %s118, %s132
      %p134 = scmp.eq.s32.totalorder %s24, 0
      %p135 = por %p133, %p134
      %s137 = sadd.s32 %s136, 1
      %p140 = scmp.eq.s32.totalorder %s18, 1
      %p141 = scmp.ne.s32.totalorder %s136, %s138
      %p142 = scmp.eq.s32.totalorder %s18, 0
      %p143 = por %p141, %p142
      %p144 = scmp.ne.s32.totalorder %s136, %s138
      %p145 = scmp.eq.s32.totalorder %s23, 1
      %p146 = por %p144, %p145
      %p147 = scmp.ne.s32.totalorder %s138, %s139
      %p148 = scmp.eq.s32.totalorder %s23, 0
      %p149 = por %p147, %p148
      %p150 = scmp.ne.s32.totalorder %s138, %s139
      %p151 = scmp.eq.s32.totalorder %s24, 1
      %p152 = por %p150, %p151
      %p154 = scmp.ne.s32.totalorder %s139, %s153
      %p155 = scmp.eq.s32.totalorder %s24, 0
      %p156 = por %p154, %p155
      %s158 = sadd.s32 %s157, 1
      %p161 = scmp.eq.s32.totalorder %s18, 1
      %p162 = scmp.ne.s32.totalorder %s157, %s159
      %p163 = scmp.eq.s32.totalorder %s18, 0
      %p164 = por %p162, %p163
      %p165 = scmp.ne.s32.totalorder %s157, %s159
      %p166 = scmp.eq.s32.totalorder %s23, 1
      %p167 = por %p165, %p166
      %p168 = scmp.ne.s32.totalorder %s159, %s160
      %p169 = scmp.eq.s32.totalorder %s23, 0
      %p170 = por %p168, %p169
      %p171 = scmp.ne.s32.totalorder %s159, %s160
      %p172 = scmp.eq.s32.totalorder %s24, 1
      %p173 = por %p171, %p172
      %p175 = scmp.ne.s32.totalorder %s160, %s174
      %p176 = scmp.eq.s32.totalorder %s24, 0
      %p177 = por %p175, %p176
      %s179 = sadd.s32 %s178, 1
      %p182 = scmp.eq.s32.totalorder %s18, 1
      %p183 = scmp.ne.s32.totalorder %s178, %s180
      %p184 = scmp.eq.s32.totalorder %s18, 0
      %p185 = por %p183, %p184
      %p186 = scmp.ne.s32.totalorder %s178, %s180
      %p187 = scmp.eq.s32.totalorder %s23, 1
      %p188 = por %p186, %p187
      %p189 = scmp.ne.s32.totalorder %s180, %s181
      %p190 = scmp.eq.s32.totalorder %s23, 0
      %p191 = por %p189, %p190
      %p192 = scmp.ne.s32.totalorder %s180, %s181
      %p193 = scmp.eq.s32.totalorder %s24, 1
      %p194 = por %p192, %p193
      %p196 = scmp.ne.s32.totalorder %s181, %s195
      %p197 = scmp.eq.s32.totalorder %s24, 0
      %p198 = por %p196, %p197
      %s200 = sadd.s32 %s199, 1
      %p203 = scmp.eq.s32.totalorder %s18, 1
      %p204 = scmp.ne.s32.totalorder %s199, %s201
      %p205 = scmp.eq.s32.totalorder %s18, 0
      %p206 = por %p204, %p205
      %p207 = scmp.ne.s32.totalorder %s199, %s201
      %p208 = scmp.eq.s32.totalorder %s23, 1
      %p209 = por %p207, %p208
      %p210 = scmp.ne.s32.totalorder %s201, %s202
      %p211 = scmp.eq.s32.totalorder %s23, 0
      %p212 = por %p210, %p211
      %p213 = scmp.ne.s32.totalorder %s201, %s202
      %p214 = scmp.eq.s32.totalorder %s24, 1
      %p215 = por %p213, %p214
      %p217 = scmp.ne.s32.totalorder %s202, %s216
      %p218 = scmp.eq.s32.totalorder %s24, 0
      %p219 = por %p217, %p218
      %s220 = ssub.s32 %s18, %s25
      %p221 = scmp.eq.s32.totalorder %s220, 0
      %s223 = sadd.s32 %s222, 1
      %s224 = scalar_select %p221, %s222, %s223
      %p227 = pneg %p221
      %p228 = scmp.eq.s32.totalorder %s18, 1
      %p229 = por %p227, %p228
      %p230 = scmp.ne.s32.totalorder %s222, %s225
      %p231 = scmp.eq.s32.totalorder %s18, 0
      %p232 = por %p230, %p231
      %p233 = scmp.ne.s32.totalorder %s222, %s225
      %p234 = scmp.eq.s32.totalorder %s23, 1
      %p235 = por %p233, %p234
      %p236 = scmp.ne.s32.totalorder %s225, %s226
      %p237 = scmp.eq.s32.totalorder %s23, 0
      %p238 = por %p236, %p237
      %p239 = scmp.ne.s32.totalorder %s225, %s226
      %p240 = scmp.eq.s32.totalorder %s24, 1
      %p241 = por %p239, %p240
      %p243 = scmp.ne.s32.totalorder %s226, %s242
      %p244 = scmp.eq.s32.totalorder %s24, 0
      %p245 = por %p243, %p244
      %p246 = scmp.le.s32.totalorder 1, %s18
      %p247 = scmp.lt.s32.totalorder %s18, 3
      %p248 = pnand %p246, %p247
      %p249 = pneg %p248
      // Predicated region
      $region9: #{tpu_custom_call.1} parent=5 // pred_check
        _
      $region10: #{tpu_custom_call.1} parent=5 // pred_check_branch
        %251 = sbr.rel (%p248) target = $region12
      $region11: #{tpu_custom_call.1} parent=5 // pred_region
        %s252 = ssub.s32 %s18, 1
        // Predicated region
        $region13: #{tpu_custom_call.1} parent=11 // pred_check
          %p253 = pneg %p65
        $region14: #{tpu_custom_call.1} parent=11 // pred_check_branch
          %255 = sbr.rel (%p253) target = $region16
        $region15: #{tpu_custom_call.1} parent=11 // pred_region
          _
        $region16: #{tpu_custom_call.1} parent=11 // pred_fallthru
          _
        // Predicated region
        $region17: #{tpu_custom_call.1} parent=11 // pred_check
          %p256 = pneg %p86
        $region18: #{tpu_custom_call.1} parent=11 // pred_check_branch
          %258 = sbr.rel (%p256) target = $region20
        $region19: #{tpu_custom_call.1} parent=11 // pred_region
          _
        $region20: #{tpu_custom_call.1} parent=11 // pred_fallthru
          _
        // Predicated region
        $region21: #{tpu_custom_call.1} parent=11 // pred_check
          %p259 = pneg %p107
        $region22: #{tpu_custom_call.1} parent=11 // pred_check_branch
          %261 = sbr.rel (%p259) target = $region24
        $region23: #{tpu_custom_call.1} parent=11 // pred_region
          _
        $region24: #{tpu_custom_call.1} parent=11 // pred_fallthru
          _
        // Predicated region
        $region25: #{tpu_custom_call.1} parent=11 // pred_check
          %p262 = pneg %p128
        $region26: #{tpu_custom_call.1} parent=11 // pred_check_branch
          %264 = sbr.rel (%p262) target = $region28
        $region27: #{tpu_custom_call.1} parent=11 // pred_region
          _
        $region28: #{tpu_custom_call.1} parent=11 // pred_fallthru
          _
        // Predicated region
        $region29: #{tpu_custom_call.1} parent=11 // pred_check
          %p265 = pneg %p149
        $region30: #{tpu_custom_call.1} parent=11 // pred_check_branch
          %267 = sbr.rel (%p265) target = $region32
        $region31: #{tpu_custom_call.1} parent=11 // pred_region
          _
        $region32: #{tpu_custom_call.1} parent=11 // pred_fallthru
          _
        // Predicated region
        $region33: #{tpu_custom_call.1} parent=11 // pred_check
          %p268 = pneg %p170
        $region34: #{tpu_custom_call.1} parent=11 // pred_check_branch
          %270 = sbr.rel (%p268) target = $region36
        $region35: #{tpu_custom_call.1} parent=11 // pred_region
          _
        $region36: #{tpu_custom_call.1} parent=11 // pred_fallthru
          _
        // Predicated region
        $region37: #{tpu_custom_call.1} parent=11 // pred_check
          %p271 = pneg %p191
        $region38: #{tpu_custom_call.1} parent=11 // pred_check_branch
          %273 = sbr.rel (%p271) target = $region40
        $region39: #{tpu_custom_call.1} parent=11 // pred_region
          _
        $region40: #{tpu_custom_call.1} parent=11 // pred_fallthru
          _
        // Predicated region
        $region41: #{tpu_custom_call.1} parent=11 // pred_check
          %p274 = pneg %p212
        $region42: #{tpu_custom_call.1} parent=11 // pred_check_branch
          %276 = sbr.rel (%p274) target = $region44
        $region43: #{tpu_custom_call.1} parent=11 // pred_region
          _
        $region44: #{tpu_custom_call.1} parent=11 // pred_fallthru
          _
      $region12: #{tpu_custom_call.1} parent=5 // pred_fallthru
        _
      %p277 = scmp.lt.s32.totalorder %s18, 2
      // Predicated region
      $region45: #{tpu_custom_call.1} parent=5 // pred_check
        %p278 = pneg %p277
      $region46: #{tpu_custom_call.1} parent=5 // pred_check_branch
        %280 = sbr.rel (%p278) target = $region48
      $region47: #{tpu_custom_call.1} parent=5 // pred_region
        // Predicated region
        $region49: #{tpu_custom_call.1} parent=47 // pred_check
          %p281 = pneg %p38
        $region50: #{tpu_custom_call.1} parent=47 // pred_check_branch
          %283 = sbr.rel (%p281) target = $region52
        $region51: #{tpu_custom_call.1} parent=47 // pred_region
          %p284 = scmp.lt.s32.totalorder %s18, 1
          %s285 = scalar_select %p284, %s18, 1
          %s286 = smul.addr %s285, 54
          %s287 = smul.addr %s286, 8
          %s288 = scalar_lea.vmem %s0, %s287
        $region52: #{tpu_custom_call.1} parent=47 // pred_fallthru
          _
      $region48: #{tpu_custom_call.1} parent=5 // pred_fallthru
        _
      %p289 = scmp.le.s32.totalorder 1, %s18
      %p290 = scmp.lt.s32.totalorder %s18, 3
      %p291 = pnand %p289, %p290
      %p292 = pneg %p291
      // Predicated region
      $region53: #{tpu_custom_call.1} parent=5 // pred_check
        _
      $region54: #{tpu_custom_call.1} parent=5 // pred_check_branch
        %294 = sbr.rel (%p291) target = $region56
      $region55: #{tpu_custom_call.1} parent=5 // pred_region
        %s295 = ssub.s32 %s18, 1
        %p296 = scmp.lt.s32.totalorder %s23, 1
        %s297 = scalar_select %p296, %s23, 1
        %s298 = smul.addr %s297, 54
        %s299 = smul.addr %s298, 8
        %s300 = scalar_lea.vmem %s0, %s299
        %p301 = pneg %p44
        %p302 = pneg %p41
        %p303 = pneg %p65
        %p304 = pneg %p62
        %p305 = pneg %p86
        %p306 = pneg %p83
        %p307 = pneg %p107
        %p308 = pneg %p104
        %p309 = pneg %p128
        %p310 = pneg %p125
        %p311 = pneg %p149
        %p312 = pneg %p146
        %p313 = pneg %p170
        %p314 = pneg %p167
        %p315 = pneg %p191
        %p316 = pneg %p188
        %p317 = pneg %p212
        %p318 = pneg %p209
        %p319 = pneg %p238
        %p320 = pneg %p235
        %s321 = sand.u32 %s225, 1
        %s322 = scalar_lea.sflag [#allocation4], %s321
        %s323 = sand.u32 %s225, 1
        %s324 = smul.addr %s323, 512
        %s325 = scalar_lea.vmem [#allocation3], %s324
        %p326 = scmp.lt.s32.totalorder %s23, 1
        %s327 = scalar_select %p326, %s23, 1
        %s328 = smul.addr %s327, 54
        %s329 = smul.addr %s328, 8
        %s330 = scalar_lea.vmem %s0, %s329
        %v331 = vld [vmem:[%s330] sm:$0xff]
        %v332 = vld [vmem:[%s330 + $0x8] sm:$0xff]
        %v333 = vld [vmem:[%s330 + $0x18] sm:$0xff]
        %v334 = vld [vmem:[%s330 + $0x20] sm:$0xff]
        %v335 = vld [vmem:[%s330 + $0x30] sm:$0xff]
        %v336 = vld [vmem:[%s330 + $0x38] sm:$0xff]
        %v337 = vld [vmem:[%s330 + $0x48] sm:$0xff]
        %v338 = vld [vmem:[%s330 + $0x50] sm:$0xff]
        %v339 = vld [vmem:[%s330 + $0x60] sm:$0xff]
        %v340 = vld [vmem:[%s330 + $0x68] sm:$0xff]
        %v341 = vld [vmem:[%s330 + $0x78] sm:$0xff]
        %v342 = vld [vmem:[%s330 + $0x80] sm:$0xff]
        %v343 = vld [vmem:[%s330 + $0x90] sm:$0xff]
        %v344 = vld [vmem:[%s330 + $0x98] sm:$0xff]
        %v345 = vld [vmem:[%s330 + $0xa8] sm:$0xff]
        %v346 = vld [vmem:[%s330 + $0xb0] sm:$0xff]
        %v347 = vld [vmem:[%s330 + $0xc0] sm:$0xff]
        %v348 = vld [vmem:[%s330 + $0xc8] sm:$0xff]
        %v349 = vld [vmem:[%s330 + $0xd8] sm:$0xff]
        %v350 = vld [vmem:[%s330 + $0xe0] sm:$0xff]
        %v351 = vld [vmem:[%s330 + $0xf0] sm:$0xff]
        %v352 = vld [vmem:[%s330 + $0xf8] sm:$0xff]
        %v353 = vld [vmem:[%s330 + $0x108] sm:$0xff]
        %v354 = vld [vmem:[%s330 + $0x110] sm:$0xff]
        %v355 = vld [vmem:[%s330 + $0x120] sm:$0xff]
        %v356 = vld [vmem:[%s330 + $0x128] sm:$0xff]
        %v357 = vld [vmem:[%s330 + $0x138] sm:$0xff]
        %v358 = vld [vmem:[%s330 + $0x140] sm:$0xff]
        %v359 = vld [vmem:[%s330 + $0x150] sm:$0xff]
        %v360 = vld [vmem:[%s330 + $0x158] sm:$0xff]
        %v361 = vld [vmem:[%s330 + $0x168] sm:$0xff]
        %v362 = vld [vmem:[%s330 + $0x170] sm:$0xff]
        %v363 = vld [vmem:[%s1] sm:$0xf]
        %v364 = vld [vmem:[%s330 + $0x1] sm:$0xff]
        %v365 = vld [vmem:[%s330 + $0x9] sm:$0xff]
        %v366 = vld [vmem:[%s330 + $0x19] sm:$0xff]
        %v367 = vld [vmem:[%s330 + $0x21] sm:$0xff]
        %v368 = vld [vmem:[%s330 + $0x31] sm:$0xff]
        %v369 = vld [vmem:[%s330 + $0x39] sm:$0xff]
        %v370 = vld [vmem:[%s330 + $0x49] sm:$0xff]
        %v371 = vld [vmem:[%s330 + $0x51] sm:$0xff]
        %v372 = vld [vmem:[%s330 + $0x61] sm:$0xff]
        %v373 = vld [vmem:[%s330 + $0x69] sm:$0xff]
        %v374 = vld [vmem:[%s330 + $0x79] sm:$0xff]
        %v375 = vld [vmem:[%s330 + $0x81] sm:$0xff]
        %v376 = vld [vmem:[%s330 + $0x91] sm:$0xff]
        %v377 = vld [vmem:[%s330 + $0x99] sm:$0xff]
        %v378 = vld [vmem:[%s330 + $0xa9] sm:$0xff]
        %v379 = vld [vmem:[%s330 + $0xb1] sm:$0xff]
        %v380 = vld [vmem:[%s330 + $0xc1] sm:$0xff]
        %v381 = vld [vmem:[%s330 + $0xc9] sm:$0xff]
        %v382 = vld [vmem:[%s330 + $0xd9] sm:$0xff]
        %v383 = vld [vmem:[%s330 + $0xe1] sm:$0xff]
        %v384 = vld [vmem:[%s330 + $0xf1] sm:$0xff]
        %v385 = vld [vmem:[%s330 + $0xf9] sm:$0xff]
        %v386 = vld [vmem:[%s330 + $0x109] sm:$0xff]
        %v387 = vld [vmem:[%s330 + $0x111] sm:$0xff]
        %v388 = vld [vmem:[%s330 + $0x121] sm:$0xff]
        %v389 = vld [vmem:[%s330 + $0x129] sm:$0xff]
        %v390 = vld [vmem:[%s330 + $0x139] sm:$0xff]
        %v391 = vld [vmem:[%s330 + $0x141] sm:$0xff]
        %v392 = vld [vmem:[%s330 + $0x151] sm:$0xff]
        %v393 = vld [vmem:[%s330 + $0x159] sm:$0xff]
        %v394 = vld [vmem:[%s330 + $0x169] sm:$0xff]
        %v395 = vld [vmem:[%s330 + $0x171] sm:$0xff]
        %s396 = scalar_lea.vmem %s1, 4
        %v397 = vld [vmem:[%s396] sm:$0xf]
        %vm398 = vcmask 31744
        %v400 = vsel %vm398, %v364, 0
        %v403 = vsel %vm398, %v365, 0
        %v406 = vsel %vm398, %v366, 0
        %v409 = vsel %vm398, %v367, 0
        %v412 = vsel %vm398, %v368, 0
        %v415 = vsel %vm398, %v369, 0
        %v418 = vsel %vm398, %v370, 0
        %v421 = vsel %vm398, %v371, 0
        %v424 = vsel %vm398, %v372, 0
        %v427 = vsel %vm398, %v373, 0
        %v430 = vsel %vm398, %v374, 0
        %v433 = vsel %vm398, %v375, 0
        %v436 = vsel %vm398, %v376, 0
        %v439 = vsel %vm398, %v377, 0
        %v442 = vsel %vm398, %v378, 0
        %v445 = vsel %vm398, %v379, 0
        %v448 = vsel %vm398, %v380, 0
        %v451 = vsel %vm398, %v381, 0
        %v454 = vsel %vm398, %v382, 0
        %v457 = vsel %vm398, %v383, 0
        %v460 = vsel %vm398, %v384, 0
        %v463 = vsel %vm398, %v385, 0
        %v466 = vsel %vm398, %v386, 0
        %v469 = vsel %vm398, %v387, 0
        %v472 = vsel %vm398, %v388, 0
        %v475 = vsel %vm398, %v389, 0
        %v478 = vsel %vm398, %v390, 0
        %v481 = vsel %vm398, %v391, 0
        %v484 = vsel %vm398, %v392, 0
        %v487 = vsel %vm398, %v393, 0
        %v490 = vsel %vm398, %v394, 0
        %v493 = vsel %vm398, %v395, 0
        %vm495 = vcmask 1043456
        %v497 = vsel %vm495, %v397, 0
        %499 = vmatprep.subr.mxu0 0.0
        %500 = vmatpush1.msra.mxu0 0.0
        %501 = vmatprep.subr.mxu0 0.0
        %502 = vmatpush1.msra.mxu0 0.0
        %503 = vmatprep.subr.mxu0 0.0
        %504 = vmatpush1.msra.mxu0 0.0
        %505 = vmatprep.subr.mxu0 0.0
        %506 = vmatpush1.msra.mxu0 0.0
        %507 = vmatprep.subr.mxu0 0.0
        %508 = vmatpush1.msra.mxu0 0.0
        %509 = vmatprep.subr.mxu0 0.0
        %510 = vmatpush1.msra.mxu0 0.0
        %511 = vmatprep.subr.mxu0 0.0
        %512 = vmatpush1.msra.mxu0 0.0
        %513 = vmatprep.subr.mxu0 0.0
        %514 = vmatpush1.msra.mxu0 0.0
        %515 = vmatprep.subr.mxu0 0.0
        %516 = vmatpush1.msra.mxu0 0.0
        %517 = vmatprep.subr.mxu0 0.0
        %518 = vmatpush1.msra.mxu0 0.0
        %519 = vmatprep.subr.mxu0 0.0
        %520 = vmatpush1.msra.mxu0 0.0
        %521 = vmatprep.subr.mxu0 0.0
        %522 = vmatpush1.msra.mxu0 0.0
        %523 = vmatprep.subr.mxu0 0.0
        %524 = vmatpush1.msra.mxu0 0.0
        %525 = vmatprep.subr.mxu0 0.0
        %526 = vmatpush1.msra.mxu0 0.0
        %527 = vmatprep.subr.mxu0 0.0
        %528 = vmatpush1.msra.mxu0 0.0
        %529 = vmatprep.subr.mxu0 0.0
        %530 = vmatpush1.msra.mxu0 %v497
        %531 = vmatprep.subr.mxu0 0.0
        %532 = vmatpush2.msra.mxu0 0.0
        %533 = vmatprep.subr.mxu0 0.0
        %534 = vmatpush2.msra.mxu0 0.0
        %535 = vmatprep.subr.mxu0 0.0
        %536 = vmatpush2.msra.mxu0 0.0
        %537 = vmatprep.subr.mxu0 0.0
        %538 = vmatpush2.msra.mxu0 0.0
        %539 = vmatprep.subr.mxu0 0.0
        %540 = vmatpush2.msra.mxu0 0.0
        %541 = vmatprep.subr.mxu0 0.0
        %542 = vmatpush2.msra.mxu0 0.0
        %543 = vmatprep.subr.mxu0 0.0
        %544 = vmatpush2.msra.mxu0 0.0
        %545 = vmatprep.subr.mxu0 0.0
        %546 = vmatpush2.msra.mxu0 0.0
        %547 = vmatprep.subr.mxu0 0.0
        %548 = vmatpush2.msra.mxu0 0.0
        %549 = vmatprep.subr.mxu0 0.0
        %550 = vmatpush2.msra.mxu0 0.0
        %551 = vmatprep.subr.mxu0 0.0
        %552 = vmatpush2.msra.mxu0 0.0
        %553 = vmatprep.subr.mxu0 0.0
        %554 = vmatpush2.msra.mxu0 0.0
        %555 = vmatprep.subr.mxu0 0.0
        %556 = vmatpush2.msra.mxu0 0.0
        %557 = vmatprep.subr.mxu0 0.0
        %558 = vmatpush2.msra.mxu0 0.0
        %559 = vmatprep.subr.mxu0 0.0
        %560 = vmatpush2.msra.mxu0 0.0
        %561 = vmatprep.subr.mxu0 0.0
        %562 = vmatpush2.msra.mxu0 0.0
        %563 = vmatprep.mubr.f32.mxu0 0.0
        %564 = vmatmul.mubr.f32.gmra.mxu0 %v400
        %v565 = vpop.f32.mrf.mxu0
        %v566 = vadd.f32 0.0, %v565
        %v567 = vpop.f32.mrf.mxu0
        %568 = vmatprep.mubr.f32.mxu0 0.0
        %569 = vmatmul.mubr.f32.gmra.mxu0 %v403
        %v570 = vpop.f32.mrf.mxu0
        %v571 = vadd.f32 0.0, %v570
        %v572 = vpop.f32.mrf.mxu0
        %573 = vmatprep.mubr.f32.mxu0 0.0
        %574 = vmatmul.mubr.f32.gmra.mxu0 %v406
        %v575 = vpop.f32.mrf.mxu0
        %v576 = vadd.f32 0.0, %v575
        %v577 = vpop.f32.mrf.mxu0
        %578 = vmatprep.mubr.f32.mxu0 0.0
        %579 = vmatmul.mubr.f32.gmra.mxu0 %v409
        %v580 = vpop.f32.mrf.mxu0
        %v581 = vadd.f32 0.0, %v580
        %v582 = vpop.f32.mrf.mxu0
        %583 = vmatprep.mubr.f32.mxu0 0.0
        %584 = vmatmul.mubr.f32.gmra.mxu0 %v412
        %v585 = vpop.f32.mrf.mxu0
        %v586 = vadd.f32 0.0, %v585
        %v587 = vpop.f32.mrf.mxu0
        %588 = vmatprep.mubr.f32.mxu0 0.0
        %589 = vmatmul.mubr.f32.gmra.mxu0 %v415
        %v590 = vpop.f32.mrf.mxu0
        %v591 = vadd.f32 0.0, %v590
        %v592 = vpop.f32.mrf.mxu0
        %593 = vmatprep.mubr.f32.mxu0 0.0
        %594 = vmatmul.mubr.f32.gmra.mxu0 %v418
        %v595 = vpop.f32.mrf.mxu0
        %v596 = vadd.f32 0.0, %v595
        %v597 = vpop.f32.mrf.mxu0
        %598 = vmatprep.mubr.f32.mxu0 0.0
        %599 = vmatmul.mubr.f32.gmra.mxu0 %v421
        %v600 = vpop.f32.mrf.mxu0
        %v601 = vadd.f32 0.0, %v600
        %v602 = vpop.f32.mrf.mxu0
        %603 = vmatprep.mubr.f32.mxu0 0.0
        %604 = vmatmul.mubr.f32.gmra.mxu0 %v424
        %v605 = vpop.f32.mrf.mxu0
        %v606 = vadd.f32 0.0, %v605
        %v607 = vpop.f32.mrf.mxu0
        %608 = vmatprep.mubr.f32.mxu0 0.0
        %609 = vmatmul.mubr.f32.gmra.mxu0 %v427
        %v610 = vpop.f32.mrf.mxu0
        %v611 = vadd.f32 0.0, %v610
        %v612 = vpop.f32.mrf.mxu0
        %613 = vmatprep.mubr.f32.mxu0 0.0
        %614 = vmatmul.mubr.f32.gmra.mxu0 %v430
        %v615 = vpop.f32.mrf.mxu0
        %v616 = vadd.f32 0.0, %v615
        %v617 = vpop.f32.mrf.mxu0
        %618 = vmatprep.mubr.f32.mxu0 0.0
        %619 = vmatmul.mubr.f32.gmra.mxu0 %v433
        %v620 = vpop.f32.mrf.mxu0
        %v621 = vadd.f32 0.0, %v620
        %v622 = vpop.f32.mrf.mxu0
        %623 = vmatprep.mubr.f32.mxu0 0.0
        %624 = vmatmul.mubr.f32.gmra.mxu0 %v436
        %v625 = vpop.f32.mrf.mxu0
        %v626 = vadd.f32 0.0, %v625
        %v627 = vpop.f32.mrf.mxu0
        %628 = vmatprep.mubr.f32.mxu0 0.0
        %629 = vmatmul.mubr.f32.gmra.mxu0 %v439
        %v630 = vpop.f32.mrf.mxu0
        %v631 = vadd.f32 0.0, %v630
        %v632 = vpop.f32.mrf.mxu0
        %633 = vmatprep.mubr.f32.mxu0 0.0
        %634 = vmatmul.mubr.f32.gmra.mxu0 %v442
        %v635 = vpop.f32.mrf.mxu0
        %v636 = vadd.f32 0.0, %v635
        %v637 = vpop.f32.mrf.mxu0
        %638 = vmatprep.mubr.f32.mxu0 0.0
        %639 = vmatmul.mubr.f32.gmra.mxu0 %v445
        %v640 = vpop.f32.mrf.mxu0
        %v641 = vadd.f32 0.0, %v640
        %v642 = vpop.f32.mrf.mxu0
        %643 = vmatprep.mubr.f32.mxu0 0.0
        %644 = vmatmul.mubr.f32.gmra.mxu0 %v448
        %v645 = vpop.f32.mrf.mxu0
        %v646 = vadd.f32 0.0, %v645
        %v647 = vpop.f32.mrf.mxu0
        %648 = vmatprep.mubr.f32.mxu0 0.0
        %649 = vmatmul.mubr.f32.gmra.mxu0 %v451
        %v650 = vpop.f32.mrf.mxu0
        %v651 = vadd.f32 0.0, %v650
        %v652 = vpop.f32.mrf.mxu0
        %653 = vmatprep.mubr.f32.mxu0 0.0
        %654 = vmatmul.mubr.f32.gmra.mxu0 %v454
        %v655 = vpop.f32.mrf.mxu0
        %v656 = vadd.f32 0.0, %v655
        %v657 = vpop.f32.mrf.mxu0
        %658 = vmatprep.mubr.f32.mxu0 0.0
        %659 = vmatmul.mubr.f32.gmra.mxu0 %v457
        %v660 = vpop.f32.mrf.mxu0
        %v661 = vadd.f32 0.0, %v660
        %v662 = vpop.f32.mrf.mxu0
        %663 = vmatprep.mubr.f32.mxu0 0.0
        %664 = vmatmul.mubr.f32.gmra.mxu0 %v460
        %v665 = vpop.f32.mrf.mxu0
        %v666 = vadd.f32 0.0, %v665
        %v667 = vpop.f32.mrf.mxu0
        %668 = vmatprep.mubr.f32.mxu0 0.0
        %669 = vmatmul.mubr.f32.gmra.mxu0 %v463
        %v670 = vpop.f32.mrf.mxu0
        %v671 = vadd.f32 0.0, %v670
        %v672 = vpop.f32.mrf.mxu0
        %673 = vmatprep.mubr.f32.mxu0 0.0
        %674 = vmatmul.mubr.f32.gmra.mxu0 %v466
        %v675 = vpop.f32.mrf.mxu0
        %v676 = vadd.f32 0.0, %v675
        %v677 = vpop.f32.mrf.mxu0
        %678 = vmatprep.mubr.f32.mxu0 0.0
        %679 = vmatmul.mubr.f32.gmra.mxu0 %v469
        %v680 = vpop.f32.mrf.mxu0
        %v681 = vadd.f32 0.0, %v680
        %v682 = vpop.f32.mrf.mxu0
        %683 = vmatprep.mubr.f32.mxu0 0.0
        %684 = vmatmul.mubr.f32.gmra.mxu0 %v472
        %v685 = vpop.f32.mrf.mxu0
        %v686 = vadd.f32 0.0, %v685
        %v687 = vpop.f32.mrf.mxu0
        %688 = vmatprep.mubr.f32.mxu0 0.0
        %689 = vmatmul.mubr.f32.gmra.mxu0 %v475
        %v690 = vpop.f32.mrf.mxu0
        %v691 = vadd.f32 0.0, %v690
        %v692 = vpop.f32.mrf.mxu0
        %693 = vmatprep.mubr.f32.mxu0 0.0
        %694 = vmatmul.mubr.f32.gmra.mxu0 %v478
        %v695 = vpop.f32.mrf.mxu0
        %v696 = vadd.f32 0.0, %v695
        %v697 = vpop.f32.mrf.mxu0
        %698 = vmatprep.mubr.f32.mxu0 0.0
        %699 = vmatmul.mubr.f32.gmra.mxu0 %v481
        %v700 = vpop.f32.mrf.mxu0
        %v701 = vadd.f32 0.0, %v700
        %v702 = vpop.f32.mrf.mxu0
        %703 = vmatprep.mubr.f32.mxu0 0.0
        %704 = vmatmul.mubr.f32.gmra.mxu0 %v484
        %v705 = vpop.f32.mrf.mxu0
        %v706 = vadd.f32 0.0, %v705
        %v707 = vpop.f32.mrf.mxu0
        %708 = vmatprep.mubr.f32.mxu0 0.0
        %709 = vmatmul.mubr.f32.gmra.mxu0 %v487
        %v710 = vpop.f32.mrf.mxu0
        %v711 = vadd.f32 0.0, %v710
        %v712 = vpop.f32.mrf.mxu0
        %713 = vmatprep.mubr.f32.mxu0 0.0
        %714 = vmatmul.mubr.f32.gmra.mxu0 %v490
        %v715 = vpop.f32.mrf.mxu0
        %v716 = vadd.f32 0.0, %v715
        %v717 = vpop.f32.mrf.mxu0
        %718 = vmatprep.mubr.f32.mxu0 0.0
        %719 = vmatmul.mubr.f32.gmra.mxu0 %v493
        %v720 = vpop.f32.mrf.mxu0
        %v721 = vadd.f32 0.0, %v720
        %v722 = vpop.f32.mrf.mxu0
        %723 = vdwg.mxu0
        %v725 = vsel %vm398, %v331, 0
        %v728 = vsel %vm398, %v332, 0
        %v731 = vsel %vm398, %v333, 0
        %v734 = vsel %vm398, %v334, 0
        %v737 = vsel %vm398, %v335, 0
        %v740 = vsel %vm398, %v336, 0
        %v743 = vsel %vm398, %v337, 0
        %v746 = vsel %vm398, %v338, 0
        %v749 = vsel %vm398, %v339, 0
        %v752 = vsel %vm398, %v340, 0
        %v755 = vsel %vm398, %v341, 0
        %v758 = vsel %vm398, %v342, 0
        %v761 = vsel %vm398, %v343, 0
        %v764 = vsel %vm398, %v344, 0
        %v767 = vsel %vm398, %v345, 0
        %v770 = vsel %vm398, %v346, 0
        %v773 = vsel %vm398, %v347, 0
        %v776 = vsel %vm398, %v348, 0
        %v779 = vsel %vm398, %v349, 0
        %v782 = vsel %vm398, %v350, 0
        %v785 = vsel %vm398, %v351, 0
        %v788 = vsel %vm398, %v352, 0
        %v791 = vsel %vm398, %v353, 0
        %v794 = vsel %vm398, %v354, 0
        %v797 = vsel %vm398, %v355, 0
        %v800 = vsel %vm398, %v356, 0
        %v803 = vsel %vm398, %v357, 0
        %v806 = vsel %vm398, %v358, 0
        %v809 = vsel %vm398, %v359, 0
        %v812 = vsel %vm398, %v360, 0
        %v815 = vsel %vm398, %v361, 0
        %v818 = vsel %vm398, %v362, 0
        %v821 = vsel %vm495, %v363, 0
        %823 = vmatprep.subr.mxu0 0.0
        %824 = vmatpush1.msra.mxu0 0.0
        %825 = vmatprep.subr.mxu0 0.0
        %826 = vmatpush1.msra.mxu0 0.0
        %827 = vmatprep.subr.mxu0 0.0
        %828 = vmatpush1.msra.mxu0 0.0
        %829 = vmatprep.subr.mxu0 0.0
        %830 = vmatpush1.msra.mxu0 0.0
        %831 = vmatprep.subr.mxu0 0.0
        %832 = vmatpush1.msra.mxu0 0.0
        %833 = vmatprep.subr.mxu0 0.0
        %834 = vmatpush1.msra.mxu0 0.0
        %835 = vmatprep.subr.mxu0 0.0
        %836 = vmatpush1.msra.mxu0 0.0
        %837 = vmatprep.subr.mxu0 0.0
        %838 = vmatpush1.msra.mxu0 0.0
        %839 = vmatprep.subr.mxu0 0.0
        %840 = vmatpush1.msra.mxu0 0.0
        %841 = vmatprep.subr.mxu0 0.0
        %842 = vmatpush1.msra.mxu0 0.0
        %843 = vmatprep.subr.mxu0 0.0
        %844 = vmatpush1.msra.mxu0 0.0
        %845 = vmatprep.subr.mxu0 0.0
        %846 = vmatpush1.msra.mxu0 0.0
        %847 = vmatprep.subr.mxu0 0.0
        %848 = vmatpush1.msra.mxu0 0.0
        %849 = vmatprep.subr.mxu0 0.0
        %850 = vmatpush1.msra.mxu0 0.0
        %851 = vmatprep.subr.mxu0 0.0
        %852 = vmatpush1.msra.mxu0 0.0
        %853 = vmatprep.subr.mxu0 0.0
        %854 = vmatpush1.msra.mxu0 %v821
        %855 = vmatprep.subr.mxu0 0.0
        %856 = vmatpush2.msra.mxu0 0.0
        %857 = vmatprep.subr.mxu0 0.0
        %858 = vmatpush2.msra.mxu0 0.0
        %859 = vmatprep.subr.mxu0 0.0
        %860 = vmatpush2.msra.mxu0 0.0
        %861 = vmatprep.subr.mxu0 0.0
        %862 = vmatpush2.msra.mxu0 0.0
        %863 = vmatprep.subr.mxu0 0.0
        %864 = vmatpush2.msra.mxu0 0.0
        %865 = vmatprep.subr.mxu0 0.0
        %866 = vmatpush2.msra.mxu0 0.0
        %867 = vmatprep.subr.mxu0 0.0
        %868 = vmatpush2.msra.mxu0 0.0
        %869 = vmatprep.subr.mxu0 0.0
        %870 = vmatpush2.msra.mxu0 0.0
        %871 = vmatprep.subr.mxu0 0.0
        %872 = vmatpush2.msra.mxu0 0.0
        %873 = vmatprep.subr.mxu0 0.0
        %874 = vmatpush2.msra.mxu0 0.0
        %875 = vmatprep.subr.mxu0 0.0
        %876 = vmatpush2.msra.mxu0 0.0
        %877 = vmatprep.subr.mxu0 0.0
        %878 = vmatpush2.msra.mxu0 0.0
        %879 = vmatprep.subr.mxu0 0.0
        %880 = vmatpush2.msra.mxu0 0.0
        %881 = vmatprep.subr.mxu0 0.0
        %882 = vmatpush2.msra.mxu0 0.0
        %883 = vmatprep.subr.mxu0 0.0
        %884 = vmatpush2.msra.mxu0 0.0
        %885 = vmatprep.subr.mxu0 0.0
        %886 = vmatpush2.msra.mxu0 0.0
        %887 = vmatprep.mubr.f32.mxu0 0.0
        %888 = vmatmul.mubr.f32.gmra.mxu0 %v725
        %v889 = vpop.f32.mrf.mxu0
        %v890 = vadd.f32 %v566, %v889
        %v891 = vpop.f32.mrf.mxu0
        %892 = vmatprep.mubr.f32.mxu0 0.0
        %893 = vmatmul.mubr.f32.gmra.mxu0 %v728
        %v894 = vpop.f32.mrf.mxu0
        %v895 = vadd.f32 %v571, %v894
        %v896 = vpop.f32.mrf.mxu0
        %897 = vmatprep.mubr.f32.mxu0 0.0
        %898 = vmatmul.mubr.f32.gmra.mxu0 %v731
        %v899 = vpop.f32.mrf.mxu0
        %v900 = vadd.f32 %v576, %v899
        %v901 = vpop.f32.mrf.mxu0
        %902 = vmatprep.mubr.f32.mxu0 0.0
        %903 = vmatmul.mubr.f32.gmra.mxu0 %v734
        %v904 = vpop.f32.mrf.mxu0
        %v905 = vadd.f32 %v581, %v904
        %v906 = vpop.f32.mrf.mxu0
        %907 = vmatprep.mubr.f32.mxu0 0.0
        %908 = vmatmul.mubr.f32.gmra.mxu0 %v737
        %v909 = vpop.f32.mrf.mxu0
        %v910 = vadd.f32 %v586, %v909
        %v911 = vpop.f32.mrf.mxu0
        %912 = vmatprep.mubr.f32.mxu0 0.0
        %913 = vmatmul.mubr.f32.gmra.mxu0 %v740
        %v914 = vpop.f32.mrf.mxu0
        %v915 = vadd.f32 %v591, %v914
        %v916 = vpop.f32.mrf.mxu0
        %917 = vmatprep.mubr.f32.mxu0 0.0
        %918 = vmatmul.mubr.f32.gmra.mxu0 %v743
        %v919 = vpop.f32.mrf.mxu0
        %v920 = vadd.f32 %v596, %v919
        %v921 = vpop.f32.mrf.mxu0
        %922 = vmatprep.mubr.f32.mxu0 0.0
        %923 = vmatmul.mubr.f32.gmra.mxu0 %v746
        %v924 = vpop.f32.mrf.mxu0
        %v925 = vadd.f32 %v601, %v924
        %v926 = vpop.f32.mrf.mxu0
        %927 = vmatprep.mubr.f32.mxu0 0.0
        %928 = vmatmul.mubr.f32.gmra.mxu0 %v749
        %v929 = vpop.f32.mrf.mxu0
        %v930 = vadd.f32 %v606, %v929
        %v931 = vpop.f32.mrf.mxu0
        %932 = vmatprep.mubr.f32.mxu0 0.0
        %933 = vmatmul.mubr.f32.gmra.mxu0 %v752
        %v934 = vpop.f32.mrf.mxu0
        %v935 = vadd.f32 %v611, %v934
        %v936 = vpop.f32.mrf.mxu0
        %937 = vmatprep.mubr.f32.mxu0 0.0
        %938 = vmatmul.mubr.f32.gmra.mxu0 %v755
        %v939 = vpop.f32.mrf.mxu0
        %v940 = vadd.f32 %v616, %v939
        %v941 = vpop.f32.mrf.mxu0
        %942 = vmatprep.mubr.f32.mxu0 0.0
        %943 = vmatmul.mubr.f32.gmra.mxu0 %v758
        %v944 = vpop.f32.mrf.mxu0
        %v945 = vadd.f32 %v621, %v944
        %v946 = vpop.f32.mrf.mxu0
        %947 = vmatprep.mubr.f32.mxu0 0.0
        %948 = vmatmul.mubr.f32.gmra.mxu0 %v761
        %v949 = vpop.f32.mrf.mxu0
        %v950 = vadd.f32 %v626, %v949
        %v951 = vpop.f32.mrf.mxu0
        %952 = vmatprep.mubr.f32.mxu0 0.0
        %953 = vmatmul.mubr.f32.gmra.mxu0 %v764
        %v954 = vpop.f32.mrf.mxu0
        %v955 = vadd.f32 %v631, %v954
        %v956 = vpop.f32.mrf.mxu0
        %957 = vmatprep.mubr.f32.mxu0 0.0
        %958 = vmatmul.mubr.f32.gmra.mxu0 %v767
        %v959 = vpop.f32.mrf.mxu0
        %v960 = vadd.f32 %v636, %v959
        %v961 = vpop.f32.mrf.mxu0
        %962 = vmatprep.mubr.f32.mxu0 0.0
        %963 = vmatmul.mubr.f32.gmra.mxu0 %v770
        %v964 = vpop.f32.mrf.mxu0
        %v965 = vadd.f32 %v641, %v964
        %v966 = vpop.f32.mrf.mxu0
        %967 = vmatprep.mubr.f32.mxu0 0.0
        %968 = vmatmul.mubr.f32.gmra.mxu0 %v773
        %v969 = vpop.f32.mrf.mxu0
        %v970 = vadd.f32 %v646, %v969
        %v971 = vpop.f32.mrf.mxu0
        %972 = vmatprep.mubr.f32.mxu0 0.0
        %973 = vmatmul.mubr.f32.gmra.mxu0 %v776
        %v974 = vpop.f32.mrf.mxu0
        %v975 = vadd.f32 %v651, %v974
        %v976 = vpop.f32.mrf.mxu0
        %977 = vmatprep.mubr.f32.mxu0 0.0
        %978 = vmatmul.mubr.f32.gmra.mxu0 %v779
        %v979 = vpop.f32.mrf.mxu0
        %v980 = vadd.f32 %v656, %v979
        %v981 = vpop.f32.mrf.mxu0
        %982 = vmatprep.mubr.f32.mxu0 0.0
        %983 = vmatmul.mubr.f32.gmra.mxu0 %v782
        %v984 = vpop.f32.mrf.mxu0
        %v985 = vadd.f32 %v661, %v984
        %v986 = vpop.f32.mrf.mxu0
        %987 = vmatprep.mubr.f32.mxu0 0.0
        %988 = vmatmul.mubr.f32.gmra.mxu0 %v785
        %v989 = vpop.f32.mrf.mxu0
        %v990 = vadd.f32 %v666, %v989
        %v991 = vpop.f32.mrf.mxu0
        %992 = vmatprep.mubr.f32.mxu0 0.0
        %993 = vmatmul.mubr.f32.gmra.mxu0 %v788
        %v994 = vpop.f32.mrf.mxu0
        %v995 = vadd.f32 %v671, %v994
        %v996 = vpop.f32.mrf.mxu0
        %997 = vmatprep.mubr.f32.mxu0 0.0
        %998 = vmatmul.mubr.f32.gmra.mxu0 %v791
        %v999 = vpop.f32.mrf.mxu0
        %v1000 = vadd.f32 %v676, %v999
        %v1001 = vpop.f32.mrf.mxu0
        %1002 = vmatprep.mubr.f32.mxu0 0.0
        %1003 = vmatmul.mubr.f32.gmra.mxu0 %v794
        %v1004 = vpop.f32.mrf.mxu0
        %v1005 = vadd.f32 %v681, %v1004
        %v1006 = vpop.f32.mrf.mxu0
        %1007 = vmatprep.mubr.f32.mxu0 0.0
        %1008 = vmatmul.mubr.f32.gmra.mxu0 %v797
        %v1009 = vpop.f32.mrf.mxu0
        %v1010 = vadd.f32 %v686, %v1009
        %v1011 = vpop.f32.mrf.mxu0
        %1012 = vmatprep.mubr.f32.mxu0 0.0
        %1013 = vmatmul.mubr.f32.gmra.mxu0 %v800
        %v1014 = vpop.f32.mrf.mxu0
        %v1015 = vadd.f32 %v691, %v1014
        %v1016 = vpop.f32.mrf.mxu0
        %1017 = vmatprep.mubr.f32.mxu0 0.0
        %1018 = vmatmul.mubr.f32.gmra.mxu0 %v803
        %v1019 = vpop.f32.mrf.mxu0
        %v1020 = vadd.f32 %v696, %v1019
        %v1021 = vpop.f32.mrf.mxu0
        %1022 = vmatprep.mubr.f32.mxu0 0.0
        %1023 = vmatmul.mubr.f32.gmra.mxu0 %v806
        %v1024 = vpop.f32.mrf.mxu0
        %v1025 = vadd.f32 %v701, %v1024
        %v1026 = vpop.f32.mrf.mxu0
        %1027 = vmatprep.mubr.f32.mxu0 0.0
        %1028 = vmatmul.mubr.f32.gmra.mxu0 %v809
        %v1029 = vpop.f32.mrf.mxu0
        %v1030 = vadd.f32 %v706, %v1029
        %v1031 = vpop.f32.mrf.mxu0
        %1032 = vmatprep.mubr.f32.mxu0 0.0
        %1033 = vmatmul.mubr.f32.gmra.mxu0 %v812
        %v1034 = vpop.f32.mrf.mxu0
        %v1035 = vadd.f32 %v711, %v1034
        %v1036 = vpop.f32.mrf.mxu0
        %1037 = vmatprep.mubr.f32.mxu0 0.0
        %1038 = vmatmul.mubr.f32.gmra.mxu0 %v815
        %v1039 = vpop.f32.mrf.mxu0
        %v1040 = vadd.f32 %v716, %v1039
        %v1041 = vpop.f32.mrf.mxu0
        %1042 = vmatprep.mubr.f32.mxu0 0.0
        %1043 = vmatmul.mubr.f32.gmra.mxu0 %v818
        %v1044 = vpop.f32.mrf.mxu0
        %v1045 = vadd.f32 %v721, %v1044
        %v1046 = vpop.f32.mrf.mxu0
        %1047 = vdwg.mxu0
        %v1048 = vld [vmem:[%s330 + $0x2] sm:$0xff]
        %v1049 = vld [vmem:[%s330 + $0xa] sm:$0xff]
        %v1050 = vld [vmem:[%s330 + $0x1a] sm:$0xff]
        %v1051 = vld [vmem:[%s330 + $0x22] sm:$0xff]
        %v1052 = vld [vmem:[%s330 + $0x32] sm:$0xff]
        %v1053 = vld [vmem:[%s330 + $0x3a] sm:$0xff]
        %v1054 = vld [vmem:[%s330 + $0x4a] sm:$0xff]
        %v1055 = vld [vmem:[%s330 + $0x52] sm:$0xff]
        %v1056 = vld [vmem:[%s330 + $0x62] sm:$0xff]
        %v1057 = vld [vmem:[%s330 + $0x6a] sm:$0xff]
        %v1058 = vld [vmem:[%s330 + $0x7a] sm:$0xff]
        %v1059 = vld [vmem:[%s330 + $0x82] sm:$0xff]
        %v1060 = vld [vmem:[%s330 + $0x92] sm:$0xff]
        %v1061 = vld [vmem:[%s330 + $0x9a] sm:$0xff]
        %v1062 = vld [vmem:[%s330 + $0xaa] sm:$0xff]
        %v1063 = vld [vmem:[%s330 + $0xb2] sm:$0xff]
        %v1064 = vld [vmem:[%s330 + $0xc2] sm:$0xff]
        %v1065 = vld [vmem:[%s330 + $0xca] sm:$0xff]
        %v1066 = vld [vmem:[%s330 + $0xda] sm:$0xff]
        %v1067 = vld [vmem:[%s330 + $0xe2] sm:$0xff]
        %v1068 = vld [vmem:[%s330 + $0xf2] sm:$0xff]
        %v1069 = vld [vmem:[%s330 + $0xfa] sm:$0xff]
        %v1070 = vld [vmem:[%s330 + $0x10a] sm:$0xff]
        %v1071 = vld [vmem:[%s330 + $0x112] sm:$0xff]
        %v1072 = vld [vmem:[%s330 + $0x122] sm:$0xff]
        %v1073 = vld [vmem:[%s330 + $0x12a] sm:$0xff]
        %v1074 = vld [vmem:[%s330 + $0x13a] sm:$0xff]
        %v1075 = vld [vmem:[%s330 + $0x142] sm:$0xff]
        %v1076 = vld [vmem:[%s330 + $0x152] sm:$0xff]
        %v1077 = vld [vmem:[%s330 + $0x15a] sm:$0xff]
        %v1078 = vld [vmem:[%s330 + $0x16a] sm:$0xff]
        %v1079 = vld [vmem:[%s330 + $0x172] sm:$0xff]
        %s1080 = scalar_lea.vmem %s1, 8
        %v1081 = vld [vmem:[%s1080] sm:$0xf]
        %v1083 = vsel %vm398, %v1048, 0
        %v1086 = vsel %vm398, %v1049, 0
        %v1089 = vsel %vm398, %v1050, 0
        %v1092 = vsel %vm398, %v1051, 0
        %v1095 = vsel %vm398, %v1052, 0
        %v1098 = vsel %vm398, %v1053, 0
        %v1101 = vsel %vm398, %v1054, 0
        %v1104 = vsel %vm398, %v1055, 0
        %v1107 = vsel %vm398, %v1056, 0
        %v1110 = vsel %vm398, %v1057, 0
        %v1113 = vsel %vm398, %v1058, 0
        %v1116 = vsel %vm398, %v1059, 0
        %v1119 = vsel %vm398, %v1060, 0
        %v1122 = vsel %vm398, %v1061, 0
        %v1125 = vsel %vm398, %v1062, 0
        %v1128 = vsel %vm398, %v1063, 0
        %v1131 = vsel %vm398, %v1064, 0
        %v1134 = vsel %vm398, %v1065, 0
        %v1137 = vsel %vm398, %v1066, 0
        %v1140 = vsel %vm398, %v1067, 0
        %v1143 = vsel %vm398, %v1068, 0
        %v1146 = vsel %vm398, %v1069, 0
        %v1149 = vsel %vm398, %v1070, 0
        %v1152 = vsel %vm398, %v1071, 0
        %v1155 = vsel %vm398, %v1072, 0
        %v1158 = vsel %vm398, %v1073, 0
        %v1161 = vsel %vm398, %v1074, 0
        %v1164 = vsel %vm398, %v1075, 0
        %v1167 = vsel %vm398, %v1076, 0
        %v1170 = vsel %vm398, %v1077, 0
        %v1173 = vsel %vm398, %v1078, 0
        %v1176 = vsel %vm398, %v1079, 0
        %v1179 = vsel %vm495, %v1081, 0
        %1181 = vmatprep.subr.mxu0 0.0
        %1182 = vmatpush1.msra.mxu0 0.0
        %1183 = vmatprep.subr.mxu0 0.0
        %1184 = vmatpush1.msra.mxu0 0.0
        %1185 = vmatprep.subr.mxu0 0.0
        %1186 = vmatpush1.msra.mxu0 0.0
        %1187 = vmatprep.subr.mxu0 0.0
        %1188 = vmatpush1.msra.mxu0 0.0
        %1189 = vmatprep.subr.mxu0 0.0
        %1190 = vmatpush1.msra.mxu0 0.0
        %1191 = vmatprep.subr.mxu0 0.0
        %1192 = vmatpush1.msra.mxu0 0.0
        %1193 = vmatprep.subr.mxu0 0.0
        %1194 = vmatpush1.msra.mxu0 0.0
        %1195 = vmatprep.subr.mxu0 0.0
        %1196 = vmatpush1.msra.mxu0 0.0
        %1197 = vmatprep.subr.mxu0 0.0
        %1198 = vmatpush1.msra.mxu0 0.0
        %1199 = vmatprep.subr.mxu0 0.0
        %1200 = vmatpush1.msra.mxu0 0.0
        %1201 = vmatprep.subr.mxu0 0.0
        %1202 = vmatpush1.msra.mxu0 0.0
        %1203 = vmatprep.subr.mxu0 0.0
        %1204 = vmatpush1.msra.mxu0 0.0
        %1205 = vmatprep.subr.mxu0 0.0
        %1206 = vmatpush1.msra.mxu0 0.0
        %1207 = vmatprep.subr.mxu0 0.0
        %1208 = vmatpush1.msra.mxu0 0.0
        %1209 = vmatprep.subr.mxu0 0.0
        %1210 = vmatpush1.msra.mxu0 0.0
        %1211 = vmatprep.subr.mxu0 0.0
        %1212 = vmatpush1.msra.mxu0 %v1179
        %1213 = vmatprep.subr.mxu0 0.0
        %1214 = vmatpush2.msra.mxu0 0.0
        %1215 = vmatprep.subr.mxu0 0.0
        %1216 = vmatpush2.msra.mxu0 0.0
        %1217 = vmatprep.subr.mxu0 0.0
        %1218 = vmatpush2.msra.mxu0 0.0
        %1219 = vmatprep.subr.mxu0 0.0
        %1220 = vmatpush2.msra.mxu0 0.0
        %1221 = vmatprep.subr.mxu0 0.0
        %1222 = vmatpush2.msra.mxu0 0.0
        %1223 = vmatprep.subr.mxu0 0.0
        %1224 = vmatpush2.msra.mxu0 0.0
        %1225 = vmatprep.subr.mxu0 0.0
        %1226 = vmatpush2.msra.mxu0 0.0
        %1227 = vmatprep.subr.mxu0 0.0
        %1228 = vmatpush2.msra.mxu0 0.0
        %1229 = vmatprep.subr.mxu0 0.0
        %1230 = vmatpush2.msra.mxu0 0.0
        %1231 = vmatprep.subr.mxu0 0.0
        %1232 = vmatpush2.msra.mxu0 0.0
        %1233 = vmatprep.subr.mxu0 0.0
        %1234 = vmatpush2.msra.mxu0 0.0
        %1235 = vmatprep.subr.mxu0 0.0
        %1236 = vmatpush2.msra.mxu0 0.0
        %1237 = vmatprep.subr.mxu0 0.0
        %1238 = vmatpush2.msra.mxu0 0.0
        %1239 = vmatprep.subr.mxu0 0.0
        %1240 = vmatpush2.msra.mxu0 0.0
        %1241 = vmatprep.subr.mxu0 0.0
        %1242 = vmatpush2.msra.mxu0 0.0
        %1243 = vmatprep.subr.mxu0 0.0
        %1244 = vmatpush2.msra.mxu0 0.0
        %1245 = vmatprep.mubr.f32.mxu0 0.0
        %1246 = vmatmul.mubr.f32.gmra.mxu0 %v1083
        %v1247 = vpop.f32.mrf.mxu0
        %v1248 = vadd.f32 0.0, %v1247
        %v1249 = vpop.f32.mrf.mxu0
        %1250 = vmatprep.mubr.f32.mxu0 0.0
        %1251 = vmatmul.mubr.f32.gmra.mxu0 %v1086
        %v1252 = vpop.f32.mrf.mxu0
        %v1253 = vadd.f32 0.0, %v1252
        %v1254 = vpop.f32.mrf.mxu0
        %1255 = vmatprep.mubr.f32.mxu0 0.0
        %1256 = vmatmul.mubr.f32.gmra.mxu0 %v1089
        %v1257 = vpop.f32.mrf.mxu0
        %v1258 = vadd.f32 0.0, %v1257
        %v1259 = vpop.f32.mrf.mxu0
        %1260 = vmatprep.mubr.f32.mxu0 0.0
        %1261 = vmatmul.mubr.f32.gmra.mxu0 %v1092
        %v1262 = vpop.f32.mrf.mxu0
        %v1263 = vadd.f32 0.0, %v1262
        %v1264 = vpop.f32.mrf.mxu0
        %1265 = vmatprep.mubr.f32.mxu0 0.0
        %1266 = vmatmul.mubr.f32.gmra.mxu0 %v1095
        %v1267 = vpop.f32.mrf.mxu0
        %v1268 = vadd.f32 0.0, %v1267
        %v1269 = vpop.f32.mrf.mxu0
        %1270 = vmatprep.mubr.f32.mxu0 0.0
        %1271 = vmatmul.mubr.f32.gmra.mxu0 %v1098
        %v1272 = vpop.f32.mrf.mxu0
        %v1273 = vadd.f32 0.0, %v1272
        %v1274 = vpop.f32.mrf.mxu0
        %1275 = vmatprep.mubr.f32.mxu0 0.0
        %1276 = vmatmul.mubr.f32.gmra.mxu0 %v1101
        %v1277 = vpop.f32.mrf.mxu0
        %v1278 = vadd.f32 0.0, %v1277
        %v1279 = vpop.f32.mrf.mxu0
        %1280 = vmatprep.mubr.f32.mxu0 0.0
        %1281 = vmatmul.mubr.f32.gmra.mxu0 %v1104
        %v1282 = vpop.f32.mrf.mxu0
        %v1283 = vadd.f32 0.0, %v1282
        %v1284 = vpop.f32.mrf.mxu0
        %1285 = vmatprep.mubr.f32.mxu0 0.0
        %1286 = vmatmul.mubr.f32.gmra.mxu0 %v1107
        %v1287 = vpop.f32.mrf.mxu0
        %v1288 = vadd.f32 0.0, %v1287
        %v1289 = vpop.f32.mrf.mxu0
        %1290 = vmatprep.mubr.f32.mxu0 0.0
        %1291 = vmatmul.mubr.f32.gmra.mxu0 %v1110
        %v1292 = vpop.f32.mrf.mxu0
        %v1293 = vadd.f32 0.0, %v1292
        %v1294 = vpop.f32.mrf.mxu0
        %1295 = vmatprep.mubr.f32.mxu0 0.0
        %1296 = vmatmul.mubr.f32.gmra.mxu0 %v1113
        %v1297 = vpop.f32.mrf.mxu0
        %v1298 = vadd.f32 0.0, %v1297
        %v1299 = vpop.f32.mrf.mxu0
        %1300 = vmatprep.mubr.f32.mxu0 0.0
        %1301 = vmatmul.mubr.f32.gmra.mxu0 %v1116
        %v1302 = vpop.f32.mrf.mxu0
        %v1303 = vadd.f32 0.0, %v1302
        %v1304 = vpop.f32.mrf.mxu0
        %1305 = vmatprep.mubr.f32.mxu0 0.0
        %1306 = vmatmul.mubr.f32.gmra.mxu0 %v1119
        %v1307 = vpop.f32.mrf.mxu0
        %v1308 = vadd.f32 0.0, %v1307
        %v1309 = vpop.f32.mrf.mxu0
        %1310 = vmatprep.mubr.f32.mxu0 0.0
        %1311 = vmatmul.mubr.f32.gmra.mxu0 %v1122
        %v1312 = vpop.f32.mrf.mxu0
        %v1313 = vadd.f32 0.0, %v1312
        %v1314 = vpop.f32.mrf.mxu0
        %1315 = vmatprep.mubr.f32.mxu0 0.0
        %1316 = vmatmul.mubr.f32.gmra.mxu0 %v1125
        %v1317 = vpop.f32.mrf.mxu0
        %v1318 = vadd.f32 0.0, %v1317
        %v1319 = vpop.f32.mrf.mxu0
        %1320 = vmatprep.mubr.f32.mxu0 0.0
        %1321 = vmatmul.mubr.f32.gmra.mxu0 %v1128
        %v1322 = vpop.f32.mrf.mxu0
        %v1323 = vadd.f32 0.0, %v1322
        %v1324 = vpop.f32.mrf.mxu0
        %1325 = vmatprep.mubr.f32.mxu0 0.0
        %1326 = vmatmul.mubr.f32.gmra.mxu0 %v1131
        %v1327 = vpop.f32.mrf.mxu0
        %v1328 = vadd.f32 0.0, %v1327
        %v1329 = vpop.f32.mrf.mxu0
        %1330 = vmatprep.mubr.f32.mxu0 0.0
        %1331 = vmatmul.mubr.f32.gmra.mxu0 %v1134
        %v1332 = vpop.f32.mrf.mxu0
        %v1333 = vadd.f32 0.0, %v1332
        %v1334 = vpop.f32.mrf.mxu0
        %1335 = vmatprep.mubr.f32.mxu0 0.0
        %1336 = vmatmul.mubr.f32.gmra.mxu0 %v1137
        %v1337 = vpop.f32.mrf.mxu0
        %v1338 = vadd.f32 0.0, %v1337
        %v1339 = vpop.f32.mrf.mxu0
        %1340 = vmatprep.mubr.f32.mxu0 0.0
        %1341 = vmatmul.mubr.f32.gmra.mxu0 %v1140
        %v1342 = vpop.f32.mrf.mxu0
        %v1343 = vadd.f32 0.0, %v1342
        %v1344 = vpop.f32.mrf.mxu0
        %1345 = vmatprep.mubr.f32.mxu0 0.0
        %1346 = vmatmul.mubr.f32.gmra.mxu0 %v1143
        %v1347 = vpop.f32.mrf.mxu0
        %v1348 = vadd.f32 0.0, %v1347
        %v1349 = vpop.f32.mrf.mxu0
        %1350 = vmatprep.mubr.f32.mxu0 0.0
        %1351 = vmatmul.mubr.f32.gmra.mxu0 %v1146
        %v1352 = vpop.f32.mrf.mxu0
        %v1353 = vadd.f32 0.0, %v1352
        %v1354 = vpop.f32.mrf.mxu0
        %1355 = vmatprep.mubr.f32.mxu0 0.0
        %1356 = vmatmul.mubr.f32.gmra.mxu0 %v1149
        %v1357 = vpop.f32.mrf.mxu0
        %v1358 = vadd.f32 0.0, %v1357
        %v1359 = vpop.f32.mrf.mxu0
        %1360 = vmatprep.mubr.f32.mxu0 0.0
        %1361 = vmatmul.mubr.f32.gmra.mxu0 %v1152
        %v1362 = vpop.f32.mrf.mxu0
        %v1363 = vadd.f32 0.0, %v1362
        %v1364 = vpop.f32.mrf.mxu0
        %1365 = vmatprep.mubr.f32.mxu0 0.0
        %1366 = vmatmul.mubr.f32.gmra.mxu0 %v1155
        %v1367 = vpop.f32.mrf.mxu0
        %v1368 = vadd.f32 0.0, %v1367
        %v1369 = vpop.f32.mrf.mxu0
        %1370 = vmatprep.mubr.f32.mxu0 0.0
        %1371 = vmatmul.mubr.f32.gmra.mxu0 %v1158
        %v1372 = vpop.f32.mrf.mxu0
        %v1373 = vadd.f32 0.0, %v1372
        %v1374 = vpop.f32.mrf.mxu0
        %1375 = vmatprep.mubr.f32.mxu0 0.0
        %1376 = vmatmul.mubr.f32.gmra.mxu0 %v1161
        %v1377 = vpop.f32.mrf.mxu0
        %v1378 = vadd.f32 0.0, %v1377
        %v1379 = vpop.f32.mrf.mxu0
        %1380 = vmatprep.mubr.f32.mxu0 0.0
        %1381 = vmatmul.mubr.f32.gmra.mxu0 %v1164
        %v1382 = vpop.f32.mrf.mxu0
        %v1383 = vadd.f32 0.0, %v1382
        %v1384 = vpop.f32.mrf.mxu0
        %1385 = vmatprep.mubr.f32.mxu0 0.0
        %1386 = vmatmul.mubr.f32.gmra.mxu0 %v1167
        %v1387 = vpop.f32.mrf.mxu0
        %v1388 = vadd.f32 0.0, %v1387
        %v1389 = vpop.f32.mrf.mxu0
        %1390 = vmatprep.mubr.f32.mxu0 0.0
        %1391 = vmatmul.mubr.f32.gmra.mxu0 %v1170
        %v1392 = vpop.f32.mrf.mxu0
        %v1393 = vadd.f32 0.0, %v1392
        %v1394 = vpop.f32.mrf.mxu0
        %1395 = vmatprep.mubr.f32.mxu0 0.0
        %1396 = vmatmul.mubr.f32.gmra.mxu0 %v1173
        %v1397 = vpop.f32.mrf.mxu0
        %v1398 = vadd.f32 0.0, %v1397
        %v1399 = vpop.f32.mrf.mxu0
        %1400 = vmatprep.mubr.f32.mxu0 0.0
        %1401 = vmatmul.mubr.f32.gmra.mxu0 %v1176
        %v1402 = vpop.f32.mrf.mxu0
        %v1403 = vadd.f32 0.0, %v1402
        %v1404 = vpop.f32.mrf.mxu0
        %1405 = vdwg.mxu0
        %v1406 = vadd.f32 %v890, %v1248
        %v1407 = vadd.f32 %v895, %v1253
        %v1408 = vadd.f32 %v900, %v1258
        %v1409 = vadd.f32 %v905, %v1263
        %v1410 = vadd.f32 %v910, %v1268
        %v1411 = vadd.f32 %v915, %v1273
        %v1412 = vadd.f32 %v920, %v1278
        %v1413 = vadd.f32 %v925, %v1283
        %v1414 = vadd.f32 %v930, %v1288
        %v1415 = vadd.f32 %v935, %v1293
        %v1416 = vadd.f32 %v940, %v1298
        %v1417 = vadd.f32 %v945, %v1303
        %v1418 = vadd.f32 %v950, %v1308
        %v1419 = vadd.f32 %v955, %v1313
        %v1420 = vadd.f32 %v960, %v1318
        %v1421 = vadd.f32 %v965, %v1323
        %v1422 = vadd.f32 %v970, %v1328
        %v1423 = vadd.f32 %v975, %v1333
        %v1424 = vadd.f32 %v980, %v1338
        %v1425 = vadd.f32 %v985, %v1343
        %v1426 = vadd.f32 %v990, %v1348
        %v1427 = vadd.f32 %v995, %v1353
        %v1428 = vadd.f32 %v1000, %v1358
        %v1429 = vadd.f32 %v1005, %v1363
        %v1430 = vadd.f32 %v1010, %v1368
        %v1431 = vadd.f32 %v1015, %v1373
        %v1432 = vadd.f32 %v1020, %v1378
        %v1433 = vadd.f32 %v1025, %v1383
        %v1434 = vadd.f32 %v1030, %v1388
        %v1435 = vadd.f32 %v1035, %v1393
        %v1436 = vadd.f32 %v1040, %v1398
        %v1437 = vadd.f32 %v1045, %v1403
        %s1438 = scalar_lea.vmem %s330, 24
        %v1439 = vld [vmem:[%s1438] sm:$0xff]
        %v1440 = vld [vmem:[%s1438 + $0x8] sm:$0xff]
        %v1441 = vld [vmem:[%s1438 + $0x18] sm:$0xff]
        %v1442 = vld [vmem:[%s1438 + $0x20] sm:$0xff]
        %v1443 = vld [vmem:[%s1438 + $0x30] sm:$0xff]
        %v1444 = vld [vmem:[%s1438 + $0x38] sm:$0xff]
        %v1445 = vld [vmem:[%s1438 + $0x48] sm:$0xff]
        %v1446 = vld [vmem:[%s1438 + $0x50] sm:$0xff]
        %v1447 = vld [vmem:[%s1438 + $0x60] sm:$0xff]
        %v1448 = vld [vmem:[%s1438 + $0x68] sm:$0xff]
        %v1449 = vld [vmem:[%s1438 + $0x78] sm:$0xff]
        %v1450 = vld [vmem:[%s1438 + $0x80] sm:$0xff]
        %v1451 = vld [vmem:[%s1438 + $0x90] sm:$0xff]
        %v1452 = vld [vmem:[%s1438 + $0x98] sm:$0xff]
        %v1453 = vld [vmem:[%s1438 + $0xa8] sm:$0xff]
        %v1454 = vld [vmem:[%s1438 + $0xb0] sm:$0xff]
        %v1455 = vld [vmem:[%s1438 + $0xc0] sm:$0xff]
        %v1456 = vld [vmem:[%s1438 + $0xc8] sm:$0xff]
        %v1457 = vld [vmem:[%s1438 + $0xd8] sm:$0xff]
        %v1458 = vld [vmem:[%s1438 + $0xe0] sm:$0xff]
        %v1459 = vld [vmem:[%s1438 + $0xf0] sm:$0xff]
        %v1460 = vld [vmem:[%s1438 + $0xf8] sm:$0xff]
        %v1461 = vld [vmem:[%s1438 + $0x108] sm:$0xff]
        %v1462 = vld [vmem:[%s1438 + $0x110] sm:$0xff]
        %v1463 = vld [vmem:[%s1438 + $0x120] sm:$0xff]
        %v1464 = vld [vmem:[%s1438 + $0x128] sm:$0xff]
        %v1465 = vld [vmem:[%s1438 + $0x138] sm:$0xff]
        %v1466 = vld [vmem:[%s1438 + $0x140] sm:$0xff]
        %v1467 = vld [vmem:[%s1438 + $0x150] sm:$0xff]
        %v1468 = vld [vmem:[%s1438 + $0x158] sm:$0xff]
        %v1469 = vld [vmem:[%s1438 + $0x168] sm:$0xff]
        %v1470 = vld [vmem:[%s1438 + $0x170] sm:$0xff]
        %s1471 = scalar_lea.vmem %s1, 12
        %v1472 = vld [vmem:[%s1471] sm:$0xf]
        %v1474 = vsel %vm398, %v1439, 0
        %v1477 = vsel %vm398, %v1440, 0
        %v1480 = vsel %vm398, %v1441, 0
        %v1483 = vsel %vm398, %v1442, 0
        %v1486 = vsel %vm398, %v1443, 0
        %v1489 = vsel %vm398, %v1444, 0
        %v1492 = vsel %vm398, %v1445, 0
        %v1495 = vsel %vm398, %v1446, 0
        %v1498 = vsel %vm398, %v1447, 0
        %v1501 = vsel %vm398, %v1448, 0
        %v1504 = vsel %vm398, %v1449, 0
        %v1507 = vsel %vm398, %v1450, 0
        %v1510 = vsel %vm398, %v1451, 0
        %v1513 = vsel %vm398, %v1452, 0
        %v1516 = vsel %vm398, %v1453, 0
        %v1519 = vsel %vm398, %v1454, 0
        %v1522 = vsel %vm398, %v1455, 0
        %v1525 = vsel %vm398, %v1456, 0
        %v1528 = vsel %vm398, %v1457, 0
        %v1531 = vsel %vm398, %v1458, 0
        %v1534 = vsel %vm398, %v1459, 0
        %v1537 = vsel %vm398, %v1460, 0
        %v1540 = vsel %vm398, %v1461, 0
        %v1543 = vsel %vm398, %v1462, 0
        %v1546 = vsel %vm398, %v1463, 0
        %v1549 = vsel %vm398, %v1464, 0
        %v1552 = vsel %vm398, %v1465, 0
        %v1555 = vsel %vm398, %v1466, 0
        %v1558 = vsel %vm398, %v1467, 0
        %v1561 = vsel %vm398, %v1468, 0
        %v1564 = vsel %vm398, %v1469, 0
        %v1567 = vsel %vm398, %v1470, 0
        %v1570 = vsel %vm495, %v1472, 0
        %1572 = vmatprep.subr.mxu0 0.0
        %1573 = vmatpush1.msra.mxu0 0.0
        %1574 = vmatprep.subr.mxu0 0.0
        %1575 = vmatpush1.msra.mxu0 0.0
        %1576 = vmatprep.subr.mxu0 0.0
        %1577 = vmatpush1.msra.mxu0 0.0
        %1578 = vmatprep.subr.mxu0 0.0
        %1579 = vmatpush1.msra.mxu0 0.0
        %1580 = vmatprep.subr.mxu0 0.0
        %1581 = vmatpush1.msra.mxu0 0.0
        %1582 = vmatprep.subr.mxu0 0.0
        %1583 = vmatpush1.msra.mxu0 0.0
        %1584 = vmatprep.subr.mxu0 0.0
        %1585 = vmatpush1.msra.mxu0 0.0
        %1586 = vmatprep.subr.mxu0 0.0
        %1587 = vmatpush1.msra.mxu0 0.0
        %1588 = vmatprep.subr.mxu0 0.0
        %1589 = vmatpush1.msra.mxu0 0.0
        %1590 = vmatprep.subr.mxu0 0.0
        %1591 = vmatpush1.msra.mxu0 0.0
        %1592 = vmatprep.subr.mxu0 0.0
        %1593 = vmatpush1.msra.mxu0 0.0
        %1594 = vmatprep.subr.mxu0 0.0
        %1595 = vmatpush1.msra.mxu0 0.0
        %1596 = vmatprep.subr.mxu0 0.0
        %1597 = vmatpush1.msra.mxu0 0.0
        %1598 = vmatprep.subr.mxu0 0.0
        %1599 = vmatpush1.msra.mxu0 0.0
        %1600 = vmatprep.subr.mxu0 0.0
        %1601 = vmatpush1.msra.mxu0 0.0
        %1602 = vmatprep.subr.mxu0 0.0
        %1603 = vmatpush1.msra.mxu0 %v1570
        %1604 = vmatprep.subr.mxu0 0.0
        %1605 = vmatpush2.msra.mxu0 0.0
        %1606 = vmatprep.subr.mxu0 0.0
        %1607 = vmatpush2.msra.mxu0 0.0
        %1608 = vmatprep.subr.mxu0 0.0
        %1609 = vmatpush2.msra.mxu0 0.0
        %1610 = vmatprep.subr.mxu0 0.0
        %1611 = vmatpush2.msra.mxu0 0.0
        %1612 = vmatprep.subr.mxu0 0.0
        %1613 = vmatpush2.msra.mxu0 0.0
        %1614 = vmatprep.subr.mxu0 0.0
        %1615 = vmatpush2.msra.mxu0 0.0
        %1616 = vmatprep.subr.mxu0 0.0
        %1617 = vmatpush2.msra.mxu0 0.0
        %1618 = vmatprep.subr.mxu0 0.0
        %1619 = vmatpush2.msra.mxu0 0.0
        %1620 = vmatprep.subr.mxu0 0.0
        %1621 = vmatpush2.msra.mxu0 0.0
        %1622 = vmatprep.subr.mxu0 0.0
        %1623 = vmatpush2.msra.mxu0 0.0
        %1624 = vmatprep.subr.mxu0 0.0
        %1625 = vmatpush2.msra.mxu0 0.0
        %1626 = vmatprep.subr.mxu0 0.0
        %1627 = vmatpush2.msra.mxu0 0.0
        %1628 = vmatprep.subr.mxu0 0.0
        %1629 = vmatpush2.msra.mxu0 0.0
        %1630 = vmatprep.subr.mxu0 0.0
        %1631 = vmatpush2.msra.mxu0 0.0
        %1632 = vmatprep.subr.mxu0 0.0
        %1633 = vmatpush2.msra.mxu0 0.0
        %1634 = vmatprep.subr.mxu0 0.0
        %1635 = vmatpush2.msra.mxu0 0.0
        %1636 = vmatprep.mubr.f32.mxu0 0.0
        %1637 = vmatmul.mubr.f32.gmra.mxu0 %v1474
        %v1638 = vpop.f32.mrf.mxu0
        %v1639 = vadd.f32 0.0, %v1638
        %v1640 = vpop.f32.mrf.mxu0
        %1641 = vmatprep.mubr.f32.mxu0 0.0
        %1642 = vmatmul.mubr.f32.gmra.mxu0 %v1477
        %v1643 = vpop.f32.mrf.mxu0
        %v1644 = vadd.f32 0.0, %v1643
        %v1645 = vpop.f32.mrf.mxu0
        %1646 = vmatprep.mubr.f32.mxu0 0.0
        %1647 = vmatmul.mubr.f32.gmra.mxu0 %v1480
        %v1648 = vpop.f32.mrf.mxu0
        %v1649 = vadd.f32 0.0, %v1648
        %v1650 = vpop.f32.mrf.mxu0
        %1651 = vmatprep.mubr.f32.mxu0 0.0
        %1652 = vmatmul.mubr.f32.gmra.mxu0 %v1483
        %v1653 = vpop.f32.mrf.mxu0
        %v1654 = vadd.f32 0.0, %v1653
        %v1655 = vpop.f32.mrf.mxu0
        %1656 = vmatprep.mubr.f32.mxu0 0.0
        %1657 = vmatmul.mubr.f32.gmra.mxu0 %v1486
        %v1658 = vpop.f32.mrf.mxu0
        %v1659 = vadd.f32 0.0, %v1658
        %v1660 = vpop.f32.mrf.mxu0
        %1661 = vmatprep.mubr.f32.mxu0 0.0
        %1662 = vmatmul.mubr.f32.gmra.mxu0 %v1489
        %v1663 = vpop.f32.mrf.mxu0
        %v1664 = vadd.f32 0.0, %v1663
        %v1665 = vpop.f32.mrf.mxu0
        %1666 = vmatprep.mubr.f32.mxu0 0.0
        %1667 = vmatmul.mubr.f32.gmra.mxu0 %v1492
        %v1668 = vpop.f32.mrf.mxu0
        %v1669 = vadd.f32 0.0, %v1668
        %v1670 = vpop.f32.mrf.mxu0
        %1671 = vmatprep.mubr.f32.mxu0 0.0
        %1672 = vmatmul.mubr.f32.gmra.mxu0 %v1495
        %v1673 = vpop.f32.mrf.mxu0
        %v1674 = vadd.f32 0.0, %v1673
        %v1675 = vpop.f32.mrf.mxu0
        %1676 = vmatprep.mubr.f32.mxu0 0.0
        %1677 = vmatmul.mubr.f32.gmra.mxu0 %v1498
        %v1678 = vpop.f32.mrf.mxu0
        %v1679 = vadd.f32 0.0, %v1678
        %v1680 = vpop.f32.mrf.mxu0
        %1681 = vmatprep.mubr.f32.mxu0 0.0
        %1682 = vmatmul.mubr.f32.gmra.mxu0 %v1501
        %v1683 = vpop.f32.mrf.mxu0
        %v1684 = vadd.f32 0.0, %v1683
        %v1685 = vpop.f32.mrf.mxu0
        %1686 = vmatprep.mubr.f32.mxu0 0.0
        %1687 = vmatmul.mubr.f32.gmra.mxu0 %v1504
        %v1688 = vpop.f32.mrf.mxu0
        %v1689 = vadd.f32 0.0, %v1688
        %v1690 = vpop.f32.mrf.mxu0
        %1691 = vmatprep.mubr.f32.mxu0 0.0
        %1692 = vmatmul.mubr.f32.gmra.mxu0 %v1507
        %v1693 = vpop.f32.mrf.mxu0
        %v1694 = vadd.f32 0.0, %v1693
        %v1695 = vpop.f32.mrf.mxu0
        %1696 = vmatprep.mubr.f32.mxu0 0.0
        %1697 = vmatmul.mubr.f32.gmra.mxu0 %v1510
        %v1698 = vpop.f32.mrf.mxu0
        %v1699 = vadd.f32 0.0, %v1698
        %v1700 = vpop.f32.mrf.mxu0
        %1701 = vmatprep.mubr.f32.mxu0 0.0
        %1702 = vmatmul.mubr.f32.gmra.mxu0 %v1513
        %v1703 = vpop.f32.mrf.mxu0
        %v1704 = vadd.f32 0.0, %v1703
        %v1705 = vpop.f32.mrf.mxu0
        %1706 = vmatprep.mubr.f32.mxu0 0.0
        %1707 = vmatmul.mubr.f32.gmra.mxu0 %v1516
        %v1708 = vpop.f32.mrf.mxu0
        %v1709 = vadd.f32 0.0, %v1708
        %v1710 = vpop.f32.mrf.mxu0
        %1711 = vmatprep.mubr.f32.mxu0 0.0
        %1712 = vmatmul.mubr.f32.gmra.mxu0 %v1519
        %v1713 = vpop.f32.mrf.mxu0
        %v1714 = vadd.f32 0.0, %v1713
        %v1715 = vpop.f32.mrf.mxu0
        %1716 = vmatprep.mubr.f32.mxu0 0.0
        %1717 = vmatmul.mubr.f32.gmra.mxu0 %v1522
        %v1718 = vpop.f32.mrf.mxu0
        %v1719 = vadd.f32 0.0, %v1718
        %v1720 = vpop.f32.mrf.mxu0
        %1721 = vmatprep.mubr.f32.mxu0 0.0
        %1722 = vmatmul.mubr.f32.gmra.mxu0 %v1525
        %v1723 = vpop.f32.mrf.mxu0
        %v1724 = vadd.f32 0.0, %v1723
        %v1725 = vpop.f32.mrf.mxu0
        %1726 = vmatprep.mubr.f32.mxu0 0.0
        %1727 = vmatmul.mubr.f32.gmra.mxu0 %v1528
        %v1728 = vpop.f32.mrf.mxu0
        %v1729 = vadd.f32 0.0, %v1728
        %v1730 = vpop.f32.mrf.mxu0
        %1731 = vmatprep.mubr.f32.mxu0 0.0
        %1732 = vmatmul.mubr.f32.gmra.mxu0 %v1531
        %v1733 = vpop.f32.mrf.mxu0
        %v1734 = vadd.f32 0.0, %v1733
        %v1735 = vpop.f32.mrf.mxu0
        %1736 = vmatprep.mubr.f32.mxu0 0.0
        %1737 = vmatmul.mubr.f32.gmra.mxu0 %v1534
        %v1738 = vpop.f32.mrf.mxu0
        %v1739 = vadd.f32 0.0, %v1738
        %v1740 = vpop.f32.mrf.mxu0
        %1741 = vmatprep.mubr.f32.mxu0 0.0
        %1742 = vmatmul.mubr.f32.gmra.mxu0 %v1537
        %v1743 = vpop.f32.mrf.mxu0
        %v1744 = vadd.f32 0.0, %v1743
        %v1745 = vpop.f32.mrf.mxu0
        %1746 = vmatprep.mubr.f32.mxu0 0.0
        %1747 = vmatmul.mubr.f32.gmra.mxu0 %v1540
        %v1748 = vpop.f32.mrf.mxu0
        %v1749 = vadd.f32 0.0, %v1748
        %v1750 = vpop.f32.mrf.mxu0
        %1751 = vmatprep.mubr.f32.mxu0 0.0
        %1752 = vmatmul.mubr.f32.gmra.mxu0 %v1543
        %v1753 = vpop.f32.mrf.mxu0
        %v1754 = vadd.f32 0.0, %v1753
        %v1755 = vpop.f32.mrf.mxu0
        %1756 = vmatprep.mubr.f32.mxu0 0.0
        %1757 = vmatmul.mubr.f32.gmra.mxu0 %v1546
        %v1758 = vpop.f32.mrf.mxu0
        %v1759 = vadd.f32 0.0, %v1758
        %v1760 = vpop.f32.mrf.mxu0
        %1761 = vmatprep.mubr.f32.mxu0 0.0
        %1762 = vmatmul.mubr.f32.gmra.mxu0 %v1549
        %v1763 = vpop.f32.mrf.mxu0
        %v1764 = vadd.f32 0.0, %v1763
        %v1765 = vpop.f32.mrf.mxu0
        %1766 = vmatprep.mubr.f32.mxu0 0.0
        %1767 = vmatmul.mubr.f32.gmra.mxu0 %v1552
        %v1768 = vpop.f32.mrf.mxu0
        %v1769 = vadd.f32 0.0, %v1768
        %v1770 = vpop.f32.mrf.mxu0
        %1771 = vmatprep.mubr.f32.mxu0 0.0
        %1772 = vmatmul.mubr.f32.gmra.mxu0 %v1555
        %v1773 = vpop.f32.mrf.mxu0
        %v1774 = vadd.f32 0.0, %v1773
        %v1775 = vpop.f32.mrf.mxu0
        %1776 = vmatprep.mubr.f32.mxu0 0.0
        %1777 = vmatmul.mubr.f32.gmra.mxu0 %v1558
        %v1778 = vpop.f32.mrf.mxu0
        %v1779 = vadd.f32 0.0, %v1778
        %v1780 = vpop.f32.mrf.mxu0
        %1781 = vmatprep.mubr.f32.mxu0 0.0
        %1782 = vmatmul.mubr.f32.gmra.mxu0 %v1561
        %v1783 = vpop.f32.mrf.mxu0
        %v1784 = vadd.f32 0.0, %v1783
        %v1785 = vpop.f32.mrf.mxu0
        %1786 = vmatprep.mubr.f32.mxu0 0.0
        %1787 = vmatmul.mubr.f32.gmra.mxu0 %v1564
        %v1788 = vpop.f32.mrf.mxu0
        %v1789 = vadd.f32 0.0, %v1788
        %v1790 = vpop.f32.mrf.mxu0
        %1791 = vmatprep.mubr.f32.mxu0 0.0
        %1792 = vmatmul.mubr.f32.gmra.mxu0 %v1567
        %v1793 = vpop.f32.mrf.mxu0
        %v1794 = vadd.f32 0.0, %v1793
        %v1795 = vpop.f32.mrf.mxu0
        %1796 = vdwg.mxu0
        %v1797 = vadd.f32 %v1406, %v1639
        %v1798 = vadd.f32 %v1407, %v1644
        %v1799 = vadd.f32 %v1408, %v1649
        %v1800 = vadd.f32 %v1409, %v1654
        %v1801 = vadd.f32 %v1410, %v1659
        %v1802 = vadd.f32 %v1411, %v1664
        %v1803 = vadd.f32 %v1412, %v1669
        %v1804 = vadd.f32 %v1413, %v1674
        %v1805 = vadd.f32 %v1414, %v1679
        %v1806 = vadd.f32 %v1415, %v1684
        %v1807 = vadd.f32 %v1416, %v1689
        %v1808 = vadd.f32 %v1417, %v1694
        %v1809 = vadd.f32 %v1418, %v1699
        %v1810 = vadd.f32 %v1419, %v1704
        %v1811 = vadd.f32 %v1420, %v1709
        %v1812 = vadd.f32 %v1421, %v1714
        %v1813 = vadd.f32 %v1422, %v1719
        %v1814 = vadd.f32 %v1423, %v1724
        %v1815 = vadd.f32 %v1424, %v1729
        %v1816 = vadd.f32 %v1425, %v1734
        %v1817 = vadd.f32 %v1426, %v1739
        %v1818 = vadd.f32 %v1427, %v1744
        %v1819 = vadd.f32 %v1428, %v1749
        %v1820 = vadd.f32 %v1429, %v1754
        %v1821 = vadd.f32 %v1430, %v1759
        %v1822 = vadd.f32 %v1431, %v1764
        %v1823 = vadd.f32 %v1432, %v1769
        %v1824 = vadd.f32 %v1433, %v1774
        %v1825 = vadd.f32 %v1434, %v1779
        %v1826 = vadd.f32 %v1435, %v1784
        %v1827 = vadd.f32 %v1436, %v1789
        %v1828 = vadd.f32 %v1437, %v1794
        %v1829 = vld [vmem:[%s1438 + $0x1] sm:$0xff]
        %v1830 = vld [vmem:[%s1438 + $0x9] sm:$0xff]
        %v1831 = vld [vmem:[%s1438 + $0x19] sm:$0xff]
        %v1832 = vld [vmem:[%s1438 + $0x21] sm:$0xff]
        %v1833 = vld [vmem:[%s1438 + $0x31] sm:$0xff]
        %v1834 = vld [vmem:[%s1438 + $0x39] sm:$0xff]
        %v1835 = vld [vmem:[%s1438 + $0x49] sm:$0xff]
        %v1836 = vld [vmem:[%s1438 + $0x51] sm:$0xff]
        %v1837 = vld [vmem:[%s1438 + $0x61] sm:$0xff]
        %v1838 = vld [vmem:[%s1438 + $0x69] sm:$0xff]
        %v1839 = vld [vmem:[%s1438 + $0x79] sm:$0xff]
        %v1840 = vld [vmem:[%s1438 + $0x81] sm:$0xff]
        %v1841 = vld [vmem:[%s1438 + $0x91] sm:$0xff]
        %v1842 = vld [vmem:[%s1438 + $0x99] sm:$0xff]
        %v1843 = vld [vmem:[%s1438 + $0xa9] sm:$0xff]
        %v1844 = vld [vmem:[%s1438 + $0xb1] sm:$0xff]
        %v1845 = vld [vmem:[%s1438 + $0xc1] sm:$0xff]
        %v1846 = vld [vmem:[%s1438 + $0xc9] sm:$0xff]
        %v1847 = vld [vmem:[%s1438 + $0xd9] sm:$0xff]
        %v1848 = vld [vmem:[%s1438 + $0xe1] sm:$0xff]
        %v1849 = vld [vmem:[%s1438 + $0xf1] sm:$0xff]
        %v1850 = vld [vmem:[%s1438 + $0xf9] sm:$0xff]
        %v1851 = vld [vmem:[%s1438 + $0x109] sm:$0xff]
        %v1852 = vld [vmem:[%s1438 + $0x111] sm:$0xff]
        %v1853 = vld [vmem:[%s1438 + $0x121] sm:$0xff]
        %v1854 = vld [vmem:[%s1438 + $0x129] sm:$0xff]
        %v1855 = vld [vmem:[%s1438 + $0x139] sm:$0xff]
        %v1856 = vld [vmem:[%s1438 + $0x141] sm:$0xff]
        %v1857 = vld [vmem:[%s1438 + $0x151] sm:$0xff]
        %v1858 = vld [vmem:[%s1438 + $0x159] sm:$0xff]
        %v1859 = vld [vmem:[%s1438 + $0x169] sm:$0xff]
        %v1860 = vld [vmem:[%s1438 + $0x171] sm:$0xff]
        %s1861 = scalar_lea.vmem %s1, 16
        %v1862 = vld [vmem:[%s1861] sm:$0xf]
        %v1864 = vsel %vm398, %v1829, 0
        %v1867 = vsel %vm398, %v1830, 0
        %v1870 = vsel %vm398, %v1831, 0
        %v1873 = vsel %vm398, %v1832, 0
        %v1876 = vsel %vm398, %v1833, 0
        %v1879 = vsel %vm398, %v1834, 0
        %v1882 = vsel %vm398, %v1835, 0
        %v1885 = vsel %vm398, %v1836, 0
        %v1888 = vsel %vm398, %v1837, 0
        %v1891 = vsel %vm398, %v1838, 0
        %v1894 = vsel %vm398, %v1839, 0
        %v1897 = vsel %vm398, %v1840, 0
        %v1900 = vsel %vm398, %v1841, 0
        %v1903 = vsel %vm398, %v1842, 0
        %v1906 = vsel %vm398, %v1843, 0
        %v1909 = vsel %vm398, %v1844, 0
        %v1912 = vsel %vm398, %v1845, 0
        %v1915 = vsel %vm398, %v1846, 0
        %v1918 = vsel %vm398, %v1847, 0
        %v1921 = vsel %vm398, %v1848, 0
        %v1924 = vsel %vm398, %v1849, 0
        %v1927 = vsel %vm398, %v1850, 0
        %v1930 = vsel %vm398, %v1851, 0
        %v1933 = vsel %vm398, %v1852, 0
        %v1936 = vsel %vm398, %v1853, 0
        %v1939 = vsel %vm398, %v1854, 0
        %v1942 = vsel %vm398, %v1855, 0
        %v1945 = vsel %vm398, %v1856, 0
        %v1948 = vsel %vm398, %v1857, 0
        %v1951 = vsel %vm398, %v1858, 0
        %v1954 = vsel %vm398, %v1859, 0
        %v1957 = vsel %vm398, %v1860, 0
        %v1960 = vsel %vm495, %v1862, 0
        %1962 = vmatprep.subr.mxu0 0.0
        %1963 = vmatpush1.msra.mxu0 0.0
        %1964 = vmatprep.subr.mxu0 0.0
        %1965 = vmatpush1.msra.mxu0 0.0
        %1966 = vmatprep.subr.mxu0 0.0
        %1967 = vmatpush1.msra.mxu0 0.0
        %1968 = vmatprep.subr.mxu0 0.0
        %1969 = vmatpush1.msra.mxu0 0.0
        %1970 = vmatprep.subr.mxu0 0.0
        %1971 = vmatpush1.msra.mxu0 0.0
        %1972 = vmatprep.subr.mxu0 0.0
        %1973 = vmatpush1.msra.mxu0 0.0
        %1974 = vmatprep.subr.mxu0 0.0
        %1975 = vmatpush1.msra.mxu0 0.0
        %1976 = vmatprep.subr.mxu0 0.0
        %1977 = vmatpush1.msra.mxu0 0.0
        %1978 = vmatprep.subr.mxu0 0.0
        %1979 = vmatpush1.msra.mxu0 0.0
        %1980 = vmatprep.subr.mxu0 0.0
        %1981 = vmatpush1.msra.mxu0 0.0
        %1982 = vmatprep.subr.mxu0 0.0
        %1983 = vmatpush1.msra.mxu0 0.0
        %1984 = vmatprep.subr.mxu0 0.0
        %1985 = vmatpush1.msra.mxu0 0.0
        %1986 = vmatprep.subr.mxu0 0.0
        %1987 = vmatpush1.msra.mxu0 0.0
        %1988 = vmatprep.subr.mxu0 0.0
        %1989 = vmatpush1.msra.mxu0 0.0
        %1990 = vmatprep.subr.mxu0 0.0
        %1991 = vmatpush1.msra.mxu0 0.0
        %1992 = vmatprep.subr.mxu0 0.0
        %1993 = vmatpush1.msra.mxu0 %v1960
        %1994 = vmatprep.subr.mxu0 0.0
        %1995 = vmatpush2.msra.mxu0 0.0
        %1996 = vmatprep.subr.mxu0 0.0
        %1997 = vmatpush2.msra.mxu0 0.0
        %1998 = vmatprep.subr.mxu0 0.0
        %1999 = vmatpush2.msra.mxu0 0.0
        %2000 = vmatprep.subr.mxu0 0.0
        %2001 = vmatpush2.msra.mxu0 0.0
        %2002 = vmatprep.subr.mxu0 0.0
        %2003 = vmatpush2.msra.mxu0 0.0
        %2004 = vmatprep.subr.mxu0 0.0
        %2005 = vmatpush2.msra.mxu0 0.0
        %2006 = vmatprep.subr.mxu0 0.0
        %2007 = vmatpush2.msra.mxu0 0.0
        %2008 = vmatprep.subr.mxu0 0.0
        %2009 = vmatpush2.msra.mxu0 0.0
        %2010 = vmatprep.subr.mxu0 0.0
        %2011 = vmatpush2.msra.mxu0 0.0
        %2012 = vmatprep.subr.mxu0 0.0
        %2013 = vmatpush2.msra.mxu0 0.0
        %2014 = vmatprep.subr.mxu0 0.0
        %2015 = vmatpush2.msra.mxu0 0.0
        %2016 = vmatprep.subr.mxu0 0.0
        %2017 = vmatpush2.msra.mxu0 0.0
        %2018 = vmatprep.subr.mxu0 0.0
        %2019 = vmatpush2.msra.mxu0 0.0
        %2020 = vmatprep.subr.mxu0 0.0
        %2021 = vmatpush2.msra.mxu0 0.0
        %2022 = vmatprep.subr.mxu0 0.0
        %2023 = vmatpush2.msra.mxu0 0.0
        %2024 = vmatprep.subr.mxu0 0.0
        %2025 = vmatpush2.msra.mxu0 0.0
        %2026 = vmatprep.mubr.f32.mxu0 0.0
        %2027 = vmatmul.mubr.f32.gmra.mxu0 %v1864
        %v2028 = vpop.f32.mrf.mxu0
        %v2029 = vadd.f32 0.0, %v2028
        %v2030 = vpop.f32.mrf.mxu0
        %2031 = vmatprep.mubr.f32.mxu0 0.0
        %2032 = vmatmul.mubr.f32.gmra.mxu0 %v1867
        %v2033 = vpop.f32.mrf.mxu0
        %v2034 = vadd.f32 0.0, %v2033
        %v2035 = vpop.f32.mrf.mxu0
        %2036 = vmatprep.mubr.f32.mxu0 0.0
        %2037 = vmatmul.mubr.f32.gmra.mxu0 %v1870
        %v2038 = vpop.f32.mrf.mxu0
        %v2039 = vadd.f32 0.0, %v2038
        %v2040 = vpop.f32.mrf.mxu0
        %2041 = vmatprep.mubr.f32.mxu0 0.0
        %2042 = vmatmul.mubr.f32.gmra.mxu0 %v1873
        %v2043 = vpop.f32.mrf.mxu0
        %v2044 = vadd.f32 0.0, %v2043
        %v2045 = vpop.f32.mrf.mxu0
        %2046 = vmatprep.mubr.f32.mxu0 0.0
        %2047 = vmatmul.mubr.f32.gmra.mxu0 %v1876
        %v2048 = vpop.f32.mrf.mxu0
        %v2049 = vadd.f32 0.0, %v2048
        %v2050 = vpop.f32.mrf.mxu0
        %2051 = vmatprep.mubr.f32.mxu0 0.0
        %2052 = vmatmul.mubr.f32.gmra.mxu0 %v1879
        %v2053 = vpop.f32.mrf.mxu0
        %v2054 = vadd.f32 0.0, %v2053
        %v2055 = vpop.f32.mrf.mxu0
        %2056 = vmatprep.mubr.f32.mxu0 0.0
        %2057 = vmatmul.mubr.f32.gmra.mxu0 %v1882
        %v2058 = vpop.f32.mrf.mxu0
        %v2059 = vadd.f32 0.0, %v2058
        %v2060 = vpop.f32.mrf.mxu0
        %2061 = vmatprep.mubr.f32.mxu0 0.0
        %2062 = vmatmul.mubr.f32.gmra.mxu0 %v1885
        %v2063 = vpop.f32.mrf.mxu0
        %v2064 = vadd.f32 0.0, %v2063
        %v2065 = vpop.f32.mrf.mxu0
        %2066 = vmatprep.mubr.f32.mxu0 0.0
        %2067 = vmatmul.mubr.f32.gmra.mxu0 %v1888
        %v2068 = vpop.f32.mrf.mxu0
        %v2069 = vadd.f32 0.0, %v2068
        %v2070 = vpop.f32.mrf.mxu0
        %2071 = vmatprep.mubr.f32.mxu0 0.0
        %2072 = vmatmul.mubr.f32.gmra.mxu0 %v1891
        %v2073 = vpop.f32.mrf.mxu0
        %v2074 = vadd.f32 0.0, %v2073
        %v2075 = vpop.f32.mrf.mxu0
        %2076 = vmatprep.mubr.f32.mxu0 0.0
        %2077 = vmatmul.mubr.f32.gmra.mxu0 %v1894
        %v2078 = vpop.f32.mrf.mxu0
        %v2079 = vadd.f32 0.0, %v2078
        %v2080 = vpop.f32.mrf.mxu0
        %2081 = vmatprep.mubr.f32.mxu0 0.0
        %2082 = vmatmul.mubr.f32.gmra.mxu0 %v1897
        %v2083 = vpop.f32.mrf.mxu0
        %v2084 = vadd.f32 0.0, %v2083
        %v2085 = vpop.f32.mrf.mxu0
        %2086 = vmatprep.mubr.f32.mxu0 0.0
        %2087 = vmatmul.mubr.f32.gmra.mxu0 %v1900
        %v2088 = vpop.f32.mrf.mxu0
        %v2089 = vadd.f32 0.0, %v2088
        %v2090 = vpop.f32.mrf.mxu0
        %2091 = vmatprep.mubr.f32.mxu0 0.0
        %2092 = vmatmul.mubr.f32.gmra.mxu0 %v1903
        %v2093 = vpop.f32.mrf.mxu0
        %v2094 = vadd.f32 0.0, %v2093
        %v2095 = vpop.f32.mrf.mxu0
        %2096 = vmatprep.mubr.f32.mxu0 0.0
        %2097 = vmatmul.mubr.f32.gmra.mxu0 %v1906
        %v2098 = vpop.f32.mrf.mxu0
        %v2099 = vadd.f32 0.0, %v2098
        %v2100 = vpop.f32.mrf.mxu0
        %2101 = vmatprep.mubr.f32.mxu0 0.0
        %2102 = vmatmul.mubr.f32.gmra.mxu0 %v1909
        %v2103 = vpop.f32.mrf.mxu0
        %v2104 = vadd.f32 0.0, %v2103
        %v2105 = vpop.f32.mrf.mxu0
        %2106 = vmatprep.mubr.f32.mxu0 0.0
        %2107 = vmatmul.mubr.f32.gmra.mxu0 %v1912
        %v2108 = vpop.f32.mrf.mxu0
        %v2109 = vadd.f32 0.0, %v2108
        %v2110 = vpop.f32.mrf.mxu0
        %2111 = vmatprep.mubr.f32.mxu0 0.0
        %2112 = vmatmul.mubr.f32.gmra.mxu0 %v1915
        %v2113 = vpop.f32.mrf.mxu0
        %v2114 = vadd.f32 0.0, %v2113
        %v2115 = vpop.f32.mrf.mxu0
        %2116 = vmatprep.mubr.f32.mxu0 0.0
        %2117 = vmatmul.mubr.f32.gmra.mxu0 %v1918
        %v2118 = vpop.f32.mrf.mxu0
        %v2119 = vadd.f32 0.0, %v2118
        %v2120 = vpop.f32.mrf.mxu0
        %2121 = vmatprep.mubr.f32.mxu0 0.0
        %2122 = vmatmul.mubr.f32.gmra.mxu0 %v1921
        %v2123 = vpop.f32.mrf.mxu0
        %v2124 = vadd.f32 0.0, %v2123
        %v2125 = vpop.f32.mrf.mxu0
        %2126 = vmatprep.mubr.f32.mxu0 0.0
        %2127 = vmatmul.mubr.f32.gmra.mxu0 %v1924
        %v2128 = vpop.f32.mrf.mxu0
        %v2129 = vadd.f32 0.0, %v2128
        %v2130 = vpop.f32.mrf.mxu0
        %2131 = vmatprep.mubr.f32.mxu0 0.0
        %2132 = vmatmul.mubr.f32.gmra.mxu0 %v1927
        %v2133 = vpop.f32.mrf.mxu0
        %v2134 = vadd.f32 0.0, %v2133
        %v2135 = vpop.f32.mrf.mxu0
        %2136 = vmatprep.mubr.f32.mxu0 0.0
        %2137 = vmatmul.mubr.f32.gmra.mxu0 %v1930
        %v2138 = vpop.f32.mrf.mxu0
        %v2139 = vadd.f32 0.0, %v2138
        %v2140 = vpop.f32.mrf.mxu0
        %2141 = vmatprep.mubr.f32.mxu0 0.0
        %2142 = vmatmul.mubr.f32.gmra.mxu0 %v1933
        %v2143 = vpop.f32.mrf.mxu0
        %v2144 = vadd.f32 0.0, %v2143
        %v2145 = vpop.f32.mrf.mxu0
        %2146 = vmatprep.mubr.f32.mxu0 0.0
        %2147 = vmatmul.mubr.f32.gmra.mxu0 %v1936
        %v2148 = vpop.f32.mrf.mxu0
        %v2149 = vadd.f32 0.0, %v2148
        %v2150 = vpop.f32.mrf.mxu0
        %2151 = vmatprep.mubr.f32.mxu0 0.0
        %2152 = vmatmul.mubr.f32.gmra.mxu0 %v1939
        %v2153 = vpop.f32.mrf.mxu0
        %v2154 = vadd.f32 0.0, %v2153
        %v2155 = vpop.f32.mrf.mxu0
        %2156 = vmatprep.mubr.f32.mxu0 0.0
        %2157 = vmatmul.mubr.f32.gmra.mxu0 %v1942
        %v2158 = vpop.f32.mrf.mxu0
        %v2159 = vadd.f32 0.0, %v2158
        %v2160 = vpop.f32.mrf.mxu0
        %2161 = vmatprep.mubr.f32.mxu0 0.0
        %2162 = vmatmul.mubr.f32.gmra.mxu0 %v1945
        %v2163 = vpop.f32.mrf.mxu0
        %v2164 = vadd.f32 0.0, %v2163
        %v2165 = vpop.f32.mrf.mxu0
        %2166 = vmatprep.mubr.f32.mxu0 0.0
        %2167 = vmatmul.mubr.f32.gmra.mxu0 %v1948
        %v2168 = vpop.f32.mrf.mxu0
        %v2169 = vadd.f32 0.0, %v2168
        %v2170 = vpop.f32.mrf.mxu0
        %2171 = vmatprep.mubr.f32.mxu0 0.0
        %2172 = vmatmul.mubr.f32.gmra.mxu0 %v1951
        %v2173 = vpop.f32.mrf.mxu0
        %v2174 = vadd.f32 0.0, %v2173
        %v2175 = vpop.f32.mrf.mxu0
        %2176 = vmatprep.mubr.f32.mxu0 0.0
        %2177 = vmatmul.mubr.f32.gmra.mxu0 %v1954
        %v2178 = vpop.f32.mrf.mxu0
        %v2179 = vadd.f32 0.0, %v2178
        %v2180 = vpop.f32.mrf.mxu0
        %2181 = vmatprep.mubr.f32.mxu0 0.0
        %2182 = vmatmul.mubr.f32.gmra.mxu0 %v1957
        %v2183 = vpop.f32.mrf.mxu0
        %v2184 = vadd.f32 0.0, %v2183
        %v2185 = vpop.f32.mrf.mxu0
        %2186 = vdwg.mxu0
        %v2187 = vadd.f32 %v1797, %v2029
        %v2188 = vadd.f32 %v1798, %v2034
        %v2189 = vadd.f32 %v1799, %v2039
        %v2190 = vadd.f32 %v1800, %v2044
        %v2191 = vadd.f32 %v1801, %v2049
        %v2192 = vadd.f32 %v1802, %v2054
        %v2193 = vadd.f32 %v1803, %v2059
        %v2194 = vadd.f32 %v1804, %v2064
        %v2195 = vadd.f32 %v1805, %v2069
        %v2196 = vadd.f32 %v1806, %v2074
        %v2197 = vadd.f32 %v1807, %v2079
        %v2198 = vadd.f32 %v1808, %v2084
        %v2199 = vadd.f32 %v1809, %v2089
        %v2200 = vadd.f32 %v1810, %v2094
        %v2201 = vadd.f32 %v1811, %v2099
        %v2202 = vadd.f32 %v1812, %v2104
        %v2203 = vadd.f32 %v1813, %v2109
        %v2204 = vadd.f32 %v1814, %v2114
        %v2205 = vadd.f32 %v1815, %v2119
        %v2206 = vadd.f32 %v1816, %v2124
        %v2207 = vadd.f32 %v1817, %v2129
        %v2208 = vadd.f32 %v1818, %v2134
        %v2209 = vadd.f32 %v1819, %v2139
        %v2210 = vadd.f32 %v1820, %v2144
        %v2211 = vadd.f32 %v1821, %v2149
        %v2212 = vadd.f32 %v1822, %v2154
        %v2213 = vadd.f32 %v1823, %v2159
        %v2214 = vadd.f32 %v1824, %v2164
        %v2215 = vadd.f32 %v1825, %v2169
        %v2216 = vadd.f32 %v1826, %v2174
        %v2217 = vadd.f32 %v1827, %v2179
        %v2218 = vadd.f32 %v1828, %v2184
        %v2219 = vld [vmem:[%s1438 + $0x2] sm:$0xff]
        %v2220 = vld [vmem:[%s1438 + $0xa] sm:$0xff]
        %v2221 = vld [vmem:[%s1438 + $0x1a] sm:$0xff]
        %v2222 = vld [vmem:[%s1438 + $0x22] sm:$0xff]
        %v2223 = vld [vmem:[%s1438 + $0x32] sm:$0xff]
        %v2224 = vld [vmem:[%s1438 + $0x3a] sm:$0xff]
        %v2225 = vld [vmem:[%s1438 + $0x4a] sm:$0xff]
        %v2226 = vld [vmem:[%s1438 + $0x52] sm:$0xff]
        %v2227 = vld [vmem:[%s1438 + $0x62] sm:$0xff]
        %v2228 = vld [vmem:[%s1438 + $0x6a] sm:$0xff]
        %v2229 = vld [vmem:[%s1438 + $0x7a] sm:$0xff]
        %v2230 = vld [vmem:[%s1438 + $0x82] sm:$0xff]
        %v2231 = vld [vmem:[%s1438 + $0x92] sm:$0xff]
        %v2232 = vld [vmem:[%s1438 + $0x9a] sm:$0xff]
        %v2233 = vld [vmem:[%s1438 + $0xaa] sm:$0xff]
        %v2234 = vld [vmem:[%s1438 + $0xb2] sm:$0xff]
        %v2235 = vld [vmem:[%s1438 + $0xc2] sm:$0xff]
        %v2236 = vld [vmem:[%s1438 + $0xca] sm:$0xff]
        %v2237 = vld [vmem:[%s1438 + $0xda] sm:$0xff]
        %v2238 = vld [vmem:[%s1438 + $0xe2] sm:$0xff]
        %v2239 = vld [vmem:[%s1438 + $0xf2] sm:$0xff]
        %v2240 = vld [vmem:[%s1438 + $0xfa] sm:$0xff]
        %v2241 = vld [vmem:[%s1438 + $0x10a] sm:$0xff]
        %v2242 = vld [vmem:[%s1438 + $0x112] sm:$0xff]
        %v2243 = vld [vmem:[%s1438 + $0x122] sm:$0xff]
        %v2244 = vld [vmem:[%s1438 + $0x12a] sm:$0xff]
        %v2245 = vld [vmem:[%s1438 + $0x13a] sm:$0xff]
        %v2246 = vld [vmem:[%s1438 + $0x142] sm:$0xff]
        %v2247 = vld [vmem:[%s1438 + $0x152] sm:$0xff]
        %v2248 = vld [vmem:[%s1438 + $0x15a] sm:$0xff]
        %v2249 = vld [vmem:[%s1438 + $0x16a] sm:$0xff]
        %v2250 = vld [vmem:[%s1438 + $0x172] sm:$0xff]
        %s2251 = scalar_lea.vmem %s1, 20
        %v2252 = vld [vmem:[%s2251] sm:$0xf]
        %v2254 = vsel %vm398, %v2219, 0
        %v2257 = vsel %vm398, %v2220, 0
        %v2260 = vsel %vm398, %v2221, 0
        %v2263 = vsel %vm398, %v2222, 0
        %v2266 = vsel %vm398, %v2223, 0
        %v2269 = vsel %vm398, %v2224, 0
        %v2272 = vsel %vm398, %v2225, 0
        %v2275 = vsel %vm398, %v2226, 0
        %v2278 = vsel %vm398, %v2227, 0
        %v2281 = vsel %vm398, %v2228, 0
        %v2284 = vsel %vm398, %v2229, 0
        %v2287 = vsel %vm398, %v2230, 0
        %v2290 = vsel %vm398, %v2231, 0
        %v2293 = vsel %vm398, %v2232, 0
        %v2296 = vsel %vm398, %v2233, 0
        %v2299 = vsel %vm398, %v2234, 0
        %v2302 = vsel %vm398, %v2235, 0
        %v2305 = vsel %vm398, %v2236, 0
        %v2308 = vsel %vm398, %v2237, 0
        %v2311 = vsel %vm398, %v2238, 0
        %v2314 = vsel %vm398, %v2239, 0
        %v2317 = vsel %vm398, %v2240, 0
        %v2320 = vsel %vm398, %v2241, 0
        %v2323 = vsel %vm398, %v2242, 0
        %v2326 = vsel %vm398, %v2243, 0
        %v2329 = vsel %vm398, %v2244, 0
        %v2332 = vsel %vm398, %v2245, 0
        %v2335 = vsel %vm398, %v2246, 0
        %v2338 = vsel %vm398, %v2247, 0
        %v2341 = vsel %vm398, %v2248, 0
        %v2344 = vsel %vm398, %v2249, 0
        %v2347 = vsel %vm398, %v2250, 0
        %v2350 = vsel %vm495, %v2252, 0
        %2352 = vmatprep.subr.mxu0 0.0
        %2353 = vmatpush1.msra.mxu0 0.0
        %2354 = vmatprep.subr.mxu0 0.0
        %2355 = vmatpush1.msra.mxu0 0.0
        %2356 = vmatprep.subr.mxu0 0.0
        %2357 = vmatpush1.msra.mxu0 0.0
        %2358 = vmatprep.subr.mxu0 0.0
        %2359 = vmatpush1.msra.mxu0 0.0
        %2360 = vmatprep.subr.mxu0 0.0
        %2361 = vmatpush1.msra.mxu0 0.0
        %2362 = vmatprep.subr.mxu0 0.0
        %2363 = vmatpush1.msra.mxu0 0.0
        %2364 = vmatprep.subr.mxu0 0.0
        %2365 = vmatpush1.msra.mxu0 0.0
        %2366 = vmatprep.subr.mxu0 0.0
        %2367 = vmatpush1.msra.mxu0 0.0
        %2368 = vmatprep.subr.mxu0 0.0
        %2369 = vmatpush1.msra.mxu0 0.0
        %2370 = vmatprep.subr.mxu0 0.0
        %2371 = vmatpush1.msra.mxu0 0.0
        %2372 = vmatprep.subr.mxu0 0.0
        %2373 = vmatpush1.msra.mxu0 0.0
        %2374 = vmatprep.subr.mxu0 0.0
        %2375 = vmatpush1.msra.mxu0 0.0
        %2376 = vmatprep.subr.mxu0 0.0
        %2377 = vmatpush1.msra.mxu0 0.0
        %2378 = vmatprep.subr.mxu0 0.0
        %2379 = vmatpush1.msra.mxu0 0.0
        %2380 = vmatprep.subr.mxu0 0.0
        %2381 = vmatpush1.msra.mxu0 0.0
        %2382 = vmatprep.subr.mxu0 0.0
        %2383 = vmatpush1.msra.mxu0 %v2350
        %2384 = vmatprep.subr.mxu0 0.0
        %2385 = vmatpush2.msra.mxu0 0.0
        %2386 = vmatprep.subr.mxu0 0.0
        %2387 = vmatpush2.msra.mxu0 0.0
        %2388 = vmatprep.subr.mxu0 0.0
        %2389 = vmatpush2.msra.mxu0 0.0
        %2390 = vmatprep.subr.mxu0 0.0
        %2391 = vmatpush2.msra.mxu0 0.0
        %2392 = vmatprep.subr.mxu0 0.0
        %2393 = vmatpush2.msra.mxu0 0.0
        %2394 = vmatprep.subr.mxu0 0.0
        %2395 = vmatpush2.msra.mxu0 0.0
        %2396 = vmatprep.subr.mxu0 0.0
        %2397 = vmatpush2.msra.mxu0 0.0
        %2398 = vmatprep.subr.mxu0 0.0
        %2399 = vmatpush2.msra.mxu0 0.0
        %2400 = vmatprep.subr.mxu0 0.0
        %2401 = vmatpush2.msra.mxu0 0.0
        %2402 = vmatprep.subr.mxu0 0.0
        %2403 = vmatpush2.msra.mxu0 0.0
        %2404 = vmatprep.subr.mxu0 0.0
        %2405 = vmatpush2.msra.mxu0 0.0
        %2406 = vmatprep.subr.mxu0 0.0
        %2407 = vmatpush2.msra.mxu0 0.0
        %2408 = vmatprep.subr.mxu0 0.0
        %2409 = vmatpush2.msra.mxu0 0.0
        %2410 = vmatprep.subr.mxu0 0.0
        %2411 = vmatpush2.msra.mxu0 0.0
        %2412 = vmatprep.subr.mxu0 0.0
        %2413 = vmatpush2.msra.mxu0 0.0
        %2414 = vmatprep.subr.mxu0 0.0
        %2415 = vmatpush2.msra.mxu0 0.0
        %2416 = vmatprep.mubr.f32.mxu0 0.0
        %2417 = vmatmul.mubr.f32.gmra.mxu0 %v2254
        %v2418 = vpop.f32.mrf.mxu0
        %v2419 = vadd.f32 0.0, %v2418
        %v2420 = vpop.f32.mrf.mxu0
        %2421 = vmatprep.mubr.f32.mxu0 0.0
        %2422 = vmatmul.mubr.f32.gmra.mxu0 %v2257
        %v2423 = vpop.f32.mrf.mxu0
        %v2424 = vadd.f32 0.0, %v2423
        %v2425 = vpop.f32.mrf.mxu0
        %2426 = vmatprep.mubr.f32.mxu0 0.0
        %2427 = vmatmul.mubr.f32.gmra.mxu0 %v2260
        %v2428 = vpop.f32.mrf.mxu0
        %v2429 = vadd.f32 0.0, %v2428
        %v2430 = vpop.f32.mrf.mxu0
        %2431 = vmatprep.mubr.f32.mxu0 0.0
        %2432 = vmatmul.mubr.f32.gmra.mxu0 %v2263
        %v2433 = vpop.f32.mrf.mxu0
        %v2434 = vadd.f32 0.0, %v2433
        %v2435 = vpop.f32.mrf.mxu0
        %2436 = vmatprep.mubr.f32.mxu0 0.0
        %2437 = vmatmul.mubr.f32.gmra.mxu0 %v2266
        %v2438 = vpop.f32.mrf.mxu0
        %v2439 = vadd.f32 0.0, %v2438
        %v2440 = vpop.f32.mrf.mxu0
        %2441 = vmatprep.mubr.f32.mxu0 0.0
        %2442 = vmatmul.mubr.f32.gmra.mxu0 %v2269
        %v2443 = vpop.f32.mrf.mxu0
        %v2444 = vadd.f32 0.0, %v2443
        %v2445 = vpop.f32.mrf.mxu0
        %2446 = vmatprep.mubr.f32.mxu0 0.0
        %2447 = vmatmul.mubr.f32.gmra.mxu0 %v2272
        %v2448 = vpop.f32.mrf.mxu0
        %v2449 = vadd.f32 0.0, %v2448
        %v2450 = vpop.f32.mrf.mxu0
        %2451 = vmatprep.mubr.f32.mxu0 0.0
        %2452 = vmatmul.mubr.f32.gmra.mxu0 %v2275
        %v2453 = vpop.f32.mrf.mxu0
        %v2454 = vadd.f32 0.0, %v2453
        %v2455 = vpop.f32.mrf.mxu0
        %2456 = vmatprep.mubr.f32.mxu0 0.0
        %2457 = vmatmul.mubr.f32.gmra.mxu0 %v2278
        %v2458 = vpop.f32.mrf.mxu0
        %v2459 = vadd.f32 0.0, %v2458
        %v2460 = vpop.f32.mrf.mxu0
        %2461 = vmatprep.mubr.f32.mxu0 0.0
        %2462 = vmatmul.mubr.f32.gmra.mxu0 %v2281
        %v2463 = vpop.f32.mrf.mxu0
        %v2464 = vadd.f32 0.0, %v2463
        %v2465 = vpop.f32.mrf.mxu0
        %2466 = vmatprep.mubr.f32.mxu0 0.0
        %2467 = vmatmul.mubr.f32.gmra.mxu0 %v2284
        %v2468 = vpop.f32.mrf.mxu0
        %v2469 = vadd.f32 0.0, %v2468
        %v2470 = vpop.f32.mrf.mxu0
        %2471 = vmatprep.mubr.f32.mxu0 0.0
        %2472 = vmatmul.mubr.f32.gmra.mxu0 %v2287
        %v2473 = vpop.f32.mrf.mxu0
        %v2474 = vadd.f32 0.0, %v2473
        %v2475 = vpop.f32.mrf.mxu0
        %2476 = vmatprep.mubr.f32.mxu0 0.0
        %2477 = vmatmul.mubr.f32.gmra.mxu0 %v2290
        %v2478 = vpop.f32.mrf.mxu0
        %v2479 = vadd.f32 0.0, %v2478
        %v2480 = vpop.f32.mrf.mxu0
        %2481 = vmatprep.mubr.f32.mxu0 0.0
        %2482 = vmatmul.mubr.f32.gmra.mxu0 %v2293
        %v2483 = vpop.f32.mrf.mxu0
        %v2484 = vadd.f32 0.0, %v2483
        %v2485 = vpop.f32.mrf.mxu0
        %2486 = vmatprep.mubr.f32.mxu0 0.0
        %2487 = vmatmul.mubr.f32.gmra.mxu0 %v2296
        %v2488 = vpop.f32.mrf.mxu0
        %v2489 = vadd.f32 0.0, %v2488
        %v2490 = vpop.f32.mrf.mxu0
        %2491 = vmatprep.mubr.f32.mxu0 0.0
        %2492 = vmatmul.mubr.f32.gmra.mxu0 %v2299
        %v2493 = vpop.f32.mrf.mxu0
        %v2494 = vadd.f32 0.0, %v2493
        %v2495 = vpop.f32.mrf.mxu0
        %2496 = vmatprep.mubr.f32.mxu0 0.0
        %2497 = vmatmul.mubr.f32.gmra.mxu0 %v2302
        %v2498 = vpop.f32.mrf.mxu0
        %v2499 = vadd.f32 0.0, %v2498
        %v2500 = vpop.f32.mrf.mxu0
        %2501 = vmatprep.mubr.f32.mxu0 0.0
        %2502 = vmatmul.mubr.f32.gmra.mxu0 %v2305
        %v2503 = vpop.f32.mrf.mxu0
        %v2504 = vadd.f32 0.0, %v2503
        %v2505 = vpop.f32.mrf.mxu0
        %2506 = vmatprep.mubr.f32.mxu0 0.0
        %2507 = vmatmul.mubr.f32.gmra.mxu0 %v2308
        %v2508 = vpop.f32.mrf.mxu0
        %v2509 = vadd.f32 0.0, %v2508
        %v2510 = vpop.f32.mrf.mxu0
        %2511 = vmatprep.mubr.f32.mxu0 0.0
        %2512 = vmatmul.mubr.f32.gmra.mxu0 %v2311
        %v2513 = vpop.f32.mrf.mxu0
        %v2514 = vadd.f32 0.0, %v2513
        %v2515 = vpop.f32.mrf.mxu0
        %2516 = vmatprep.mubr.f32.mxu0 0.0
        %2517 = vmatmul.mubr.f32.gmra.mxu0 %v2314
        %v2518 = vpop.f32.mrf.mxu0
        %v2519 = vadd.f32 0.0, %v2518
        %v2520 = vpop.f32.mrf.mxu0
        %2521 = vmatprep.mubr.f32.mxu0 0.0
        %2522 = vmatmul.mubr.f32.gmra.mxu0 %v2317
        %v2523 = vpop.f32.mrf.mxu0
        %v2524 = vadd.f32 0.0, %v2523
        %v2525 = vpop.f32.mrf.mxu0
        %2526 = vmatprep.mubr.f32.mxu0 0.0
        %2527 = vmatmul.mubr.f32.gmra.mxu0 %v2320
        %v2528 = vpop.f32.mrf.mxu0
        %v2529 = vadd.f32 0.0, %v2528
        %v2530 = vpop.f32.mrf.mxu0
        %2531 = vmatprep.mubr.f32.mxu0 0.0
        %2532 = vmatmul.mubr.f32.gmra.mxu0 %v2323
        %v2533 = vpop.f32.mrf.mxu0
        %v2534 = vadd.f32 0.0, %v2533
        %v2535 = vpop.f32.mrf.mxu0
        %2536 = vmatprep.mubr.f32.mxu0 0.0
        %2537 = vmatmul.mubr.f32.gmra.mxu0 %v2326
        %v2538 = vpop.f32.mrf.mxu0
        %v2539 = vadd.f32 0.0, %v2538
        %v2540 = vpop.f32.mrf.mxu0
        %2541 = vmatprep.mubr.f32.mxu0 0.0
        %2542 = vmatmul.mubr.f32.gmra.mxu0 %v2329
        %v2543 = vpop.f32.mrf.mxu0
        %v2544 = vadd.f32 0.0, %v2543
        %v2545 = vpop.f32.mrf.mxu0
        %2546 = vmatprep.mubr.f32.mxu0 0.0
        %2547 = vmatmul.mubr.f32.gmra.mxu0 %v2332
        %v2548 = vpop.f32.mrf.mxu0
        %v2549 = vadd.f32 0.0, %v2548
        %v2550 = vpop.f32.mrf.mxu0
        %2551 = vmatprep.mubr.f32.mxu0 0.0
        %2552 = vmatmul.mubr.f32.gmra.mxu0 %v2335
        %v2553 = vpop.f32.mrf.mxu0
        %v2554 = vadd.f32 0.0, %v2553
        %v2555 = vpop.f32.mrf.mxu0
        %2556 = vmatprep.mubr.f32.mxu0 0.0
        %2557 = vmatmul.mubr.f32.gmra.mxu0 %v2338
        %v2558 = vpop.f32.mrf.mxu0
        %v2559 = vadd.f32 0.0, %v2558
        %v2560 = vpop.f32.mrf.mxu0
        %2561 = vmatprep.mubr.f32.mxu0 0.0
        %2562 = vmatmul.mubr.f32.gmra.mxu0 %v2341
        %v2563 = vpop.f32.mrf.mxu0
        %v2564 = vadd.f32 0.0, %v2563
        %v2565 = vpop.f32.mrf.mxu0
        %2566 = vmatprep.mubr.f32.mxu0 0.0
        %2567 = vmatmul.mubr.f32.gmra.mxu0 %v2344
        %v2568 = vpop.f32.mrf.mxu0
        %v2569 = vadd.f32 0.0, %v2568
        %v2570 = vpop.f32.mrf.mxu0
        %2571 = vmatprep.mubr.f32.mxu0 0.0
        %2572 = vmatmul.mubr.f32.gmra.mxu0 %v2347
        %v2573 = vpop.f32.mrf.mxu0
        %v2574 = vadd.f32 0.0, %v2573
        %v2575 = vpop.f32.mrf.mxu0
        %2576 = vdwg.mxu0
        %v2577 = vadd.f32 %v2187, %v2419
        %v2578 = vadd.f32 %v2188, %v2424
        %v2579 = vadd.f32 %v2189, %v2429
        %v2580 = vadd.f32 %v2190, %v2434
        %v2581 = vadd.f32 %v2191, %v2439
        %v2582 = vadd.f32 %v2192, %v2444
        %v2583 = vadd.f32 %v2193, %v2449
        %v2584 = vadd.f32 %v2194, %v2454
        %v2585 = vadd.f32 %v2195, %v2459
        %v2586 = vadd.f32 %v2196, %v2464
        %v2587 = vadd.f32 %v2197, %v2469
        %v2588 = vadd.f32 %v2198, %v2474
        %v2589 = vadd.f32 %v2199, %v2479
        %v2590 = vadd.f32 %v2200, %v2484
        %v2591 = vadd.f32 %v2201, %v2489
        %v2592 = vadd.f32 %v2202, %v2494
        %v2593 = vadd.f32 %v2203, %v2499
        %v2594 = vadd.f32 %v2204, %v2504
        %v2595 = vadd.f32 %v2205, %v2509
        %v2596 = vadd.f32 %v2206, %v2514
        %v2597 = vadd.f32 %v2207, %v2519
        %v2598 = vadd.f32 %v2208, %v2524
        %v2599 = vadd.f32 %v2209, %v2529
        %v2600 = vadd.f32 %v2210, %v2534
        %v2601 = vadd.f32 %v2211, %v2539
        %v2602 = vadd.f32 %v2212, %v2544
        %v2603 = vadd.f32 %v2213, %v2549
        %v2604 = vadd.f32 %v2214, %v2554
        %v2605 = vadd.f32 %v2215, %v2559
        %v2606 = vadd.f32 %v2216, %v2564
        %v2607 = vadd.f32 %v2217, %v2569
        %v2608 = vadd.f32 %v2218, %v2574
        %s2609 = scalar_lea.vmem %s330, 48
        %v2610 = vld [vmem:[%s2609] sm:$0xff]
        %v2611 = vld [vmem:[%s2609 + $0x8] sm:$0xff]
        %v2612 = vld [vmem:[%s2609 + $0x18] sm:$0xff]
        %v2613 = vld [vmem:[%s2609 + $0x20] sm:$0xff]
        %v2614 = vld [vmem:[%s2609 + $0x30] sm:$0xff]
        %v2615 = vld [vmem:[%s2609 + $0x38] sm:$0xff]
        %v2616 = vld [vmem:[%s2609 + $0x48] sm:$0xff]
        %v2617 = vld [vmem:[%s2609 + $0x50] sm:$0xff]
        %v2618 = vld [vmem:[%s2609 + $0x60] sm:$0xff]
        %v2619 = vld [vmem:[%s2609 + $0x68] sm:$0xff]
        %v2620 = vld [vmem:[%s2609 + $0x78] sm:$0xff]
        %v2621 = vld [vmem:[%s2609 + $0x80] sm:$0xff]
        %v2622 = vld [vmem:[%s2609 + $0x90] sm:$0xff]
        %v2623 = vld [vmem:[%s2609 + $0x98] sm:$0xff]
        %v2624 = vld [vmem:[%s2609 + $0xa8] sm:$0xff]
        %v2625 = vld [vmem:[%s2609 + $0xb0] sm:$0xff]
        %v2626 = vld [vmem:[%s2609 + $0xc0] sm:$0xff]
        %v2627 = vld [vmem:[%s2609 + $0xc8] sm:$0xff]
        %v2628 = vld [vmem:[%s2609 + $0xd8] sm:$0xff]
        %v2629 = vld [vmem:[%s2609 + $0xe0] sm:$0xff]
        %v2630 = vld [vmem:[%s2609 + $0xf0] sm:$0xff]
        %v2631 = vld [vmem:[%s2609 + $0xf8] sm:$0xff]
        %v2632 = vld [vmem:[%s2609 + $0x108] sm:$0xff]
        %v2633 = vld [vmem:[%s2609 + $0x110] sm:$0xff]
        %v2634 = vld [vmem:[%s2609 + $0x120] sm:$0xff]
        %v2635 = vld [vmem:[%s2609 + $0x128] sm:$0xff]
        %v2636 = vld [vmem:[%s2609 + $0x138] sm:$0xff]
        %v2637 = vld [vmem:[%s2609 + $0x140] sm:$0xff]
        %v2638 = vld [vmem:[%s2609 + $0x150] sm:$0xff]
        %v2639 = vld [vmem:[%s2609 + $0x158] sm:$0xff]
        %v2640 = vld [vmem:[%s2609 + $0x168] sm:$0xff]
        %v2641 = vld [vmem:[%s2609 + $0x170] sm:$0xff]
        %s2642 = scalar_lea.vmem %s1, 24
        %v2643 = vld [vmem:[%s2642] sm:$0xf]
        %v2645 = vsel %vm398, %v2610, 0
        %v2648 = vsel %vm398, %v2611, 0
        %v2651 = vsel %vm398, %v2612, 0
        %v2654 = vsel %vm398, %v2613, 0
        %v2657 = vsel %vm398, %v2614, 0
        %v2660 = vsel %vm398, %v2615, 0
        %v2663 = vsel %vm398, %v2616, 0
        %v2666 = vsel %vm398, %v2617, 0
        %v2669 = vsel %vm398, %v2618, 0
        %v2672 = vsel %vm398, %v2619, 0
        %v2675 = vsel %vm398, %v2620, 0
        %v2678 = vsel %vm398, %v2621, 0
        %v2681 = vsel %vm398, %v2622, 0
        %v2684 = vsel %vm398, %v2623, 0
        %v2687 = vsel %vm398, %v2624, 0
        %v2690 = vsel %vm398, %v2625, 0
        %v2693 = vsel %vm398, %v2626, 0
        %v2696 = vsel %vm398, %v2627, 0
        %v2699 = vsel %vm398, %v2628, 0
        %v2702 = vsel %vm398, %v2629, 0
        %v2705 = vsel %vm398, %v2630, 0
        %v2708 = vsel %vm398, %v2631, 0
        %v2711 = vsel %vm398, %v2632, 0
        %v2714 = vsel %vm398, %v2633, 0
        %v2717 = vsel %vm398, %v2634, 0
        %v2720 = vsel %vm398, %v2635, 0
        %v2723 = vsel %vm398, %v2636, 0
        %v2726 = vsel %vm398, %v2637, 0
        %v2729 = vsel %vm398, %v2638, 0
        %v2732 = vsel %vm398, %v2639, 0
        %v2735 = vsel %vm398, %v2640, 0
        %v2738 = vsel %vm398, %v2641, 0
        %v2741 = vsel %vm495, %v2643, 0
        %2743 = vmatprep.subr.mxu0 0.0
        %2744 = vmatpush1.msra.mxu0 0.0
        %2745 = vmatprep.subr.mxu0 0.0
        %2746 = vmatpush1.msra.mxu0 0.0
        %2747 = vmatprep.subr.mxu0 0.0
        %2748 = vmatpush1.msra.mxu0 0.0
        %2749 = vmatprep.subr.mxu0 0.0
        %2750 = vmatpush1.msra.mxu0 0.0
        %2751 = vmatprep.subr.mxu0 0.0
        %2752 = vmatpush1.msra.mxu0 0.0
        %2753 = vmatprep.subr.mxu0 0.0
        %2754 = vmatpush1.msra.mxu0 0.0
        %2755 = vmatprep.subr.mxu0 0.0
        %2756 = vmatpush1.msra.mxu0 0.0
        %2757 = vmatprep.subr.mxu0 0.0
        %2758 = vmatpush1.msra.mxu0 0.0
        %2759 = vmatprep.subr.mxu0 0.0
        %2760 = vmatpush1.msra.mxu0 0.0
        %2761 = vmatprep.subr.mxu0 0.0
        %2762 = vmatpush1.msra.mxu0 0.0
        %2763 = vmatprep.subr.mxu0 0.0
        %2764 = vmatpush1.msra.mxu0 0.0
        %2765 = vmatprep.subr.mxu0 0.0
        %2766 = vmatpush1.msra.mxu0 0.0
        %2767 = vmatprep.subr.mxu0 0.0
        %2768 = vmatpush1.msra.mxu0 0.0
        %2769 = vmatprep.subr.mxu0 0.0
        %2770 = vmatpush1.msra.mxu0 0.0
        %2771 = vmatprep.subr.mxu0 0.0
        %2772 = vmatpush1.msra.mxu0 0.0
        %2773 = vmatprep.subr.mxu0 0.0
        %2774 = vmatpush1.msra.mxu0 %v2741
        %2775 = vmatprep.subr.mxu0 0.0
        %2776 = vmatpush2.msra.mxu0 0.0
        %2777 = vmatprep.subr.mxu0 0.0
        %2778 = vmatpush2.msra.mxu0 0.0
        %2779 = vmatprep.subr.mxu0 0.0
        %2780 = vmatpush2.msra.mxu0 0.0
        %2781 = vmatprep.subr.mxu0 0.0
        %2782 = vmatpush2.msra.mxu0 0.0
        %2783 = vmatprep.subr.mxu0 0.0
        %2784 = vmatpush2.msra.mxu0 0.0
        %2785 = vmatprep.subr.mxu0 0.0
        %2786 = vmatpush2.msra.mxu0 0.0
        %2787 = vmatprep.subr.mxu0 0.0
        %2788 = vmatpush2.msra.mxu0 0.0
        %2789 = vmatprep.subr.mxu0 0.0
        %2790 = vmatpush2.msra.mxu0 0.0
        %2791 = vmatprep.subr.mxu0 0.0
        %2792 = vmatpush2.msra.mxu0 0.0
        %2793 = vmatprep.subr.mxu0 0.0
        %2794 = vmatpush2.msra.mxu0 0.0
        %2795 = vmatprep.subr.mxu0 0.0
        %2796 = vmatpush2.msra.mxu0 0.0
        %2797 = vmatprep.subr.mxu0 0.0
        %2798 = vmatpush2.msra.mxu0 0.0
        %2799 = vmatprep.subr.mxu0 0.0
        %2800 = vmatpush2.msra.mxu0 0.0
        %2801 = vmatprep.subr.mxu0 0.0
        %2802 = vmatpush2.msra.mxu0 0.0
        %2803 = vmatprep.subr.mxu0 0.0
        %2804 = vmatpush2.msra.mxu0 0.0
        %2805 = vmatprep.subr.mxu0 0.0
        %2806 = vmatpush2.msra.mxu0 0.0
        %2807 = vmatprep.mubr.f32.mxu0 0.0
        %2808 = vmatmul.mubr.f32.gmra.mxu0 %v2645
        %v2809 = vpop.f32.mrf.mxu0
        %v2810 = vadd.f32 0.0, %v2809
        %v2811 = vpop.f32.mrf.mxu0
        %2812 = vmatprep.mubr.f32.mxu0 0.0
        %2813 = vmatmul.mubr.f32.gmra.mxu0 %v2648
        %v2814 = vpop.f32.mrf.mxu0
        %v2815 = vadd.f32 0.0, %v2814
        %v2816 = vpop.f32.mrf.mxu0
        %2817 = vmatprep.mubr.f32.mxu0 0.0
        %2818 = vmatmul.mubr.f32.gmra.mxu0 %v2651
        %v2819 = vpop.f32.mrf.mxu0
        %v2820 = vadd.f32 0.0, %v2819
        %v2821 = vpop.f32.mrf.mxu0
        %2822 = vmatprep.mubr.f32.mxu0 0.0
        %2823 = vmatmul.mubr.f32.gmra.mxu0 %v2654
        %v2824 = vpop.f32.mrf.mxu0
        %v2825 = vadd.f32 0.0, %v2824
        %v2826 = vpop.f32.mrf.mxu0
        %2827 = vmatprep.mubr.f32.mxu0 0.0
        %2828 = vmatmul.mubr.f32.gmra.mxu0 %v2657
        %v2829 = vpop.f32.mrf.mxu0
        %v2830 = vadd.f32 0.0, %v2829
        %v2831 = vpop.f32.mrf.mxu0
        %2832 = vmatprep.mubr.f32.mxu0 0.0
        %2833 = vmatmul.mubr.f32.gmra.mxu0 %v2660
        %v2834 = vpop.f32.mrf.mxu0
        %v2835 = vadd.f32 0.0, %v2834
        %v2836 = vpop.f32.mrf.mxu0
        %2837 = vmatprep.mubr.f32.mxu0 0.0
        %2838 = vmatmul.mubr.f32.gmra.mxu0 %v2663
        %v2839 = vpop.f32.mrf.mxu0
        %v2840 = vadd.f32 0.0, %v2839
        %v2841 = vpop.f32.mrf.mxu0
        %2842 = vmatprep.mubr.f32.mxu0 0.0
        %2843 = vmatmul.mubr.f32.gmra.mxu0 %v2666
        %v2844 = vpop.f32.mrf.mxu0
        %v2845 = vadd.f32 0.0, %v2844
        %v2846 = vpop.f32.mrf.mxu0
        %2847 = vmatprep.mubr.f32.mxu0 0.0
        %2848 = vmatmul.mubr.f32.gmra.mxu0 %v2669
        %v2849 = vpop.f32.mrf.mxu0
        %v2850 = vadd.f32 0.0, %v2849
        %v2851 = vpop.f32.mrf.mxu0
        %2852 = vmatprep.mubr.f32.mxu0 0.0
        %2853 = vmatmul.mubr.f32.gmra.mxu0 %v2672
        %v2854 = vpop.f32.mrf.mxu0
        %v2855 = vadd.f32 0.0, %v2854
        %v2856 = vpop.f32.mrf.mxu0
        %2857 = vmatprep.mubr.f32.mxu0 0.0
        %2858 = vmatmul.mubr.f32.gmra.mxu0 %v2675
        %v2859 = vpop.f32.mrf.mxu0
        %v2860 = vadd.f32 0.0, %v2859
        %v2861 = vpop.f32.mrf.mxu0
        %2862 = vmatprep.mubr.f32.mxu0 0.0
        %2863 = vmatmul.mubr.f32.gmra.mxu0 %v2678
        %v2864 = vpop.f32.mrf.mxu0
        %v2865 = vadd.f32 0.0, %v2864
        %v2866 = vpop.f32.mrf.mxu0
        %2867 = vmatprep.mubr.f32.mxu0 0.0
        %2868 = vmatmul.mubr.f32.gmra.mxu0 %v2681
        %v2869 = vpop.f32.mrf.mxu0
        %v2870 = vadd.f32 0.0, %v2869
        %v2871 = vpop.f32.mrf.mxu0
        %2872 = vmatprep.mubr.f32.mxu0 0.0
        %2873 = vmatmul.mubr.f32.gmra.mxu0 %v2684
        %v2874 = vpop.f32.mrf.mxu0
        %v2875 = vadd.f32 0.0, %v2874
        %v2876 = vpop.f32.mrf.mxu0
        %2877 = vmatprep.mubr.f32.mxu0 0.0
        %2878 = vmatmul.mubr.f32.gmra.mxu0 %v2687
        %v2879 = vpop.f32.mrf.mxu0
        %v2880 = vadd.f32 0.0, %v2879
        %v2881 = vpop.f32.mrf.mxu0
        %2882 = vmatprep.mubr.f32.mxu0 0.0
        %2883 = vmatmul.mubr.f32.gmra.mxu0 %v2690
        %v2884 = vpop.f32.mrf.mxu0
        %v2885 = vadd.f32 0.0, %v2884
        %v2886 = vpop.f32.mrf.mxu0
        %2887 = vmatprep.mubr.f32.mxu0 0.0
        %2888 = vmatmul.mubr.f32.gmra.mxu0 %v2693
        %v2889 = vpop.f32.mrf.mxu0
        %v2890 = vadd.f32 0.0, %v2889
        %v2891 = vpop.f32.mrf.mxu0
        %2892 = vmatprep.mubr.f32.mxu0 0.0
        %2893 = vmatmul.mubr.f32.gmra.mxu0 %v2696
        %v2894 = vpop.f32.mrf.mxu0
        %v2895 = vadd.f32 0.0, %v2894
        %v2896 = vpop.f32.mrf.mxu0
        %2897 = vmatprep.mubr.f32.mxu0 0.0
        %2898 = vmatmul.mubr.f32.gmra.mxu0 %v2699
        %v2899 = vpop.f32.mrf.mxu0
        %v2900 = vadd.f32 0.0, %v2899
        %v2901 = vpop.f32.mrf.mxu0
        %2902 = vmatprep.mubr.f32.mxu0 0.0
        %2903 = vmatmul.mubr.f32.gmra.mxu0 %v2702
        %v2904 = vpop.f32.mrf.mxu0
        %v2905 = vadd.f32 0.0, %v2904
        %v2906 = vpop.f32.mrf.mxu0
        %2907 = vmatprep.mubr.f32.mxu0 0.0
        %2908 = vmatmul.mubr.f32.gmra.mxu0 %v2705
        %v2909 = vpop.f32.mrf.mxu0
        %v2910 = vadd.f32 0.0, %v2909
        %v2911 = vpop.f32.mrf.mxu0
        %2912 = vmatprep.mubr.f32.mxu0 0.0
        %2913 = vmatmul.mubr.f32.gmra.mxu0 %v2708
        %v2914 = vpop.f32.mrf.mxu0
        %v2915 = vadd.f32 0.0, %v2914
        %v2916 = vpop.f32.mrf.mxu0
        %2917 = vmatprep.mubr.f32.mxu0 0.0
        %2918 = vmatmul.mubr.f32.gmra.mxu0 %v2711
        %v2919 = vpop.f32.mrf.mxu0
        %v2920 = vadd.f32 0.0, %v2919
        %v2921 = vpop.f32.mrf.mxu0
        %2922 = vmatprep.mubr.f32.mxu0 0.0
        %2923 = vmatmul.mubr.f32.gmra.mxu0 %v2714
        %v2924 = vpop.f32.mrf.mxu0
        %v2925 = vadd.f32 0.0, %v2924
        %v2926 = vpop.f32.mrf.mxu0
        %2927 = vmatprep.mubr.f32.mxu0 0.0
        %2928 = vmatmul.mubr.f32.gmra.mxu0 %v2717
        %v2929 = vpop.f32.mrf.mxu0
        %v2930 = vadd.f32 0.0, %v2929
        %v2931 = vpop.f32.mrf.mxu0
        %2932 = vmatprep.mubr.f32.mxu0 0.0
        %2933 = vmatmul.mubr.f32.gmra.mxu0 %v2720
        %v2934 = vpop.f32.mrf.mxu0
        %v2935 = vadd.f32 0.0, %v2934
        %v2936 = vpop.f32.mrf.mxu0
        %2937 = vmatprep.mubr.f32.mxu0 0.0
        %2938 = vmatmul.mubr.f32.gmra.mxu0 %v2723
        %v2939 = vpop.f32.mrf.mxu0
        %v2940 = vadd.f32 0.0, %v2939
        %v2941 = vpop.f32.mrf.mxu0
        %2942 = vmatprep.mubr.f32.mxu0 0.0
        %2943 = vmatmul.mubr.f32.gmra.mxu0 %v2726
        %v2944 = vpop.f32.mrf.mxu0
        %v2945 = vadd.f32 0.0, %v2944
        %v2946 = vpop.f32.mrf.mxu0
        %2947 = vmatprep.mubr.f32.mxu0 0.0
        %2948 = vmatmul.mubr.f32.gmra.mxu0 %v2729
        %v2949 = vpop.f32.mrf.mxu0
        %v2950 = vadd.f32 0.0, %v2949
        %v2951 = vpop.f32.mrf.mxu0
        %2952 = vmatprep.mubr.f32.mxu0 0.0
        %2953 = vmatmul.mubr.f32.gmra.mxu0 %v2732
        %v2954 = vpop.f32.mrf.mxu0
        %v2955 = vadd.f32 0.0, %v2954
        %v2956 = vpop.f32.mrf.mxu0
        %2957 = vmatprep.mubr.f32.mxu0 0.0
        %2958 = vmatmul.mubr.f32.gmra.mxu0 %v2735
        %v2959 = vpop.f32.mrf.mxu0
        %v2960 = vadd.f32 0.0, %v2959
        %v2961 = vpop.f32.mrf.mxu0
        %2962 = vmatprep.mubr.f32.mxu0 0.0
        %2963 = vmatmul.mubr.f32.gmra.mxu0 %v2738
        %v2964 = vpop.f32.mrf.mxu0
        %v2965 = vadd.f32 0.0, %v2964
        %v2966 = vpop.f32.mrf.mxu0
        %2967 = vdwg.mxu0
        %v2968 = vadd.f32 %v2577, %v2810
        %v2969 = vadd.f32 %v2578, %v2815
        %v2970 = vadd.f32 %v2579, %v2820
        %v2971 = vadd.f32 %v2580, %v2825
        %v2972 = vadd.f32 %v2581, %v2830
        %v2973 = vadd.f32 %v2582, %v2835
        %v2974 = vadd.f32 %v2583, %v2840
        %v2975 = vadd.f32 %v2584, %v2845
        %v2976 = vadd.f32 %v2585, %v2850
        %v2977 = vadd.f32 %v2586, %v2855
        %v2978 = vadd.f32 %v2587, %v2860
        %v2979 = vadd.f32 %v2588, %v2865
        %v2980 = vadd.f32 %v2589, %v2870
        %v2981 = vadd.f32 %v2590, %v2875
        %v2982 = vadd.f32 %v2591, %v2880
        %v2983 = vadd.f32 %v2592, %v2885
        %v2984 = vadd.f32 %v2593, %v2890
        %v2985 = vadd.f32 %v2594, %v2895
        %v2986 = vadd.f32 %v2595, %v2900
        %v2987 = vadd.f32 %v2596, %v2905
        %v2988 = vadd.f32 %v2597, %v2910
        %v2989 = vadd.f32 %v2598, %v2915
        %v2990 = vadd.f32 %v2599, %v2920
        %v2991 = vadd.f32 %v2600, %v2925
        %v2992 = vadd.f32 %v2601, %v2930
        %v2993 = vadd.f32 %v2602, %v2935
        %v2994 = vadd.f32 %v2603, %v2940
        %v2995 = vadd.f32 %v2604, %v2945
        %v2996 = vadd.f32 %v2605, %v2950
        %v2997 = vadd.f32 %v2606, %v2955
        %v2998 = vadd.f32 %v2607, %v2960
        %v2999 = vadd.f32 %v2608, %v2965
        %v3000 = vld [vmem:[%s2609 + $0x1] sm:$0xff]
        %v3001 = vld [vmem:[%s2609 + $0x9] sm:$0xff]
        %v3002 = vld [vmem:[%s2609 + $0x19] sm:$0xff]
        %v3003 = vld [vmem:[%s2609 + $0x21] sm:$0xff]
        %v3004 = vld [vmem:[%s2609 + $0x31] sm:$0xff]
        %v3005 = vld [vmem:[%s2609 + $0x39] sm:$0xff]
        %v3006 = vld [vmem:[%s2609 + $0x49] sm:$0xff]
        %v3007 = vld [vmem:[%s2609 + $0x51] sm:$0xff]
        %v3008 = vld [vmem:[%s2609 + $0x61] sm:$0xff]
        %v3009 = vld [vmem:[%s2609 + $0x69] sm:$0xff]
        %v3010 = vld [vmem:[%s2609 + $0x79] sm:$0xff]
        %v3011 = vld [vmem:[%s2609 + $0x81] sm:$0xff]
        %v3012 = vld [vmem:[%s2609 + $0x91] sm:$0xff]
        %v3013 = vld [vmem:[%s2609 + $0x99] sm:$0xff]
        %v3014 = vld [vmem:[%s2609 + $0xa9] sm:$0xff]
        %v3015 = vld [vmem:[%s2609 + $0xb1] sm:$0xff]
        %v3016 = vld [vmem:[%s2609 + $0xc1] sm:$0xff]
        %v3017 = vld [vmem:[%s2609 + $0xc9] sm:$0xff]
        %v3018 = vld [vmem:[%s2609 + $0xd9] sm:$0xff]
        %v3019 = vld [vmem:[%s2609 + $0xe1] sm:$0xff]
        %v3020 = vld [vmem:[%s2609 + $0xf1] sm:$0xff]
        %v3021 = vld [vmem:[%s2609 + $0xf9] sm:$0xff]
        %v3022 = vld [vmem:[%s2609 + $0x109] sm:$0xff]
        %v3023 = vld [vmem:[%s2609 + $0x111] sm:$0xff]
        %v3024 = vld [vmem:[%s2609 + $0x121] sm:$0xff]
        %v3025 = vld [vmem:[%s2609 + $0x129] sm:$0xff]
        %v3026 = vld [vmem:[%s2609 + $0x139] sm:$0xff]
        %v3027 = vld [vmem:[%s2609 + $0x141] sm:$0xff]
        %v3028 = vld [vmem:[%s2609 + $0x151] sm:$0xff]
        %v3029 = vld [vmem:[%s2609 + $0x159] sm:$0xff]
        %v3030 = vld [vmem:[%s2609 + $0x169] sm:$0xff]
        %v3031 = vld [vmem:[%s2609 + $0x171] sm:$0xff]
        %s3032 = scalar_lea.vmem %s1, 28
        %v3033 = vld [vmem:[%s3032] sm:$0xf]
        %v3035 = vsel %vm398, %v3000, 0
        %v3038 = vsel %vm398, %v3001, 0
        %v3041 = vsel %vm398, %v3002, 0
        %v3044 = vsel %vm398, %v3003, 0
        %v3047 = vsel %vm398, %v3004, 0
        %v3050 = vsel %vm398, %v3005, 0
        %v3053 = vsel %vm398, %v3006, 0
        %v3056 = vsel %vm398, %v3007, 0
        %v3059 = vsel %vm398, %v3008, 0
        %v3062 = vsel %vm398, %v3009, 0
        %v3065 = vsel %vm398, %v3010, 0
        %v3068 = vsel %vm398, %v3011, 0
        %v3071 = vsel %vm398, %v3012, 0
        %v3074 = vsel %vm398, %v3013, 0
        %v3077 = vsel %vm398, %v3014, 0
        %v3080 = vsel %vm398, %v3015, 0
        %v3083 = vsel %vm398, %v3016, 0
        %v3086 = vsel %vm398, %v3017, 0
        %v3089 = vsel %vm398, %v3018, 0
        %v3092 = vsel %vm398, %v3019, 0
        %v3095 = vsel %vm398, %v3020, 0
        %v3098 = vsel %vm398, %v3021, 0
        %v3101 = vsel %vm398, %v3022, 0
        %v3104 = vsel %vm398, %v3023, 0
        %v3107 = vsel %vm398, %v3024, 0
        %v3110 = vsel %vm398, %v3025, 0
        %v3113 = vsel %vm398, %v3026, 0
        %v3116 = vsel %vm398, %v3027, 0
        %v3119 = vsel %vm398, %v3028, 0
        %v3122 = vsel %vm398, %v3029, 0
        %v3125 = vsel %vm398, %v3030, 0
        %v3128 = vsel %vm398, %v3031, 0
        %v3131 = vsel %vm495, %v3033, 0
        %3133 = vmatprep.subr.mxu0 0.0
        %3134 = vmatpush1.msra.mxu0 0.0
        %3135 = vmatprep.subr.mxu0 0.0
        %3136 = vmatpush1.msra.mxu0 0.0
        %3137 = vmatprep.subr.mxu0 0.0
        %3138 = vmatpush1.msra.mxu0 0.0
        %3139 = vmatprep.subr.mxu0 0.0
        %3140 = vmatpush1.msra.mxu0 0.0
        %3141 = vmatprep.subr.mxu0 0.0
        %3142 = vmatpush1.msra.mxu0 0.0
        %3143 = vmatprep.subr.mxu0 0.0
        %3144 = vmatpush1.msra.mxu0 0.0
        %3145 = vmatprep.subr.mxu0 0.0
        %3146 = vmatpush1.msra.mxu0 0.0
        %3147 = vmatprep.subr.mxu0 0.0
        %3148 = vmatpush1.msra.mxu0 0.0
        %3149 = vmatprep.subr.mxu0 0.0
        %3150 = vmatpush1.msra.mxu0 0.0
        %3151 = vmatprep.subr.mxu0 0.0
        %3152 = vmatpush1.msra.mxu0 0.0
        %3153 = vmatprep.subr.mxu0 0.0
        %3154 = vmatpush1.msra.mxu0 0.0
        %3155 = vmatprep.subr.mxu0 0.0
        %3156 = vmatpush1.msra.mxu0 0.0
        %3157 = vmatprep.subr.mxu0 0.0
        %3158 = vmatpush1.msra.mxu0 0.0
        %3159 = vmatprep.subr.mxu0 0.0
        %3160 = vmatpush1.msra.mxu0 0.0
        %3161 = vmatprep.subr.mxu0 0.0
        %3162 = vmatpush1.msra.mxu0 0.0
        %3163 = vmatprep.subr.mxu0 0.0
        %3164 = vmatpush1.msra.mxu0 %v3131
        %3165 = vmatprep.subr.mxu0 0.0
        %3166 = vmatpush2.msra.mxu0 0.0
        %3167 = vmatprep.subr.mxu0 0.0
        %3168 = vmatpush2.msra.mxu0 0.0
        %3169 = vmatprep.subr.mxu0 0.0
        %3170 = vmatpush2.msra.mxu0 0.0
        %3171 = vmatprep.subr.mxu0 0.0
        %3172 = vmatpush2.msra.mxu0 0.0
        %3173 = vmatprep.subr.mxu0 0.0
        %3174 = vmatpush2.msra.mxu0 0.0
        %3175 = vmatprep.subr.mxu0 0.0
        %3176 = vmatpush2.msra.mxu0 0.0
        %3177 = vmatprep.subr.mxu0 0.0
        %3178 = vmatpush2.msra.mxu0 0.0
        %3179 = vmatprep.subr.mxu0 0.0
        %3180 = vmatpush2.msra.mxu0 0.0
        %3181 = vmatprep.subr.mxu0 0.0
        %3182 = vmatpush2.msra.mxu0 0.0
        %3183 = vmatprep.subr.mxu0 0.0
        %3184 = vmatpush2.msra.mxu0 0.0
        %3185 = vmatprep.subr.mxu0 0.0
        %3186 = vmatpush2.msra.mxu0 0.0
        %3187 = vmatprep.subr.mxu0 0.0
        %3188 = vmatpush2.msra.mxu0 0.0
        %3189 = vmatprep.subr.mxu0 0.0
        %3190 = vmatpush2.msra.mxu0 0.0
        %3191 = vmatprep.subr.mxu0 0.0
        %3192 = vmatpush2.msra.mxu0 0.0
        %3193 = vmatprep.subr.mxu0 0.0
        %3194 = vmatpush2.msra.mxu0 0.0
        %3195 = vmatprep.subr.mxu0 0.0
        %3196 = vmatpush2.msra.mxu0 0.0
        %3197 = vmatprep.mubr.f32.mxu0 0.0
        %3198 = vmatmul.mubr.f32.gmra.mxu0 %v3035
        %v3199 = vpop.f32.mrf.mxu0
        %v3200 = vadd.f32 0.0, %v3199
        %v3201 = vpop.f32.mrf.mxu0
        %3202 = vmatprep.mubr.f32.mxu0 0.0
        %3203 = vmatmul.mubr.f32.gmra.mxu0 %v3038
        %v3204 = vpop.f32.mrf.mxu0
        %v3205 = vadd.f32 0.0, %v3204
        %v3206 = vpop.f32.mrf.mxu0
        %3207 = vmatprep.mubr.f32.mxu0 0.0
        %3208 = vmatmul.mubr.f32.gmra.mxu0 %v3041
        %v3209 = vpop.f32.mrf.mxu0
        %v3210 = vadd.f32 0.0, %v3209
        %v3211 = vpop.f32.mrf.mxu0
        %3212 = vmatprep.mubr.f32.mxu0 0.0
        %3213 = vmatmul.mubr.f32.gmra.mxu0 %v3044
        %v3214 = vpop.f32.mrf.mxu0
        %v3215 = vadd.f32 0.0, %v3214
        %v3216 = vpop.f32.mrf.mxu0
        %3217 = vmatprep.mubr.f32.mxu0 0.0
        %3218 = vmatmul.mubr.f32.gmra.mxu0 %v3047
        %v3219 = vpop.f32.mrf.mxu0
        %v3220 = vadd.f32 0.0, %v3219
        %v3221 = vpop.f32.mrf.mxu0
        %3222 = vmatprep.mubr.f32.mxu0 0.0
        %3223 = vmatmul.mubr.f32.gmra.mxu0 %v3050
        %v3224 = vpop.f32.mrf.mxu0
        %v3225 = vadd.f32 0.0, %v3224
        %v3226 = vpop.f32.mrf.mxu0
        %3227 = vmatprep.mubr.f32.mxu0 0.0
        %3228 = vmatmul.mubr.f32.gmra.mxu0 %v3053
        %v3229 = vpop.f32.mrf.mxu0
        %v3230 = vadd.f32 0.0, %v3229
        %v3231 = vpop.f32.mrf.mxu0
        %3232 = vmatprep.mubr.f32.mxu0 0.0
        %3233 = vmatmul.mubr.f32.gmra.mxu0 %v3056
        %v3234 = vpop.f32.mrf.mxu0
        %v3235 = vadd.f32 0.0, %v3234
        %v3236 = vpop.f32.mrf.mxu0
        %3237 = vmatprep.mubr.f32.mxu0 0.0
        %3238 = vmatmul.mubr.f32.gmra.mxu0 %v3059
        %v3239 = vpop.f32.mrf.mxu0
        %v3240 = vadd.f32 0.0, %v3239
        %v3241 = vpop.f32.mrf.mxu0
        %3242 = vmatprep.mubr.f32.mxu0 0.0
        %3243 = vmatmul.mubr.f32.gmra.mxu0 %v3062
        %v3244 = vpop.f32.mrf.mxu0
        %v3245 = vadd.f32 0.0, %v3244
        %v3246 = vpop.f32.mrf.mxu0
        %3247 = vmatprep.mubr.f32.mxu0 0.0
        %3248 = vmatmul.mubr.f32.gmra.mxu0 %v3065
        %v3249 = vpop.f32.mrf.mxu0
        %v3250 = vadd.f32 0.0, %v3249
        %v3251 = vpop.f32.mrf.mxu0
        %3252 = vmatprep.mubr.f32.mxu0 0.0
        %3253 = vmatmul.mubr.f32.gmra.mxu0 %v3068
        %v3254 = vpop.f32.mrf.mxu0
        %v3255 = vadd.f32 0.0, %v3254
        %v3256 = vpop.f32.mrf.mxu0
        %3257 = vmatprep.mubr.f32.mxu0 0.0
        %3258 = vmatmul.mubr.f32.gmra.mxu0 %v3071
        %v3259 = vpop.f32.mrf.mxu0
        %v3260 = vadd.f32 0.0, %v3259
        %v3261 = vpop.f32.mrf.mxu0
        %3262 = vmatprep.mubr.f32.mxu0 0.0
        %3263 = vmatmul.mubr.f32.gmra.mxu0 %v3074
        %v3264 = vpop.f32.mrf.mxu0
        %v3265 = vadd.f32 0.0, %v3264
        %v3266 = vpop.f32.mrf.mxu0
        %3267 = vmatprep.mubr.f32.mxu0 0.0
        %3268 = vmatmul.mubr.f32.gmra.mxu0 %v3077
        %v3269 = vpop.f32.mrf.mxu0
        %v3270 = vadd.f32 0.0, %v3269
        %v3271 = vpop.f32.mrf.mxu0
        %3272 = vmatprep.mubr.f32.mxu0 0.0
        %3273 = vmatmul.mubr.f32.gmra.mxu0 %v3080
        %v3274 = vpop.f32.mrf.mxu0
        %v3275 = vadd.f32 0.0, %v3274
        %v3276 = vpop.f32.mrf.mxu0
        %3277 = vmatprep.mubr.f32.mxu0 0.0
        %3278 = vmatmul.mubr.f32.gmra.mxu0 %v3083
        %v3279 = vpop.f32.mrf.mxu0
        %v3280 = vadd.f32 0.0, %v3279
        %v3281 = vpop.f32.mrf.mxu0
        %3282 = vmatprep.mubr.f32.mxu0 0.0
        %3283 = vmatmul.mubr.f32.gmra.mxu0 %v3086
        %v3284 = vpop.f32.mrf.mxu0
        %v3285 = vadd.f32 0.0, %v3284
        %v3286 = vpop.f32.mrf.mxu0
        %3287 = vmatprep.mubr.f32.mxu0 0.0
        %3288 = vmatmul.mubr.f32.gmra.mxu0 %v3089
        %v3289 = vpop.f32.mrf.mxu0
        %v3290 = vadd.f32 0.0, %v3289
        %v3291 = vpop.f32.mrf.mxu0
        %3292 = vmatprep.mubr.f32.mxu0 0.0
        %3293 = vmatmul.mubr.f32.gmra.mxu0 %v3092
        %v3294 = vpop.f32.mrf.mxu0
        %v3295 = vadd.f32 0.0, %v3294
        %v3296 = vpop.f32.mrf.mxu0
        %3297 = vmatprep.mubr.f32.mxu0 0.0
        %3298 = vmatmul.mubr.f32.gmra.mxu0 %v3095
        %v3299 = vpop.f32.mrf.mxu0
        %v3300 = vadd.f32 0.0, %v3299
        %v3301 = vpop.f32.mrf.mxu0
        %3302 = vmatprep.mubr.f32.mxu0 0.0
        %3303 = vmatmul.mubr.f32.gmra.mxu0 %v3098
        %v3304 = vpop.f32.mrf.mxu0
        %v3305 = vadd.f32 0.0, %v3304
        %v3306 = vpop.f32.mrf.mxu0
        %3307 = vmatprep.mubr.f32.mxu0 0.0
        %3308 = vmatmul.mubr.f32.gmra.mxu0 %v3101
        %v3309 = vpop.f32.mrf.mxu0
        %v3310 = vadd.f32 0.0, %v3309
        %v3311 = vpop.f32.mrf.mxu0
        %3312 = vmatprep.mubr.f32.mxu0 0.0
        %3313 = vmatmul.mubr.f32.gmra.mxu0 %v3104
        %v3314 = vpop.f32.mrf.mxu0
        %v3315 = vadd.f32 0.0, %v3314
        %v3316 = vpop.f32.mrf.mxu0
        %3317 = vmatprep.mubr.f32.mxu0 0.0
        %3318 = vmatmul.mubr.f32.gmra.mxu0 %v3107
        %v3319 = vpop.f32.mrf.mxu0
        %v3320 = vadd.f32 0.0, %v3319
        %v3321 = vpop.f32.mrf.mxu0
        %3322 = vmatprep.mubr.f32.mxu0 0.0
        %3323 = vmatmul.mubr.f32.gmra.mxu0 %v3110
        %v3324 = vpop.f32.mrf.mxu0
        %v3325 = vadd.f32 0.0, %v3324
        %v3326 = vpop.f32.mrf.mxu0
        %3327 = vmatprep.mubr.f32.mxu0 0.0
        %3328 = vmatmul.mubr.f32.gmra.mxu0 %v3113
        %v3329 = vpop.f32.mrf.mxu0
        %v3330 = vadd.f32 0.0, %v3329
        %v3331 = vpop.f32.mrf.mxu0
        %3332 = vmatprep.mubr.f32.mxu0 0.0
        %3333 = vmatmul.mubr.f32.gmra.mxu0 %v3116
        %v3334 = vpop.f32.mrf.mxu0
        %v3335 = vadd.f32 0.0, %v3334
        %v3336 = vpop.f32.mrf.mxu0
        %3337 = vmatprep.mubr.f32.mxu0 0.0
        %3338 = vmatmul.mubr.f32.gmra.mxu0 %v3119
        %v3339 = vpop.f32.mrf.mxu0
        %v3340 = vadd.f32 0.0, %v3339
        %v3341 = vpop.f32.mrf.mxu0
        %3342 = vmatprep.mubr.f32.mxu0 0.0
        %3343 = vmatmul.mubr.f32.gmra.mxu0 %v3122
        %v3344 = vpop.f32.mrf.mxu0
        %v3345 = vadd.f32 0.0, %v3344
        %v3346 = vpop.f32.mrf.mxu0
        %3347 = vmatprep.mubr.f32.mxu0 0.0
        %3348 = vmatmul.mubr.f32.gmra.mxu0 %v3125
        %v3349 = vpop.f32.mrf.mxu0
        %v3350 = vadd.f32 0.0, %v3349
        %v3351 = vpop.f32.mrf.mxu0
        %3352 = vmatprep.mubr.f32.mxu0 0.0
        %3353 = vmatmul.mubr.f32.gmra.mxu0 %v3128
        %v3354 = vpop.f32.mrf.mxu0
        %v3355 = vadd.f32 0.0, %v3354
        %v3356 = vpop.f32.mrf.mxu0
        %3357 = vdwg.mxu0
        %v3358 = vadd.f32 %v2968, %v3200
        %v3359 = vadd.f32 %v2969, %v3205
        %v3360 = vadd.f32 %v2970, %v3210
        %v3361 = vadd.f32 %v2971, %v3215
        %v3362 = vadd.f32 %v2972, %v3220
        %v3363 = vadd.f32 %v2973, %v3225
        %v3364 = vadd.f32 %v2974, %v3230
        %v3365 = vadd.f32 %v2975, %v3235
        %v3366 = vadd.f32 %v2976, %v3240
        %v3367 = vadd.f32 %v2977, %v3245
        %v3368 = vadd.f32 %v2978, %v3250
        %v3369 = vadd.f32 %v2979, %v3255
        %v3370 = vadd.f32 %v2980, %v3260
        %v3371 = vadd.f32 %v2981, %v3265
        %v3372 = vadd.f32 %v2982, %v3270
        %v3373 = vadd.f32 %v2983, %v3275
        %v3374 = vadd.f32 %v2984, %v3280
        %v3375 = vadd.f32 %v2985, %v3285
        %v3376 = vadd.f32 %v2986, %v3290
        %v3377 = vadd.f32 %v2987, %v3295
        %v3378 = vadd.f32 %v2988, %v3300
        %v3379 = vadd.f32 %v2989, %v3305
        %v3380 = vadd.f32 %v2990, %v3310
        %v3381 = vadd.f32 %v2991, %v3315
        %v3382 = vadd.f32 %v2992, %v3320
        %v3383 = vadd.f32 %v2993, %v3325
        %v3384 = vadd.f32 %v2994, %v3330
        %v3385 = vadd.f32 %v2995, %v3335
        %v3386 = vadd.f32 %v2996, %v3340
        %v3387 = vadd.f32 %v2997, %v3345
        %v3388 = vadd.f32 %v2998, %v3350
        %v3389 = vadd.f32 %v2999, %v3355
        %v3390 = vld [vmem:[%s2609 + $0x2] sm:$0xff]
        %v3391 = vld [vmem:[%s2609 + $0xa] sm:$0xff]
        %v3392 = vld [vmem:[%s2609 + $0x1a] sm:$0xff]
        %v3393 = vld [vmem:[%s2609 + $0x22] sm:$0xff]
        %v3394 = vld [vmem:[%s2609 + $0x32] sm:$0xff]
        %v3395 = vld [vmem:[%s2609 + $0x3a] sm:$0xff]
        %v3396 = vld [vmem:[%s2609 + $0x4a] sm:$0xff]
        %v3397 = vld [vmem:[%s2609 + $0x52] sm:$0xff]
        %v3398 = vld [vmem:[%s2609 + $0x62] sm:$0xff]
        %v3399 = vld [vmem:[%s2609 + $0x6a] sm:$0xff]
        %v3400 = vld [vmem:[%s2609 + $0x7a] sm:$0xff]
        %v3401 = vld [vmem:[%s2609 + $0x82] sm:$0xff]
        %v3402 = vld [vmem:[%s2609 + $0x92] sm:$0xff]
        %v3403 = vld [vmem:[%s2609 + $0x9a] sm:$0xff]
        %v3404 = vld [vmem:[%s2609 + $0xaa] sm:$0xff]
        %v3405 = vld [vmem:[%s2609 + $0xb2] sm:$0xff]
        %v3406 = vld [vmem:[%s2609 + $0xc2] sm:$0xff]
        %v3407 = vld [vmem:[%s2609 + $0xca] sm:$0xff]
        %v3408 = vld [vmem:[%s2609 + $0xda] sm:$0xff]
        %v3409 = vld [vmem:[%s2609 + $0xe2] sm:$0xff]
        %v3410 = vld [vmem:[%s2609 + $0xf2] sm:$0xff]
        %v3411 = vld [vmem:[%s2609 + $0xfa] sm:$0xff]
        %v3412 = vld [vmem:[%s2609 + $0x10a] sm:$0xff]
        %v3413 = vld [vmem:[%s2609 + $0x112] sm:$0xff]
        %v3414 = vld [vmem:[%s2609 + $0x122] sm:$0xff]
        %v3415 = vld [vmem:[%s2609 + $0x12a] sm:$0xff]
        %v3416 = vld [vmem:[%s2609 + $0x13a] sm:$0xff]
        %v3417 = vld [vmem:[%s2609 + $0x142] sm:$0xff]
        %v3418 = vld [vmem:[%s2609 + $0x152] sm:$0xff]
        %v3419 = vld [vmem:[%s2609 + $0x15a] sm:$0xff]
        %v3420 = vld [vmem:[%s2609 + $0x16a] sm:$0xff]
        %v3421 = vld [vmem:[%s2609 + $0x172] sm:$0xff]
        %s3422 = scalar_lea.vmem %s1, 32
        %v3423 = vld [vmem:[%s3422] sm:$0xf]
        %v3425 = vsel %vm398, %v3390, 0
        %v3428 = vsel %vm398, %v3391, 0
        %v3431 = vsel %vm398, %v3392, 0
        %v3434 = vsel %vm398, %v3393, 0
        %v3437 = vsel %vm398, %v3394, 0
        %v3440 = vsel %vm398, %v3395, 0
        %v3443 = vsel %vm398, %v3396, 0
        %v3446 = vsel %vm398, %v3397, 0
        %v3449 = vsel %vm398, %v3398, 0
        %v3452 = vsel %vm398, %v3399, 0
        %v3455 = vsel %vm398, %v3400, 0
        %v3458 = vsel %vm398, %v3401, 0
        %v3461 = vsel %vm398, %v3402, 0
        %v3464 = vsel %vm398, %v3403, 0
        %v3467 = vsel %vm398, %v3404, 0
        %v3470 = vsel %vm398, %v3405, 0
        %v3473 = vsel %vm398, %v3406, 0
        %v3476 = vsel %vm398, %v3407, 0
        %v3479 = vsel %vm398, %v3408, 0
        %v3482 = vsel %vm398, %v3409, 0
        %v3485 = vsel %vm398, %v3410, 0
        %v3488 = vsel %vm398, %v3411, 0
        %v3491 = vsel %vm398, %v3412, 0
        %v3494 = vsel %vm398, %v3413, 0
        %v3497 = vsel %vm398, %v3414, 0
        %v3500 = vsel %vm398, %v3415, 0
        %v3503 = vsel %vm398, %v3416, 0
        %v3506 = vsel %vm398, %v3417, 0
        %v3509 = vsel %vm398, %v3418, 0
        %v3512 = vsel %vm398, %v3419, 0
        %v3515 = vsel %vm398, %v3420, 0
        %v3518 = vsel %vm398, %v3421, 0
        %v3521 = vsel %vm495, %v3423, 0
        %3523 = vmatprep.subr.mxu0 0.0
        %3524 = vmatpush1.msra.mxu0 0.0
        %3525 = vmatprep.subr.mxu0 0.0
        %3526 = vmatpush1.msra.mxu0 0.0
        %3527 = vmatprep.subr.mxu0 0.0
        %3528 = vmatpush1.msra.mxu0 0.0
        %3529 = vmatprep.subr.mxu0 0.0
        %3530 = vmatpush1.msra.mxu0 0.0
        %3531 = vmatprep.subr.mxu0 0.0
        %3532 = vmatpush1.msra.mxu0 0.0
        %3533 = vmatprep.subr.mxu0 0.0
        %3534 = vmatpush1.msra.mxu0 0.0
        %3535 = vmatprep.subr.mxu0 0.0
        %3536 = vmatpush1.msra.mxu0 0.0
        %3537 = vmatprep.subr.mxu0 0.0
        %3538 = vmatpush1.msra.mxu0 0.0
        %3539 = vmatprep.subr.mxu0 0.0
        %3540 = vmatpush1.msra.mxu0 0.0
        %3541 = vmatprep.subr.mxu0 0.0
        %3542 = vmatpush1.msra.mxu0 0.0
        %3543 = vmatprep.subr.mxu0 0.0
        %3544 = vmatpush1.msra.mxu0 0.0
        %3545 = vmatprep.subr.mxu0 0.0
        %3546 = vmatpush1.msra.mxu0 0.0
        %3547 = vmatprep.subr.mxu0 0.0
        %3548 = vmatpush1.msra.mxu0 0.0
        %3549 = vmatprep.subr.mxu0 0.0
        %3550 = vmatpush1.msra.mxu0 0.0
        %3551 = vmatprep.subr.mxu0 0.0
        %3552 = vmatpush1.msra.mxu0 0.0
        %3553 = vmatprep.subr.mxu0 0.0
        %3554 = vmatpush1.msra.mxu0 %v3521
        %3555 = vmatprep.subr.mxu0 0.0
        %3556 = vmatpush2.msra.mxu0 0.0
        %3557 = vmatprep.subr.mxu0 0.0
        %3558 = vmatpush2.msra.mxu0 0.0
        %3559 = vmatprep.subr.mxu0 0.0
        %3560 = vmatpush2.msra.mxu0 0.0
        %3561 = vmatprep.subr.mxu0 0.0
        %3562 = vmatpush2.msra.mxu0 0.0
        %3563 = vmatprep.subr.mxu0 0.0
        %3564 = vmatpush2.msra.mxu0 0.0
        %3565 = vmatprep.subr.mxu0 0.0
        %3566 = vmatpush2.msra.mxu0 0.0
        %3567 = vmatprep.subr.mxu0 0.0
        %3568 = vmatpush2.msra.mxu0 0.0
        %3569 = vmatprep.subr.mxu0 0.0
        %3570 = vmatpush2.msra.mxu0 0.0
        %3571 = vmatprep.subr.mxu0 0.0
        %3572 = vmatpush2.msra.mxu0 0.0
        %3573 = vmatprep.subr.mxu0 0.0
        %3574 = vmatpush2.msra.mxu0 0.0
        %3575 = vmatprep.subr.mxu0 0.0
        %3576 = vmatpush2.msra.mxu0 0.0
        %3577 = vmatprep.subr.mxu0 0.0
        %3578 = vmatpush2.msra.mxu0 0.0
        %3579 = vmatprep.subr.mxu0 0.0
        %3580 = vmatpush2.msra.mxu0 0.0
        %3581 = vmatprep.subr.mxu0 0.0
        %3582 = vmatpush2.msra.mxu0 0.0
        %3583 = vmatprep.subr.mxu0 0.0
        %3584 = vmatpush2.msra.mxu0 0.0
        %3585 = vmatprep.subr.mxu0 0.0
        %3586 = vmatpush2.msra.mxu0 0.0
        %3587 = vmatprep.mubr.f32.mxu0 0.0
        %3588 = vmatmul.mubr.f32.gmra.mxu0 %v3425
        %v3589 = vpop.f32.mrf.mxu0
        %v3590 = vadd.f32 0.0, %v3589
        %v3591 = vpop.f32.mrf.mxu0
        %3592 = vmatprep.mubr.f32.mxu0 0.0
        %3593 = vmatmul.mubr.f32.gmra.mxu0 %v3428
        %v3594 = vpop.f32.mrf.mxu0
        %v3595 = vadd.f32 0.0, %v3594
        %v3596 = vpop.f32.mrf.mxu0
        %3597 = vmatprep.mubr.f32.mxu0 0.0
        %3598 = vmatmul.mubr.f32.gmra.mxu0 %v3431
        %v3599 = vpop.f32.mrf.mxu0
        %v3600 = vadd.f32 0.0, %v3599
        %v3601 = vpop.f32.mrf.mxu0
        %3602 = vmatprep.mubr.f32.mxu0 0.0
        %3603 = vmatmul.mubr.f32.gmra.mxu0 %v3434
        %v3604 = vpop.f32.mrf.mxu0
        %v3605 = vadd.f32 0.0, %v3604
        %v3606 = vpop.f32.mrf.mxu0
        %3607 = vmatprep.mubr.f32.mxu0 0.0
        %3608 = vmatmul.mubr.f32.gmra.mxu0 %v3437
        %v3609 = vpop.f32.mrf.mxu0
        %v3610 = vadd.f32 0.0, %v3609
        %v3611 = vpop.f32.mrf.mxu0
        %3612 = vmatprep.mubr.f32.mxu0 0.0
        %3613 = vmatmul.mubr.f32.gmra.mxu0 %v3440
        %v3614 = vpop.f32.mrf.mxu0
        %v3615 = vadd.f32 0.0, %v3614
        %v3616 = vpop.f32.mrf.mxu0
        %3617 = vmatprep.mubr.f32.mxu0 0.0
        %3618 = vmatmul.mubr.f32.gmra.mxu0 %v3443
        %v3619 = vpop.f32.mrf.mxu0
        %v3620 = vadd.f32 0.0, %v3619
        %v3621 = vpop.f32.mrf.mxu0
        %3622 = vmatprep.mubr.f32.mxu0 0.0
        %3623 = vmatmul.mubr.f32.gmra.mxu0 %v3446
        %v3624 = vpop.f32.mrf.mxu0
        %v3625 = vadd.f32 0.0, %v3624
        %v3626 = vpop.f32.mrf.mxu0
        %3627 = vmatprep.mubr.f32.mxu0 0.0
        %3628 = vmatmul.mubr.f32.gmra.mxu0 %v3449
        %v3629 = vpop.f32.mrf.mxu0
        %v3630 = vadd.f32 0.0, %v3629
        %v3631 = vpop.f32.mrf.mxu0
        %3632 = vmatprep.mubr.f32.mxu0 0.0
        %3633 = vmatmul.mubr.f32.gmra.mxu0 %v3452
        %v3634 = vpop.f32.mrf.mxu0
        %v3635 = vadd.f32 0.0, %v3634
        %v3636 = vpop.f32.mrf.mxu0
        %3637 = vmatprep.mubr.f32.mxu0 0.0
        %3638 = vmatmul.mubr.f32.gmra.mxu0 %v3455
        %v3639 = vpop.f32.mrf.mxu0
        %v3640 = vadd.f32 0.0, %v3639
        %v3641 = vpop.f32.mrf.mxu0
        %3642 = vmatprep.mubr.f32.mxu0 0.0
        %3643 = vmatmul.mubr.f32.gmra.mxu0 %v3458
        %v3644 = vpop.f32.mrf.mxu0
        %v3645 = vadd.f32 0.0, %v3644
        %v3646 = vpop.f32.mrf.mxu0
        %3647 = vmatprep.mubr.f32.mxu0 0.0
        %3648 = vmatmul.mubr.f32.gmra.mxu0 %v3461
        %v3649 = vpop.f32.mrf.mxu0
        %v3650 = vadd.f32 0.0, %v3649
        %v3651 = vpop.f32.mrf.mxu0
        %3652 = vmatprep.mubr.f32.mxu0 0.0
        %3653 = vmatmul.mubr.f32.gmra.mxu0 %v3464
        %v3654 = vpop.f32.mrf.mxu0
        %v3655 = vadd.f32 0.0, %v3654
        %v3656 = vpop.f32.mrf.mxu0
        %3657 = vmatprep.mubr.f32.mxu0 0.0
        %3658 = vmatmul.mubr.f32.gmra.mxu0 %v3467
        %v3659 = vpop.f32.mrf.mxu0
        %v3660 = vadd.f32 0.0, %v3659
        %v3661 = vpop.f32.mrf.mxu0
        %3662 = vmatprep.mubr.f32.mxu0 0.0
        %3663 = vmatmul.mubr.f32.gmra.mxu0 %v3470
        %v3664 = vpop.f32.mrf.mxu0
        %v3665 = vadd.f32 0.0, %v3664
        %v3666 = vpop.f32.mrf.mxu0
        %3667 = vmatprep.mubr.f32.mxu0 0.0
        %3668 = vmatmul.mubr.f32.gmra.mxu0 %v3473
        %v3669 = vpop.f32.mrf.mxu0
        %v3670 = vadd.f32 0.0, %v3669
        %v3671 = vpop.f32.mrf.mxu0
        %3672 = vmatprep.mubr.f32.mxu0 0.0
        %3673 = vmatmul.mubr.f32.gmra.mxu0 %v3476
        %v3674 = vpop.f32.mrf.mxu0
        %v3675 = vadd.f32 0.0, %v3674
        %v3676 = vpop.f32.mrf.mxu0
        %3677 = vmatprep.mubr.f32.mxu0 0.0
        %3678 = vmatmul.mubr.f32.gmra.mxu0 %v3479
        %v3679 = vpop.f32.mrf.mxu0
        %v3680 = vadd.f32 0.0, %v3679
        %v3681 = vpop.f32.mrf.mxu0
        %3682 = vmatprep.mubr.f32.mxu0 0.0
        %3683 = vmatmul.mubr.f32.gmra.mxu0 %v3482
        %v3684 = vpop.f32.mrf.mxu0
        %v3685 = vadd.f32 0.0, %v3684
        %v3686 = vpop.f32.mrf.mxu0
        %3687 = vmatprep.mubr.f32.mxu0 0.0
        %3688 = vmatmul.mubr.f32.gmra.mxu0 %v3485
        %v3689 = vpop.f32.mrf.mxu0
        %v3690 = vadd.f32 0.0, %v3689
        %v3691 = vpop.f32.mrf.mxu0
        %3692 = vmatprep.mubr.f32.mxu0 0.0
        %3693 = vmatmul.mubr.f32.gmra.mxu0 %v3488
        %v3694 = vpop.f32.mrf.mxu0
        %v3695 = vadd.f32 0.0, %v3694
        %v3696 = vpop.f32.mrf.mxu0
        %3697 = vmatprep.mubr.f32.mxu0 0.0
        %3698 = vmatmul.mubr.f32.gmra.mxu0 %v3491
        %v3699 = vpop.f32.mrf.mxu0
        %v3700 = vadd.f32 0.0, %v3699
        %v3701 = vpop.f32.mrf.mxu0
        %3702 = vmatprep.mubr.f32.mxu0 0.0
        %3703 = vmatmul.mubr.f32.gmra.mxu0 %v3494
        %v3704 = vpop.f32.mrf.mxu0
        %v3705 = vadd.f32 0.0, %v3704
        %v3706 = vpop.f32.mrf.mxu0
        %3707 = vmatprep.mubr.f32.mxu0 0.0
        %3708 = vmatmul.mubr.f32.gmra.mxu0 %v3497
        %v3709 = vpop.f32.mrf.mxu0
        %v3710 = vadd.f32 0.0, %v3709
        %v3711 = vpop.f32.mrf.mxu0
        %3712 = vmatprep.mubr.f32.mxu0 0.0
        %3713 = vmatmul.mubr.f32.gmra.mxu0 %v3500
        %v3714 = vpop.f32.mrf.mxu0
        %v3715 = vadd.f32 0.0, %v3714
        %v3716 = vpop.f32.mrf.mxu0
        %3717 = vmatprep.mubr.f32.mxu0 0.0
        %3718 = vmatmul.mubr.f32.gmra.mxu0 %v3503
        %v3719 = vpop.f32.mrf.mxu0
        %v3720 = vadd.f32 0.0, %v3719
        %v3721 = vpop.f32.mrf.mxu0
        %3722 = vmatprep.mubr.f32.mxu0 0.0
        %3723 = vmatmul.mubr.f32.gmra.mxu0 %v3506
        %v3724 = vpop.f32.mrf.mxu0
        %v3725 = vadd.f32 0.0, %v3724
        %v3726 = vpop.f32.mrf.mxu0
        %3727 = vmatprep.mubr.f32.mxu0 0.0
        %3728 = vmatmul.mubr.f32.gmra.mxu0 %v3509
        %v3729 = vpop.f32.mrf.mxu0
        %v3730 = vadd.f32 0.0, %v3729
        %v3731 = vpop.f32.mrf.mxu0
        %3732 = vmatprep.mubr.f32.mxu0 0.0
        %3733 = vmatmul.mubr.f32.gmra.mxu0 %v3512
        %v3734 = vpop.f32.mrf.mxu0
        %v3735 = vadd.f32 0.0, %v3734
        %v3736 = vpop.f32.mrf.mxu0
        %3737 = vmatprep.mubr.f32.mxu0 0.0
        %3738 = vmatmul.mubr.f32.gmra.mxu0 %v3515
        %v3739 = vpop.f32.mrf.mxu0
        %v3740 = vadd.f32 0.0, %v3739
        %v3741 = vpop.f32.mrf.mxu0
        %3742 = vmatprep.mubr.f32.mxu0 0.0
        %3743 = vmatmul.mubr.f32.gmra.mxu0 %v3518
        %v3744 = vpop.f32.mrf.mxu0
        %v3745 = vadd.f32 0.0, %v3744
        %v3746 = vpop.f32.mrf.mxu0
        %3747 = vdwg.mxu0
        %v3748 = vadd.f32 %v3358, %v3590
        %v3749 = vadd.f32 %v3359, %v3595
        %v3750 = vadd.f32 %v3360, %v3600
        %v3751 = vadd.f32 %v3361, %v3605
        %v3752 = vadd.f32 %v3362, %v3610
        %v3753 = vadd.f32 %v3363, %v3615
        %v3754 = vadd.f32 %v3364, %v3620
        %v3755 = vadd.f32 %v3365, %v3625
        %v3756 = vadd.f32 %v3366, %v3630
        %v3757 = vadd.f32 %v3367, %v3635
        %v3758 = vadd.f32 %v3368, %v3640
        %v3759 = vadd.f32 %v3369, %v3645
        %v3760 = vadd.f32 %v3370, %v3650
        %v3761 = vadd.f32 %v3371, %v3655
        %v3762 = vadd.f32 %v3372, %v3660
        %v3763 = vadd.f32 %v3373, %v3665
        %v3764 = vadd.f32 %v3374, %v3670
        %v3765 = vadd.f32 %v3375, %v3675
        %v3766 = vadd.f32 %v3376, %v3680
        %v3767 = vadd.f32 %v3377, %v3685
        %v3768 = vadd.f32 %v3378, %v3690
        %v3769 = vadd.f32 %v3379, %v3695
        %v3770 = vadd.f32 %v3380, %v3700
        %v3771 = vadd.f32 %v3381, %v3705
        %v3772 = vadd.f32 %v3382, %v3710
        %v3773 = vadd.f32 %v3383, %v3715
        %v3774 = vadd.f32 %v3384, %v3720
        %v3775 = vadd.f32 %v3385, %v3725
        %v3776 = vadd.f32 %v3386, %v3730
        %v3777 = vadd.f32 %v3387, %v3735
        %v3778 = vadd.f32 %v3388, %v3740
        %v3779 = vadd.f32 %v3389, %v3745
        %v3780 = vld [vmem:[%s2] sm:$0x1]
        %v3782 = vlaneseq
        %v3783 = vshrl.u32 %v3782, 7
        %v3784 = vsub.s32 0, %v3783
        %v3785 = vrot.slane %v3780, %v3784
        %v3787 = vadd.f32 %v3748, %v3785
        %v3788 = vadd.f32 %v3749, %v3785
        %v3789 = vadd.f32 %v3750, %v3785
        %v3790 = vadd.f32 %v3751, %v3785
        %v3791 = vadd.f32 %v3752, %v3785
        %v3792 = vadd.f32 %v3753, %v3785
        %v3793 = vadd.f32 %v3754, %v3785
        %v3794 = vadd.f32 %v3755, %v3785
        %v3795 = vadd.f32 %v3756, %v3785
        %v3796 = vadd.f32 %v3757, %v3785
        %v3797 = vadd.f32 %v3758, %v3785
        %v3798 = vadd.f32 %v3759, %v3785
        %v3799 = vadd.f32 %v3760, %v3785
        %v3800 = vadd.f32 %v3761, %v3785
        %v3801 = vadd.f32 %v3762, %v3785
        %v3802 = vadd.f32 %v3763, %v3785
        %v3803 = vadd.f32 %v3764, %v3785
        %v3804 = vadd.f32 %v3765, %v3785
        %v3805 = vadd.f32 %v3766, %v3785
        %v3806 = vadd.f32 %v3767, %v3785
        %v3807 = vadd.f32 %v3768, %v3785
        %v3808 = vadd.f32 %v3769, %v3785
        %v3809 = vadd.f32 %v3770, %v3785
        %v3810 = vadd.f32 %v3771, %v3785
        %v3811 = vadd.f32 %v3772, %v3785
        %v3812 = vadd.f32 %v3773, %v3785
        %v3813 = vadd.f32 %v3774, %v3785
        %v3814 = vadd.f32 %v3775, %v3785
        %v3815 = vadd.f32 %v3776, %v3785
        %v3816 = vadd.f32 %v3777, %v3785
        %v3817 = vadd.f32 %v3778, %v3785
        %v3818 = vadd.f32 %v3779, %v3785
        %vm3819 = vcmask 130048
        %v3820 = vsel %vm3819, %v3787, 0.0
        %v3821 = vsel %vm3819, %v3788, 0.0
        %v3822 = vadd.f32 %v3820, %v3821
        %v3823 = vsel %vm3819, %v3789, 0.0
        %v3824 = vadd.f32 %v3822, %v3823
        %v3825 = vsel %vm3819, %v3790, 0.0
        %v3826 = vadd.f32 %v3824, %v3825
        %v3827 = vsel %vm3819, %v3791, 0.0
        %v3828 = vadd.f32 %v3826, %v3827
        %v3829 = vsel %vm3819, %v3792, 0.0
        %v3830 = vadd.f32 %v3828, %v3829
        %v3831 = vsel %vm3819, %v3793, 0.0
        %v3832 = vadd.f32 %v3830, %v3831
        %v3833 = vsel %vm3819, %v3794, 0.0
        %v3834 = vadd.f32 %v3832, %v3833
        %v3835 = vsel %vm3819, %v3795, 0.0
        %v3836 = vadd.f32 %v3834, %v3835
        %v3837 = vsel %vm3819, %v3796, 0.0
        %v3838 = vadd.f32 %v3836, %v3837
        %v3839 = vsel %vm3819, %v3797, 0.0
        %v3840 = vadd.f32 %v3838, %v3839
        %v3841 = vsel %vm3819, %v3798, 0.0
        %v3842 = vadd.f32 %v3840, %v3841
        %v3843 = vsel %vm3819, %v3799, 0.0
        %v3844 = vadd.f32 %v3842, %v3843
        %v3845 = vsel %vm3819, %v3800, 0.0
        %v3846 = vadd.f32 %v3844, %v3845
        %v3847 = vsel %vm3819, %v3801, 0.0
        %v3848 = vadd.f32 %v3846, %v3847
        %v3849 = vsel %vm3819, %v3802, 0.0
        %v3850 = vadd.f32 %v3848, %v3849
        %v3851 = vsel %vm3819, %v3803, 0.0
        %v3852 = vadd.f32 %v3850, %v3851
        %v3853 = vsel %vm3819, %v3804, 0.0
        %v3854 = vadd.f32 %v3852, %v3853
        %v3855 = vsel %vm3819, %v3805, 0.0
        %v3856 = vadd.f32 %v3854, %v3855
        %v3857 = vsel %vm3819, %v3806, 0.0
        %v3858 = vadd.f32 %v3856, %v3857
        %v3859 = vsel %vm3819, %v3807, 0.0
        %v3860 = vadd.f32 %v3858, %v3859
        %v3861 = vsel %vm3819, %v3808, 0.0
        %v3862 = vadd.f32 %v3860, %v3861
        %v3863 = vsel %vm3819, %v3809, 0.0
        %v3864 = vadd.f32 %v3862, %v3863
        %v3865 = vsel %vm3819, %v3810, 0.0
        %v3866 = vadd.f32 %v3864, %v3865
        %v3867 = vsel %vm3819, %v3811, 0.0
        %v3868 = vadd.f32 %v3866, %v3867
        %v3869 = vsel %vm3819, %v3812, 0.0
        %v3870 = vadd.f32 %v3868, %v3869
        %v3871 = vsel %vm3819, %v3813, 0.0
        %v3872 = vadd.f32 %v3870, %v3871
        %v3873 = vsel %vm3819, %v3814, 0.0
        %v3874 = vadd.f32 %v3872, %v3873
        %v3875 = vsel %vm3819, %v3815, 0.0
        %v3876 = vadd.f32 %v3874, %v3875
        %v3877 = vsel %vm3819, %v3816, 0.0
        %v3878 = vadd.f32 %v3876, %v3877
        %v3879 = vsel %vm3819, %v3817, 0.0
        %v3880 = vadd.f32 %v3878, %v3879
        %v3881 = vsel %vm3819, %v3818, 0.0
        %v3882 = vadd.f32 %v3880, %v3881
        %v3883 = vrot.slane %v3882, 4
        %v3884 = vadd.f32 %v3882, %v3883
        %v3885 = vrot.slane %v3884, 2
        %v3886 = vadd.f32 %v3884, %v3885
        %v3887 = vrot.slane %v3886, 1
        %v3888 = vadd.f32 %v3886, %v3887
        %v3889 = vmul.f32 %v3787, %v3787
        %v3890 = vmul.f32 %v3788, %v3788
        %v3891 = vmul.f32 %v3789, %v3789
        %v3892 = vmul.f32 %v3790, %v3790
        %v3893 = vmul.f32 %v3791, %v3791
        %v3894 = vmul.f32 %v3792, %v3792
        %v3895 = vmul.f32 %v3793, %v3793
        %v3896 = vmul.f32 %v3794, %v3794
        %v3897 = vmul.f32 %v3795, %v3795
        %v3898 = vmul.f32 %v3796, %v3796
        %v3899 = vmul.f32 %v3797, %v3797
        %v3900 = vmul.f32 %v3798, %v3798
        %v3901 = vmul.f32 %v3799, %v3799
        %v3902 = vmul.f32 %v3800, %v3800
        %v3903 = vmul.f32 %v3801, %v3801
        %v3904 = vmul.f32 %v3802, %v3802
        %v3905 = vmul.f32 %v3803, %v3803
        %v3906 = vmul.f32 %v3804, %v3804
        %v3907 = vmul.f32 %v3805, %v3805
        %v3908 = vmul.f32 %v3806, %v3806
        %v3909 = vmul.f32 %v3807, %v3807
        %v3910 = vmul.f32 %v3808, %v3808
        %v3911 = vmul.f32 %v3809, %v3809
        %v3912 = vmul.f32 %v3810, %v3810
        %v3913 = vmul.f32 %v3811, %v3811
        %v3914 = vmul.f32 %v3812, %v3812
        %v3915 = vmul.f32 %v3813, %v3813
        %v3916 = vmul.f32 %v3814, %v3814
        %v3917 = vmul.f32 %v3815, %v3815
        %v3918 = vmul.f32 %v3816, %v3816
        %v3919 = vmul.f32 %v3817, %v3817
        %v3920 = vmul.f32 %v3818, %v3818
        %v3921 = vsel %vm3819, %v3889, 0.0
        %v3922 = vsel %vm3819, %v3890, 0.0
        %v3923 = vadd.f32 %v3921, %v3922
        %v3924 = vsel %vm3819, %v3891, 0.0
        %v3925 = vadd.f32 %v3923, %v3924
        %v3926 = vsel %vm3819, %v3892, 0.0
        %v3927 = vadd.f32 %v3925, %v3926
        %v3928 = vsel %vm3819, %v3893, 0.0
        %v3929 = vadd.f32 %v3927, %v3928
        %v3930 = vsel %vm3819, %v3894, 0.0
        %v3931 = vadd.f32 %v3929, %v3930
        %v3932 = vsel %vm3819, %v3895, 0.0
        %v3933 = vadd.f32 %v3931, %v3932
        %v3934 = vsel %vm3819, %v3896, 0.0
        %v3935 = vadd.f32 %v3933, %v3934
        %v3936 = vsel %vm3819, %v3897, 0.0
        %v3937 = vadd.f32 %v3935, %v3936
        %v3938 = vsel %vm3819, %v3898, 0.0
        %v3939 = vadd.f32 %v3937, %v3938
        %v3940 = vsel %vm3819, %v3899, 0.0
        %v3941 = vadd.f32 %v3939, %v3940
        %v3942 = vsel %vm3819, %v3900, 0.0
        %v3943 = vadd.f32 %v3941, %v3942
        %v3944 = vsel %vm3819, %v3901, 0.0
        %v3945 = vadd.f32 %v3943, %v3944
        %v3946 = vsel %vm3819, %v3902, 0.0
        %v3947 = vadd.f32 %v3945, %v3946
        %v3948 = vsel %vm3819, %v3903, 0.0
        %v3949 = vadd.f32 %v3947, %v3948
        %v3950 = vsel %vm3819, %v3904, 0.0
        %v3951 = vadd.f32 %v3949, %v3950
        %v3952 = vsel %vm3819, %v3905, 0.0
        %v3953 = vadd.f32 %v3951, %v3952
        %v3954 = vsel %vm3819, %v3906, 0.0
        %v3955 = vadd.f32 %v3953, %v3954
        %v3956 = vsel %vm3819, %v3907, 0.0
        %v3957 = vadd.f32 %v3955, %v3956
        %v3958 = vsel %vm3819, %v3908, 0.0
        %v3959 = vadd.f32 %v3957, %v3958
        %v3960 = vsel %vm3819, %v3909, 0.0
        %v3961 = vadd.f32 %v3959, %v3960
        %v3962 = vsel %vm3819, %v3910, 0.0
        %v3963 = vadd.f32 %v3961, %v3962
        %v3964 = vsel %vm3819, %v3911, 0.0
        %v3965 = vadd.f32 %v3963, %v3964
        %v3966 = vsel %vm3819, %v3912, 0.0
        %v3967 = vadd.f32 %v3965, %v3966
        %v3968 = vsel %vm3819, %v3913, 0.0
        %v3969 = vadd.f32 %v3967, %v3968
        %v3970 = vsel %vm3819, %v3914, 0.0
        %v3971 = vadd.f32 %v3969, %v3970
        %v3972 = vsel %vm3819, %v3915, 0.0
        %v3973 = vadd.f32 %v3971, %v3972
        %v3974 = vsel %vm3819, %v3916, 0.0
        %v3975 = vadd.f32 %v3973, %v3974
        %v3976 = vsel %vm3819, %v3917, 0.0
        %v3977 = vadd.f32 %v3975, %v3976
        %v3978 = vsel %vm3819, %v3918, 0.0
        %v3979 = vadd.f32 %v3977, %v3978
        %v3980 = vsel %vm3819, %v3919, 0.0
        %v3981 = vadd.f32 %v3979, %v3980
        %v3982 = vsel %vm3819, %v3920, 0.0
        %v3983 = vadd.f32 %v3981, %v3982
        %v3984 = vrot.slane %v3983, 4
        %v3985 = vadd.f32 %v3983, %v3984
        %v3986 = vrot.slane %v3985, 2
        %v3987 = vadd.f32 %v3985, %v3986
        %v3988 = vrot.slane %v3987, 1
        %v3989 = vadd.f32 %v3987, %v3988
        %vm3990 = vcmask 1040384
        %v3991 = vsel %vm3990, %v3888, %v3989
        %v3992 = vld [vmem:[%s3] sm:$0xff]
        %v3993 = vld [vmem:[%s3 + $0x8] sm:$0xff]
        %v3995 = vsel %vm3819, %v3991, 0
        %3997 = vmatprep.subr.mxu0 0.0
        %3998 = vmatpush1.msra.mxu0 0.0
        %3999 = vmatprep.subr.mxu0 0.0
        %4000 = vmatpush1.msra.mxu0 0.0
        %4001 = vmatprep.subr.mxu0 0.0
        %4002 = vmatpush1.msra.mxu0 0.0
        %4003 = vmatprep.subr.mxu0 0.0
        %4004 = vmatpush1.msra.mxu0 0.0
        %4005 = vmatprep.subr.mxu0 0.0
        %4006 = vmatpush1.msra.mxu0 0.0
        %4007 = vmatprep.subr.mxu0 0.0
        %4008 = vmatpush1.msra.mxu0 0.0
        %4009 = vmatprep.subr.mxu0 0.0
        %4010 = vmatpush1.msra.mxu0 0.0
        %4011 = vmatprep.subr.mxu0 0.0
        %4012 = vmatpush1.msra.mxu0 0.0
        %4013 = vmatprep.subr.mxu0 0.0
        %4014 = vmatpush1.msra.mxu0 0.0
        %4015 = vmatprep.subr.mxu0 0.0
        %4016 = vmatpush1.msra.mxu0 0.0
        %4017 = vmatprep.subr.mxu0 0.0
        %4018 = vmatpush1.msra.mxu0 0.0
        %4019 = vmatprep.subr.mxu0 0.0
        %4020 = vmatpush1.msra.mxu0 0.0
        %4021 = vmatprep.subr.mxu0 0.0
        %4022 = vmatpush1.msra.mxu0 0.0
        %4023 = vmatprep.subr.mxu0 0.0
        %4024 = vmatpush1.msra.mxu0 0.0
        %4025 = vmatprep.subr.mxu0 0.0
        %4026 = vmatpush1.msra.mxu0 %v3993
        %4027 = vmatprep.subr.mxu0 0.0
        %4028 = vmatpush1.msra.mxu0 %v3992
        %4029 = vmatprep.subr.mxu0 0.0
        %4030 = vmatpush2.msra.mxu0 0.0
        %4031 = vmatprep.subr.mxu0 0.0
        %4032 = vmatpush2.msra.mxu0 0.0
        %4033 = vmatprep.subr.mxu0 0.0
        %4034 = vmatpush2.msra.mxu0 0.0
        %4035 = vmatprep.subr.mxu0 0.0
        %4036 = vmatpush2.msra.mxu0 0.0
        %4037 = vmatprep.subr.mxu0 0.0
        %4038 = vmatpush2.msra.mxu0 0.0
        %4039 = vmatprep.subr.mxu0 0.0
        %4040 = vmatpush2.msra.mxu0 0.0
        %4041 = vmatprep.subr.mxu0 0.0
        %4042 = vmatpush2.msra.mxu0 0.0
        %4043 = vmatprep.subr.mxu0 0.0
        %4044 = vmatpush2.msra.mxu0 0.0
        %4045 = vmatprep.subr.mxu0 0.0
        %4046 = vmatpush2.msra.mxu0 0.0
        %4047 = vmatprep.subr.mxu0 0.0
        %4048 = vmatpush2.msra.mxu0 0.0
        %4049 = vmatprep.subr.mxu0 0.0
        %4050 = vmatpush2.msra.mxu0 0.0
        %4051 = vmatprep.subr.mxu0 0.0
        %4052 = vmatpush2.msra.mxu0 0.0
        %4053 = vmatprep.subr.mxu0 0.0
        %4054 = vmatpush2.msra.mxu0 0.0
        %4055 = vmatprep.subr.mxu0 0.0
        %4056 = vmatpush2.msra.mxu0 0.0
        %4057 = vmatprep.subr.mxu0 0.0
        %4058 = vmatpush2.msra.mxu0 0.0
        %4059 = vmatprep.subr.mxu0 0.0
        %4060 = vmatpush2.msra.mxu0 0.0
        %4061 = vmatprep.mubr.f32.mxu0 0.0
        %4062 = vmatmul.mubr.f32.gmra.mxu0 %v3995
        %v4063 = vpop.f32.mrf.mxu0
        %v4064 = vadd.f32 0.0, %v4063
        %v4065 = vpop.f32.mrf.mxu0
        %4066 = vdwg.mxu0
        %v4067 = vmul.f32 %v4064, 0.001953125
        %v4068 = vld [vmem:[%s4] sm:$0xff]
        %vm4069 = vcmask 64512
        %v4071 = vsel %vm4069, %v4067, 0
        %4073 = vmatprep.subr.mxu0 0.0
        %4074 = vmatpush1.msra.mxu0 0.0
        %4075 = vmatprep.subr.mxu0 0.0
        %4076 = vmatpush1.msra.mxu0 0.0
        %4077 = vmatprep.subr.mxu0 0.0
        %4078 = vmatpush1.msra.mxu0 0.0
        %4079 = vmatprep.subr.mxu0 0.0
        %4080 = vmatpush1.msra.mxu0 0.0
        %4081 = vmatprep.subr.mxu0 0.0
        %4082 = vmatpush1.msra.mxu0 0.0
        %4083 = vmatprep.subr.mxu0 0.0
        %4084 = vmatpush1.msra.mxu0 0.0
        %4085 = vmatprep.subr.mxu0 0.0
        %4086 = vmatpush1.msra.mxu0 0.0
        %4087 = vmatprep.subr.mxu0 0.0
        %4088 = vmatpush1.msra.mxu0 0.0
        %4089 = vmatprep.subr.mxu0 0.0
        %4090 = vmatpush1.msra.mxu0 0.0
        %4091 = vmatprep.subr.mxu0 0.0
        %4092 = vmatpush1.msra.mxu0 0.0
        %4093 = vmatprep.subr.mxu0 0.0
        %4094 = vmatpush1.msra.mxu0 0.0
        %4095 = vmatprep.subr.mxu0 0.0
        %4096 = vmatpush1.msra.mxu0 0.0
        %4097 = vmatprep.subr.mxu0 0.0
        %4098 = vmatpush1.msra.mxu0 0.0
        %4099 = vmatprep.subr.mxu0 0.0
        %4100 = vmatpush1.msra.mxu0 0.0
        %4101 = vmatprep.subr.mxu0 0.0
        %4102 = vmatpush1.msra.mxu0 0.0
        %4103 = vmatprep.subr.mxu0 0.0
        %4104 = vmatpush1.msra.mxu0 %v4068
        %4105 = vmatprep.subr.mxu0 0.0
        %4106 = vmatpush2.msra.mxu0 0.0
        %4107 = vmatprep.subr.mxu0 0.0
        %4108 = vmatpush2.msra.mxu0 0.0
        %4109 = vmatprep.subr.mxu0 0.0
        %4110 = vmatpush2.msra.mxu0 0.0
        %4111 = vmatprep.subr.mxu0 0.0
        %4112 = vmatpush2.msra.mxu0 0.0
        %4113 = vmatprep.subr.mxu0 0.0
        %4114 = vmatpush2.msra.mxu0 0.0
        %4115 = vmatprep.subr.mxu0 0.0
        %4116 = vmatpush2.msra.mxu0 0.0
        %4117 = vmatprep.subr.mxu0 0.0
        %4118 = vmatpush2.msra.mxu0 0.0
        %4119 = vmatprep.subr.mxu0 0.0
        %4120 = vmatpush2.msra.mxu0 0.0
        %4121 = vmatprep.subr.mxu0 0.0
        %4122 = vmatpush2.msra.mxu0 0.0
        %4123 = vmatprep.subr.mxu0 0.0
        %4124 = vmatpush2.msra.mxu0 0.0
        %4125 = vmatprep.subr.mxu0 0.0
        %4126 = vmatpush2.msra.mxu0 0.0
        %4127 = vmatprep.subr.mxu0 0.0
        %4128 = vmatpush2.msra.mxu0 0.0
        %4129 = vmatprep.subr.mxu0 0.0
        %4130 = vmatpush2.msra.mxu0 0.0
        %4131 = vmatprep.subr.mxu0 0.0
        %4132 = vmatpush2.msra.mxu0 0.0
        %4133 = vmatprep.subr.mxu0 0.0
        %4134 = vmatpush2.msra.mxu0 0.0
        %4135 = vmatprep.subr.mxu0 0.0
        %4136 = vmatpush2.msra.mxu0 0.0
        %4137 = vmatprep.mubr.f32.mxu0 0.0
        %4138 = vmatmul.mubr.f32.gmra.mxu0 %v4071
        %v4139 = vpop.f32.mrf.mxu0
        %v4140 = vadd.f32 0.0, %v4139
        %v4141 = vpop.f32.mrf.mxu0
        %4142 = vdwg.mxu0
        %v4143 = vmul.f32 %v4140, %v4140
        %v4145 = vrot.slane %v4143, 7
        %v4147 = vsub.f32 %v4140, %v4145
        %v4148 = vld [vmem:[%s5] sm:$0x1]
        %v4149 = vadd.f32 %v4147, 1e-05
        %v4150 = vrsqrt.pop %v4149
        %v4153 = vunpack.c.l.s4 1966171168
        %v4154 = vunpack.c.0.s8 %v4153
        %v4155 = vlaneseq
        %v4156 = vshrl.u32 %v4155, 7
        %v4157 = vsub.s32 %v4154, %v4156
        %v4158 = vrot.slane %v4150, %v4157
        %v4159 = vcombine.high %v4158, %v4158
        %v4161 = vunpack.c.l.s4 1966171168
        %v4162 = vunpack.c.0.s8 %v4161
        %v4163 = vlaneseq
        %v4164 = vshrl.u32 %v4163, 7
        %v4165 = vsub.s32 %v4162, %v4164
        %v4166 = vrot.slane %v4159, %v4165
        %v4168 = vmul.f32 %v4148, %v4166
        %v4169 = vld [vmem:[%s6] sm:$0x1]
        %v4170 = vmul.f32 %v4140, %v4168
        %v4171 = vsub.f32 %v4169, %v4170
        %v4173 = vlaneseq
        %v4174 = vshrl.u32 %v4173, 7
        %v4175 = vsub.s32 0, %v4174
        %v4176 = vrot.slane %v4168, %v4175
        %v4178 = vmul.f32 %v3787, %v4176
        %v4179 = vmul.f32 %v3788, %v4176
        %v4180 = vmul.f32 %v3789, %v4176
        %v4181 = vmul.f32 %v3790, %v4176
        %v4182 = vmul.f32 %v3791, %v4176
        %v4183 = vmul.f32 %v3792, %v4176
        %v4184 = vmul.f32 %v3793, %v4176
        %v4185 = vmul.f32 %v3794, %v4176
        %v4186 = vmul.f32 %v3795, %v4176
        %v4187 = vmul.f32 %v3796, %v4176
        %v4188 = vmul.f32 %v3797, %v4176
        %v4189 = vmul.f32 %v3798, %v4176
        %v4190 = vmul.f32 %v3799, %v4176
        %v4191 = vmul.f32 %v3800, %v4176
        %v4192 = vmul.f32 %v3801, %v4176
        %v4193 = vmul.f32 %v3802, %v4176
        %v4194 = vmul.f32 %v3803, %v4176
        %v4195 = vmul.f32 %v3804, %v4176
        %v4196 = vmul.f32 %v3805, %v4176
        %v4197 = vmul.f32 %v3806, %v4176
        %v4198 = vmul.f32 %v3807, %v4176
        %v4199 = vmul.f32 %v3808, %v4176
        %v4200 = vmul.f32 %v3809, %v4176
        %v4201 = vmul.f32 %v3810, %v4176
        %v4202 = vmul.f32 %v3811, %v4176
        %v4203 = vmul.f32 %v3812, %v4176
        %v4204 = vmul.f32 %v3813, %v4176
        %v4205 = vmul.f32 %v3814, %v4176
        %v4206 = vmul.f32 %v3815, %v4176
        %v4207 = vmul.f32 %v3816, %v4176
        %v4208 = vmul.f32 %v3817, %v4176
        %v4209 = vmul.f32 %v3818, %v4176
        %v4211 = vlaneseq
        %v4212 = vshrl.u32 %v4211, 7
        %v4213 = vsub.s32 0, %v4212
        %v4214 = vrot.slane %v4171, %v4213
        %v4216 = vadd.f32 %v4178, %v4214
        %v4217 = vadd.f32 %v4179, %v4214
        %v4218 = vadd.f32 %v4180, %v4214
        %v4219 = vadd.f32 %v4181, %v4214
        %v4220 = vadd.f32 %v4182, %v4214
        %v4221 = vadd.f32 %v4183, %v4214
        %v4222 = vadd.f32 %v4184, %v4214
        %v4223 = vadd.f32 %v4185, %v4214
        %v4224 = vadd.f32 %v4186, %v4214
        %v4225 = vadd.f32 %v4187, %v4214
        %v4226 = vadd.f32 %v4188, %v4214
        %v4227 = vadd.f32 %v4189, %v4214
        %v4228 = vadd.f32 %v4190, %v4214
        %v4229 = vadd.f32 %v4191, %v4214
        %v4230 = vadd.f32 %v4192, %v4214
        %v4231 = vadd.f32 %v4193, %v4214
        %v4232 = vadd.f32 %v4194, %v4214
        %v4233 = vadd.f32 %v4195, %v4214
        %v4234 = vadd.f32 %v4196, %v4214
        %v4235 = vadd.f32 %v4197, %v4214
        %v4236 = vadd.f32 %v4198, %v4214
        %v4237 = vadd.f32 %v4199, %v4214
        %v4238 = vadd.f32 %v4200, %v4214
        %v4239 = vadd.f32 %v4201, %v4214
        %v4240 = vadd.f32 %v4202, %v4214
        %v4241 = vadd.f32 %v4203, %v4214
        %v4242 = vadd.f32 %v4204, %v4214
        %v4243 = vadd.f32 %v4205, %v4214
        %v4244 = vadd.f32 %v4206, %v4214
        %v4245 = vadd.f32 %v4207, %v4214
        %v4246 = vadd.f32 %v4208, %v4214
        %v4247 = vadd.f32 %v4209, %v4214
        %v4248 = vmax.f32 %v4216, 0.0
        %v4249 = vmax.f32 %v4217, 0.0
        %v4250 = vmax.f32 %v4218, 0.0
        %v4251 = vmax.f32 %v4219, 0.0
        %v4252 = vmax.f32 %v4220, 0.0
        %v4253 = vmax.f32 %v4221, 0.0
        %v4254 = vmax.f32 %v4222, 0.0
        %v4255 = vmax.f32 %v4223, 0.0
        %v4256 = vmax.f32 %v4224, 0.0
        %v4257 = vmax.f32 %v4225, 0.0
        %v4258 = vmax.f32 %v4226, 0.0
        %v4259 = vmax.f32 %v4227, 0.0
        %v4260 = vmax.f32 %v4228, 0.0
        %v4261 = vmax.f32 %v4229, 0.0
        %v4262 = vmax.f32 %v4230, 0.0
        %v4263 = vmax.f32 %v4231, 0.0
        %v4264 = vmax.f32 %v4232, 0.0
        %v4265 = vmax.f32 %v4233, 0.0
        %v4266 = vmax.f32 %v4234, 0.0
        %v4267 = vmax.f32 %v4235, 0.0
        %v4268 = vmax.f32 %v4236, 0.0
        %v4269 = vmax.f32 %v4237, 0.0
        %v4270 = vmax.f32 %v4238, 0.0
        %v4271 = vmax.f32 %v4239, 0.0
        %v4272 = vmax.f32 %v4240, 0.0
        %v4273 = vmax.f32 %v4241, 0.0
        %v4274 = vmax.f32 %v4242, 0.0
        %v4275 = vmax.f32 %v4243, 0.0
        %v4276 = vmax.f32 %v4244, 0.0
        %v4277 = vmax.f32 %v4245, 0.0
        %v4278 = vmax.f32 %v4246, 0.0
        %v4279 = vmax.f32 %v4247, 0.0
        %4280 = vxpose.xlu0.b32.start [1/16] %v4248, 128
        %4281 = vxpose.xlu0.b32.cont [2/16] %v4249, 128
        %4282 = vxpose.xlu0.b32.cont [3/16] 0.0, 128
        %4283 = vxpose.xlu0.b32.cont [4/16] 0.0, 128
        %4284 = vxpose.xlu0.b32.cont [5/16] 0.0, 128
        %4285 = vxpose.xlu0.b32.cont [6/16] 0.0, 128
        %4286 = vxpose.xlu0.b32.cont [7/16] 0.0, 128
        %4287 = vxpose.xlu0.b32.cont [8/16] 0.0, 128
        %4288 = vxpose.xlu0.b32.cont [9/16] 0.0, 128
        %4289 = vxpose.xlu0.b32.cont [10/16] 0.0, 128
        %4290 = vxpose.xlu0.b32.cont [11/16] 0.0, 128
        %4291 = vxpose.xlu0.b32.cont [12/16] 0.0, 128
        %4292 = vxpose.xlu0.b32.cont [13/16] 0.0, 128
        %4293 = vxpose.xlu0.b32.cont [14/16] 0.0, 128
        %4294 = vxpose.xlu0.b32.cont [15/16] 0.0, 128
        %4295 = vxpose.xlu0.b32.end [16/16] 0.0, 128
        %v4296 = vpop.trf.xlu0
        %v4297 = vpop.trf.xlu0
        %v4298 = vpop.trf.xlu0
        %v4299 = vpop.trf.xlu0
        %v4300 = vpop.trf.xlu0
        %v4301 = vpop.trf.xlu0
        %v4302 = vpop.trf.xlu0
        %v4303 = vpop.trf.xlu0
        %v4304 = vpop.trf.xlu0
        %v4305 = vpop.trf.xlu0
        %v4306 = vpop.trf.xlu0
        %v4307 = vpop.trf.xlu0
        %v4308 = vpop.trf.xlu0
        %v4309 = vpop.trf.xlu0
        %v4310 = vpop.trf.xlu0
        %v4311 = vpop.trf.xlu0
        %4312 = vxpose.xlu0.b32.start [1/16] %v4250, 128
        %4313 = vxpose.xlu0.b32.cont [2/16] %v4251, 128
        %4314 = vxpose.xlu0.b32.cont [3/16] 0.0, 128
        %4315 = vxpose.xlu0.b32.cont [4/16] 0.0, 128
        %4316 = vxpose.xlu0.b32.cont [5/16] 0.0, 128
        %4317 = vxpose.xlu0.b32.cont [6/16] 0.0, 128
        %4318 = vxpose.xlu0.b32.cont [7/16] 0.0, 128
        %4319 = vxpose.xlu0.b32.cont [8/16] 0.0, 128
        %4320 = vxpose.xlu0.b32.cont [9/16] 0.0, 128
        %4321 = vxpose.xlu0.b32.cont [10/16] 0.0, 128
        %4322 = vxpose.xlu0.b32.cont [11/16] 0.0, 128
        %4323 = vxpose.xlu0.b32.cont [12/16] 0.0, 128
        %4324 = vxpose.xlu0.b32.cont [13/16] 0.0, 128
        %4325 = vxpose.xlu0.b32.cont [14/16] 0.0, 128
        %4326 = vxpose.xlu0.b32.cont [15/16] 0.0, 128
        %4327 = vxpose.xlu0.b32.end [16/16] 0.0, 128
        %v4328 = vpop.trf.xlu0
        %v4329 = vpop.trf.xlu0
        %v4330 = vpop.trf.xlu0
        %v4331 = vpop.trf.xlu0
        %v4332 = vpop.trf.xlu0
        %v4333 = vpop.trf.xlu0
        %v4334 = vpop.trf.xlu0
        %v4335 = vpop.trf.xlu0
        %v4336 = vpop.trf.xlu0
        %v4337 = vpop.trf.xlu0
        %v4338 = vpop.trf.xlu0
        %v4339 = vpop.trf.xlu0
        %v4340 = vpop.trf.xlu0
        %v4341 = vpop.trf.xlu0
        %v4342 = vpop.trf.xlu0
        %v4343 = vpop.trf.xlu0
        %4344 = vxpose.xlu0.b32.start [1/16] %v4252, 128
        %4345 = vxpose.xlu0.b32.cont [2/16] %v4253, 128
        %4346 = vxpose.xlu0.b32.cont [3/16] 0.0, 128
        %4347 = vxpose.xlu0.b32.cont [4/16] 0.0, 128
        %4348 = vxpose.xlu0.b32.cont [5/16] 0.0, 128
        %4349 = vxpose.xlu0.b32.cont [6/16] 0.0, 128
        %4350 = vxpose.xlu0.b32.cont [7/16] 0.0, 128
        %4351 = vxpose.xlu0.b32.cont [8/16] 0.0, 128
        %4352 = vxpose.xlu0.b32.cont [9/16] 0.0, 128
        %4353 = vxpose.xlu0.b32.cont [10/16] 0.0, 128
        %4354 = vxpose.xlu0.b32.cont [11/16] 0.0, 128
        %4355 = vxpose.xlu0.b32.cont [12/16] 0.0, 128
        %4356 = vxpose.xlu0.b32.cont [13/16] 0.0, 128
        %4357 = vxpose.xlu0.b32.cont [14/16] 0.0, 128
        %4358 = vxpose.xlu0.b32.cont [15/16] 0.0, 128
        %4359 = vxpose.xlu0.b32.end [16/16] 0.0, 128
        %v4360 = vpop.trf.xlu0
        %v4361 = vpop.trf.xlu0
        %v4362 = vpop.trf.xlu0
        %v4363 = vpop.trf.xlu0
        %v4364 = vpop.trf.xlu0
        %v4365 = vpop.trf.xlu0
        %v4366 = vpop.trf.xlu0
        %v4367 = vpop.trf.xlu0
        %v4368 = vpop.trf.xlu0
        %v4369 = vpop.trf.xlu0
        %v4370 = vpop.trf.xlu0
        %v4371 = vpop.trf.xlu0
        %v4372 = vpop.trf.xlu0
        %v4373 = vpop.trf.xlu0
        %v4374 = vpop.trf.xlu0
        %v4375 = vpop.trf.xlu0
        %4376 = vxpose.xlu0.b32.start [1/16] %v4254, 128
        %4377 = vxpose.xlu0.b32.cont [2/16] %v4255, 128
        %4378 = vxpose.xlu0.b32.cont [3/16] 0.0, 128
        %4379 = vxpose.xlu0.b32.cont [4/16] 0.0, 128
        %4380 = vxpose.xlu0.b32.cont [5/16] 0.0, 128
        %4381 = vxpose.xlu0.b32.cont [6/16] 0.0, 128
        %4382 = vxpose.xlu0.b32.cont [7/16] 0.0, 128
        %4383 = vxpose.xlu0.b32.cont [8/16] 0.0, 128
        %4384 = vxpose.xlu0.b32.cont [9/16] 0.0, 128
        %4385 = vxpose.xlu0.b32.cont [10/16] 0.0, 128
        %4386 = vxpose.xlu0.b32.cont [11/16] 0.0, 128
        %4387 = vxpose.xlu0.b32.cont [12/16] 0.0, 128
        %4388 = vxpose.xlu0.b32.cont [13/16] 0.0, 128
        %4389 = vxpose.xlu0.b32.cont [14/16] 0.0, 128
        %4390 = vxpose.xlu0.b32.cont [15/16] 0.0, 128
        %4391 = vxpose.xlu0.b32.end [16/16] 0.0, 128
        %v4392 = vpop.trf.xlu0
        %v4393 = vpop.trf.xlu0
        %v4394 = vpop.trf.xlu0
        %v4395 = vpop.trf.xlu0
        %v4396 = vpop.trf.xlu0
        %v4397 = vpop.trf.xlu0
        %v4398 = vpop.trf.xlu0
        %v4399 = vpop.trf.xlu0
        %v4400 = vpop.trf.xlu0
        %v4401 = vpop.trf.xlu0
        %v4402 = vpop.trf.xlu0
        %v4403 = vpop.trf.xlu0
        %v4404 = vpop.trf.xlu0
        %v4405 = vpop.trf.xlu0
        %v4406 = vpop.trf.xlu0
        %v4407 = vpop.trf.xlu0
        %4408 = vxpose.xlu0.b32.start [1/16] %v4256, 128
        %4409 = vxpose.xlu0.b32.cont [2/16] %v4257, 128
        %4410 = vxpose.xlu0.b32.cont [3/16] 0.0, 128
        %4411 = vxpose.xlu0.b32.cont [4/16] 0.0, 128
        %4412 = vxpose.xlu0.b32.cont [5/16] 0.0, 128
        %4413 = vxpose.xlu0.b32.cont [6/16] 0.0, 128
        %4414 = vxpose.xlu0.b32.cont [7/16] 0.0, 128
        %4415 = vxpose.xlu0.b32.cont [8/16] 0.0, 128
        %4416 = vxpose.xlu0.b32.cont [9/16] 0.0, 128
        %4417 = vxpose.xlu0.b32.cont [10/16] 0.0, 128
        %4418 = vxpose.xlu0.b32.cont [11/16] 0.0, 128
        %4419 = vxpose.xlu0.b32.cont [12/16] 0.0, 128
        %4420 = vxpose.xlu0.b32.cont [13/16] 0.0, 128
        %4421 = vxpose.xlu0.b32.cont [14/16] 0.0, 128
        %4422 = vxpose.xlu0.b32.cont [15/16] 0.0, 128
        %4423 = vxpose.xlu0.b32.end [16/16] 0.0, 128
        %v4424 = vpop.trf.xlu0
        %v4425 = vpop.trf.xlu0
        %v4426 = vpop.trf.xlu0
        %v4427 = vpop.trf.xlu0
        %v4428 = vpop.trf.xlu0
        %v4429 = vpop.trf.xlu0
        %v4430 = vpop.trf.xlu0
        %v4431 = vpop.trf.xlu0
        %v4432 = vpop.trf.xlu0
        %v4433 = vpop.trf.xlu0
        %v4434 = vpop.trf.xlu0
        %v4435 = vpop.trf.xlu0
        %v4436 = vpop.trf.xlu0
        %v4437 = vpop.trf.xlu0
        %v4438 = vpop.trf.xlu0
        %v4439 = vpop.trf.xlu0
        %4440 = vxpose.xlu0.b32.start [1/16] %v4258, 128
        %4441 = vxpose.xlu0.b32.cont [2/16] %v4259, 128
        %4442 = vxpose.xlu0.b32.cont [3/16] 0.0, 128
        %4443 = vxpose.xlu0.b32.cont [4/16] 0.0, 128
        %4444 = vxpose.xlu0.b32.cont [5/16] 0.0, 128
        %4445 = vxpose.xlu0.b32.cont [6/16] 0.0, 128
        %4446 = vxpose.xlu0.b32.cont [7/16] 0.0, 128
        %4447 = vxpose.xlu0.b32.cont [8/16] 0.0, 128
        %4448 = vxpose.xlu0.b32.cont [9/16] 0.0, 128
        %4449 = vxpose.xlu0.b32.cont [10/16] 0.0, 128
        %4450 = vxpose.xlu0.b32.cont [11/16] 0.0, 128
        %4451 = vxpose.xlu0.b32.cont [12/16] 0.0, 128
        %4452 = vxpose.xlu0.b32.cont [13/16] 0.0, 128
        %4453 = vxpose.xlu0.b32.cont [14/16] 0.0, 128
        %4454 = vxpose.xlu0.b32.cont [15/16] 0.0, 128
        %4455 = vxpose.xlu0.b32.end [16/16] 0.0, 128
        %v4456 = vpop.trf.xlu0
        %v4457 = vpop.trf.xlu0
        %v4458 = vpop.trf.xlu0
        %v4459 = vpop.trf.xlu0
        %v4460 = vpop.trf.xlu0
        %v4461 = vpop.trf.xlu0
        %v4462 = vpop.trf.xlu0
        %v4463 = vpop.trf.xlu0
        %v4464 = vpop.trf.xlu0
        %v4465 = vpop.trf.xlu0
        %v4466 = vpop.trf.xlu0
        %v4467 = vpop.trf.xlu0
        %v4468 = vpop.trf.xlu0
        %v4469 = vpop.trf.xlu0
        %v4470 = vpop.trf.xlu0
        %v4471 = vpop.trf.xlu0
        %4472 = vxpose.xlu0.b32.start [1/16] %v4260, 128
        %4473 = vxpose.xlu0.b32.cont [2/16] %v4261, 128
        %4474 = vxpose.xlu0.b32.cont [3/16] 0.0, 128
        %4475 = vxpose.xlu0.b32.cont [4/16] 0.0, 128
        %4476 = vxpose.xlu0.b32.cont [5/16] 0.0, 128
        %4477 = vxpose.xlu0.b32.cont [6/16] 0.0, 128
        %4478 = vxpose.xlu0.b32.cont [7/16] 0.0, 128
        %4479 = vxpose.xlu0.b32.cont [8/16] 0.0, 128
        %4480 = vxpose.xlu0.b32.cont [9/16] 0.0, 128
        %4481 = vxpose.xlu0.b32.cont [10/16] 0.0, 128
        %4482 = vxpose.xlu0.b32.cont [11/16] 0.0, 128
        %4483 = vxpose.xlu0.b32.cont [12/16] 0.0, 128
        %4484 = vxpose.xlu0.b32.cont [13/16] 0.0, 128
        %4485 = vxpose.xlu0.b32.cont [14/16] 0.0, 128
        %4486 = vxpose.xlu0.b32.cont [15/16] 0.0, 128
        %4487 = vxpose.xlu0.b32.end [16/16] 0.0, 128
        %v4488 = vpop.trf.xlu0
        %v4489 = vpop.trf.xlu0
        %v4490 = vpop.trf.xlu0
        %v4491 = vpop.trf.xlu0
        %v4492 = vpop.trf.xlu0
        %v4493 = vpop.trf.xlu0
        %v4494 = vpop.trf.xlu0
        %v4495 = vpop.trf.xlu0
        %v4496 = vpop.trf.xlu0
        %v4497 = vpop.trf.xlu0
        %v4498 = vpop.trf.xlu0
        %v4499 = vpop.trf.xlu0
        %v4500 = vpop.trf.xlu0
        %v4501 = vpop.trf.xlu0
        %v4502 = vpop.trf.xlu0
        %v4503 = vpop.trf.xlu0
        %4504 = vxpose.xlu0.b32.start [1/16] %v4262, 128
        %4505 = vxpose.xlu0.b32.cont [2/16] %v4263, 128
        %4506 = vxpose.xlu0.b32.cont [3/16] 0.0, 128
        %4507 = vxpose.xlu0.b32.cont [4/16] 0.0, 128
        %4508 = vxpose.xlu0.b32.cont [5/16] 0.0, 128
        %4509 = vxpose.xlu0.b32.cont [6/16] 0.0, 128
        %4510 = vxpose.xlu0.b32.cont [7/16] 0.0, 128
        %4511 = vxpose.xlu0.b32.cont [8/16] 0.0, 128
        %4512 = vxpose.xlu0.b32.cont [9/16] 0.0, 128
        %4513 = vxpose.xlu0.b32.cont [10/16] 0.0, 128
        %4514 = vxpose.xlu0.b32.cont [11/16] 0.0, 128
        %4515 = vxpose.xlu0.b32.cont [12/16] 0.0, 128
        %4516 = vxpose.xlu0.b32.cont [13/16] 0.0, 128
        %4517 = vxpose.xlu0.b32.cont [14/16] 0.0, 128
        %4518 = vxpose.xlu0.b32.cont [15/16] 0.0, 128
        %4519 = vxpose.xlu0.b32.end [16/16] 0.0, 128
        %v4520 = vpop.trf.xlu0
        %v4521 = vpop.trf.xlu0
        %v4522 = vpop.trf.xlu0
        %v4523 = vpop.trf.xlu0
        %v4524 = vpop.trf.xlu0
        %v4525 = vpop.trf.xlu0
        %v4526 = vpop.trf.xlu0
        %v4527 = vpop.trf.xlu0
        %v4528 = vpop.trf.xlu0
        %v4529 = vpop.trf.xlu0
        %v4530 = vpop.trf.xlu0
        %v4531 = vpop.trf.xlu0
        %v4532 = vpop.trf.xlu0
        %v4533 = vpop.trf.xlu0
        %v4534 = vpop.trf.xlu0
        %v4535 = vpop.trf.xlu0
        %4536 = vxpose.xlu0.b32.start [1/16] %v4264, 128
        %4537 = vxpose.xlu0.b32.cont [2/16] %v4265, 128
        %4538 = vxpose.xlu0.b32.cont [3/16] 0.0, 128
        %4539 = vxpose.xlu0.b32.cont [4/16] 0.0, 128
        %4540 = vxpose.xlu0.b32.cont [5/16] 0.0, 128
        %4541 = vxpose.xlu0.b32.cont [6/16] 0.0, 128
        %4542 = vxpose.xlu0.b32.cont [7/16] 0.0, 128
        %4543 = vxpose.xlu0.b32.cont [8/16] 0.0, 128
        %4544 = vxpose.xlu0.b32.cont [9/16] 0.0, 128
        %4545 = vxpose.xlu0.b32.cont [10/16] 0.0, 128
        %4546 = vxpose.xlu0.b32.cont [11/16] 0.0, 128
        %4547 = vxpose.xlu0.b32.cont [12/16] 0.0, 128
        %4548 = vxpose.xlu0.b32.cont [13/16] 0.0, 128
        %4549 = vxpose.xlu0.b32.cont [14/16] 0.0, 128
        %4550 = vxpose.xlu0.b32.cont [15/16] 0.0, 128
        %4551 = vxpose.xlu0.b32.end [16/16] 0.0, 128
        %v4552 = vpop.trf.xlu0
        %v4553 = vpop.trf.xlu0
        %v4554 = vpop.trf.xlu0
        %v4555 = vpop.trf.xlu0
        %v4556 = vpop.trf.xlu0
        %v4557 = vpop.trf.xlu0
        %v4558 = vpop.trf.xlu0
        %v4559 = vpop.trf.xlu0
        %v4560 = vpop.trf.xlu0
        %v4561 = vpop.trf.xlu0
        %v4562 = vpop.trf.xlu0
        %v4563 = vpop.trf.xlu0
        %v4564 = vpop.trf.xlu0
        %v4565 = vpop.trf.xlu0
        %v4566 = vpop.trf.xlu0
        %v4567 = vpop.trf.xlu0
        %4568 = vxpose.xlu0.b32.start [1/16] %v4266, 128
        %4569 = vxpose.xlu0.b32.cont [2/16] %v4267, 128
        %4570 = vxpose.xlu0.b32.cont [3/16] 0.0, 128
        %4571 = vxpose.xlu0.b32.cont [4/16] 0.0, 128
        %4572 = vxpose.xlu0.b32.cont [5/16] 0.0, 128
        %4573 = vxpose.xlu0.b32.cont [6/16] 0.0, 128
        %4574 = vxpose.xlu0.b32.cont [7/16] 0.0, 128
        %4575 = vxpose.xlu0.b32.cont [8/16] 0.0, 128
        %4576 = vxpose.xlu0.b32.cont [9/16] 0.0, 128
        %4577 = vxpose.xlu0.b32.cont [10/16] 0.0, 128
        %4578 = vxpose.xlu0.b32.cont [11/16] 0.0, 128
        %4579 = vxpose.xlu0.b32.cont [12/16] 0.0, 128
        %4580 = vxpose.xlu0.b32.cont [13/16] 0.0, 128
        %4581 = vxpose.xlu0.b32.cont [14/16] 0.0, 128
        %4582 = vxpose.xlu0.b32.cont [15/16] 0.0, 128
        %4583 = vxpose.xlu0.b32.end [16/16] 0.0, 128
        %v4584 = vpop.trf.xlu0
        %v4585 = vpop.trf.xlu0
        %v4586 = vpop.trf.xlu0
        %v4587 = vpop.trf.xlu0
        %v4588 = vpop.trf.xlu0
        %v4589 = vpop.trf.xlu0
        %v4590 = vpop.trf.xlu0
        %v4591 = vpop.trf.xlu0
        %v4592 = vpop.trf.xlu0
        %v4593 = vpop.trf.xlu0
        %v4594 = vpop.trf.xlu0
        %v4595 = vpop.trf.xlu0
        %v4596 = vpop.trf.xlu0
        %v4597 = vpop.trf.xlu0
        %v4598 = vpop.trf.xlu0
        %v4599 = vpop.trf.xlu0
        %4600 = vxpose.xlu0.b32.start [1/16] %v4268, 128
        %4601 = vxpose.xlu0.b32.cont [2/16] %v4269, 128
        %4602 = vxpose.xlu0.b32.cont [3/16] 0.0, 128
        %4603 = vxpose.xlu0.b32.cont [4/16] 0.0, 128
        %4604 = vxpose.xlu0.b32.cont [5/16] 0.0, 128
        %4605 = vxpose.xlu0.b32.cont [6/16] 0.0, 128
        %4606 = vxpose.xlu0.b32.cont [7/16] 0.0, 128
        %4607 = vxpose.xlu0.b32.cont [8/16] 0.0, 128
        %4608 = vxpose.xlu0.b32.cont [9/16] 0.0, 128
        %4609 = vxpose.xlu0.b32.cont [10/16] 0.0, 128
        %4610 = vxpose.xlu0.b32.cont [11/16] 0.0, 128
        %4611 = vxpose.xlu0.b32.cont [12/16] 0.0, 128
        %4612 = vxpose.xlu0.b32.cont [13/16] 0.0, 128
        %4613 = vxpose.xlu0.b32.cont [14/16] 0.0, 128
        %4614 = vxpose.xlu0.b32.cont [15/16] 0.0, 128
        %4615 = vxpose.xlu0.b32.end [16/16] 0.0, 128
        %v4616 = vpop.trf.xlu0
        %v4617 = vpop.trf.xlu0
        %v4618 = vpop.trf.xlu0
        %v4619 = vpop.trf.xlu0
        %v4620 = vpop.trf.xlu0
        %v4621 = vpop.trf.xlu0
        %v4622 = vpop.trf.xlu0
        %v4623 = vpop.trf.xlu0
        %v4624 = vpop.trf.xlu0
        %v4625 = vpop.trf.xlu0
        %v4626 = vpop.trf.xlu0
        %v4627 = vpop.trf.xlu0
        %v4628 = vpop.trf.xlu0
        %v4629 = vpop.trf.xlu0
        %v4630 = vpop.trf.xlu0
        %v4631 = vpop.trf.xlu0
        %4632 = vxpose.xlu0.b32.start [1/16] %v4270, 128
        %4633 = vxpose.xlu0.b32.cont [2/16] %v4271, 128
        %4634 = vxpose.xlu0.b32.cont [3/16] 0.0, 128
        %4635 = vxpose.xlu0.b32.cont [4/16] 0.0, 128
        %4636 = vxpose.xlu0.b32.cont [5/16] 0.0, 128
        %4637 = vxpose.xlu0.b32.cont [6/16] 0.0, 128
        %4638 = vxpose.xlu0.b32.cont [7/16] 0.0, 128
        %4639 = vxpose.xlu0.b32.cont [8/16] 0.0, 128
        %4640 = vxpose.xlu0.b32.cont [9/16] 0.0, 128
        %4641 = vxpose.xlu0.b32.cont [10/16] 0.0, 128
        %4642 = vxpose.xlu0.b32.cont [11/16] 0.0, 128
        %4643 = vxpose.xlu0.b32.cont [12/16] 0.0, 128
        %4644 = vxpose.xlu0.b32.cont [13/16] 0.0, 128
        %4645 = vxpose.xlu0.b32.cont [14/16] 0.0, 128
        %4646 = vxpose.xlu0.b32.cont [15/16] 0.0, 128
        %4647 = vxpose.xlu0.b32.end [16/16] 0.0, 128
        %v4648 = vpop.trf.xlu0
        %v4649 = vpop.trf.xlu0
        %v4650 = vpop.trf.xlu0
        %v4651 = vpop.trf.xlu0
        %v4652 = vpop.trf.xlu0
        %v4653 = vpop.trf.xlu0
        %v4654 = vpop.trf.xlu0
        %v4655 = vpop.trf.xlu0
        %v4656 = vpop.trf.xlu0
        %v4657 = vpop.trf.xlu0
        %v4658 = vpop.trf.xlu0
        %v4659 = vpop.trf.xlu0
        %v4660 = vpop.trf.xlu0
        %v4661 = vpop.trf.xlu0
        %v4662 = vpop.trf.xlu0
        %v4663 = vpop.trf.xlu0
        %4664 = vxpose.xlu0.b32.start [1/16] %v4272, 128
        %4665 = vxpose.xlu0.b32.cont [2/16] %v4273, 128
        %4666 = vxpose.xlu0.b32.cont [3/16] 0.0, 128
        %4667 = vxpose.xlu0.b32.cont [4/16] 0.0, 128
        %4668 = vxpose.xlu0.b32.cont [5/16] 0.0, 128
        %4669 = vxpose.xlu0.b32.cont [6/16] 0.0, 128
        %4670 = vxpose.xlu0.b32.cont [7/16] 0.0, 128
        %4671 = vxpose.xlu0.b32.cont [8/16] 0.0, 128
        %4672 = vxpose.xlu0.b32.cont [9/16] 0.0, 128
        %4673 = vxpose.xlu0.b32.cont [10/16] 0.0, 128
        %4674 = vxpose.xlu0.b32.cont [11/16] 0.0, 128
        %4675 = vxpose.xlu0.b32.cont [12/16] 0.0, 128
        %4676 = vxpose.xlu0.b32.cont [13/16] 0.0, 128
        %4677 = vxpose.xlu0.b32.cont [14/16] 0.0, 128
        %4678 = vxpose.xlu0.b32.cont [15/16] 0.0, 128
        %4679 = vxpose.xlu0.b32.end [16/16] 0.0, 128
        %v4680 = vpop.trf.xlu0
        %v4681 = vpop.trf.xlu0
        %v4682 = vpop.trf.xlu0
        %v4683 = vpop.trf.xlu0
        %v4684 = vpop.trf.xlu0
        %v4685 = vpop.trf.xlu0
        %v4686 = vpop.trf.xlu0
        %v4687 = vpop.trf.xlu0
        %v4688 = vpop.trf.xlu0
        %v4689 = vpop.trf.xlu0
        %v4690 = vpop.trf.xlu0
        %v4691 = vpop.trf.xlu0
        %v4692 = vpop.trf.xlu0
        %v4693 = vpop.trf.xlu0
        %v4694 = vpop.trf.xlu0
        %v4695 = vpop.trf.xlu0
        %4696 = vxpose.xlu0.b32.start [1/16] %v4274, 128
        %4697 = vxpose.xlu0.b32.cont [2/16] %v4275, 128
        %4698 = vxpose.xlu0.b32.cont [3/16] 0.0, 128
        %4699 = vxpose.xlu0.b32.cont [4/16] 0.0, 128
        %4700 = vxpose.xlu0.b32.cont [5/16] 0.0, 128
        %4701 = vxpose.xlu0.b32.cont [6/16] 0.0, 128
        %4702 = vxpose.xlu0.b32.cont [7/16] 0.0, 128
        %4703 = vxpose.xlu0.b32.cont [8/16] 0.0, 128
        %4704 = vxpose.xlu0.b32.cont [9/16] 0.0, 128
        %4705 = vxpose.xlu0.b32.cont [10/16] 0.0, 128
        %4706 = vxpose.xlu0.b32.cont [11/16] 0.0, 128
        %4707 = vxpose.xlu0.b32.cont [12/16] 0.0, 128
        %4708 = vxpose.xlu0.b32.cont [13/16] 0.0, 128
        %4709 = vxpose.xlu0.b32.cont [14/16] 0.0, 128
        %4710 = vxpose.xlu0.b32.cont [15/16] 0.0, 128
        %4711 = vxpose.xlu0.b32.end [16/16] 0.0, 128
        %v4712 = vpop.trf.xlu0
        %v4713 = vpop.trf.xlu0
        %v4714 = vpop.trf.xlu0
        %v4715 = vpop.trf.xlu0
        %v4716 = vpop.trf.xlu0
        %v4717 = vpop.trf.xlu0
        %v4718 = vpop.trf.xlu0
        %v4719 = vpop.trf.xlu0
        %v4720 = vpop.trf.xlu0
        %v4721 = vpop.trf.xlu0
        %v4722 = vpop.trf.xlu0
        %v4723 = vpop.trf.xlu0
        %v4724 = vpop.trf.xlu0
        %v4725 = vpop.trf.xlu0
        %v4726 = vpop.trf.xlu0
        %v4727 = vpop.trf.xlu0
        %4728 = vxpose.xlu0.b32.start [1/16] %v4276, 128
        %4729 = vxpose.xlu0.b32.cont [2/16] %v4277, 128
        %4730 = vxpose.xlu0.b32.cont [3/16] 0.0, 128
        %4731 = vxpose.xlu0.b32.cont [4/16] 0.0, 128
        %4732 = vxpose.xlu0.b32.cont [5/16] 0.0, 128
        %4733 = vxpose.xlu0.b32.cont [6/16] 0.0, 128
        %4734 = vxpose.xlu0.b32.cont [7/16] 0.0, 128
        %4735 = vxpose.xlu0.b32.cont [8/16] 0.0, 128
        %4736 = vxpose.xlu0.b32.cont [9/16] 0.0, 128
        %4737 = vxpose.xlu0.b32.cont [10/16] 0.0, 128
        %4738 = vxpose.xlu0.b32.cont [11/16] 0.0, 128
        %4739 = vxpose.xlu0.b32.cont [12/16] 0.0, 128
        %4740 = vxpose.xlu0.b32.cont [13/16] 0.0, 128
        %4741 = vxpose.xlu0.b32.cont [14/16] 0.0, 128
        %4742 = vxpose.xlu0.b32.cont [15/16] 0.0, 128
        %4743 = vxpose.xlu0.b32.end [16/16] 0.0, 128
        %v4744 = vpop.trf.xlu0
        %v4745 = vpop.trf.xlu0
        %v4746 = vpop.trf.xlu0
        %v4747 = vpop.trf.xlu0
        %v4748 = vpop.trf.xlu0
        %v4749 = vpop.trf.xlu0
        %v4750 = vpop.trf.xlu0
        %v4751 = vpop.trf.xlu0
        %v4752 = vpop.trf.xlu0
        %v4753 = vpop.trf.xlu0
        %v4754 = vpop.trf.xlu0
        %v4755 = vpop.trf.xlu0
        %v4756 = vpop.trf.xlu0
        %v4757 = vpop.trf.xlu0
        %v4758 = vpop.trf.xlu0
        %v4759 = vpop.trf.xlu0
        %4760 = vxpose.xlu0.b32.start [1/16] %v4278, 128
        %4761 = vxpose.xlu0.b32.cont [2/16] %v4279, 128
        %4762 = vxpose.xlu0.b32.cont [3/16] 0.0, 128
        %4763 = vxpose.xlu0.b32.cont [4/16] 0.0, 128
        %4764 = vxpose.xlu0.b32.cont [5/16] 0.0, 128
        %4765 = vxpose.xlu0.b32.cont [6/16] 0.0, 128
        %4766 = vxpose.xlu0.b32.cont [7/16] 0.0, 128
        %4767 = vxpose.xlu0.b32.cont [8/16] 0.0, 128
        %4768 = vxpose.xlu0.b32.cont [9/16] 0.0, 128
        %4769 = vxpose.xlu0.b32.cont [10/16] 0.0, 128
        %4770 = vxpose.xlu0.b32.cont [11/16] 0.0, 128
        %4771 = vxpose.xlu0.b32.cont [12/16] 0.0, 128
        %4772 = vxpose.xlu0.b32.cont [13/16] 0.0, 128
        %4773 = vxpose.xlu0.b32.cont [14/16] 0.0, 128
        %4774 = vxpose.xlu0.b32.cont [15/16] 0.0, 128
        %4775 = vxpose.xlu0.b32.end [16/16] 0.0, 128
        %v4776 = vpop.trf.xlu0
        %v4777 = vpop.trf.xlu0
        %v4778 = vpop.trf.xlu0
        %v4779 = vpop.trf.xlu0
        %v4780 = vpop.trf.xlu0
        %v4781 = vpop.trf.xlu0
        %v4782 = vpop.trf.xlu0
        %v4783 = vpop.trf.xlu0
        %v4784 = vpop.trf.xlu0
        %v4785 = vpop.trf.xlu0
        %v4786 = vpop.trf.xlu0
        %v4787 = vpop.trf.xlu0
        %v4788 = vpop.trf.xlu0
        %v4789 = vpop.trf.xlu0
        %v4790 = vpop.trf.xlu0
        %v4791 = vpop.trf.xlu0
        %v4792 = vld [vmem:[%s7] sm:$0xff]
        %v4793 = vld [vmem:[%s7 + $0x8] sm:$0xff]
        %v4795 = vsel %vm3819, %v4296, 0
        %v4798 = vsel %vm3819, %v4297, 0
        %v4801 = vsel %vm3819, %v4328, 0
        %v4804 = vsel %vm3819, %v4329, 0
        %v4807 = vsel %vm3819, %v4360, 0
        %v4810 = vsel %vm3819, %v4361, 0
        %v4813 = vsel %vm3819, %v4392, 0
        %v4816 = vsel %vm3819, %v4393, 0
        %v4819 = vsel %vm3819, %v4424, 0
        %v4822 = vsel %vm3819, %v4425, 0
        %v4825 = vsel %vm3819, %v4456, 0
        %v4828 = vsel %vm3819, %v4457, 0
        %v4831 = vsel %vm3819, %v4488, 0
        %v4834 = vsel %vm3819, %v4489, 0
        %v4837 = vsel %vm3819, %v4520, 0
        %v4840 = vsel %vm3819, %v4521, 0
        %v4843 = vsel %vm3819, %v4552, 0
        %v4846 = vsel %vm3819, %v4553, 0
        %v4849 = vsel %vm3819, %v4584, 0
        %v4852 = vsel %vm3819, %v4585, 0
        %v4855 = vsel %vm3819, %v4616, 0
        %v4858 = vsel %vm3819, %v4617, 0
        %v4861 = vsel %vm3819, %v4648, 0
        %v4864 = vsel %vm3819, %v4649, 0
        %v4867 = vsel %vm3819, %v4680, 0
        %v4870 = vsel %vm3819, %v4681, 0
        %v4873 = vsel %vm3819, %v4712, 0
        %v4876 = vsel %vm3819, %v4713, 0
        %v4879 = vsel %vm3819, %v4744, 0
        %v4882 = vsel %vm3819, %v4745, 0
        %v4885 = vsel %vm3819, %v4776, 0
        %v4888 = vsel %vm3819, %v4777, 0
        %4890 = vmatprep.subr.mxu0 0.0
        %4891 = vmatpush1.msra.mxu0 0.0
        %4892 = vmatprep.subr.mxu0 0.0
        %4893 = vmatpush1.msra.mxu0 0.0
        %4894 = vmatprep.subr.mxu0 0.0
        %4895 = vmatpush1.msra.mxu0 0.0
        %4896 = vmatprep.subr.mxu0 0.0
        %4897 = vmatpush1.msra.mxu0 0.0
        %4898 = vmatprep.subr.mxu0 0.0
        %4899 = vmatpush1.msra.mxu0 0.0
        %4900 = vmatprep.subr.mxu0 0.0
        %4901 = vmatpush1.msra.mxu0 0.0
        %4902 = vmatprep.subr.mxu0 0.0
        %4903 = vmatpush1.msra.mxu0 0.0
        %4904 = vmatprep.subr.mxu0 0.0
        %4905 = vmatpush1.msra.mxu0 0.0
        %4906 = vmatprep.subr.mxu0 0.0
        %4907 = vmatpush1.msra.mxu0 0.0
        %4908 = vmatprep.subr.mxu0 0.0
        %4909 = vmatpush1.msra.mxu0 0.0
        %4910 = vmatprep.subr.mxu0 0.0
        %4911 = vmatpush1.msra.mxu0 0.0
        %4912 = vmatprep.subr.mxu0 0.0
        %4913 = vmatpush1.msra.mxu0 0.0
        %4914 = vmatprep.subr.mxu0 0.0
        %4915 = vmatpush1.msra.mxu0 0.0
        %4916 = vmatprep.subr.mxu0 0.0
        %4917 = vmatpush1.msra.mxu0 0.0
        %4918 = vmatprep.subr.mxu0 0.0
        %4919 = vmatpush1.msra.mxu0 %v4793
        %4920 = vmatprep.subr.mxu0 0.0
        %4921 = vmatpush1.msra.mxu0 %v4792
        %4922 = vmatprep.subr.mxu0 0.0
        %4923 = vmatpush2.msra.mxu0 0.0
        %4924 = vmatprep.subr.mxu0 0.0
        %4925 = vmatpush2.msra.mxu0 0.0
        %4926 = vmatprep.subr.mxu0 0.0
        %4927 = vmatpush2.msra.mxu0 0.0
        %4928 = vmatprep.subr.mxu0 0.0
        %4929 = vmatpush2.msra.mxu0 0.0
        %4930 = vmatprep.subr.mxu0 0.0
        %4931 = vmatpush2.msra.mxu0 0.0
        %4932 = vmatprep.subr.mxu0 0.0
        %4933 = vmatpush2.msra.mxu0 0.0
        %4934 = vmatprep.subr.mxu0 0.0
        %4935 = vmatpush2.msra.mxu0 0.0
        %4936 = vmatprep.subr.mxu0 0.0
        %4937 = vmatpush2.msra.mxu0 0.0
        %4938 = vmatprep.subr.mxu0 0.0
        %4939 = vmatpush2.msra.mxu0 0.0
        %4940 = vmatprep.subr.mxu0 0.0
        %4941 = vmatpush2.msra.mxu0 0.0
        %4942 = vmatprep.subr.mxu0 0.0
        %4943 = vmatpush2.msra.mxu0 0.0
        %4944 = vmatprep.subr.mxu0 0.0
        %4945 = vmatpush2.msra.mxu0 0.0
        %4946 = vmatprep.subr.mxu0 0.0
        %4947 = vmatpush2.msra.mxu0 0.0
        %4948 = vmatprep.subr.mxu0 0.0
        %4949 = vmatpush2.msra.mxu0 0.0
        %4950 = vmatprep.subr.mxu0 0.0
        %4951 = vmatpush2.msra.mxu0 0.0
        %4952 = vmatprep.subr.mxu0 0.0
        %4953 = vmatpush2.msra.mxu0 0.0
        %4954 = vmatprep.mubr.f32.mxu0 0.0
        %4955 = vmatmul.mubr.f32.gmra.mxu0 %v4795
        %v4956 = vpop.f32.mrf.mxu0
        %v4957 = vadd.f32 0.0, %v4956
        %v4958 = vpop.f32.mrf.mxu0
        %4959 = vmatprep.mubr.f32.mxu0 0.0
        %4960 = vmatmul.mubr.f32.gmra.mxu0 %v4798
        %v4961 = vpop.f32.mrf.mxu0
        %v4962 = vadd.f32 0.0, %v4961
        %v4963 = vpop.f32.mrf.mxu0
        %4964 = vmatprep.mubr.f32.mxu0 0.0
        %4965 = vmatmul.mubr.f32.gmra.mxu0 %v4801
        %v4966 = vpop.f32.mrf.mxu0
        %v4967 = vadd.f32 0.0, %v4966
        %v4968 = vpop.f32.mrf.mxu0
        %4969 = vmatprep.mubr.f32.mxu0 0.0
        %4970 = vmatmul.mubr.f32.gmra.mxu0 %v4804
        %v4971 = vpop.f32.mrf.mxu0
        %v4972 = vadd.f32 0.0, %v4971
        %v4973 = vpop.f32.mrf.mxu0
        %4974 = vmatprep.mubr.f32.mxu0 0.0
        %4975 = vmatmul.mubr.f32.gmra.mxu0 %v4807
        %v4976 = vpop.f32.mrf.mxu0
        %v4977 = vadd.f32 0.0, %v4976
        %v4978 = vpop.f32.mrf.mxu0
        %4979 = vmatprep.mubr.f32.mxu0 0.0
        %4980 = vmatmul.mubr.f32.gmra.mxu0 %v4810
        %v4981 = vpop.f32.mrf.mxu0
        %v4982 = vadd.f32 0.0, %v4981
        %v4983 = vpop.f32.mrf.mxu0
        %4984 = vmatprep.mubr.f32.mxu0 0.0
        %4985 = vmatmul.mubr.f32.gmra.mxu0 %v4813
        %v4986 = vpop.f32.mrf.mxu0
        %v4987 = vadd.f32 0.0, %v4986
        %v4988 = vpop.f32.mrf.mxu0
        %4989 = vmatprep.mubr.f32.mxu0 0.0
        %4990 = vmatmul.mubr.f32.gmra.mxu0 %v4816
        %v4991 = vpop.f32.mrf.mxu0
        %v4992 = vadd.f32 0.0, %v4991
        %v4993 = vpop.f32.mrf.mxu0
        %4994 = vmatprep.mubr.f32.mxu0 0.0
        %4995 = vmatmul.mubr.f32.gmra.mxu0 %v4819
        %v4996 = vpop.f32.mrf.mxu0
        %v4997 = vadd.f32 0.0, %v4996
        %v4998 = vpop.f32.mrf.mxu0
        %4999 = vmatprep.mubr.f32.mxu0 0.0
        %5000 = vmatmul.mubr.f32.gmra.mxu0 %v4822
        %v5001 = vpop.f32.mrf.mxu0
        %v5002 = vadd.f32 0.0, %v5001
        %v5003 = vpop.f32.mrf.mxu0
        %5004 = vmatprep.mubr.f32.mxu0 0.0
        %5005 = vmatmul.mubr.f32.gmra.mxu0 %v4825
        %v5006 = vpop.f32.mrf.mxu0
        %v5007 = vadd.f32 0.0, %v5006
        %v5008 = vpop.f32.mrf.mxu0
        %5009 = vmatprep.mubr.f32.mxu0 0.0
        %5010 = vmatmul.mubr.f32.gmra.mxu0 %v4828
        %v5011 = vpop.f32.mrf.mxu0
        %v5012 = vadd.f32 0.0, %v5011
        %v5013 = vpop.f32.mrf.mxu0
        %5014 = vmatprep.mubr.f32.mxu0 0.0
        %5015 = vmatmul.mubr.f32.gmra.mxu0 %v4831
        %v5016 = vpop.f32.mrf.mxu0
        %v5017 = vadd.f32 0.0, %v5016
        %v5018 = vpop.f32.mrf.mxu0
        %5019 = vmatprep.mubr.f32.mxu0 0.0
        %5020 = vmatmul.mubr.f32.gmra.mxu0 %v4834
        %v5021 = vpop.f32.mrf.mxu0
        %v5022 = vadd.f32 0.0, %v5021
        %v5023 = vpop.f32.mrf.mxu0
        %5024 = vmatprep.mubr.f32.mxu0 0.0
        %5025 = vmatmul.mubr.f32.gmra.mxu0 %v4837
        %v5026 = vpop.f32.mrf.mxu0
        %v5027 = vadd.f32 0.0, %v5026
        %v5028 = vpop.f32.mrf.mxu0
        %5029 = vmatprep.mubr.f32.mxu0 0.0
        %5030 = vmatmul.mubr.f32.gmra.mxu0 %v4840
        %v5031 = vpop.f32.mrf.mxu0
        %v5032 = vadd.f32 0.0, %v5031
        %v5033 = vpop.f32.mrf.mxu0
        %5034 = vmatprep.mubr.f32.mxu0 0.0
        %5035 = vmatmul.mubr.f32.gmra.mxu0 %v4843
        %v5036 = vpop.f32.mrf.mxu0
        %v5037 = vadd.f32 0.0, %v5036
        %v5038 = vpop.f32.mrf.mxu0
        %5039 = vmatprep.mubr.f32.mxu0 0.0
        %5040 = vmatmul.mubr.f32.gmra.mxu0 %v4846
        %v5041 = vpop.f32.mrf.mxu0
        %v5042 = vadd.f32 0.0, %v5041
        %v5043 = vpop.f32.mrf.mxu0
        %5044 = vmatprep.mubr.f32.mxu0 0.0
        %5045 = vmatmul.mubr.f32.gmra.mxu0 %v4849
        %v5046 = vpop.f32.mrf.mxu0
        %v5047 = vadd.f32 0.0, %v5046
        %v5048 = vpop.f32.mrf.mxu0
        %5049 = vmatprep.mubr.f32.mxu0 0.0
        %5050 = vmatmul.mubr.f32.gmra.mxu0 %v4852
        %v5051 = vpop.f32.mrf.mxu0
        %v5052 = vadd.f32 0.0, %v5051
        %v5053 = vpop.f32.mrf.mxu0
        %5054 = vmatprep.mubr.f32.mxu0 0.0
        %5055 = vmatmul.mubr.f32.gmra.mxu0 %v4855
        %v5056 = vpop.f32.mrf.mxu0
        %v5057 = vadd.f32 0.0, %v5056
        %v5058 = vpop.f32.mrf.mxu0
        %5059 = vmatprep.mubr.f32.mxu0 0.0
        %5060 = vmatmul.mubr.f32.gmra.mxu0 %v4858
        %v5061 = vpop.f32.mrf.mxu0
        %v5062 = vadd.f32 0.0, %v5061
        %v5063 = vpop.f32.mrf.mxu0
        %5064 = vmatprep.mubr.f32.mxu0 0.0
        %5065 = vmatmul.mubr.f32.gmra.mxu0 %v4861
        %v5066 = vpop.f32.mrf.mxu0
        %v5067 = vadd.f32 0.0, %v5066
        %v5068 = vpop.f32.mrf.mxu0
        %5069 = vmatprep.mubr.f32.mxu0 0.0
        %5070 = vmatmul.mubr.f32.gmra.mxu0 %v4864
        %v5071 = vpop.f32.mrf.mxu0
        %v5072 = vadd.f32 0.0, %v5071
        %v5073 = vpop.f32.mrf.mxu0
        %5074 = vmatprep.mubr.f32.mxu0 0.0
        %5075 = vmatmul.mubr.f32.gmra.mxu0 %v4867
        %v5076 = vpop.f32.mrf.mxu0
        %v5077 = vadd.f32 0.0, %v5076
        %v5078 = vpop.f32.mrf.mxu0
        %5079 = vmatprep.mubr.f32.mxu0 0.0
        %5080 = vmatmul.mubr.f32.gmra.mxu0 %v4870
        %v5081 = vpop.f32.mrf.mxu0
        %v5082 = vadd.f32 0.0, %v5081
        %v5083 = vpop.f32.mrf.mxu0
        %5084 = vmatprep.mubr.f32.mxu0 0.0
        %5085 = vmatmul.mubr.f32.gmra.mxu0 %v4873
        %v5086 = vpop.f32.mrf.mxu0
        %v5087 = vadd.f32 0.0, %v5086
        %v5088 = vpop.f32.mrf.mxu0
        %5089 = vmatprep.mubr.f32.mxu0 0.0
        %5090 = vmatmul.mubr.f32.gmra.mxu0 %v4876
        %v5091 = vpop.f32.mrf.mxu0
        %v5092 = vadd.f32 0.0, %v5091
        %v5093 = vpop.f32.mrf.mxu0
        %5094 = vmatprep.mubr.f32.mxu0 0.0
        %5095 = vmatmul.mubr.f32.gmra.mxu0 %v4879
        %v5096 = vpop.f32.mrf.mxu0
        %v5097 = vadd.f32 0.0, %v5096
        %v5098 = vpop.f32.mrf.mxu0
        %5099 = vmatprep.mubr.f32.mxu0 0.0
        %5100 = vmatmul.mubr.f32.gmra.mxu0 %v4882
        %v5101 = vpop.f32.mrf.mxu0
        %v5102 = vadd.f32 0.0, %v5101
        %v5103 = vpop.f32.mrf.mxu0
        %5104 = vmatprep.mubr.f32.mxu0 0.0
        %5105 = vmatmul.mubr.f32.gmra.mxu0 %v4885
        %v5106 = vpop.f32.mrf.mxu0
        %v5107 = vadd.f32 0.0, %v5106
        %v5108 = vpop.f32.mrf.mxu0
        %5109 = vmatprep.mubr.f32.mxu0 0.0
        %5110 = vmatmul.mubr.f32.gmra.mxu0 %v4888
        %v5111 = vpop.f32.mrf.mxu0
        %v5112 = vadd.f32 0.0, %v5111
        %v5113 = vpop.f32.mrf.mxu0
        %5114 = vdwg.mxu0
        %vm5115 = vcmask 261120
        %5116 = vst.msk [vmem:[#allocation2] sm:$0xff] %vm5115, %v4957
        %5117 = vst.msk [vmem:[#allocation2 + $0x8] sm:$0xff] %vm5115, %v4962
        %5118 = vst.msk [vmem:[#allocation2 + $0x10] sm:$0xff] %vm5115, %v4967
        %5119 = vst.msk [vmem:[#allocation2 + $0x18] sm:$0xff] %vm5115, %v4972
        %5120 = vst.msk [vmem:[#allocation2 + $0x20] sm:$0xff] %vm5115, %v4977
        %5121 = vst.msk [vmem:[#allocation2 + $0x28] sm:$0xff] %vm5115, %v4982
        %5122 = vst.msk [vmem:[#allocation2 + $0x30] sm:$0xff] %vm5115, %v4987
        %5123 = vst.msk [vmem:[#allocation2 + $0x38] sm:$0xff] %vm5115, %v4992
        %5124 = vst.msk [vmem:[#allocation2 + $0x40] sm:$0xff] %vm5115, %v4997
        %5125 = vst.msk [vmem:[#allocation2 + $0x48] sm:$0xff] %vm5115, %v5002
        %5126 = vst.msk [vmem:[#allocation2 + $0x50] sm:$0xff] %vm5115, %v5007
        %5127 = vst.msk [vmem:[#allocation2 + $0x58] sm:$0xff] %vm5115, %v5012
        %5128 = vst.msk [vmem:[#allocation2 + $0x60] sm:$0xff] %vm5115, %v5017
        %5129 = vst.msk [vmem:[#allocation2 + $0x68] sm:$0xff] %vm5115, %v5022
        %5130 = vst.msk [vmem:[#allocation2 + $0x70] sm:$0xff] %vm5115, %v5027
        %5131 = vst.msk [vmem:[#allocation2 + $0x78] sm:$0xff] %vm5115, %v5032
        %5132 = vst.msk [vmem:[#allocation2 + $0x80] sm:$0xff] %vm5115, %v5037
        %5133 = vst.msk [vmem:[#allocation2 + $0x88] sm:$0xff] %vm5115, %v5042
        %5134 = vst.msk [vmem:[#allocation2 + $0x90] sm:$0xff] %vm5115, %v5047
        %5135 = vst.msk [vmem:[#allocation2 + $0x98] sm:$0xff] %vm5115, %v5052
        %5136 = vst.msk [vmem:[#allocation2 + $0xa0] sm:$0xff] %vm5115, %v5057
        %5137 = vst.msk [vmem:[#allocation2 + $0xa8] sm:$0xff] %vm5115, %v5062
        %5138 = vst.msk [vmem:[#allocation2 + $0xb0] sm:$0xff] %vm5115, %v5067
        %5139 = vst.msk [vmem:[#allocation2 + $0xb8] sm:$0xff] %vm5115, %v5072
        %5140 = vst.msk [vmem:[#allocation2 + $0xc0] sm:$0xff] %vm5115, %v5077
        %5141 = vst.msk [vmem:[#allocation2 + $0xc8] sm:$0xff] %vm5115, %v5082
        %5142 = vst.msk [vmem:[#allocation2 + $0xd0] sm:$0xff] %vm5115, %v5087
        %5143 = vst.msk [vmem:[#allocation2 + $0xd8] sm:$0xff] %vm5115, %v5092
        %5144 = vst.msk [vmem:[#allocation2 + $0xe0] sm:$0xff] %vm5115, %v5097
        %5145 = vst.msk [vmem:[#allocation2 + $0xe8] sm:$0xff] %vm5115, %v5102
        %5146 = vst.msk [vmem:[#allocation2 + $0xf0] sm:$0xff] %vm5115, %v5107
        %5147 = vst.msk [vmem:[#allocation2 + $0xf8] sm:$0xff] %vm5115, %v5112
        %v5148 = vld [vmem:[%s8] sm:$0xff]
        %v5149 = vld [vmem:[%s8 + $0x8] sm:$0xff]
        %v5150 = vld [vmem:[%s8 + $0x10] sm:$0xff]
        %v5151 = vld [vmem:[%s8 + $0x18] sm:$0xff]
        %v5152 = vld [vmem:[#allocation2] sm:$0x1]
        %v5153 = vld [vmem:[#allocation2 + $0x10] sm:$0x1]
        %v5154 = vld [vmem:[#allocation2 + $0x20] sm:$0x1]
        %v5155 = vld [vmem:[#allocation2 + $0x30] sm:$0x1]
        %v5156 = vld [vmem:[#allocation2 + $0x40] sm:$0x1]
        %v5157 = vld [vmem:[#allocation2 + $0x50] sm:$0x1]
        %v5158 = vld [vmem:[#allocation2 + $0x60] sm:$0x1]
        %v5159 = vld [vmem:[#allocation2 + $0x70] sm:$0x1]
        %v5160 = vld [vmem:[#allocation2 + $0x80] sm:$0x1]
        %v5161 = vld [vmem:[#allocation2 + $0x90] sm:$0x1]
        %v5162 = vld [vmem:[#allocation2 + $0xa0] sm:$0x1]
        %v5163 = vld [vmem:[#allocation2 + $0xb0] sm:$0x1]
        %v5164 = vld [vmem:[#allocation2 + $0xc0] sm:$0x1]
        %v5165 = vld [vmem:[#allocation2 + $0xd0] sm:$0x1]
        %v5166 = vld [vmem:[#allocation2 + $0xe0] sm:$0x1]
        %v5167 = vld [vmem:[#allocation2 + $0xf0] sm:$0x1]
        %v5184 = vrot.slane %v5153, 7
        %vm5185 = vcmask 1041409
        %v5186 = vsel %vm5185, %v5184, %v5152
        %v5187 = vrot.slane %v5154, 6
        %vm5188 = vcmask 1042434
        %v5189 = vsel %vm5188, %v5187, %v5186
        %v5190 = vrot.slane %v5155, 5
        %vm5191 = vcmask 1043459
        %v5192 = vsel %vm5191, %v5190, %v5189
        %v5193 = vrot.slane %v5156, 4
        %vm5194 = vcmask 1044484
        %v5195 = vsel %vm5194, %v5193, %v5192
        %v5196 = vrot.slane %v5157, 3
        %vm5197 = vcmask 1045509
        %v5198 = vsel %vm5197, %v5196, %v5195
        %v5199 = vrot.slane %v5158, 2
        %vm5200 = vcmask 1046534
        %v5201 = vsel %vm5200, %v5199, %v5198
        %v5202 = vrot.slane %v5159, 1
        %vm5203 = vcmask 1047559
        %v5204 = vsel %vm5203, %v5202, %v5201
        %v5205 = vrot.slane %v5161, 7
        %v5206 = vsel %vm5185, %v5205, %v5160
        %v5207 = vrot.slane %v5162, 6
        %v5208 = vsel %vm5188, %v5207, %v5206
        %v5209 = vrot.slane %v5163, 5
        %v5210 = vsel %vm5191, %v5209, %v5208
        %v5211 = vrot.slane %v5164, 4
        %v5212 = vsel %vm5194, %v5211, %v5210
        %v5213 = vrot.slane %v5165, 3
        %v5214 = vsel %vm5197, %v5213, %v5212
        %v5215 = vrot.slane %v5166, 2
        %v5216 = vsel %vm5200, %v5215, %v5214
        %v5217 = vrot.slane %v5167, 1
        %v5218 = vsel %vm5203, %v5217, %v5216
        %v5222 = vsel %vm3819, %v5148, 0
        %v5225 = vsel %vm3819, %v5149, 0
        %v5228 = vsel %vm3819, %v5150, 0
        %v5231 = vsel %vm3819, %v5151, 0
        %5233 = vmatprep.subr.mxu0 0.0
        %5234 = vmatpush1.msra.mxu0 0.0
        %5235 = vmatprep.subr.mxu0 0.0
        %5236 = vmatpush1.msra.mxu0 0.0
        %5237 = vmatprep.subr.mxu0 0.0
        %5238 = vmatpush1.msra.mxu0 0.0
        %5239 = vmatprep.subr.mxu0 0.0
        %5240 = vmatpush1.msra.mxu0 0.0
        %5241 = vmatprep.subr.mxu0 0.0
        %5242 = vmatpush1.msra.mxu0 0.0
        %5243 = vmatprep.subr.mxu0 0.0
        %5244 = vmatpush1.msra.mxu0 0.0
        %5245 = vmatprep.subr.mxu0 0.0
        %5246 = vmatpush1.msra.mxu0 0.0
        %5247 = vmatprep.subr.mxu0 0.0
        %5248 = vmatpush1.msra.mxu0 0.0
        %5249 = vmatprep.subr.mxu0 0.0
        %5250 = vmatpush1.msra.mxu0 0.0
        %5251 = vmatprep.subr.mxu0 0.0
        %5252 = vmatpush1.msra.mxu0 0.0
        %5253 = vmatprep.subr.mxu0 0.0
        %5254 = vmatpush1.msra.mxu0 0.0
        %5255 = vmatprep.subr.mxu0 0.0
        %5256 = vmatpush1.msra.mxu0 0.0
        %5257 = vmatprep.subr.mxu0 0.0
        %5258 = vmatpush1.msra.mxu0 0.0
        %5259 = vmatprep.subr.mxu0 0.0
        %5260 = vmatpush1.msra.mxu0 0.0
        %5261 = vmatprep.subr.mxu0 0.0
        %5262 = vmatpush1.msra.mxu0 %v5218
        %5263 = vmatprep.subr.mxu0 0.0
        %5264 = vmatpush1.msra.mxu0 %v5204
        %5265 = vmatprep.subr.mxu0 0.0
        %5266 = vmatpush2.msra.mxu0 0.0
        %5267 = vmatprep.subr.mxu0 0.0
        %5268 = vmatpush2.msra.mxu0 0.0
        %5269 = vmatprep.subr.mxu0 0.0
        %5270 = vmatpush2.msra.mxu0 0.0
        %5271 = vmatprep.subr.mxu0 0.0
        %5272 = vmatpush2.msra.mxu0 0.0
        %5273 = vmatprep.subr.mxu0 0.0
        %5274 = vmatpush2.msra.mxu0 0.0
        %5275 = vmatprep.subr.mxu0 0.0
        %5276 = vmatpush2.msra.mxu0 0.0
        %5277 = vmatprep.subr.mxu0 0.0
        %5278 = vmatpush2.msra.mxu0 0.0
        %5279 = vmatprep.subr.mxu0 0.0
        %5280 = vmatpush2.msra.mxu0 0.0
        %5281 = vmatprep.subr.mxu0 0.0
        %5282 = vmatpush2.msra.mxu0 0.0
        %5283 = vmatprep.subr.mxu0 0.0
        %5284 = vmatpush2.msra.mxu0 0.0
        %5285 = vmatprep.subr.mxu0 0.0
        %5286 = vmatpush2.msra.mxu0 0.0
        %5287 = vmatprep.subr.mxu0 0.0
        %5288 = vmatpush2.msra.mxu0 0.0
        %5289 = vmatprep.subr.mxu0 0.0
        %5290 = vmatpush2.msra.mxu0 0.0
        %5291 = vmatprep.subr.mxu0 0.0
        %5292 = vmatpush2.msra.mxu0 0.0
        %5293 = vmatprep.subr.mxu0 0.0
        %5294 = vmatpush2.msra.mxu0 0.0
        %5295 = vmatprep.subr.mxu0 0.0
        %5296 = vmatpush2.msra.mxu0 0.0
        %5297 = vmatprep.mubr.f32.mxu0 0.0
        %5298 = vmatmul.mubr.f32.gmra.mxu0 %v5222
        %v5299 = vpop.f32.mrf.mxu0
        %v5300 = vadd.f32 0.0, %v5299
        %v5301 = vpop.f32.mrf.mxu0
        %5302 = vmatprep.mubr.f32.mxu0 0.0
        %5303 = vmatmul.mubr.f32.gmra.mxu0 %v5225
        %v5304 = vpop.f32.mrf.mxu0
        %v5305 = vadd.f32 0.0, %v5304
        %v5306 = vpop.f32.mrf.mxu0
        %5307 = vmatprep.mubr.f32.mxu0 0.0
        %5308 = vmatmul.mubr.f32.gmra.mxu0 %v5228
        %v5309 = vpop.f32.mrf.mxu0
        %v5310 = vadd.f32 0.0, %v5309
        %v5311 = vpop.f32.mrf.mxu0
        %5312 = vmatprep.mubr.f32.mxu0 0.0
        %5313 = vmatmul.mubr.f32.gmra.mxu0 %v5231
        %v5314 = vpop.f32.mrf.mxu0
        %v5315 = vadd.f32 0.0, %v5314
        %v5316 = vpop.f32.mrf.mxu0
        %5317 = vdwg.mxu0
        %5318 = vst.msk [vmem:[%s325] sm:$0xff] %vm5115, %v5300
        %5319 = vst.msk [vmem:[%s325 + $0x8] sm:$0xff] %vm5115, %v5305
        %5320 = vst.msk [vmem:[%s325 + $0x10] sm:$0xff] %vm5115, %v5310
        %5321 = vst.msk [vmem:[%s325 + $0x18] sm:$0xff] %vm5115, %v5315
        %v5322 = vld [vmem:[#allocation2 + $0x1] sm:$0x1]
        %v5323 = vld [vmem:[#allocation2 + $0x11] sm:$0x1]
        %v5324 = vld [vmem:[#allocation2 + $0x21] sm:$0x1]
        %v5325 = vld [vmem:[#allocation2 + $0x31] sm:$0x1]
        %v5326 = vld [vmem:[#allocation2 + $0x41] sm:$0x1]
        %v5327 = vld [vmem:[#allocation2 + $0x51] sm:$0x1]
        %v5328 = vld [vmem:[#allocation2 + $0x61] sm:$0x1]
        %v5329 = vld [vmem:[#allocation2 + $0x71] sm:$0x1]
        %v5330 = vld [vmem:[#allocation2 + $0x81] sm:$0x1]
        %v5331 = vld [vmem:[#allocation2 + $0x91] sm:$0x1]
        %v5332 = vld [vmem:[#allocation2 + $0xa1] sm:$0x1]
        %v5333 = vld [vmem:[#allocation2 + $0xb1] sm:$0x1]
        %v5334 = vld [vmem:[#allocation2 + $0xc1] sm:$0x1]
        %v5335 = vld [vmem:[#allocation2 + $0xd1] sm:$0x1]
        %v5336 = vld [vmem:[#allocation2 + $0xe1] sm:$0x1]
        %v5337 = vld [vmem:[#allocation2 + $0xf1] sm:$0x1]
        %v5354 = vrot.slane %v5323, 7
        %v5355 = vsel %vm5185, %v5354, %v5322
        %v5356 = vrot.slane %v5324, 6
        %v5357 = vsel %vm5188, %v5356, %v5355
        %v5358 = vrot.slane %v5325, 5
        %v5359 = vsel %vm5191, %v5358, %v5357
        %v5360 = vrot.slane %v5326, 4
        %v5361 = vsel %vm5194, %v5360, %v5359
        %v5362 = vrot.slane %v5327, 3
        %v5363 = vsel %vm5197, %v5362, %v5361
        %v5364 = vrot.slane %v5328, 2
        %v5365 = vsel %vm5200, %v5364, %v5363
        %v5366 = vrot.slane %v5329, 1
        %v5367 = vsel %vm5203, %v5366, %v5365
        %v5368 = vrot.slane %v5331, 7
        %v5369 = vsel %vm5185, %v5368, %v5330
        %v5370 = vrot.slane %v5332, 6
        %v5371 = vsel %vm5188, %v5370, %v5369
        %v5372 = vrot.slane %v5333, 5
        %v5373 = vsel %vm5191, %v5372, %v5371
        %v5374 = vrot.slane %v5334, 4
        %v5375 = vsel %vm5194, %v5374, %v5373
        %v5376 = vrot.slane %v5335, 3
        %v5377 = vsel %vm5197, %v5376, %v5375
        %v5378 = vrot.slane %v5336, 2
        %v5379 = vsel %vm5200, %v5378, %v5377
        %v5380 = vrot.slane %v5337, 1
        %v5381 = vsel %vm5203, %v5380, %v5379
        %5384 = vmatprep.subr.mxu0 0.0
        %5385 = vmatpush1.msra.mxu0 0.0
        %5386 = vmatprep.subr.mxu0 0.0
        %5387 = vmatpush1.msra.mxu0 0.0
        %5388 = vmatprep.subr.mxu0 0.0
        %5389 = vmatpush1.msra.mxu0 0.0
        %5390 = vmatprep.subr.mxu0 0.0
        %5391 = vmatpush1.msra.mxu0 0.0
        %5392 = vmatprep.subr.mxu0 0.0
        %5393 = vmatpush1.msra.mxu0 0.0
        %5394 = vmatprep.subr.mxu0 0.0
        %5395 = vmatpush1.msra.mxu0 0.0
        %5396 = vmatprep.subr.mxu0 0.0
        %5397 = vmatpush1.msra.mxu0 0.0
        %5398 = vmatprep.subr.mxu0 0.0
        %5399 = vmatpush1.msra.mxu0 0.0
        %5400 = vmatprep.subr.mxu0 0.0
        %5401 = vmatpush1.msra.mxu0 0.0
        %5402 = vmatprep.subr.mxu0 0.0
        %5403 = vmatpush1.msra.mxu0 0.0
        %5404 = vmatprep.subr.mxu0 0.0
        %5405 = vmatpush1.msra.mxu0 0.0
        %5406 = vmatprep.subr.mxu0 0.0
        %5407 = vmatpush1.msra.mxu0 0.0
        %5408 = vmatprep.subr.mxu0 0.0
        %5409 = vmatpush1.msra.mxu0 0.0
        %5410 = vmatprep.subr.mxu0 0.0
        %5411 = vmatpush1.msra.mxu0 0.0
        %5412 = vmatprep.subr.mxu0 0.0
        %5413 = vmatpush1.msra.mxu0 %v5381
        %5414 = vmatprep.subr.mxu0 0.0
        %5415 = vmatpush1.msra.mxu0 %v5367
        %5416 = vmatprep.subr.mxu0 0.0
        %5417 = vmatpush2.msra.mxu0 0.0
        %5418 = vmatprep.subr.mxu0 0.0
        %5419 = vmatpush2.msra.mxu0 0.0
        %5420 = vmatprep.subr.mxu0 0.0
        %5421 = vmatpush2.msra.mxu0 0.0
        %5422 = vmatprep.subr.mxu0 0.0
        %5423 = vmatpush2.msra.mxu0 0.0
        %5424 = vmatprep.subr.mxu0 0.0
        %5425 = vmatpush2.msra.mxu0 0.0
        %5426 = vmatprep.subr.mxu0 0.0
        %5427 = vmatpush2.msra.mxu0 0.0
        %5428 = vmatprep.subr.mxu0 0.0
        %5429 = vmatpush2.msra.mxu0 0.0
        %5430 = vmatprep.subr.mxu0 0.0
        %5431 = vmatpush2.msra.mxu0 0.0
        %5432 = vmatprep.subr.mxu0 0.0
        %5433 = vmatpush2.msra.mxu0 0.0
        %5434 = vmatprep.subr.mxu0 0.0
        %5435 = vmatpush2.msra.mxu0 0.0
        %5436 = vmatprep.subr.mxu0 0.0
        %5437 = vmatpush2.msra.mxu0 0.0
        %5438 = vmatprep.subr.mxu0 0.0
        %5439 = vmatpush2.msra.mxu0 0.0
        %5440 = vmatprep.subr.mxu0 0.0
        %5441 = vmatpush2.msra.mxu0 0.0
        %5442 = vmatprep.subr.mxu0 0.0
        %5443 = vmatpush2.msra.mxu0 0.0
        %5444 = vmatprep.subr.mxu0 0.0
        %5445 = vmatpush2.msra.mxu0 0.0
        %5446 = vmatprep.subr.mxu0 0.0
        %5447 = vmatpush2.msra.mxu0 0.0
        %5448 = vmatprep.mubr.f32.mxu0 0.0
        %5449 = vmatmul.mubr.f32.gmra.mxu0 %v5222
        %v5450 = vpop.f32.mrf.mxu0
        %v5451 = vadd.f32 0.0, %v5450
        %v5452 = vpop.f32.mrf.mxu0
        %5453 = vmatprep.mubr.f32.mxu0 0.0
        %5454 = vmatmul.mubr.f32.gmra.mxu0 %v5225
        %v5455 = vpop.f32.mrf.mxu0
        %v5456 = vadd.f32 0.0, %v5455
        %v5457 = vpop.f32.mrf.mxu0
        %5458 = vmatprep.mubr.f32.mxu0 0.0
        %5459 = vmatmul.mubr.f32.gmra.mxu0 %v5228
        %v5460 = vpop.f32.mrf.mxu0
        %v5461 = vadd.f32 0.0, %v5460
        %v5462 = vpop.f32.mrf.mxu0
        %5463 = vmatprep.mubr.f32.mxu0 0.0
        %5464 = vmatmul.mubr.f32.gmra.mxu0 %v5231
        %v5465 = vpop.f32.mrf.mxu0
        %v5466 = vadd.f32 0.0, %v5465
        %v5467 = vpop.f32.mrf.mxu0
        %5468 = vdwg.mxu0
        %s5469 = scalar_lea.vmem %s325, 32 [#allocation3]
        %5470 = vst.msk [vmem:[%s5469] sm:$0xff] %vm5115, %v5451
        %5471 = vst.msk [vmem:[%s5469 + $0x8] sm:$0xff] %vm5115, %v5456
        %5472 = vst.msk [vmem:[%s5469 + $0x10] sm:$0xff] %vm5115, %v5461
        %5473 = vst.msk [vmem:[%s5469 + $0x18] sm:$0xff] %vm5115, %v5466
        %v5474 = vld [vmem:[#allocation2 + $0x2] sm:$0x1]
        %v5475 = vld [vmem:[#allocation2 + $0x12] sm:$0x1]
        %v5476 = vld [vmem:[#allocation2 + $0x22] sm:$0x1]
        %v5477 = vld [vmem:[#allocation2 + $0x32] sm:$0x1]
        %v5478 = vld [vmem:[#allocation2 + $0x42] sm:$0x1]
        %v5479 = vld [vmem:[#allocation2 + $0x52] sm:$0x1]
        %v5480 = vld [vmem:[#allocation2 + $0x62] sm:$0x1]
        %v5481 = vld [vmem:[#allocation2 + $0x72] sm:$0x1]
        %v5482 = vld [vmem:[#allocation2 + $0x82] sm:$0x1]
        %v5483 = vld [vmem:[#allocation2 + $0x92] sm:$0x1]
        %v5484 = vld [vmem:[#allocation2 + $0xa2] sm:$0x1]
        %v5485 = vld [vmem:[#allocation2 + $0xb2] sm:$0x1]
        %v5486 = vld [vmem:[#allocation2 + $0xc2] sm:$0x1]
        %v5487 = vld [vmem:[#allocation2 + $0xd2] sm:$0x1]
        %v5488 = vld [vmem:[#allocation2 + $0xe2] sm:$0x1]
        %v5489 = vld [vmem:[#allocation2 + $0xf2] sm:$0x1]
        %v5506 = vrot.slane %v5475, 7
        %v5507 = vsel %vm5185, %v5506, %v5474
        %v5508 = vrot.slane %v5476, 6
        %v5509 = vsel %vm5188, %v5508, %v5507
        %v5510 = vrot.slane %v5477, 5
        %v5511 = vsel %vm5191, %v5510, %v5509
        %v5512 = vrot.slane %v5478, 4
        %v5513 = vsel %vm5194, %v5512, %v5511
        %v5514 = vrot.slane %v5479, 3
        %v5515 = vsel %vm5197, %v5514, %v5513
        %v5516 = vrot.slane %v5480, 2
        %v5517 = vsel %vm5200, %v5516, %v5515
        %v5518 = vrot.slane %v5481, 1
        %v5519 = vsel %vm5203, %v5518, %v5517
        %v5520 = vrot.slane %v5483, 7
        %v5521 = vsel %vm5185, %v5520, %v5482
        %v5522 = vrot.slane %v5484, 6
        %v5523 = vsel %vm5188, %v5522, %v5521
        %v5524 = vrot.slane %v5485, 5
        %v5525 = vsel %vm5191, %v5524, %v5523
        %v5526 = vrot.slane %v5486, 4
        %v5527 = vsel %vm5194, %v5526, %v5525
        %v5528 = vrot.slane %v5487, 3
        %v5529 = vsel %vm5197, %v5528, %v5527
        %v5530 = vrot.slane %v5488, 2
        %v5531 = vsel %vm5200, %v5530, %v5529
        %v5532 = vrot.slane %v5489, 1
        %v5533 = vsel %vm5203, %v5532, %v5531
        %5536 = vmatprep.subr.mxu0 0.0
        %5537 = vmatpush1.msra.mxu0 0.0
        %5538 = vmatprep.subr.mxu0 0.0
        %5539 = vmatpush1.msra.mxu0 0.0
        %5540 = vmatprep.subr.mxu0 0.0
        %5541 = vmatpush1.msra.mxu0 0.0
        %5542 = vmatprep.subr.mxu0 0.0
        %5543 = vmatpush1.msra.mxu0 0.0
        %5544 = vmatprep.subr.mxu0 0.0
        %5545 = vmatpush1.msra.mxu0 0.0
        %5546 = vmatprep.subr.mxu0 0.0
        %5547 = vmatpush1.msra.mxu0 0.0
        %5548 = vmatprep.subr.mxu0 0.0
        %5549 = vmatpush1.msra.mxu0 0.0
        %5550 = vmatprep.subr.mxu0 0.0
        %5551 = vmatpush1.msra.mxu0 0.0
        %5552 = vmatprep.subr.mxu0 0.0
        %5553 = vmatpush1.msra.mxu0 0.0
        %5554 = vmatprep.subr.mxu0 0.0
        %5555 = vmatpush1.msra.mxu0 0.0
        %5556 = vmatprep.subr.mxu0 0.0
        %5557 = vmatpush1.msra.mxu0 0.0
        %5558 = vmatprep.subr.mxu0 0.0
        %5559 = vmatpush1.msra.mxu0 0.0
        %5560 = vmatprep.subr.mxu0 0.0
        %5561 = vmatpush1.msra.mxu0 0.0
        %5562 = vmatprep.subr.mxu0 0.0
        %5563 = vmatpush1.msra.mxu0 0.0
        %5564 = vmatprep.subr.mxu0 0.0
        %5565 = vmatpush1.msra.mxu0 %v5533
        %5566 = vmatprep.subr.mxu0 0.0
        %5567 = vmatpush1.msra.mxu0 %v5519
        %5568 = vmatprep.subr.mxu0 0.0
        %5569 = vmatpush2.msra.mxu0 0.0
        %5570 = vmatprep.subr.mxu0 0.0
        %5571 = vmatpush2.msra.mxu0 0.0
        %5572 = vmatprep.subr.mxu0 0.0
        %5573 = vmatpush2.msra.mxu0 0.0
        %5574 = vmatprep.subr.mxu0 0.0
        %5575 = vmatpush2.msra.mxu0 0.0
        %5576 = vmatprep.subr.mxu0 0.0
        %5577 = vmatpush2.msra.mxu0 0.0
        %5578 = vmatprep.subr.mxu0 0.0
        %5579 = vmatpush2.msra.mxu0 0.0
        %5580 = vmatprep.subr.mxu0 0.0
        %5581 = vmatpush2.msra.mxu0 0.0
        %5582 = vmatprep.subr.mxu0 0.0
        %5583 = vmatpush2.msra.mxu0 0.0
        %5584 = vmatprep.subr.mxu0 0.0
        %5585 = vmatpush2.msra.mxu0 0.0
        %5586 = vmatprep.subr.mxu0 0.0
        %5587 = vmatpush2.msra.mxu0 0.0
        %5588 = vmatprep.subr.mxu0 0.0
        %5589 = vmatpush2.msra.mxu0 0.0
        %5590 = vmatprep.subr.mxu0 0.0
        %5591 = vmatpush2.msra.mxu0 0.0
        %5592 = vmatprep.subr.mxu0 0.0
        %5593 = vmatpush2.msra.mxu0 0.0
        %5594 = vmatprep.subr.mxu0 0.0
        %5595 = vmatpush2.msra.mxu0 0.0
        %5596 = vmatprep.subr.mxu0 0.0
        %5597 = vmatpush2.msra.mxu0 0.0
        %5598 = vmatprep.subr.mxu0 0.0
        %5599 = vmatpush2.msra.mxu0 0.0
        %5600 = vmatprep.mubr.f32.mxu0 0.0
        %5601 = vmatmul.mubr.f32.gmra.mxu0 %v5222
        %v5602 = vpop.f32.mrf.mxu0
        %v5603 = vadd.f32 0.0, %v5602
        %v5604 = vpop.f32.mrf.mxu0
        %5605 = vmatprep.mubr.f32.mxu0 0.0
        %5606 = vmatmul.mubr.f32.gmra.mxu0 %v5225
        %v5607 = vpop.f32.mrf.mxu0
        %v5608 = vadd.f32 0.0, %v5607
        %v5609 = vpop.f32.mrf.mxu0
        %5610 = vmatprep.mubr.f32.mxu0 0.0
        %5611 = vmatmul.mubr.f32.gmra.mxu0 %v5228
        %v5612 = vpop.f32.mrf.mxu0
        %v5613 = vadd.f32 0.0, %v5612
        %v5614 = vpop.f32.mrf.mxu0
        %5615 = vmatprep.mubr.f32.mxu0 0.0
        %5616 = vmatmul.mubr.f32.gmra.mxu0 %v5231
        %v5617 = vpop.f32.mrf.mxu0
        %v5618 = vadd.f32 0.0, %v5617
        %v5619 = vpop.f32.mrf.mxu0
        %5620 = vdwg.mxu0
        %s5621 = scalar_lea.vmem %s325, 64 [#allocation3]
        %5622 = vst.msk [vmem:[%s5621] sm:$0xff] %vm5115, %v5603
        %5623 = vst.msk [vmem:[%s5621 + $0x8] sm:$0xff] %vm5115, %v5608
        %5624 = vst.msk [vmem:[%s5621 + $0x10] sm:$0xff] %vm5115, %v5613
        %5625 = vst.msk [vmem:[%s5621 + $0x18] sm:$0xff] %vm5115, %v5618
        %v5626 = vld [vmem:[#allocation2 + $0x3] sm:$0x1]
        %v5627 = vld [vmem:[#allocation2 + $0x13] sm:$0x1]
        %v5628 = vld [vmem:[#allocation2 + $0x23] sm:$0x1]
        %v5629 = vld [vmem:[#allocation2 + $0x33] sm:$0x1]
        %v5630 = vld [vmem:[#allocation2 + $0x43] sm:$0x1]
        %v5631 = vld [vmem:[#allocation2 + $0x53] sm:$0x1]
        %v5632 = vld [vmem:[#allocation2 + $0x63] sm:$0x1]
        %v5633 = vld [vmem:[#allocation2 + $0x73] sm:$0x1]
        %v5634 = vld [vmem:[#allocation2 + $0x83] sm:$0x1]
        %v5635 = vld [vmem:[#allocation2 + $0x93] sm:$0x1]
        %v5636 = vld [vmem:[#allocation2 + $0xa3] sm:$0x1]
        %v5637 = vld [vmem:[#allocation2 + $0xb3] sm:$0x1]
        %v5638 = vld [vmem:[#allocation2 + $0xc3] sm:$0x1]
        %v5639 = vld [vmem:[#allocation2 + $0xd3] sm:$0x1]
        %v5640 = vld [vmem:[#allocation2 + $0xe3] sm:$0x1]
        %v5641 = vld [vmem:[#allocation2 + $0xf3] sm:$0x1]
        %v5658 = vrot.slane %v5627, 7
        %v5659 = vsel %vm5185, %v5658, %v5626
        %v5660 = vrot.slane %v5628, 6
        %v5661 = vsel %vm5188, %v5660, %v5659
        %v5662 = vrot.slane %v5629, 5
        %v5663 = vsel %vm5191, %v5662, %v5661
        %v5664 = vrot.slane %v5630, 4
        %v5665 = vsel %vm5194, %v5664, %v5663
        %v5666 = vrot.slane %v5631, 3
        %v5667 = vsel %vm5197, %v5666, %v5665
        %v5668 = vrot.slane %v5632, 2
        %v5669 = vsel %vm5200, %v5668, %v5667
        %v5670 = vrot.slane %v5633, 1
        %v5671 = vsel %vm5203, %v5670, %v5669
        %v5672 = vrot.slane %v5635, 7
        %v5673 = vsel %vm5185, %v5672, %v5634
        %v5674 = vrot.slane %v5636, 6
        %v5675 = vsel %vm5188, %v5674, %v5673
        %v5676 = vrot.slane %v5637, 5
        %v5677 = vsel %vm5191, %v5676, %v5675
        %v5678 = vrot.slane %v5638, 4
        %v5679 = vsel %vm5194, %v5678, %v5677
        %v5680 = vrot.slane %v5639, 3
        %v5681 = vsel %vm5197, %v5680, %v5679
        %v5682 = vrot.slane %v5640, 2
        %v5683 = vsel %vm5200, %v5682, %v5681
        %v5684 = vrot.slane %v5641, 1
        %v5685 = vsel %vm5203, %v5684, %v5683
        %5688 = vmatprep.subr.mxu0 0.0
        %5689 = vmatpush1.msra.mxu0 0.0
        %5690 = vmatprep.subr.mxu0 0.0
        %5691 = vmatpush1.msra.mxu0 0.0
        %5692 = vmatprep.subr.mxu0 0.0
        %5693 = vmatpush1.msra.mxu0 0.0
        %5694 = vmatprep.subr.mxu0 0.0
        %5695 = vmatpush1.msra.mxu0 0.0
        %5696 = vmatprep.subr.mxu0 0.0
        %5697 = vmatpush1.msra.mxu0 0.0
        %5698 = vmatprep.subr.mxu0 0.0
        %5699 = vmatpush1.msra.mxu0 0.0
        %5700 = vmatprep.subr.mxu0 0.0
        %5701 = vmatpush1.msra.mxu0 0.0
        %5702 = vmatprep.subr.mxu0 0.0
        %5703 = vmatpush1.msra.mxu0 0.0
        %5704 = vmatprep.subr.mxu0 0.0
        %5705 = vmatpush1.msra.mxu0 0.0
        %5706 = vmatprep.subr.mxu0 0.0
        %5707 = vmatpush1.msra.mxu0 0.0
        %5708 = vmatprep.subr.mxu0 0.0
        %5709 = vmatpush1.msra.mxu0 0.0
        %5710 = vmatprep.subr.mxu0 0.0
        %5711 = vmatpush1.msra.mxu0 0.0
        %5712 = vmatprep.subr.mxu0 0.0
        %5713 = vmatpush1.msra.mxu0 0.0
        %5714 = vmatprep.subr.mxu0 0.0
        %5715 = vmatpush1.msra.mxu0 0.0
        %5716 = vmatprep.subr.mxu0 0.0
        %5717 = vmatpush1.msra.mxu0 %v5685
        %5718 = vmatprep.subr.mxu0 0.0
        %5719 = vmatpush1.msra.mxu0 %v5671
        %5720 = vmatprep.subr.mxu0 0.0
        %5721 = vmatpush2.msra.mxu0 0.0
        %5722 = vmatprep.subr.mxu0 0.0
        %5723 = vmatpush2.msra.mxu0 0.0
        %5724 = vmatprep.subr.mxu0 0.0
        %5725 = vmatpush2.msra.mxu0 0.0
        %5726 = vmatprep.subr.mxu0 0.0
        %5727 = vmatpush2.msra.mxu0 0.0
        %5728 = vmatprep.subr.mxu0 0.0
        %5729 = vmatpush2.msra.mxu0 0.0
        %5730 = vmatprep.subr.mxu0 0.0
        %5731 = vmatpush2.msra.mxu0 0.0
        %5732 = vmatprep.subr.mxu0 0.0
        %5733 = vmatpush2.msra.mxu0 0.0
        %5734 = vmatprep.subr.mxu0 0.0
        %5735 = vmatpush2.msra.mxu0 0.0
        %5736 = vmatprep.subr.mxu0 0.0
        %5737 = vmatpush2.msra.mxu0 0.0
        %5738 = vmatprep.subr.mxu0 0.0
        %5739 = vmatpush2.msra.mxu0 0.0
        %5740 = vmatprep.subr.mxu0 0.0
        %5741 = vmatpush2.msra.mxu0 0.0
        %5742 = vmatprep.subr.mxu0 0.0
        %5743 = vmatpush2.msra.mxu0 0.0
        %5744 = vmatprep.subr.mxu0 0.0
        %5745 = vmatpush2.msra.mxu0 0.0
        %5746 = vmatprep.subr.mxu0 0.0
        %5747 = vmatpush2.msra.mxu0 0.0
        %5748 = vmatprep.subr.mxu0 0.0
        %5749 = vmatpush2.msra.mxu0 0.0
        %5750 = vmatprep.subr.mxu0 0.0
        %5751 = vmatpush2.msra.mxu0 0.0
        %5752 = vmatprep.mubr.f32.mxu0 0.0
        %5753 = vmatmul.mubr.f32.gmra.mxu0 %v5222
        %v5754 = vpop.f32.mrf.mxu0
        %v5755 = vadd.f32 0.0, %v5754
        %v5756 = vpop.f32.mrf.mxu0
        %5757 = vmatprep.mubr.f32.mxu0 0.0
        %5758 = vmatmul.mubr.f32.gmra.mxu0 %v5225
        %v5759 = vpop.f32.mrf.mxu0
        %v5760 = vadd.f32 0.0, %v5759
        %v5761 = vpop.f32.mrf.mxu0
        %5762 = vmatprep.mubr.f32.mxu0 0.0
        %5763 = vmatmul.mubr.f32.gmra.mxu0 %v5228
        %v5764 = vpop.f32.mrf.mxu0
        %v5765 = vadd.f32 0.0, %v5764
        %v5766 = vpop.f32.mrf.mxu0
        %5767 = vmatprep.mubr.f32.mxu0 0.0
        %5768 = vmatmul.mubr.f32.gmra.mxu0 %v5231
        %v5769 = vpop.f32.mrf.mxu0
        %v5770 = vadd.f32 0.0, %v5769
        %v5771 = vpop.f32.mrf.mxu0
        %5772 = vdwg.mxu0
        %s5773 = scalar_lea.vmem %s325, 96 [#allocation3]
        %5774 = vst.msk [vmem:[%s5773] sm:$0xff] %vm5115, %v5755
        %5775 = vst.msk [vmem:[%s5773 + $0x8] sm:$0xff] %vm5115, %v5760
        %5776 = vst.msk [vmem:[%s5773 + $0x10] sm:$0xff] %vm5115, %v5765
        %5777 = vst.msk [vmem:[%s5773 + $0x18] sm:$0xff] %vm5115, %v5770
        %v5778 = vld [vmem:[#allocation2 + $0x4] sm:$0x1]
        %v5779 = vld [vmem:[#allocation2 + $0x14] sm:$0x1]
        %v5780 = vld [vmem:[#allocation2 + $0x24] sm:$0x1]
        %v5781 = vld [vmem:[#allocation2 + $0x34] sm:$0x1]
        %v5782 = vld [vmem:[#allocation2 + $0x44] sm:$0x1]
        %v5783 = vld [vmem:[#allocation2 + $0x54] sm:$0x1]
        %v5784 = vld [vmem:[#allocation2 + $0x64] sm:$0x1]
        %v5785 = vld [vmem:[#allocation2 + $0x74] sm:$0x1]
        %v5786 = vld [vmem:[#allocation2 + $0x84] sm:$0x1]
        %v5787 = vld [vmem:[#allocation2 + $0x94] sm:$0x1]
        %v5788 = vld [vmem:[#allocation2 + $0xa4] sm:$0x1]
        %v5789 = vld [vmem:[#allocation2 + $0xb4] sm:$0x1]
        %v5790 = vld [vmem:[#allocation2 + $0xc4] sm:$0x1]
        %v5791 = vld [vmem:[#allocation2 + $0xd4] sm:$0x1]
        %v5792 = vld [vmem:[#allocation2 + $0xe4] sm:$0x1]
        %v5793 = vld [vmem:[#allocation2 + $0xf4] sm:$0x1]
        %v5810 = vrot.slane %v5779, 7
        %v5811 = vsel %vm5185, %v5810, %v5778
        %v5812 = vrot.slane %v5780, 6
        %v5813 = vsel %vm5188, %v5812, %v5811
        %v5814 = vrot.slane %v5781, 5
        %v5815 = vsel %vm5191, %v5814, %v5813
        %v5816 = vrot.slane %v5782, 4
        %v5817 = vsel %vm5194, %v5816, %v5815
        %v5818 = vrot.slane %v5783, 3
        %v5819 = vsel %vm5197, %v5818, %v5817
        %v5820 = vrot.slane %v5784, 2
        %v5821 = vsel %vm5200, %v5820, %v5819
        %v5822 = vrot.slane %v5785, 1
        %v5823 = vsel %vm5203, %v5822, %v5821
        %v5824 = vrot.slane %v5787, 7
        %v5825 = vsel %vm5185, %v5824, %v5786
        %v5826 = vrot.slane %v5788, 6
        %v5827 = vsel %vm5188, %v5826, %v5825
        %v5828 = vrot.slane %v5789, 5
        %v5829 = vsel %vm5191, %v5828, %v5827
        %v5830 = vrot.slane %v5790, 4
        %v5831 = vsel %vm5194, %v5830, %v5829
        %v5832 = vrot.slane %v5791, 3
        %v5833 = vsel %vm5197, %v5832, %v5831
        %v5834 = vrot.slane %v5792, 2
        %v5835 = vsel %vm5200, %v5834, %v5833
        %v5836 = vrot.slane %v5793, 1
        %v5837 = vsel %vm5203, %v5836, %v5835
        %5840 = vmatprep.subr.mxu0 0.0
        %5841 = vmatpush1.msra.mxu0 0.0
        %5842 = vmatprep.subr.mxu0 0.0
        %5843 = vmatpush1.msra.mxu0 0.0
        %5844 = vmatprep.subr.mxu0 0.0
        %5845 = vmatpush1.msra.mxu0 0.0
        %5846 = vmatprep.subr.mxu0 0.0
        %5847 = vmatpush1.msra.mxu0 0.0
        %5848 = vmatprep.subr.mxu0 0.0
        %5849 = vmatpush1.msra.mxu0 0.0
        %5850 = vmatprep.subr.mxu0 0.0
        %5851 = vmatpush1.msra.mxu0 0.0
        %5852 = vmatprep.subr.mxu0 0.0
        %5853 = vmatpush1.msra.mxu0 0.0
        %5854 = vmatprep.subr.mxu0 0.0
        %5855 = vmatpush1.msra.mxu0 0.0
        %5856 = vmatprep.subr.mxu0 0.0
        %5857 = vmatpush1.msra.mxu0 0.0
        %5858 = vmatprep.subr.mxu0 0.0
        %5859 = vmatpush1.msra.mxu0 0.0
        %5860 = vmatprep.subr.mxu0 0.0
        %5861 = vmatpush1.msra.mxu0 0.0
        %5862 = vmatprep.subr.mxu0 0.0
        %5863 = vmatpush1.msra.mxu0 0.0
        %5864 = vmatprep.subr.mxu0 0.0
        %5865 = vmatpush1.msra.mxu0 0.0
        %5866 = vmatprep.subr.mxu0 0.0
        %5867 = vmatpush1.msra.mxu0 0.0
        %5868 = vmatprep.subr.mxu0 0.0
        %5869 = vmatpush1.msra.mxu0 %v5837
        %5870 = vmatprep.subr.mxu0 0.0
        %5871 = vmatpush1.msra.mxu0 %v5823
        %5872 = vmatprep.subr.mxu0 0.0
        %5873 = vmatpush2.msra.mxu0 0.0
        %5874 = vmatprep.subr.mxu0 0.0
        %5875 = vmatpush2.msra.mxu0 0.0
        %5876 = vmatprep.subr.mxu0 0.0
        %5877 = vmatpush2.msra.mxu0 0.0
        %5878 = vmatprep.subr.mxu0 0.0
        %5879 = vmatpush2.msra.mxu0 0.0
        %5880 = vmatprep.subr.mxu0 0.0
        %5881 = vmatpush2.msra.mxu0 0.0
        %5882 = vmatprep.subr.mxu0 0.0
        %5883 = vmatpush2.msra.mxu0 0.0
        %5884 = vmatprep.subr.mxu0 0.0
        %5885 = vmatpush2.msra.mxu0 0.0
        %5886 = vmatprep.subr.mxu0 0.0
        %5887 = vmatpush2.msra.mxu0 0.0
        %5888 = vmatprep.subr.mxu0 0.0
        %5889 = vmatpush2.msra.mxu0 0.0
        %5890 = vmatprep.subr.mxu0 0.0
        %5891 = vmatpush2.msra.mxu0 0.0
        %5892 = vmatprep.subr.mxu0 0.0
        %5893 = vmatpush2.msra.mxu0 0.0
        %5894 = vmatprep.subr.mxu0 0.0
        %5895 = vmatpush2.msra.mxu0 0.0
        %5896 = vmatprep.subr.mxu0 0.0
        %5897 = vmatpush2.msra.mxu0 0.0
        %5898 = vmatprep.subr.mxu0 0.0
        %5899 = vmatpush2.msra.mxu0 0.0
        %5900 = vmatprep.subr.mxu0 0.0
        %5901 = vmatpush2.msra.mxu0 0.0
        %5902 = vmatprep.subr.mxu0 0.0
        %5903 = vmatpush2.msra.mxu0 0.0
        %5904 = vmatprep.mubr.f32.mxu0 0.0
        %5905 = vmatmul.mubr.f32.gmra.mxu0 %v5222
        %v5906 = vpop.f32.mrf.mxu0
        %v5907 = vadd.f32 0.0, %v5906
        %v5908 = vpop.f32.mrf.mxu0
        %5909 = vmatprep.mubr.f32.mxu0 0.0
        %5910 = vmatmul.mubr.f32.gmra.mxu0 %v5225
        %v5911 = vpop.f32.mrf.mxu0
        %v5912 = vadd.f32 0.0, %v5911
        %v5913 = vpop.f32.mrf.mxu0
        %5914 = vmatprep.mubr.f32.mxu0 0.0
        %5915 = vmatmul.mubr.f32.gmra.mxu0 %v5228
        %v5916 = vpop.f32.mrf.mxu0
        %v5917 = vadd.f32 0.0, %v5916
        %v5918 = vpop.f32.mrf.mxu0
        %5919 = vmatprep.mubr.f32.mxu0 0.0
        %5920 = vmatmul.mubr.f32.gmra.mxu0 %v5231
        %v5921 = vpop.f32.mrf.mxu0
        %v5922 = vadd.f32 0.0, %v5921
        %v5923 = vpop.f32.mrf.mxu0
        %5924 = vdwg.mxu0
        %s5925 = scalar_lea.vmem %s325, 128 [#allocation3]
        %5926 = vst.msk [vmem:[%s5925] sm:$0xff] %vm5115, %v5907
        %5927 = vst.msk [vmem:[%s5925 + $0x8] sm:$0xff] %vm5115, %v5912
        %5928 = vst.msk [vmem:[%s5925 + $0x10] sm:$0xff] %vm5115, %v5917
        %5929 = vst.msk [vmem:[%s5925 + $0x18] sm:$0xff] %vm5115, %v5922
        %v5930 = vld [vmem:[#allocation2 + $0x5] sm:$0x1]
        %v5931 = vld [vmem:[#allocation2 + $0x15] sm:$0x1]
        %v5932 = vld [vmem:[#allocation2 + $0x25] sm:$0x1]
        %v5933 = vld [vmem:[#allocation2 + $0x35] sm:$0x1]
        %v5934 = vld [vmem:[#allocation2 + $0x45] sm:$0x1]
        %v5935 = vld [vmem:[#allocation2 + $0x55] sm:$0x1]
        %v5936 = vld [vmem:[#allocation2 + $0x65] sm:$0x1]
        %v5937 = vld [vmem:[#allocation2 + $0x75] sm:$0x1]
        %v5938 = vld [vmem:[#allocation2 + $0x85] sm:$0x1]
        %v5939 = vld [vmem:[#allocation2 + $0x95] sm:$0x1]
        %v5940 = vld [vmem:[#allocation2 + $0xa5] sm:$0x1]
        %v5941 = vld [vmem:[#allocation2 + $0xb5] sm:$0x1]
        %v5942 = vld [vmem:[#allocation2 + $0xc5] sm:$0x1]
        %v5943 = vld [vmem:[#allocation2 + $0xd5] sm:$0x1]
        %v5944 = vld [vmem:[#allocation2 + $0xe5] sm:$0x1]
        %v5945 = vld [vmem:[#allocation2 + $0xf5] sm:$0x1]
        %v5962 = vrot.slane %v5931, 7
        %v5963 = vsel %vm5185, %v5962, %v5930
        %v5964 = vrot.slane %v5932, 6
        %v5965 = vsel %vm5188, %v5964, %v5963
        %v5966 = vrot.slane %v5933, 5
        %v5967 = vsel %vm5191, %v5966, %v5965
        %v5968 = vrot.slane %v5934, 4
        %v5969 = vsel %vm5194, %v5968, %v5967
        %v5970 = vrot.slane %v5935, 3
        %v5971 = vsel %vm5197, %v5970, %v5969
        %v5972 = vrot.slane %v5936, 2
        %v5973 = vsel %vm5200, %v5972, %v5971
        %v5974 = vrot.slane %v5937, 1
        %v5975 = vsel %vm5203, %v5974, %v5973
        %v5976 = vrot.slane %v5939, 7
        %v5977 = vsel %vm5185, %v5976, %v5938
        %v5978 = vrot.slane %v5940, 6
        %v5979 = vsel %vm5188, %v5978, %v5977
        %v5980 = vrot.slane %v5941, 5
        %v5981 = vsel %vm5191, %v5980, %v5979
        %v5982 = vrot.slane %v5942, 4
        %v5983 = vsel %vm5194, %v5982, %v5981
        %v5984 = vrot.slane %v5943, 3
        %v5985 = vsel %vm5197, %v5984, %v5983
        %v5986 = vrot.slane %v5944, 2
        %v5987 = vsel %vm5200, %v5986, %v5985
        %v5988 = vrot.slane %v5945, 1
        %v5989 = vsel %vm5203, %v5988, %v5987
        %5992 = vmatprep.subr.mxu0 0.0
        %5993 = vmatpush1.msra.mxu0 0.0
        %5994 = vmatprep.subr.mxu0 0.0
        %5995 = vmatpush1.msra.mxu0 0.0
        %5996 = vmatprep.subr.mxu0 0.0
        %5997 = vmatpush1.msra.mxu0 0.0
        %5998 = vmatprep.subr.mxu0 0.0
        %5999 = vmatpush1.msra.mxu0 0.0
        %6000 = vmatprep.subr.mxu0 0.0
        %6001 = vmatpush1.msra.mxu0 0.0
        %6002 = vmatprep.subr.mxu0 0.0
        %6003 = vmatpush1.msra.mxu0 0.0
        %6004 = vmatprep.subr.mxu0 0.0
        %6005 = vmatpush1.msra.mxu0 0.0
        %6006 = vmatprep.subr.mxu0 0.0
        %6007 = vmatpush1.msra.mxu0 0.0
        %6008 = vmatprep.subr.mxu0 0.0
        %6009 = vmatpush1.msra.mxu0 0.0
        %6010 = vmatprep.subr.mxu0 0.0
        %6011 = vmatpush1.msra.mxu0 0.0
        %6012 = vmatprep.subr.mxu0 0.0
        %6013 = vmatpush1.msra.mxu0 0.0
        %6014 = vmatprep.subr.mxu0 0.0
        %6015 = vmatpush1.msra.mxu0 0.0
        %6016 = vmatprep.subr.mxu0 0.0
        %6017 = vmatpush1.msra.mxu0 0.0
        %6018 = vmatprep.subr.mxu0 0.0
        %6019 = vmatpush1.msra.mxu0 0.0
        %6020 = vmatprep.subr.mxu0 0.0
        %6021 = vmatpush1.msra.mxu0 %v5989
        %6022 = vmatprep.subr.mxu0 0.0
        %6023 = vmatpush1.msra.mxu0 %v5975
        %6024 = vmatprep.subr.mxu0 0.0
        %6025 = vmatpush2.msra.mxu0 0.0
        %6026 = vmatprep.subr.mxu0 0.0
        %6027 = vmatpush2.msra.mxu0 0.0
        %6028 = vmatprep.subr.mxu0 0.0
        %6029 = vmatpush2.msra.mxu0 0.0
        %6030 = vmatprep.subr.mxu0 0.0
        %6031 = vmatpush2.msra.mxu0 0.0
        %6032 = vmatprep.subr.mxu0 0.0
        %6033 = vmatpush2.msra.mxu0 0.0
        %6034 = vmatprep.subr.mxu0 0.0
        %6035 = vmatpush2.msra.mxu0 0.0
        %6036 = vmatprep.subr.mxu0 0.0
        %6037 = vmatpush2.msra.mxu0 0.0
        %6038 = vmatprep.subr.mxu0 0.0
        %6039 = vmatpush2.msra.mxu0 0.0
        %6040 = vmatprep.subr.mxu0 0.0
        %6041 = vmatpush2.msra.mxu0 0.0
        %6042 = vmatprep.subr.mxu0 0.0
        %6043 = vmatpush2.msra.mxu0 0.0
        %6044 = vmatprep.subr.mxu0 0.0
        %6045 = vmatpush2.msra.mxu0 0.0
        %6046 = vmatprep.subr.mxu0 0.0
        %6047 = vmatpush2.msra.mxu0 0.0
        %6048 = vmatprep.subr.mxu0 0.0
        %6049 = vmatpush2.msra.mxu0 0.0
        %6050 = vmatprep.subr.mxu0 0.0
        %6051 = vmatpush2.msra.mxu0 0.0
        %6052 = vmatprep.subr.mxu0 0.0
        %6053 = vmatpush2.msra.mxu0 0.0
        %6054 = vmatprep.subr.mxu0 0.0
        %6055 = vmatpush2.msra.mxu0 0.0
        %6056 = vmatprep.mubr.f32.mxu0 0.0
        %6057 = vmatmul.mubr.f32.gmra.mxu0 %v5222
        %v6058 = vpop.f32.mrf.mxu0
        %v6059 = vadd.f32 0.0, %v6058
        %v6060 = vpop.f32.mrf.mxu0
        %6061 = vmatprep.mubr.f32.mxu0 0.0
        %6062 = vmatmul.mubr.f32.gmra.mxu0 %v5225
        %v6063 = vpop.f32.mrf.mxu0
        %v6064 = vadd.f32 0.0, %v6063
        %v6065 = vpop.f32.mrf.mxu0
        %6066 = vmatprep.mubr.f32.mxu0 0.0
        %6067 = vmatmul.mubr.f32.gmra.mxu0 %v5228
        %v6068 = vpop.f32.mrf.mxu0
        %v6069 = vadd.f32 0.0, %v6068
        %v6070 = vpop.f32.mrf.mxu0
        %6071 = vmatprep.mubr.f32.mxu0 0.0
        %6072 = vmatmul.mubr.f32.gmra.mxu0 %v5231
        %v6073 = vpop.f32.mrf.mxu0
        %v6074 = vadd.f32 0.0, %v6073
        %v6075 = vpop.f32.mrf.mxu0
        %6076 = vdwg.mxu0
        %s6077 = scalar_lea.vmem %s325, 160 [#allocation3]
        %6078 = vst.msk [vmem:[%s6077] sm:$0xff] %vm5115, %v6059
        %6079 = vst.msk [vmem:[%s6077 + $0x8] sm:$0xff] %vm5115, %v6064
        %6080 = vst.msk [vmem:[%s6077 + $0x10] sm:$0xff] %vm5115, %v6069
        %6081 = vst.msk [vmem:[%s6077 + $0x18] sm:$0xff] %vm5115, %v6074
        %v6082 = vld [vmem:[#allocation2 + $0x6] sm:$0x1]
        %v6083 = vld [vmem:[#allocation2 + $0x16] sm:$0x1]
        %v6084 = vld [vmem:[#allocation2 + $0x26] sm:$0x1]
        %v6085 = vld [vmem:[#allocation2 + $0x36] sm:$0x1]
        %v6086 = vld [vmem:[#allocation2 + $0x46] sm:$0x1]
        %v6087 = vld [vmem:[#allocation2 + $0x56] sm:$0x1]
        %v6088 = vld [vmem:[#allocation2 + $0x66] sm:$0x1]
        %v6089 = vld [vmem:[#allocation2 + $0x76] sm:$0x1]
        %v6090 = vld [vmem:[#allocation2 + $0x86] sm:$0x1]
        %v6091 = vld [vmem:[#allocation2 + $0x96] sm:$0x1]
        %v6092 = vld [vmem:[#allocation2 + $0xa6] sm:$0x1]
        %v6093 = vld [vmem:[#allocation2 + $0xb6] sm:$0x1]
        %v6094 = vld [vmem:[#allocation2 + $0xc6] sm:$0x1]
        %v6095 = vld [vmem:[#allocation2 + $0xd6] sm:$0x1]
        %v6096 = vld [vmem:[#allocation2 + $0xe6] sm:$0x1]
        %v6097 = vld [vmem:[#allocation2 + $0xf6] sm:$0x1]
        %v6114 = vrot.slane %v6083, 7
        %v6115 = vsel %vm5185, %v6114, %v6082
        %v6116 = vrot.slane %v6084, 6
        %v6117 = vsel %vm5188, %v6116, %v6115
        %v6118 = vrot.slane %v6085, 5
        %v6119 = vsel %vm5191, %v6118, %v6117
        %v6120 = vrot.slane %v6086, 4
        %v6121 = vsel %vm5194, %v6120, %v6119
        %v6122 = vrot.slane %v6087, 3
        %v6123 = vsel %vm5197, %v6122, %v6121
        %v6124 = vrot.slane %v6088, 2
        %v6125 = vsel %vm5200, %v6124, %v6123
        %v6126 = vrot.slane %v6089, 1
        %v6127 = vsel %vm5203, %v6126, %v6125
        %v6128 = vrot.slane %v6091, 7
        %v6129 = vsel %vm5185, %v6128, %v6090
        %v6130 = vrot.slane %v6092, 6
        %v6131 = vsel %vm5188, %v6130, %v6129
        %v6132 = vrot.slane %v6093, 5
        %v6133 = vsel %vm5191, %v6132, %v6131
        %v6134 = vrot.slane %v6094, 4
        %v6135 = vsel %vm5194, %v6134, %v6133
        %v6136 = vrot.slane %v6095, 3
        %v6137 = vsel %vm5197, %v6136, %v6135
        %v6138 = vrot.slane %v6096, 2
        %v6139 = vsel %vm5200, %v6138, %v6137
        %v6140 = vrot.slane %v6097, 1
        %v6141 = vsel %vm5203, %v6140, %v6139
        %6144 = vmatprep.subr.mxu0 0.0
        %6145 = vmatpush1.msra.mxu0 0.0
        %6146 = vmatprep.subr.mxu0 0.0
        %6147 = vmatpush1.msra.mxu0 0.0
        %6148 = vmatprep.subr.mxu0 0.0
        %6149 = vmatpush1.msra.mxu0 0.0
        %6150 = vmatprep.subr.mxu0 0.0
        %6151 = vmatpush1.msra.mxu0 0.0
        %6152 = vmatprep.subr.mxu0 0.0
        %6153 = vmatpush1.msra.mxu0 0.0
        %6154 = vmatprep.subr.mxu0 0.0
        %6155 = vmatpush1.msra.mxu0 0.0
        %6156 = vmatprep.subr.mxu0 0.0
        %6157 = vmatpush1.msra.mxu0 0.0
        %6158 = vmatprep.subr.mxu0 0.0
        %6159 = vmatpush1.msra.mxu0 0.0
        %6160 = vmatprep.subr.mxu0 0.0
        %6161 = vmatpush1.msra.mxu0 0.0
        %6162 = vmatprep.subr.mxu0 0.0
        %6163 = vmatpush1.msra.mxu0 0.0
        %6164 = vmatprep.subr.mxu0 0.0
        %6165 = vmatpush1.msra.mxu0 0.0
        %6166 = vmatprep.subr.mxu0 0.0
        %6167 = vmatpush1.msra.mxu0 0.0
        %6168 = vmatprep.subr.mxu0 0.0
        %6169 = vmatpush1.msra.mxu0 0.0
        %6170 = vmatprep.subr.mxu0 0.0
        %6171 = vmatpush1.msra.mxu0 0.0
        %6172 = vmatprep.subr.mxu0 0.0
        %6173 = vmatpush1.msra.mxu0 %v6141
        %6174 = vmatprep.subr.mxu0 0.0
        %6175 = vmatpush1.msra.mxu0 %v6127
        %6176 = vmatprep.subr.mxu0 0.0
        %6177 = vmatpush2.msra.mxu0 0.0
        %6178 = vmatprep.subr.mxu0 0.0
        %6179 = vmatpush2.msra.mxu0 0.0
        %6180 = vmatprep.subr.mxu0 0.0
        %6181 = vmatpush2.msra.mxu0 0.0
        %6182 = vmatprep.subr.mxu0 0.0
        %6183 = vmatpush2.msra.mxu0 0.0
        %6184 = vmatprep.subr.mxu0 0.0
        %6185 = vmatpush2.msra.mxu0 0.0
        %6186 = vmatprep.subr.mxu0 0.0
        %6187 = vmatpush2.msra.mxu0 0.0
        %6188 = vmatprep.subr.mxu0 0.0
        %6189 = vmatpush2.msra.mxu0 0.0
        %6190 = vmatprep.subr.mxu0 0.0
        %6191 = vmatpush2.msra.mxu0 0.0
        %6192 = vmatprep.subr.mxu0 0.0
        %6193 = vmatpush2.msra.mxu0 0.0
        %6194 = vmatprep.subr.mxu0 0.0
        %6195 = vmatpush2.msra.mxu0 0.0
        %6196 = vmatprep.subr.mxu0 0.0
        %6197 = vmatpush2.msra.mxu0 0.0
        %6198 = vmatprep.subr.mxu0 0.0
        %6199 = vmatpush2.msra.mxu0 0.0
        %6200 = vmatprep.subr.mxu0 0.0
        %6201 = vmatpush2.msra.mxu0 0.0
        %6202 = vmatprep.subr.mxu0 0.0
        %6203 = vmatpush2.msra.mxu0 0.0
        %6204 = vmatprep.subr.mxu0 0.0
        %6205 = vmatpush2.msra.mxu0 0.0
        %6206 = vmatprep.subr.mxu0 0.0
        %6207 = vmatpush2.msra.mxu0 0.0
        %6208 = vmatprep.mubr.f32.mxu0 0.0
        %6209 = vmatmul.mubr.f32.gmra.mxu0 %v5222
        %v6210 = vpop.f32.mrf.mxu0
        %v6211 = vadd.f32 0.0, %v6210
        %v6212 = vpop.f32.mrf.mxu0
        %6213 = vmatprep.mubr.f32.mxu0 0.0
        %6214 = vmatmul.mubr.f32.gmra.mxu0 %v5225
        %v6215 = vpop.f32.mrf.mxu0
        %v6216 = vadd.f32 0.0, %v6215
        %v6217 = vpop.f32.mrf.mxu0
        %6218 = vmatprep.mubr.f32.mxu0 0.0
        %6219 = vmatmul.mubr.f32.gmra.mxu0 %v5228
        %v6220 = vpop.f32.mrf.mxu0
        %v6221 = vadd.f32 0.0, %v6220
        %v6222 = vpop.f32.mrf.mxu0
        %6223 = vmatprep.mubr.f32.mxu0 0.0
        %6224 = vmatmul.mubr.f32.gmra.mxu0 %v5231
        %v6225 = vpop.f32.mrf.mxu0
        %v6226 = vadd.f32 0.0, %v6225
        %v6227 = vpop.f32.mrf.mxu0
        %6228 = vdwg.mxu0
        %s6229 = scalar_lea.vmem %s325, 192 [#allocation3]
        %6230 = vst.msk [vmem:[%s6229] sm:$0xff] %vm5115, %v6211
        %6231 = vst.msk [vmem:[%s6229 + $0x8] sm:$0xff] %vm5115, %v6216
        %6232 = vst.msk [vmem:[%s6229 + $0x10] sm:$0xff] %vm5115, %v6221
        %6233 = vst.msk [vmem:[%s6229 + $0x18] sm:$0xff] %vm5115, %v6226
        %v6234 = vld [vmem:[#allocation2 + $0x7] sm:$0x1]
        %v6235 = vld [vmem:[#allocation2 + $0x17] sm:$0x1]
        %v6236 = vld [vmem:[#allocation2 + $0x27] sm:$0x1]
        %v6237 = vld [vmem:[#allocation2 + $0x37] sm:$0x1]
        %v6238 = vld [vmem:[#allocation2 + $0x47] sm:$0x1]
        %v6239 = vld [vmem:[#allocation2 + $0x57] sm:$0x1]
        %v6240 = vld [vmem:[#allocation2 + $0x67] sm:$0x1]
        %v6241 = vld [vmem:[#allocation2 + $0x77] sm:$0x1]
        %v6242 = vld [vmem:[#allocation2 + $0x87] sm:$0x1]
        %v6243 = vld [vmem:[#allocation2 + $0x97] sm:$0x1]
        %v6244 = vld [vmem:[#allocation2 + $0xa7] sm:$0x1]
        %v6245 = vld [vmem:[#allocation2 + $0xb7] sm:$0x1]
        %v6246 = vld [vmem:[#allocation2 + $0xc7] sm:$0x1]
        %v6247 = vld [vmem:[#allocation2 + $0xd7] sm:$0x1]
        %v6248 = vld [vmem:[#allocation2 + $0xe7] sm:$0x1]
        %v6249 = vld [vmem:[#allocation2 + $0xf7] sm:$0x1]
        %v6266 = vrot.slane %v6235, 7
        %v6267 = vsel %vm5185, %v6266, %v6234
        %v6268 = vrot.slane %v6236, 6
        %v6269 = vsel %vm5188, %v6268, %v6267
        %v6270 = vrot.slane %v6237, 5
        %v6271 = vsel %vm5191, %v6270, %v6269
        %v6272 = vrot.slane %v6238, 4
        %v6273 = vsel %vm5194, %v6272, %v6271
        %v6274 = vrot.slane %v6239, 3
        %v6275 = vsel %vm5197, %v6274, %v6273
        %v6276 = vrot.slane %v6240, 2
        %v6277 = vsel %vm5200, %v6276, %v6275
        %v6278 = vrot.slane %v6241, 1
        %v6279 = vsel %vm5203, %v6278, %v6277
        %v6280 = vrot.slane %v6243, 7
        %v6281 = vsel %vm5185, %v6280, %v6242
        %v6282 = vrot.slane %v6244, 6
        %v6283 = vsel %vm5188, %v6282, %v6281
        %v6284 = vrot.slane %v6245, 5
        %v6285 = vsel %vm5191, %v6284, %v6283
        %v6286 = vrot.slane %v6246, 4
        %v6287 = vsel %vm5194, %v6286, %v6285
        %v6288 = vrot.slane %v6247, 3
        %v6289 = vsel %vm5197, %v6288, %v6287
        %v6290 = vrot.slane %v6248, 2
        %v6291 = vsel %vm5200, %v6290, %v6289
        %v6292 = vrot.slane %v6249, 1
        %v6293 = vsel %vm5203, %v6292, %v6291
        %6296 = vmatprep.subr.mxu0 0.0
        %6297 = vmatpush1.msra.mxu0 0.0
        %6298 = vmatprep.subr.mxu0 0.0
        %6299 = vmatpush1.msra.mxu0 0.0
        %6300 = vmatprep.subr.mxu0 0.0
        %6301 = vmatpush1.msra.mxu0 0.0
        %6302 = vmatprep.subr.mxu0 0.0
        %6303 = vmatpush1.msra.mxu0 0.0
        %6304 = vmatprep.subr.mxu0 0.0
        %6305 = vmatpush1.msra.mxu0 0.0
        %6306 = vmatprep.subr.mxu0 0.0
        %6307 = vmatpush1.msra.mxu0 0.0
        %6308 = vmatprep.subr.mxu0 0.0
        %6309 = vmatpush1.msra.mxu0 0.0
        %6310 = vmatprep.subr.mxu0 0.0
        %6311 = vmatpush1.msra.mxu0 0.0
        %6312 = vmatprep.subr.mxu0 0.0
        %6313 = vmatpush1.msra.mxu0 0.0
        %6314 = vmatprep.subr.mxu0 0.0
        %6315 = vmatpush1.msra.mxu0 0.0
        %6316 = vmatprep.subr.mxu0 0.0
        %6317 = vmatpush1.msra.mxu0 0.0
        %6318 = vmatprep.subr.mxu0 0.0
        %6319 = vmatpush1.msra.mxu0 0.0
        %6320 = vmatprep.subr.mxu0 0.0
        %6321 = vmatpush1.msra.mxu0 0.0
        %6322 = vmatprep.subr.mxu0 0.0
        %6323 = vmatpush1.msra.mxu0 0.0
        %6324 = vmatprep.subr.mxu0 0.0
        %6325 = vmatpush1.msra.mxu0 %v6293
        %6326 = vmatprep.subr.mxu0 0.0
        %6327 = vmatpush1.msra.mxu0 %v6279
        %6328 = vmatprep.subr.mxu0 0.0
        %6329 = vmatpush2.msra.mxu0 0.0
        %6330 = vmatprep.subr.mxu0 0.0
        %6331 = vmatpush2.msra.mxu0 0.0
        %6332 = vmatprep.subr.mxu0 0.0
        %6333 = vmatpush2.msra.mxu0 0.0
        %6334 = vmatprep.subr.mxu0 0.0
        %6335 = vmatpush2.msra.mxu0 0.0
        %6336 = vmatprep.subr.mxu0 0.0
        %6337 = vmatpush2.msra.mxu0 0.0
        %6338 = vmatprep.subr.mxu0 0.0
        %6339 = vmatpush2.msra.mxu0 0.0
        %6340 = vmatprep.subr.mxu0 0.0
        %6341 = vmatpush2.msra.mxu0 0.0
        %6342 = vmatprep.subr.mxu0 0.0
        %6343 = vmatpush2.msra.mxu0 0.0
        %6344 = vmatprep.subr.mxu0 0.0
        %6345 = vmatpush2.msra.mxu0 0.0
        %6346 = vmatprep.subr.mxu0 0.0
        %6347 = vmatpush2.msra.mxu0 0.0
        %6348 = vmatprep.subr.mxu0 0.0
        %6349 = vmatpush2.msra.mxu0 0.0
        %6350 = vmatprep.subr.mxu0 0.0
        %6351 = vmatpush2.msra.mxu0 0.0
        %6352 = vmatprep.subr.mxu0 0.0
        %6353 = vmatpush2.msra.mxu0 0.0
        %6354 = vmatprep.subr.mxu0 0.0
        %6355 = vmatpush2.msra.mxu0 0.0
        %6356 = vmatprep.subr.mxu0 0.0
        %6357 = vmatpush2.msra.mxu0 0.0
        %6358 = vmatprep.subr.mxu0 0.0
        %6359 = vmatpush2.msra.mxu0 0.0
        %6360 = vmatprep.mubr.f32.mxu0 0.0
        %6361 = vmatmul.mubr.f32.gmra.mxu0 %v5222
        %v6362 = vpop.f32.mrf.mxu0
        %v6363 = vadd.f32 0.0, %v6362
        %v6364 = vpop.f32.mrf.mxu0
        %6365 = vmatprep.mubr.f32.mxu0 0.0
        %6366 = vmatmul.mubr.f32.gmra.mxu0 %v5225
        %v6367 = vpop.f32.mrf.mxu0
        %v6368 = vadd.f32 0.0, %v6367
        %v6369 = vpop.f32.mrf.mxu0
        %6370 = vmatprep.mubr.f32.mxu0 0.0
        %6371 = vmatmul.mubr.f32.gmra.mxu0 %v5228
        %v6372 = vpop.f32.mrf.mxu0
        %v6373 = vadd.f32 0.0, %v6372
        %v6374 = vpop.f32.mrf.mxu0
        %6375 = vmatprep.mubr.f32.mxu0 0.0
        %6376 = vmatmul.mubr.f32.gmra.mxu0 %v5231
        %v6377 = vpop.f32.mrf.mxu0
        %v6378 = vadd.f32 0.0, %v6377
        %v6379 = vpop.f32.mrf.mxu0
        %6380 = vdwg.mxu0
        %s6381 = scalar_lea.vmem %s325, 224 [#allocation3]
        %6382 = vst.msk [vmem:[%s6381] sm:$0xff] %vm5115, %v6363
        %6383 = vst.msk [vmem:[%s6381 + $0x8] sm:$0xff] %vm5115, %v6368
        %6384 = vst.msk [vmem:[%s6381 + $0x10] sm:$0xff] %vm5115, %v6373
        %6385 = vst.msk [vmem:[%s6381 + $0x18] sm:$0xff] %vm5115, %v6378
        %v6386 = vld [vmem:[#allocation2 + $0x8] sm:$0x1]
        %v6387 = vld [vmem:[#allocation2 + $0x18] sm:$0x1]
        %v6388 = vld [vmem:[#allocation2 + $0x28] sm:$0x1]
        %v6389 = vld [vmem:[#allocation2 + $0x38] sm:$0x1]
        %v6390 = vld [vmem:[#allocation2 + $0x48] sm:$0x1]
        %v6391 = vld [vmem:[#allocation2 + $0x58] sm:$0x1]
        %v6392 = vld [vmem:[#allocation2 + $0x68] sm:$0x1]
        %v6393 = vld [vmem:[#allocation2 + $0x78] sm:$0x1]
        %v6394 = vld [vmem:[#allocation2 + $0x88] sm:$0x1]
        %v6395 = vld [vmem:[#allocation2 + $0x98] sm:$0x1]
        %v6396 = vld [vmem:[#allocation2 + $0xa8] sm:$0x1]
        %v6397 = vld [vmem:[#allocation2 + $0xb8] sm:$0x1]
        %v6398 = vld [vmem:[#allocation2 + $0xc8] sm:$0x1]
        %v6399 = vld [vmem:[#allocation2 + $0xd8] sm:$0x1]
        %v6400 = vld [vmem:[#allocation2 + $0xe8] sm:$0x1]
        %v6401 = vld [vmem:[#allocation2 + $0xf8] sm:$0x1]
        %v6418 = vrot.slane %v6387, 7
        %v6419 = vsel %vm5185, %v6418, %v6386
        %v6420 = vrot.slane %v6388, 6
        %v6421 = vsel %vm5188, %v6420, %v6419
        %v6422 = vrot.slane %v6389, 5
        %v6423 = vsel %vm5191, %v6422, %v6421
        %v6424 = vrot.slane %v6390, 4
        %v6425 = vsel %vm5194, %v6424, %v6423
        %v6426 = vrot.slane %v6391, 3
        %v6427 = vsel %vm5197, %v6426, %v6425
        %v6428 = vrot.slane %v6392, 2
        %v6429 = vsel %vm5200, %v6428, %v6427
        %v6430 = vrot.slane %v6393, 1
        %v6431 = vsel %vm5203, %v6430, %v6429
        %v6432 = vrot.slane %v6395, 7
        %v6433 = vsel %vm5185, %v6432, %v6394
        %v6434 = vrot.slane %v6396, 6
        %v6435 = vsel %vm5188, %v6434, %v6433
        %v6436 = vrot.slane %v6397, 5
        %v6437 = vsel %vm5191, %v6436, %v6435
        %v6438 = vrot.slane %v6398, 4
        %v6439 = vsel %vm5194, %v6438, %v6437
        %v6440 = vrot.slane %v6399, 3
        %v6441 = vsel %vm5197, %v6440, %v6439
        %v6442 = vrot.slane %v6400, 2
        %v6443 = vsel %vm5200, %v6442, %v6441
        %v6444 = vrot.slane %v6401, 1
        %v6445 = vsel %vm5203, %v6444, %v6443
        %6448 = vmatprep.subr.mxu0 0.0
        %6449 = vmatpush1.msra.mxu0 0.0
        %6450 = vmatprep.subr.mxu0 0.0
        %6451 = vmatpush1.msra.mxu0 0.0
        %6452 = vmatprep.subr.mxu0 0.0
        %6453 = vmatpush1.msra.mxu0 0.0
        %6454 = vmatprep.subr.mxu0 0.0
        %6455 = vmatpush1.msra.mxu0 0.0
        %6456 = vmatprep.subr.mxu0 0.0
        %6457 = vmatpush1.msra.mxu0 0.0
        %6458 = vmatprep.subr.mxu0 0.0
        %6459 = vmatpush1.msra.mxu0 0.0
        %6460 = vmatprep.subr.mxu0 0.0
        %6461 = vmatpush1.msra.mxu0 0.0
        %6462 = vmatprep.subr.mxu0 0.0
        %6463 = vmatpush1.msra.mxu0 0.0
        %6464 = vmatprep.subr.mxu0 0.0
        %6465 = vmatpush1.msra.mxu0 0.0
        %6466 = vmatprep.subr.mxu0 0.0
        %6467 = vmatpush1.msra.mxu0 0.0
        %6468 = vmatprep.subr.mxu0 0.0
        %6469 = vmatpush1.msra.mxu0 0.0
        %6470 = vmatprep.subr.mxu0 0.0
        %6471 = vmatpush1.msra.mxu0 0.0
        %6472 = vmatprep.subr.mxu0 0.0
        %6473 = vmatpush1.msra.mxu0 0.0
        %6474 = vmatprep.subr.mxu0 0.0
        %6475 = vmatpush1.msra.mxu0 0.0
        %6476 = vmatprep.subr.mxu0 0.0
        %6477 = vmatpush1.msra.mxu0 %v6445
        %6478 = vmatprep.subr.mxu0 0.0
        %6479 = vmatpush1.msra.mxu0 %v6431
        %6480 = vmatprep.subr.mxu0 0.0
        %6481 = vmatpush2.msra.mxu0 0.0
        %6482 = vmatprep.subr.mxu0 0.0
        %6483 = vmatpush2.msra.mxu0 0.0
        %6484 = vmatprep.subr.mxu0 0.0
        %6485 = vmatpush2.msra.mxu0 0.0
        %6486 = vmatprep.subr.mxu0 0.0
        %6487 = vmatpush2.msra.mxu0 0.0
        %6488 = vmatprep.subr.mxu0 0.0
        %6489 = vmatpush2.msra.mxu0 0.0
        %6490 = vmatprep.subr.mxu0 0.0
        %6491 = vmatpush2.msra.mxu0 0.0
        %6492 = vmatprep.subr.mxu0 0.0
        %6493 = vmatpush2.msra.mxu0 0.0
        %6494 = vmatprep.subr.mxu0 0.0
        %6495 = vmatpush2.msra.mxu0 0.0
        %6496 = vmatprep.subr.mxu0 0.0
        %6497 = vmatpush2.msra.mxu0 0.0
        %6498 = vmatprep.subr.mxu0 0.0
        %6499 = vmatpush2.msra.mxu0 0.0
        %6500 = vmatprep.subr.mxu0 0.0
        %6501 = vmatpush2.msra.mxu0 0.0
        %6502 = vmatprep.subr.mxu0 0.0
        %6503 = vmatpush2.msra.mxu0 0.0
        %6504 = vmatprep.subr.mxu0 0.0
        %6505 = vmatpush2.msra.mxu0 0.0
        %6506 = vmatprep.subr.mxu0 0.0
        %6507 = vmatpush2.msra.mxu0 0.0
        %6508 = vmatprep.subr.mxu0 0.0
        %6509 = vmatpush2.msra.mxu0 0.0
        %6510 = vmatprep.subr.mxu0 0.0
        %6511 = vmatpush2.msra.mxu0 0.0
        %6512 = vmatprep.mubr.f32.mxu0 0.0
        %6513 = vmatmul.mubr.f32.gmra.mxu0 %v5222
        %v6514 = vpop.f32.mrf.mxu0
        %v6515 = vadd.f32 0.0, %v6514
        %v6516 = vpop.f32.mrf.mxu0
        %6517 = vmatprep.mubr.f32.mxu0 0.0
        %6518 = vmatmul.mubr.f32.gmra.mxu0 %v5225
        %v6519 = vpop.f32.mrf.mxu0
        %v6520 = vadd.f32 0.0, %v6519
        %v6521 = vpop.f32.mrf.mxu0
        %6522 = vmatprep.mubr.f32.mxu0 0.0
        %6523 = vmatmul.mubr.f32.gmra.mxu0 %v5228
        %v6524 = vpop.f32.mrf.mxu0
        %v6525 = vadd.f32 0.0, %v6524
        %v6526 = vpop.f32.mrf.mxu0
        %6527 = vmatprep.mubr.f32.mxu0 0.0
        %6528 = vmatmul.mubr.f32.gmra.mxu0 %v5231
        %v6529 = vpop.f32.mrf.mxu0
        %v6530 = vadd.f32 0.0, %v6529
        %v6531 = vpop.f32.mrf.mxu0
        %6532 = vdwg.mxu0
        %s6533 = scalar_lea.vmem %s325, 256 [#allocation3]
        %6534 = vst.msk [vmem:[%s6533] sm:$0xff] %vm5115, %v6515
        %6535 = vst.msk [vmem:[%s6533 + $0x8] sm:$0xff] %vm5115, %v6520
        %6536 = vst.msk [vmem:[%s6533 + $0x10] sm:$0xff] %vm5115, %v6525
        %6537 = vst.msk [vmem:[%s6533 + $0x18] sm:$0xff] %vm5115, %v6530
        %v6538 = vld [vmem:[#allocation2 + $0x9] sm:$0x1]
        %v6539 = vld [vmem:[#allocation2 + $0x19] sm:$0x1]
        %v6540 = vld [vmem:[#allocation2 + $0x29] sm:$0x1]
        %v6541 = vld [vmem:[#allocation2 + $0x39] sm:$0x1]
        %v6542 = vld [vmem:[#allocation2 + $0x49] sm:$0x1]
        %v6543 = vld [vmem:[#allocation2 + $0x59] sm:$0x1]
        %v6544 = vld [vmem:[#allocation2 + $0x69] sm:$0x1]
        %v6545 = vld [vmem:[#allocation2 + $0x79] sm:$0x1]
        %v6546 = vld [vmem:[#allocation2 + $0x89] sm:$0x1]
        %v6547 = vld [vmem:[#allocation2 + $0x99] sm:$0x1]
        %v6548 = vld [vmem:[#allocation2 + $0xa9] sm:$0x1]
        %v6549 = vld [vmem:[#allocation2 + $0xb9] sm:$0x1]
        %v6550 = vld [vmem:[#allocation2 + $0xc9] sm:$0x1]
        %v6551 = vld [vmem:[#allocation2 + $0xd9] sm:$0x1]
        %v6552 = vld [vmem:[#allocation2 + $0xe9] sm:$0x1]
        %v6553 = vld [vmem:[#allocation2 + $0xf9] sm:$0x1]
        %v6570 = vrot.slane %v6539, 7
        %v6571 = vsel %vm5185, %v6570, %v6538
        %v6572 = vrot.slane %v6540, 6
        %v6573 = vsel %vm5188, %v6572, %v6571
        %v6574 = vrot.slane %v6541, 5
        %v6575 = vsel %vm5191, %v6574, %v6573
        %v6576 = vrot.slane %v6542, 4
        %v6577 = vsel %vm5194, %v6576, %v6575
        %v6578 = vrot.slane %v6543, 3
        %v6579 = vsel %vm5197, %v6578, %v6577
        %v6580 = vrot.slane %v6544, 2
        %v6581 = vsel %vm5200, %v6580, %v6579
        %v6582 = vrot.slane %v6545, 1
        %v6583 = vsel %vm5203, %v6582, %v6581
        %v6584 = vrot.slane %v6547, 7
        %v6585 = vsel %vm5185, %v6584, %v6546
        %v6586 = vrot.slane %v6548, 6
        %v6587 = vsel %vm5188, %v6586, %v6585
        %v6588 = vrot.slane %v6549, 5
        %v6589 = vsel %vm5191, %v6588, %v6587
        %v6590 = vrot.slane %v6550, 4
        %v6591 = vsel %vm5194, %v6590, %v6589
        %v6592 = vrot.slane %v6551, 3
        %v6593 = vsel %vm5197, %v6592, %v6591
        %v6594 = vrot.slane %v6552, 2
        %v6595 = vsel %vm5200, %v6594, %v6593
        %v6596 = vrot.slane %v6553, 1
        %v6597 = vsel %vm5203, %v6596, %v6595
        %6600 = vmatprep.subr.mxu0 0.0
        %6601 = vmatpush1.msra.mxu0 0.0
        %6602 = vmatprep.subr.mxu0 0.0
        %6603 = vmatpush1.msra.mxu0 0.0
        %6604 = vmatprep.subr.mxu0 0.0
        %6605 = vmatpush1.msra.mxu0 0.0
        %6606 = vmatprep.subr.mxu0 0.0
        %6607 = vmatpush1.msra.mxu0 0.0
        %6608 = vmatprep.subr.mxu0 0.0
        %6609 = vmatpush1.msra.mxu0 0.0
        %6610 = vmatprep.subr.mxu0 0.0
        %6611 = vmatpush1.msra.mxu0 0.0
        %6612 = vmatprep.subr.mxu0 0.0
        %6613 = vmatpush1.msra.mxu0 0.0
        %6614 = vmatprep.subr.mxu0 0.0
        %6615 = vmatpush1.msra.mxu0 0.0
        %6616 = vmatprep.subr.mxu0 0.0
        %6617 = vmatpush1.msra.mxu0 0.0
        %6618 = vmatprep.subr.mxu0 0.0
        %6619 = vmatpush1.msra.mxu0 0.0
        %6620 = vmatprep.subr.mxu0 0.0
        %6621 = vmatpush1.msra.mxu0 0.0
        %6622 = vmatprep.subr.mxu0 0.0
        %6623 = vmatpush1.msra.mxu0 0.0
        %6624 = vmatprep.subr.mxu0 0.0
        %6625 = vmatpush1.msra.mxu0 0.0
        %6626 = vmatprep.subr.mxu0 0.0
        %6627 = vmatpush1.msra.mxu0 0.0
        %6628 = vmatprep.subr.mxu0 0.0
        %6629 = vmatpush1.msra.mxu0 %v6597
        %6630 = vmatprep.subr.mxu0 0.0
        %6631 = vmatpush1.msra.mxu0 %v6583
        %6632 = vmatprep.subr.mxu0 0.0
        %6633 = vmatpush2.msra.mxu0 0.0
        %6634 = vmatprep.subr.mxu0 0.0
        %6635 = vmatpush2.msra.mxu0 0.0
        %6636 = vmatprep.subr.mxu0 0.0
        %6637 = vmatpush2.msra.mxu0 0.0
        %6638 = vmatprep.subr.mxu0 0.0
        %6639 = vmatpush2.msra.mxu0 0.0
        %6640 = vmatprep.subr.mxu0 0.0
        %6641 = vmatpush2.msra.mxu0 0.0
        %6642 = vmatprep.subr.mxu0 0.0
        %6643 = vmatpush2.msra.mxu0 0.0
        %6644 = vmatprep.subr.mxu0 0.0
        %6645 = vmatpush2.msra.mxu0 0.0
        %6646 = vmatprep.subr.mxu0 0.0
        %6647 = vmatpush2.msra.mxu0 0.0
        %6648 = vmatprep.subr.mxu0 0.0
        %6649 = vmatpush2.msra.mxu0 0.0
        %6650 = vmatprep.subr.mxu0 0.0
        %6651 = vmatpush2.msra.mxu0 0.0
        %6652 = vmatprep.subr.mxu0 0.0
        %6653 = vmatpush2.msra.mxu0 0.0
        %6654 = vmatprep.subr.mxu0 0.0
        %6655 = vmatpush2.msra.mxu0 0.0
        %6656 = vmatprep.subr.mxu0 0.0
        %6657 = vmatpush2.msra.mxu0 0.0
        %6658 = vmatprep.subr.mxu0 0.0
        %6659 = vmatpush2.msra.mxu0 0.0
        %6660 = vmatprep.subr.mxu0 0.0
        %6661 = vmatpush2.msra.mxu0 0.0
        %6662 = vmatprep.subr.mxu0 0.0
        %6663 = vmatpush2.msra.mxu0 0.0
        %6664 = vmatprep.mubr.f32.mxu0 0.0
        %6665 = vmatmul.mubr.f32.gmra.mxu0 %v5222
        %v6666 = vpop.f32.mrf.mxu0
        %v6667 = vadd.f32 0.0, %v6666
        %v6668 = vpop.f32.mrf.mxu0
        %6669 = vmatprep.mubr.f32.mxu0 0.0
        %6670 = vmatmul.mubr.f32.gmra.mxu0 %v5225
        %v6671 = vpop.f32.mrf.mxu0
        %v6672 = vadd.f32 0.0, %v6671
        %v6673 = vpop.f32.mrf.mxu0
        %6674 = vmatprep.mubr.f32.mxu0 0.0
        %6675 = vmatmul.mubr.f32.gmra.mxu0 %v5228
        %v6676 = vpop.f32.mrf.mxu0
        %v6677 = vadd.f32 0.0, %v6676
        %v6678 = vpop.f32.mrf.mxu0
        %6679 = vmatprep.mubr.f32.mxu0 0.0
        %6680 = vmatmul.mubr.f32.gmra.mxu0 %v5231
        %v6681 = vpop.f32.mrf.mxu0
        %v6682 = vadd.f32 0.0, %v6681
        %v6683 = vpop.f32.mrf.mxu0
        %6684 = vdwg.mxu0
        %s6685 = scalar_lea.vmem %s325, 288 [#allocation3]
        %6686 = vst.msk [vmem:[%s6685] sm:$0xff] %vm5115, %v6667
        %6687 = vst.msk [vmem:[%s6685 + $0x8] sm:$0xff] %vm5115, %v6672
        %6688 = vst.msk [vmem:[%s6685 + $0x10] sm:$0xff] %vm5115, %v6677
        %6689 = vst.msk [vmem:[%s6685 + $0x18] sm:$0xff] %vm5115, %v6682
        %v6690 = vld [vmem:[#allocation2 + $0xa] sm:$0x1]
        %v6691 = vld [vmem:[#allocation2 + $0x1a] sm:$0x1]
        %v6692 = vld [vmem:[#allocation2 + $0x2a] sm:$0x1]
        %v6693 = vld [vmem:[#allocation2 + $0x3a] sm:$0x1]
        %v6694 = vld [vmem:[#allocation2 + $0x4a] sm:$0x1]
        %v6695 = vld [vmem:[#allocation2 + $0x5a] sm:$0x1]
        %v6696 = vld [vmem:[#allocation2 + $0x6a] sm:$0x1]
        %v6697 = vld [vmem:[#allocation2 + $0x7a] sm:$0x1]
        %v6698 = vld [vmem:[#allocation2 + $0x8a] sm:$0x1]
        %v6699 = vld [vmem:[#allocation2 + $0x9a] sm:$0x1]
        %v6700 = vld [vmem:[#allocation2 + $0xaa] sm:$0x1]
        %v6701 = vld [vmem:[#allocation2 + $0xba] sm:$0x1]
        %v6702 = vld [vmem:[#allocation2 + $0xca] sm:$0x1]
        %v6703 = vld [vmem:[#allocation2 + $0xda] sm:$0x1]
        %v6704 = vld [vmem:[#allocation2 + $0xea] sm:$0x1]
        %v6705 = vld [vmem:[#allocation2 + $0xfa] sm:$0x1]
        %v6722 = vrot.slane %v6691, 7
        %v6723 = vsel %vm5185, %v6722, %v6690
        %v6724 = vrot.slane %v6692, 6
        %v6725 = vsel %vm5188, %v6724, %v6723
        %v6726 = vrot.slane %v6693, 5
        %v6727 = vsel %vm5191, %v6726, %v6725
        %v6728 = vrot.slane %v6694, 4
        %v6729 = vsel %vm5194, %v6728, %v6727
        %v6730 = vrot.slane %v6695, 3
        %v6731 = vsel %vm5197, %v6730, %v6729
        %v6732 = vrot.slane %v6696, 2
        %v6733 = vsel %vm5200, %v6732, %v6731
        %v6734 = vrot.slane %v6697, 1
        %v6735 = vsel %vm5203, %v6734, %v6733
        %v6736 = vrot.slane %v6699, 7
        %v6737 = vsel %vm5185, %v6736, %v6698
        %v6738 = vrot.slane %v6700, 6
        %v6739 = vsel %vm5188, %v6738, %v6737
        %v6740 = vrot.slane %v6701, 5
        %v6741 = vsel %vm5191, %v6740, %v6739
        %v6742 = vrot.slane %v6702, 4
        %v6743 = vsel %vm5194, %v6742, %v6741
        %v6744 = vrot.slane %v6703, 3
        %v6745 = vsel %vm5197, %v6744, %v6743
        %v6746 = vrot.slane %v6704, 2
        %v6747 = vsel %vm5200, %v6746, %v6745
        %v6748 = vrot.slane %v6705, 1
        %v6749 = vsel %vm5203, %v6748, %v6747
        %6752 = vmatprep.subr.mxu0 0.0
        %6753 = vmatpush1.msra.mxu0 0.0
        %6754 = vmatprep.subr.mxu0 0.0
        %6755 = vmatpush1.msra.mxu0 0.0
        %6756 = vmatprep.subr.mxu0 0.0
        %6757 = vmatpush1.msra.mxu0 0.0
        %6758 = vmatprep.subr.mxu0 0.0
        %6759 = vmatpush1.msra.mxu0 0.0
        %6760 = vmatprep.subr.mxu0 0.0
        %6761 = vmatpush1.msra.mxu0 0.0
        %6762 = vmatprep.subr.mxu0 0.0
        %6763 = vmatpush1.msra.mxu0 0.0
        %6764 = vmatprep.subr.mxu0 0.0
        %6765 = vmatpush1.msra.mxu0 0.0
        %6766 = vmatprep.subr.mxu0 0.0
        %6767 = vmatpush1.msra.mxu0 0.0
        %6768 = vmatprep.subr.mxu0 0.0
        %6769 = vmatpush1.msra.mxu0 0.0
        %6770 = vmatprep.subr.mxu0 0.0
        %6771 = vmatpush1.msra.mxu0 0.0
        %6772 = vmatprep.subr.mxu0 0.0
        %6773 = vmatpush1.msra.mxu0 0.0
        %6774 = vmatprep.subr.mxu0 0.0
        %6775 = vmatpush1.msra.mxu0 0.0
        %6776 = vmatprep.subr.mxu0 0.0
        %6777 = vmatpush1.msra.mxu0 0.0
        %6778 = vmatprep.subr.mxu0 0.0
        %6779 = vmatpush1.msra.mxu0 0.0
        %6780 = vmatprep.subr.mxu0 0.0
        %6781 = vmatpush1.msra.mxu0 %v6749
        %6782 = vmatprep.subr.mxu0 0.0
        %6783 = vmatpush1.msra.mxu0 %v6735
        %6784 = vmatprep.subr.mxu0 0.0
        %6785 = vmatpush2.msra.mxu0 0.0
        %6786 = vmatprep.subr.mxu0 0.0
        %6787 = vmatpush2.msra.mxu0 0.0
        %6788 = vmatprep.subr.mxu0 0.0
        %6789 = vmatpush2.msra.mxu0 0.0
        %6790 = vmatprep.subr.mxu0 0.0
        %6791 = vmatpush2.msra.mxu0 0.0
        %6792 = vmatprep.subr.mxu0 0.0
        %6793 = vmatpush2.msra.mxu0 0.0
        %6794 = vmatprep.subr.mxu0 0.0
        %6795 = vmatpush2.msra.mxu0 0.0
        %6796 = vmatprep.subr.mxu0 0.0
        %6797 = vmatpush2.msra.mxu0 0.0
        %6798 = vmatprep.subr.mxu0 0.0
        %6799 = vmatpush2.msra.mxu0 0.0
        %6800 = vmatprep.subr.mxu0 0.0
        %6801 = vmatpush2.msra.mxu0 0.0
        %6802 = vmatprep.subr.mxu0 0.0
        %6803 = vmatpush2.msra.mxu0 0.0
        %6804 = vmatprep.subr.mxu0 0.0
        %6805 = vmatpush2.msra.mxu0 0.0
        %6806 = vmatprep.subr.mxu0 0.0
        %6807 = vmatpush2.msra.mxu0 0.0
        %6808 = vmatprep.subr.mxu0 0.0
        %6809 = vmatpush2.msra.mxu0 0.0
        %6810 = vmatprep.subr.mxu0 0.0
        %6811 = vmatpush2.msra.mxu0 0.0
        %6812 = vmatprep.subr.mxu0 0.0
        %6813 = vmatpush2.msra.mxu0 0.0
        %6814 = vmatprep.subr.mxu0 0.0
        %6815 = vmatpush2.msra.mxu0 0.0
        %6816 = vmatprep.mubr.f32.mxu0 0.0
        %6817 = vmatmul.mubr.f32.gmra.mxu0 %v5222
        %v6818 = vpop.f32.mrf.mxu0
        %v6819 = vadd.f32 0.0, %v6818
        %v6820 = vpop.f32.mrf.mxu0
        %6821 = vmatprep.mubr.f32.mxu0 0.0
        %6822 = vmatmul.mubr.f32.gmra.mxu0 %v5225
        %v6823 = vpop.f32.mrf.mxu0
        %v6824 = vadd.f32 0.0, %v6823
        %v6825 = vpop.f32.mrf.mxu0
        %6826 = vmatprep.mubr.f32.mxu0 0.0
        %6827 = vmatmul.mubr.f32.gmra.mxu0 %v5228
        %v6828 = vpop.f32.mrf.mxu0
        %v6829 = vadd.f32 0.0, %v6828
        %v6830 = vpop.f32.mrf.mxu0
        %6831 = vmatprep.mubr.f32.mxu0 0.0
        %6832 = vmatmul.mubr.f32.gmra.mxu0 %v5231
        %v6833 = vpop.f32.mrf.mxu0
        %v6834 = vadd.f32 0.0, %v6833
        %v6835 = vpop.f32.mrf.mxu0
        %6836 = vdwg.mxu0
        %s6837 = scalar_lea.vmem %s325, 320 [#allocation3]
        %6838 = vst.msk [vmem:[%s6837] sm:$0xff] %vm5115, %v6819
        %6839 = vst.msk [vmem:[%s6837 + $0x8] sm:$0xff] %vm5115, %v6824
        %6840 = vst.msk [vmem:[%s6837 + $0x10] sm:$0xff] %vm5115, %v6829
        %6841 = vst.msk [vmem:[%s6837 + $0x18] sm:$0xff] %vm5115, %v6834
        %v6842 = vld [vmem:[#allocation2 + $0xb] sm:$0x1]
        %v6843 = vld [vmem:[#allocation2 + $0x1b] sm:$0x1]
        %v6844 = vld [vmem:[#allocation2 + $0x2b] sm:$0x1]
        %v6845 = vld [vmem:[#allocation2 + $0x3b] sm:$0x1]
        %v6846 = vld [vmem:[#allocation2 + $0x4b] sm:$0x1]
        %v6847 = vld [vmem:[#allocation2 + $0x5b] sm:$0x1]
        %v6848 = vld [vmem:[#allocation2 + $0x6b] sm:$0x1]
        %v6849 = vld [vmem:[#allocation2 + $0x7b] sm:$0x1]
        %v6850 = vld [vmem:[#allocation2 + $0x8b] sm:$0x1]
        %v6851 = vld [vmem:[#allocation2 + $0x9b] sm:$0x1]
        %v6852 = vld [vmem:[#allocation2 + $0xab] sm:$0x1]
        %v6853 = vld [vmem:[#allocation2 + $0xbb] sm:$0x1]
        %v6854 = vld [vmem:[#allocation2 + $0xcb] sm:$0x1]
        %v6855 = vld [vmem:[#allocation2 + $0xdb] sm:$0x1]
        %v6856 = vld [vmem:[#allocation2 + $0xeb] sm:$0x1]
        %v6857 = vld [vmem:[#allocation2 + $0xfb] sm:$0x1]
        %v6874 = vrot.slane %v6843, 7
        %v6875 = vsel %vm5185, %v6874, %v6842
        %v6876 = vrot.slane %v6844, 6
        %v6877 = vsel %vm5188, %v6876, %v6875
        %v6878 = vrot.slane %v6845, 5
        %v6879 = vsel %vm5191, %v6878, %v6877
        %v6880 = vrot.slane %v6846, 4
        %v6881 = vsel %vm5194, %v6880, %v6879
        %v6882 = vrot.slane %v6847, 3
        %v6883 = vsel %vm5197, %v6882, %v6881
        %v6884 = vrot.slane %v6848, 2
        %v6885 = vsel %vm5200, %v6884, %v6883
        %v6886 = vrot.slane %v6849, 1
        %v6887 = vsel %vm5203, %v6886, %v6885
        %v6888 = vrot.slane %v6851, 7
        %v6889 = vsel %vm5185, %v6888, %v6850
        %v6890 = vrot.slane %v6852, 6
        %v6891 = vsel %vm5188, %v6890, %v6889
        %v6892 = vrot.slane %v6853, 5
        %v6893 = vsel %vm5191, %v6892, %v6891
        %v6894 = vrot.slane %v6854, 4
        %v6895 = vsel %vm5194, %v6894, %v6893
        %v6896 = vrot.slane %v6855, 3
        %v6897 = vsel %vm5197, %v6896, %v6895
        %v6898 = vrot.slane %v6856, 2
        %v6899 = vsel %vm5200, %v6898, %v6897
        %v6900 = vrot.slane %v6857, 1
        %v6901 = vsel %vm5203, %v6900, %v6899
        %6904 = vmatprep.subr.mxu0 0.0
        %6905 = vmatpush1.msra.mxu0 0.0
        %6906 = vmatprep.subr.mxu0 0.0
        %6907 = vmatpush1.msra.mxu0 0.0
        %6908 = vmatprep.subr.mxu0 0.0
        %6909 = vmatpush1.msra.mxu0 0.0
        %6910 = vmatprep.subr.mxu0 0.0
        %6911 = vmatpush1.msra.mxu0 0.0
        %6912 = vmatprep.subr.mxu0 0.0
        %6913 = vmatpush1.msra.mxu0 0.0
        %6914 = vmatprep.subr.mxu0 0.0
        %6915 = vmatpush1.msra.mxu0 0.0
        %6916 = vmatprep.subr.mxu0 0.0
        %6917 = vmatpush1.msra.mxu0 0.0
        %6918 = vmatprep.subr.mxu0 0.0
        %6919 = vmatpush1.msra.mxu0 0.0
        %6920 = vmatprep.subr.mxu0 0.0
        %6921 = vmatpush1.msra.mxu0 0.0
        %6922 = vmatprep.subr.mxu0 0.0
        %6923 = vmatpush1.msra.mxu0 0.0
        %6924 = vmatprep.subr.mxu0 0.0
        %6925 = vmatpush1.msra.mxu0 0.0
        %6926 = vmatprep.subr.mxu0 0.0
        %6927 = vmatpush1.msra.mxu0 0.0
        %6928 = vmatprep.subr.mxu0 0.0
        %6929 = vmatpush1.msra.mxu0 0.0
        %6930 = vmatprep.subr.mxu0 0.0
        %6931 = vmatpush1.msra.mxu0 0.0
        %6932 = vmatprep.subr.mxu0 0.0
        %6933 = vmatpush1.msra.mxu0 %v6901
        %6934 = vmatprep.subr.mxu0 0.0
        %6935 = vmatpush1.msra.mxu0 %v6887
        %6936 = vmatprep.subr.mxu0 0.0
        %6937 = vmatpush2.msra.mxu0 0.0
        %6938 = vmatprep.subr.mxu0 0.0
        %6939 = vmatpush2.msra.mxu0 0.0
        %6940 = vmatprep.subr.mxu0 0.0
        %6941 = vmatpush2.msra.mxu0 0.0
        %6942 = vmatprep.subr.mxu0 0.0
        %6943 = vmatpush2.msra.mxu0 0.0
        %6944 = vmatprep.subr.mxu0 0.0
        %6945 = vmatpush2.msra.mxu0 0.0
        %6946 = vmatprep.subr.mxu0 0.0
        %6947 = vmatpush2.msra.mxu0 0.0
        %6948 = vmatprep.subr.mxu0 0.0
        %6949 = vmatpush2.msra.mxu0 0.0
        %6950 = vmatprep.subr.mxu0 0.0
        %6951 = vmatpush2.msra.mxu0 0.0
        %6952 = vmatprep.subr.mxu0 0.0
        %6953 = vmatpush2.msra.mxu0 0.0
        %6954 = vmatprep.subr.mxu0 0.0
        %6955 = vmatpush2.msra.mxu0 0.0
        %6956 = vmatprep.subr.mxu0 0.0
        %6957 = vmatpush2.msra.mxu0 0.0
        %6958 = vmatprep.subr.mxu0 0.0
        %6959 = vmatpush2.msra.mxu0 0.0
        %6960 = vmatprep.subr.mxu0 0.0
        %6961 = vmatpush2.msra.mxu0 0.0
        %6962 = vmatprep.subr.mxu0 0.0
        %6963 = vmatpush2.msra.mxu0 0.0
        %6964 = vmatprep.subr.mxu0 0.0
        %6965 = vmatpush2.msra.mxu0 0.0
        %6966 = vmatprep.subr.mxu0 0.0
        %6967 = vmatpush2.msra.mxu0 0.0
        %6968 = vmatprep.mubr.f32.mxu0 0.0
        %6969 = vmatmul.mubr.f32.gmra.mxu0 %v5222
        %v6970 = vpop.f32.mrf.mxu0
        %v6971 = vadd.f32 0.0, %v6970
        %v6972 = vpop.f32.mrf.mxu0
        %6973 = vmatprep.mubr.f32.mxu0 0.0
        %6974 = vmatmul.mubr.f32.gmra.mxu0 %v5225
        %v6975 = vpop.f32.mrf.mxu0
        %v6976 = vadd.f32 0.0, %v6975
        %v6977 = vpop.f32.mrf.mxu0
        %6978 = vmatprep.mubr.f32.mxu0 0.0
        %6979 = vmatmul.mubr.f32.gmra.mxu0 %v5228
        %v6980 = vpop.f32.mrf.mxu0
        %v6981 = vadd.f32 0.0, %v6980
        %v6982 = vpop.f32.mrf.mxu0
        %6983 = vmatprep.mubr.f32.mxu0 0.0
        %6984 = vmatmul.mubr.f32.gmra.mxu0 %v5231
        %v6985 = vpop.f32.mrf.mxu0
        %v6986 = vadd.f32 0.0, %v6985
        %v6987 = vpop.f32.mrf.mxu0
        %6988 = vdwg.mxu0
        %s6989 = scalar_lea.vmem %s325, 352 [#allocation3]
        %6990 = vst.msk [vmem:[%s6989] sm:$0xff] %vm5115, %v6971
        %6991 = vst.msk [vmem:[%s6989 + $0x8] sm:$0xff] %vm5115, %v6976
        %6992 = vst.msk [vmem:[%s6989 + $0x10] sm:$0xff] %vm5115, %v6981
        %6993 = vst.msk [vmem:[%s6989 + $0x18] sm:$0xff] %vm5115, %v6986
        %v6994 = vld [vmem:[#allocation2 + $0xc] sm:$0x1]
        %v6995 = vld [vmem:[#allocation2 + $0x1c] sm:$0x1]
        %v6996 = vld [vmem:[#allocation2 + $0x2c] sm:$0x1]
        %v6997 = vld [vmem:[#allocation2 + $0x3c] sm:$0x1]
        %v6998 = vld [vmem:[#allocation2 + $0x4c] sm:$0x1]
        %v6999 = vld [vmem:[#allocation2 + $0x5c] sm:$0x1]
        %v7000 = vld [vmem:[#allocation2 + $0x6c] sm:$0x1]
        %v7001 = vld [vmem:[#allocation2 + $0x7c] sm:$0x1]
        %v7002 = vld [vmem:[#allocation2 + $0x8c] sm:$0x1]
        %v7003 = vld [vmem:[#allocation2 + $0x9c] sm:$0x1]
        %v7004 = vld [vmem:[#allocation2 + $0xac] sm:$0x1]
        %v7005 = vld [vmem:[#allocation2 + $0xbc] sm:$0x1]
        %v7006 = vld [vmem:[#allocation2 + $0xcc] sm:$0x1]
        %v7007 = vld [vmem:[#allocation2 + $0xdc] sm:$0x1]
        %v7008 = vld [vmem:[#allocation2 + $0xec] sm:$0x1]
        %v7009 = vld [vmem:[#allocation2 + $0xfc] sm:$0x1]
        %v7026 = vrot.slane %v6995, 7
        %v7027 = vsel %vm5185, %v7026, %v6994
        %v7028 = vrot.slane %v6996, 6
        %v7029 = vsel %vm5188, %v7028, %v7027
        %v7030 = vrot.slane %v6997, 5
        %v7031 = vsel %vm5191, %v7030, %v7029
        %v7032 = vrot.slane %v6998, 4
        %v7033 = vsel %vm5194, %v7032, %v7031
        %v7034 = vrot.slane %v6999, 3
        %v7035 = vsel %vm5197, %v7034, %v7033
        %v7036 = vrot.slane %v7000, 2
        %v7037 = vsel %vm5200, %v7036, %v7035
        %v7038 = vrot.slane %v7001, 1
        %v7039 = vsel %vm5203, %v7038, %v7037
        %v7040 = vrot.slane %v7003, 7
        %v7041 = vsel %vm5185, %v7040, %v7002
        %v7042 = vrot.slane %v7004, 6
        %v7043 = vsel %vm5188, %v7042, %v7041
        %v7044 = vrot.slane %v7005, 5
        %v7045 = vsel %vm5191, %v7044, %v7043
        %v7046 = vrot.slane %v7006, 4
        %v7047 = vsel %vm5194, %v7046, %v7045
        %v7048 = vrot.slane %v7007, 3
        %v7049 = vsel %vm5197, %v7048, %v7047
        %v7050 = vrot.slane %v7008, 2
        %v7051 = vsel %vm5200, %v7050, %v7049
        %v7052 = vrot.slane %v7009, 1
        %v7053 = vsel %vm5203, %v7052, %v7051
        %7056 = vmatprep.subr.mxu0 0.0
        %7057 = vmatpush1.msra.mxu0 0.0
        %7058 = vmatprep.subr.mxu0 0.0
        %7059 = vmatpush1.msra.mxu0 0.0
        %7060 = vmatprep.subr.mxu0 0.0
        %7061 = vmatpush1.msra.mxu0 0.0
        %7062 = vmatprep.subr.mxu0 0.0
        %7063 = vmatpush1.msra.mxu0 0.0
        %7064 = vmatprep.subr.mxu0 0.0
        %7065 = vmatpush1.msra.mxu0 0.0
        %7066 = vmatprep.subr.mxu0 0.0
        %7067 = vmatpush1.msra.mxu0 0.0
        %7068 = vmatprep.subr.mxu0 0.0
        %7069 = vmatpush1.msra.mxu0 0.0
        %7070 = vmatprep.subr.mxu0 0.0
        %7071 = vmatpush1.msra.mxu0 0.0
        %7072 = vmatprep.subr.mxu0 0.0
        %7073 = vmatpush1.msra.mxu0 0.0
        %7074 = vmatprep.subr.mxu0 0.0
        %7075 = vmatpush1.msra.mxu0 0.0
        %7076 = vmatprep.subr.mxu0 0.0
        %7077 = vmatpush1.msra.mxu0 0.0
        %7078 = vmatprep.subr.mxu0 0.0
        %7079 = vmatpush1.msra.mxu0 0.0
        %7080 = vmatprep.subr.mxu0 0.0
        %7081 = vmatpush1.msra.mxu0 0.0
        %7082 = vmatprep.subr.mxu0 0.0
        %7083 = vmatpush1.msra.mxu0 0.0
        %7084 = vmatprep.subr.mxu0 0.0
        %7085 = vmatpush1.msra.mxu0 %v7053
        %7086 = vmatprep.subr.mxu0 0.0
        %7087 = vmatpush1.msra.mxu0 %v7039
        %7088 = vmatprep.subr.mxu0 0.0
        %7089 = vmatpush2.msra.mxu0 0.0
        %7090 = vmatprep.subr.mxu0 0.0
        %7091 = vmatpush2.msra.mxu0 0.0
        %7092 = vmatprep.subr.mxu0 0.0
        %7093 = vmatpush2.msra.mxu0 0.0
        %7094 = vmatprep.subr.mxu0 0.0
        %7095 = vmatpush2.msra.mxu0 0.0
        %7096 = vmatprep.subr.mxu0 0.0
        %7097 = vmatpush2.msra.mxu0 0.0
        %7098 = vmatprep.subr.mxu0 0.0
        %7099 = vmatpush2.msra.mxu0 0.0
        %7100 = vmatprep.subr.mxu0 0.0
        %7101 = vmatpush2.msra.mxu0 0.0
        %7102 = vmatprep.subr.mxu0 0.0
        %7103 = vmatpush2.msra.mxu0 0.0
        %7104 = vmatprep.subr.mxu0 0.0
        %7105 = vmatpush2.msra.mxu0 0.0
        %7106 = vmatprep.subr.mxu0 0.0
        %7107 = vmatpush2.msra.mxu0 0.0
        %7108 = vmatprep.subr.mxu0 0.0
        %7109 = vmatpush2.msra.mxu0 0.0
        %7110 = vmatprep.subr.mxu0 0.0
        %7111 = vmatpush2.msra.mxu0 0.0
        %7112 = vmatprep.subr.mxu0 0.0
        %7113 = vmatpush2.msra.mxu0 0.0
        %7114 = vmatprep.subr.mxu0 0.0
        %7115 = vmatpush2.msra.mxu0 0.0
        %7116 = vmatprep.subr.mxu0 0.0
        %7117 = vmatpush2.msra.mxu0 0.0
        %7118 = vmatprep.subr.mxu0 0.0
        %7119 = vmatpush2.msra.mxu0 0.0
        %7120 = vmatprep.mubr.f32.mxu0 0.0
        %7121 = vmatmul.mubr.f32.gmra.mxu0 %v5222
        %v7122 = vpop.f32.mrf.mxu0
        %v7123 = vadd.f32 0.0, %v7122
        %v7124 = vpop.f32.mrf.mxu0
        %7125 = vmatprep.mubr.f32.mxu0 0.0
        %7126 = vmatmul.mubr.f32.gmra.mxu0 %v5225
        %v7127 = vpop.f32.mrf.mxu0
        %v7128 = vadd.f32 0.0, %v7127
        %v7129 = vpop.f32.mrf.mxu0
        %7130 = vmatprep.mubr.f32.mxu0 0.0
        %7131 = vmatmul.mubr.f32.gmra.mxu0 %v5228
        %v7132 = vpop.f32.mrf.mxu0
        %v7133 = vadd.f32 0.0, %v7132
        %v7134 = vpop.f32.mrf.mxu0
        %7135 = vmatprep.mubr.f32.mxu0 0.0
        %7136 = vmatmul.mubr.f32.gmra.mxu0 %v5231
        %v7137 = vpop.f32.mrf.mxu0
        %v7138 = vadd.f32 0.0, %v7137
        %v7139 = vpop.f32.mrf.mxu0
        %7140 = vdwg.mxu0
        %s7141 = scalar_lea.vmem %s325, 384 [#allocation3]
        %7142 = vst.msk [vmem:[%s7141] sm:$0xff] %vm5115, %v7123
        %7143 = vst.msk [vmem:[%s7141 + $0x8] sm:$0xff] %vm5115, %v7128
        %7144 = vst.msk [vmem:[%s7141 + $0x10] sm:$0xff] %vm5115, %v7133
        %7145 = vst.msk [vmem:[%s7141 + $0x18] sm:$0xff] %vm5115, %v7138
        %v7146 = vld [vmem:[#allocation2 + $0xd] sm:$0x1]
        %v7147 = vld [vmem:[#allocation2 + $0x1d] sm:$0x1]
        %v7148 = vld [vmem:[#allocation2 + $0x2d] sm:$0x1]
        %v7149 = vld [vmem:[#allocation2 + $0x3d] sm:$0x1]
        %v7150 = vld [vmem:[#allocation2 + $0x4d] sm:$0x1]
        %v7151 = vld [vmem:[#allocation2 + $0x5d] sm:$0x1]
        %v7152 = vld [vmem:[#allocation2 + $0x6d] sm:$0x1]
        %v7153 = vld [vmem:[#allocation2 + $0x7d] sm:$0x1]
        %v7154 = vld [vmem:[#allocation2 + $0x8d] sm:$0x1]
        %v7155 = vld [vmem:[#allocation2 + $0x9d] sm:$0x1]
        %v7156 = vld [vmem:[#allocation2 + $0xad] sm:$0x1]
        %v7157 = vld [vmem:[#allocation2 + $0xbd] sm:$0x1]
        %v7158 = vld [vmem:[#allocation2 + $0xcd] sm:$0x1]
        %v7159 = vld [vmem:[#allocation2 + $0xdd] sm:$0x1]
        %v7160 = vld [vmem:[#allocation2 + $0xed] sm:$0x1]
        %v7161 = vld [vmem:[#allocation2 + $0xfd] sm:$0x1]
        %v7178 = vrot.slane %v7147, 7
        %v7179 = vsel %vm5185, %v7178, %v7146
        %v7180 = vrot.slane %v7148, 6
        %v7181 = vsel %vm5188, %v7180, %v7179
        %v7182 = vrot.slane %v7149, 5
        %v7183 = vsel %vm5191, %v7182, %v7181
        %v7184 = vrot.slane %v7150, 4
        %v7185 = vsel %vm5194, %v7184, %v7183
        %v7186 = vrot.slane %v7151, 3
        %v7187 = vsel %vm5197, %v7186, %v7185
        %v7188 = vrot.slane %v7152, 2
        %v7189 = vsel %vm5200, %v7188, %v7187
        %v7190 = vrot.slane %v7153, 1
        %v7191 = vsel %vm5203, %v7190, %v7189
        %v7192 = vrot.slane %v7155, 7
        %v7193 = vsel %vm5185, %v7192, %v7154
        %v7194 = vrot.slane %v7156, 6
        %v7195 = vsel %vm5188, %v7194, %v7193
        %v7196 = vrot.slane %v7157, 5
        %v7197 = vsel %vm5191, %v7196, %v7195
        %v7198 = vrot.slane %v7158, 4
        %v7199 = vsel %vm5194, %v7198, %v7197
        %v7200 = vrot.slane %v7159, 3
        %v7201 = vsel %vm5197, %v7200, %v7199
        %v7202 = vrot.slane %v7160, 2
        %v7203 = vsel %vm5200, %v7202, %v7201
        %v7204 = vrot.slane %v7161, 1
        %v7205 = vsel %vm5203, %v7204, %v7203
        %7208 = vmatprep.subr.mxu0 0.0
        %7209 = vmatpush1.msra.mxu0 0.0
        %7210 = vmatprep.subr.mxu0 0.0
        %7211 = vmatpush1.msra.mxu0 0.0
        %7212 = vmatprep.subr.mxu0 0.0
        %7213 = vmatpush1.msra.mxu0 0.0
        %7214 = vmatprep.subr.mxu0 0.0
        %7215 = vmatpush1.msra.mxu0 0.0
        %7216 = vmatprep.subr.mxu0 0.0
        %7217 = vmatpush1.msra.mxu0 0.0
        %7218 = vmatprep.subr.mxu0 0.0
        %7219 = vmatpush1.msra.mxu0 0.0
        %7220 = vmatprep.subr.mxu0 0.0
        %7221 = vmatpush1.msra.mxu0 0.0
        %7222 = vmatprep.subr.mxu0 0.0
        %7223 = vmatpush1.msra.mxu0 0.0
        %7224 = vmatprep.subr.mxu0 0.0
        %7225 = vmatpush1.msra.mxu0 0.0
        %7226 = vmatprep.subr.mxu0 0.0
        %7227 = vmatpush1.msra.mxu0 0.0
        %7228 = vmatprep.subr.mxu0 0.0
        %7229 = vmatpush1.msra.mxu0 0.0
        %7230 = vmatprep.subr.mxu0 0.0
        %7231 = vmatpush1.msra.mxu0 0.0
        %7232 = vmatprep.subr.mxu0 0.0
        %7233 = vmatpush1.msra.mxu0 0.0
        %7234 = vmatprep.subr.mxu0 0.0
        %7235 = vmatpush1.msra.mxu0 0.0
        %7236 = vmatprep.subr.mxu0 0.0
        %7237 = vmatpush1.msra.mxu0 %v7205
        %7238 = vmatprep.subr.mxu0 0.0
        %7239 = vmatpush1.msra.mxu0 %v7191
        %7240 = vmatprep.subr.mxu0 0.0
        %7241 = vmatpush2.msra.mxu0 0.0
        %7242 = vmatprep.subr.mxu0 0.0
        %7243 = vmatpush2.msra.mxu0 0.0
        %7244 = vmatprep.subr.mxu0 0.0
        %7245 = vmatpush2.msra.mxu0 0.0
        %7246 = vmatprep.subr.mxu0 0.0
        %7247 = vmatpush2.msra.mxu0 0.0
        %7248 = vmatprep.subr.mxu0 0.0
        %7249 = vmatpush2.msra.mxu0 0.0
        %7250 = vmatprep.subr.mxu0 0.0
        %7251 = vmatpush2.msra.mxu0 0.0
        %7252 = vmatprep.subr.mxu0 0.0
        %7253 = vmatpush2.msra.mxu0 0.0
        %7254 = vmatprep.subr.mxu0 0.0
        %7255 = vmatpush2.msra.mxu0 0.0
        %7256 = vmatprep.subr.mxu0 0.0
        %7257 = vmatpush2.msra.mxu0 0.0
        %7258 = vmatprep.subr.mxu0 0.0
        %7259 = vmatpush2.msra.mxu0 0.0
        %7260 = vmatprep.subr.mxu0 0.0
        %7261 = vmatpush2.msra.mxu0 0.0
        %7262 = vmatprep.subr.mxu0 0.0
        %7263 = vmatpush2.msra.mxu0 0.0
        %7264 = vmatprep.subr.mxu0 0.0
        %7265 = vmatpush2.msra.mxu0 0.0
        %7266 = vmatprep.subr.mxu0 0.0
        %7267 = vmatpush2.msra.mxu0 0.0
        %7268 = vmatprep.subr.mxu0 0.0
        %7269 = vmatpush2.msra.mxu0 0.0
        %7270 = vmatprep.subr.mxu0 0.0
        %7271 = vmatpush2.msra.mxu0 0.0
        %7272 = vmatprep.mubr.f32.mxu0 0.0
        %7273 = vmatmul.mubr.f32.gmra.mxu0 %v5222
        %v7274 = vpop.f32.mrf.mxu0
        %v7275 = vadd.f32 0.0, %v7274
        %v7276 = vpop.f32.mrf.mxu0
        %7277 = vmatprep.mubr.f32.mxu0 0.0
        %7278 = vmatmul.mubr.f32.gmra.mxu0 %v5225
        %v7279 = vpop.f32.mrf.mxu0
        %v7280 = vadd.f32 0.0, %v7279
        %v7281 = vpop.f32.mrf.mxu0
        %7282 = vmatprep.mubr.f32.mxu0 0.0
        %7283 = vmatmul.mubr.f32.gmra.mxu0 %v5228
        %v7284 = vpop.f32.mrf.mxu0
        %v7285 = vadd.f32 0.0, %v7284
        %v7286 = vpop.f32.mrf.mxu0
        %7287 = vmatprep.mubr.f32.mxu0 0.0
        %7288 = vmatmul.mubr.f32.gmra.mxu0 %v5231
        %v7289 = vpop.f32.mrf.mxu0
        %v7290 = vadd.f32 0.0, %v7289
        %v7291 = vpop.f32.mrf.mxu0
        %7292 = vdwg.mxu0
        %s7293 = scalar_lea.vmem %s325, 416 [#allocation3]
        %7294 = vst.msk [vmem:[%s7293] sm:$0xff] %vm5115, %v7275
        %7295 = vst.msk [vmem:[%s7293 + $0x8] sm:$0xff] %vm5115, %v7280
        %7296 = vst.msk [vmem:[%s7293 + $0x10] sm:$0xff] %vm5115, %v7285
        %7297 = vst.msk [vmem:[%s7293 + $0x18] sm:$0xff] %vm5115, %v7290
        %v7298 = vld [vmem:[#allocation2 + $0xe] sm:$0x1]
        %v7299 = vld [vmem:[#allocation2 + $0x1e] sm:$0x1]
        %v7300 = vld [vmem:[#allocation2 + $0x2e] sm:$0x1]
        %v7301 = vld [vmem:[#allocation2 + $0x3e] sm:$0x1]
        %v7302 = vld [vmem:[#allocation2 + $0x4e] sm:$0x1]
        %v7303 = vld [vmem:[#allocation2 + $0x5e] sm:$0x1]
        %v7304 = vld [vmem:[#allocation2 + $0x6e] sm:$0x1]
        %v7305 = vld [vmem:[#allocation2 + $0x7e] sm:$0x1]
        %v7306 = vld [vmem:[#allocation2 + $0x8e] sm:$0x1]
        %v7307 = vld [vmem:[#allocation2 + $0x9e] sm:$0x1]
        %v7308 = vld [vmem:[#allocation2 + $0xae] sm:$0x1]
        %v7309 = vld [vmem:[#allocation2 + $0xbe] sm:$0x1]
        %v7310 = vld [vmem:[#allocation2 + $0xce] sm:$0x1]
        %v7311 = vld [vmem:[#allocation2 + $0xde] sm:$0x1]
        %v7312 = vld [vmem:[#allocation2 + $0xee] sm:$0x1]
        %v7313 = vld [vmem:[#allocation2 + $0xfe] sm:$0x1]
        %v7330 = vrot.slane %v7299, 7
        %v7331 = vsel %vm5185, %v7330, %v7298
        %v7332 = vrot.slane %v7300, 6
        %v7333 = vsel %vm5188, %v7332, %v7331
        %v7334 = vrot.slane %v7301, 5
        %v7335 = vsel %vm5191, %v7334, %v7333
        %v7336 = vrot.slane %v7302, 4
        %v7337 = vsel %vm5194, %v7336, %v7335
        %v7338 = vrot.slane %v7303, 3
        %v7339 = vsel %vm5197, %v7338, %v7337
        %v7340 = vrot.slane %v7304, 2
        %v7341 = vsel %vm5200, %v7340, %v7339
        %v7342 = vrot.slane %v7305, 1
        %v7343 = vsel %vm5203, %v7342, %v7341
        %v7344 = vrot.slane %v7307, 7
        %v7345 = vsel %vm5185, %v7344, %v7306
        %v7346 = vrot.slane %v7308, 6
        %v7347 = vsel %vm5188, %v7346, %v7345
        %v7348 = vrot.slane %v7309, 5
        %v7349 = vsel %vm5191, %v7348, %v7347
        %v7350 = vrot.slane %v7310, 4
        %v7351 = vsel %vm5194, %v7350, %v7349
        %v7352 = vrot.slane %v7311, 3
        %v7353 = vsel %vm5197, %v7352, %v7351
        %v7354 = vrot.slane %v7312, 2
        %v7355 = vsel %vm5200, %v7354, %v7353
        %v7356 = vrot.slane %v7313, 1
        %v7357 = vsel %vm5203, %v7356, %v7355
        %7360 = vmatprep.subr.mxu0 0.0
        %7361 = vmatpush1.msra.mxu0 0.0
        %7362 = vmatprep.subr.mxu0 0.0
        %7363 = vmatpush1.msra.mxu0 0.0
        %7364 = vmatprep.subr.mxu0 0.0
        %7365 = vmatpush1.msra.mxu0 0.0
        %7366 = vmatprep.subr.mxu0 0.0
        %7367 = vmatpush1.msra.mxu0 0.0
        %7368 = vmatprep.subr.mxu0 0.0
        %7369 = vmatpush1.msra.mxu0 0.0
        %7370 = vmatprep.subr.mxu0 0.0
        %7371 = vmatpush1.msra.mxu0 0.0
        %7372 = vmatprep.subr.mxu0 0.0
        %7373 = vmatpush1.msra.mxu0 0.0
        %7374 = vmatprep.subr.mxu0 0.0
        %7375 = vmatpush1.msra.mxu0 0.0
        %7376 = vmatprep.subr.mxu0 0.0
        %7377 = vmatpush1.msra.mxu0 0.0
        %7378 = vmatprep.subr.mxu0 0.0
        %7379 = vmatpush1.msra.mxu0 0.0
        %7380 = vmatprep.subr.mxu0 0.0
        %7381 = vmatpush1.msra.mxu0 0.0
        %7382 = vmatprep.subr.mxu0 0.0
        %7383 = vmatpush1.msra.mxu0 0.0
        %7384 = vmatprep.subr.mxu0 0.0
        %7385 = vmatpush1.msra.mxu0 0.0
        %7386 = vmatprep.subr.mxu0 0.0
        %7387 = vmatpush1.msra.mxu0 0.0
        %7388 = vmatprep.subr.mxu0 0.0
        %7389 = vmatpush1.msra.mxu0 %v7357
        %7390 = vmatprep.subr.mxu0 0.0
        %7391 = vmatpush1.msra.mxu0 %v7343
        %7392 = vmatprep.subr.mxu0 0.0
        %7393 = vmatpush2.msra.mxu0 0.0
        %7394 = vmatprep.subr.mxu0 0.0
        %7395 = vmatpush2.msra.mxu0 0.0
        %7396 = vmatprep.subr.mxu0 0.0
        %7397 = vmatpush2.msra.mxu0 0.0
        %7398 = vmatprep.subr.mxu0 0.0
        %7399 = vmatpush2.msra.mxu0 0.0
        %7400 = vmatprep.subr.mxu0 0.0
        %7401 = vmatpush2.msra.mxu0 0.0
        %7402 = vmatprep.subr.mxu0 0.0
        %7403 = vmatpush2.msra.mxu0 0.0
        %7404 = vmatprep.subr.mxu0 0.0
        %7405 = vmatpush2.msra.mxu0 0.0
        %7406 = vmatprep.subr.mxu0 0.0
        %7407 = vmatpush2.msra.mxu0 0.0
        %7408 = vmatprep.subr.mxu0 0.0
        %7409 = vmatpush2.msra.mxu0 0.0
        %7410 = vmatprep.subr.mxu0 0.0
        %7411 = vmatpush2.msra.mxu0 0.0
        %7412 = vmatprep.subr.mxu0 0.0
        %7413 = vmatpush2.msra.mxu0 0.0
        %7414 = vmatprep.subr.mxu0 0.0
        %7415 = vmatpush2.msra.mxu0 0.0
        %7416 = vmatprep.subr.mxu0 0.0
        %7417 = vmatpush2.msra.mxu0 0.0
        %7418 = vmatprep.subr.mxu0 0.0
        %7419 = vmatpush2.msra.mxu0 0.0
        %7420 = vmatprep.subr.mxu0 0.0
        %7421 = vmatpush2.msra.mxu0 0.0
        %7422 = vmatprep.subr.mxu0 0.0
        %7423 = vmatpush2.msra.mxu0 0.0
        %7424 = vmatprep.mubr.f32.mxu0 0.0
        %7425 = vmatmul.mubr.f32.gmra.mxu0 %v5222
        %v7426 = vpop.f32.mrf.mxu0
        %v7427 = vadd.f32 0.0, %v7426
        %v7428 = vpop.f32.mrf.mxu0
        %7429 = vmatprep.mubr.f32.mxu0 0.0
        %7430 = vmatmul.mubr.f32.gmra.mxu0 %v5225
        %v7431 = vpop.f32.mrf.mxu0
        %v7432 = vadd.f32 0.0, %v7431
        %v7433 = vpop.f32.mrf.mxu0
        %7434 = vmatprep.mubr.f32.mxu0 0.0
        %7435 = vmatmul.mubr.f32.gmra.mxu0 %v5228
        %v7436 = vpop.f32.mrf.mxu0
        %v7437 = vadd.f32 0.0, %v7436
        %v7438 = vpop.f32.mrf.mxu0
        %7439 = vmatprep.mubr.f32.mxu0 0.0
        %7440 = vmatmul.mubr.f32.gmra.mxu0 %v5231
        %v7441 = vpop.f32.mrf.mxu0
        %v7442 = vadd.f32 0.0, %v7441
        %v7443 = vpop.f32.mrf.mxu0
        %7444 = vdwg.mxu0
        %s7445 = scalar_lea.vmem %s325, 448 [#allocation3]
        %7446 = vst.msk [vmem:[%s7445] sm:$0xff] %vm5115, %v7427
        %7447 = vst.msk [vmem:[%s7445 + $0x8] sm:$0xff] %vm5115, %v7432
        %7448 = vst.msk [vmem:[%s7445 + $0x10] sm:$0xff] %vm5115, %v7437
        %7449 = vst.msk [vmem:[%s7445 + $0x18] sm:$0xff] %vm5115, %v7442
        %v7450 = vld [vmem:[#allocation2 + $0xf] sm:$0x1]
        %v7451 = vld [vmem:[#allocation2 + $0x1f] sm:$0x1]
        %v7452 = vld [vmem:[#allocation2 + $0x2f] sm:$0x1]
        %v7453 = vld [vmem:[#allocation2 + $0x3f] sm:$0x1]
        %v7454 = vld [vmem:[#allocation2 + $0x4f] sm:$0x1]
        %v7455 = vld [vmem:[#allocation2 + $0x5f] sm:$0x1]
        %v7456 = vld [vmem:[#allocation2 + $0x6f] sm:$0x1]
        %v7457 = vld [vmem:[#allocation2 + $0x7f] sm:$0x1]
        %v7458 = vld [vmem:[#allocation2 + $0x8f] sm:$0x1]
        %v7459 = vld [vmem:[#allocation2 + $0x9f] sm:$0x1]
        %v7460 = vld [vmem:[#allocation2 + $0xaf] sm:$0x1]
        %v7461 = vld [vmem:[#allocation2 + $0xbf] sm:$0x1]
        %v7462 = vld [vmem:[#allocation2 + $0xcf] sm:$0x1]
        %v7463 = vld [vmem:[#allocation2 + $0xdf] sm:$0x1]
        %v7464 = vld [vmem:[#allocation2 + $0xef] sm:$0x1]
        %v7465 = vld [vmem:[#allocation2 + $0xff] sm:$0x1]
        %v7482 = vrot.slane %v7451, 7
        %v7483 = vsel %vm5185, %v7482, %v7450
        %v7484 = vrot.slane %v7452, 6
        %v7485 = vsel %vm5188, %v7484, %v7483
        %v7486 = vrot.slane %v7453, 5
        %v7487 = vsel %vm5191, %v7486, %v7485
        %v7488 = vrot.slane %v7454, 4
        %v7489 = vsel %vm5194, %v7488, %v7487
        %v7490 = vrot.slane %v7455, 3
        %v7491 = vsel %vm5197, %v7490, %v7489
        %v7492 = vrot.slane %v7456, 2
        %v7493 = vsel %vm5200, %v7492, %v7491
        %v7494 = vrot.slane %v7457, 1
        %v7495 = vsel %vm5203, %v7494, %v7493
        %v7496 = vrot.slane %v7459, 7
        %v7497 = vsel %vm5185, %v7496, %v7458
        %v7498 = vrot.slane %v7460, 6
        %v7499 = vsel %vm5188, %v7498, %v7497
        %v7500 = vrot.slane %v7461, 5
        %v7501 = vsel %vm5191, %v7500, %v7499
        %v7502 = vrot.slane %v7462, 4
        %v7503 = vsel %vm5194, %v7502, %v7501
        %v7504 = vrot.slane %v7463, 3
        %v7505 = vsel %vm5197, %v7504, %v7503
        %v7506 = vrot.slane %v7464, 2
        %v7507 = vsel %vm5200, %v7506, %v7505
        %v7508 = vrot.slane %v7465, 1
        %v7509 = vsel %vm5203, %v7508, %v7507
        %7512 = vmatprep.subr.mxu0 0.0
        %7513 = vmatpush1.msra.mxu0 0.0
        %7514 = vmatprep.subr.mxu0 0.0
        %7515 = vmatpush1.msra.mxu0 0.0
        %7516 = vmatprep.subr.mxu0 0.0
        %7517 = vmatpush1.msra.mxu0 0.0
        %7518 = vmatprep.subr.mxu0 0.0
        %7519 = vmatpush1.msra.mxu0 0.0
        %7520 = vmatprep.subr.mxu0 0.0
        %7521 = vmatpush1.msra.mxu0 0.0
        %7522 = vmatprep.subr.mxu0 0.0
        %7523 = vmatpush1.msra.mxu0 0.0
        %7524 = vmatprep.subr.mxu0 0.0
        %7525 = vmatpush1.msra.mxu0 0.0
        %7526 = vmatprep.subr.mxu0 0.0
        %7527 = vmatpush1.msra.mxu0 0.0
        %7528 = vmatprep.subr.mxu0 0.0
        %7529 = vmatpush1.msra.mxu0 0.0
        %7530 = vmatprep.subr.mxu0 0.0
        %7531 = vmatpush1.msra.mxu0 0.0
        %7532 = vmatprep.subr.mxu0 0.0
        %7533 = vmatpush1.msra.mxu0 0.0
        %7534 = vmatprep.subr.mxu0 0.0
        %7535 = vmatpush1.msra.mxu0 0.0
        %7536 = vmatprep.subr.mxu0 0.0
        %7537 = vmatpush1.msra.mxu0 0.0
        %7538 = vmatprep.subr.mxu0 0.0
        %7539 = vmatpush1.msra.mxu0 0.0
        %7540 = vmatprep.subr.mxu0 0.0
        %7541 = vmatpush1.msra.mxu0 %v7509
        %7542 = vmatprep.subr.mxu0 0.0
        %7543 = vmatpush1.msra.mxu0 %v7495
        %7544 = vmatprep.subr.mxu0 0.0
        %7545 = vmatpush2.msra.mxu0 0.0
        %7546 = vmatprep.subr.mxu0 0.0
        %7547 = vmatpush2.msra.mxu0 0.0
        %7548 = vmatprep.subr.mxu0 0.0
        %7549 = vmatpush2.msra.mxu0 0.0
        %7550 = vmatprep.subr.mxu0 0.0
        %7551 = vmatpush2.msra.mxu0 0.0
        %7552 = vmatprep.subr.mxu0 0.0
        %7553 = vmatpush2.msra.mxu0 0.0
        %7554 = vmatprep.subr.mxu0 0.0
        %7555 = vmatpush2.msra.mxu0 0.0
        %7556 = vmatprep.subr.mxu0 0.0
        %7557 = vmatpush2.msra.mxu0 0.0
        %7558 = vmatprep.subr.mxu0 0.0
        %7559 = vmatpush2.msra.mxu0 0.0
        %7560 = vmatprep.subr.mxu0 0.0
        %7561 = vmatpush2.msra.mxu0 0.0
        %7562 = vmatprep.subr.mxu0 0.0
        %7563 = vmatpush2.msra.mxu0 0.0
        %7564 = vmatprep.subr.mxu0 0.0
        %7565 = vmatpush2.msra.mxu0 0.0
        %7566 = vmatprep.subr.mxu0 0.0
        %7567 = vmatpush2.msra.mxu0 0.0
        %7568 = vmatprep.subr.mxu0 0.0
        %7569 = vmatpush2.msra.mxu0 0.0
        %7570 = vmatprep.subr.mxu0 0.0
        %7571 = vmatpush2.msra.mxu0 0.0
        %7572 = vmatprep.subr.mxu0 0.0
        %7573 = vmatpush2.msra.mxu0 0.0
        %7574 = vmatprep.subr.mxu0 0.0
        %7575 = vmatpush2.msra.mxu0 0.0
        %7576 = vmatprep.mubr.f32.mxu0 0.0
        %7577 = vmatmul.mubr.f32.gmra.mxu0 %v5222
        %v7578 = vpop.f32.mrf.mxu0
        %v7579 = vadd.f32 0.0, %v7578
        %v7580 = vpop.f32.mrf.mxu0
        %7581 = vmatprep.mubr.f32.mxu0 0.0
        %7582 = vmatmul.mubr.f32.gmra.mxu0 %v5225
        %v7583 = vpop.f32.mrf.mxu0
        %v7584 = vadd.f32 0.0, %v7583
        %v7585 = vpop.f32.mrf.mxu0
        %7586 = vmatprep.mubr.f32.mxu0 0.0
        %7587 = vmatmul.mubr.f32.gmra.mxu0 %v5228
        %v7588 = vpop.f32.mrf.mxu0
        %v7589 = vadd.f32 0.0, %v7588
        %v7590 = vpop.f32.mrf.mxu0
        %7591 = vmatprep.mubr.f32.mxu0 0.0
        %7592 = vmatmul.mubr.f32.gmra.mxu0 %v5231
        %v7593 = vpop.f32.mrf.mxu0
        %v7594 = vadd.f32 0.0, %v7593
        %v7595 = vpop.f32.mrf.mxu0
        %7596 = vdwg.mxu0
        %s7597 = scalar_lea.vmem %s325, 480 [#allocation3]
        %7598 = vst.msk [vmem:[%s7597] sm:$0xff] %vm5115, %v7579
        %7599 = vst.msk [vmem:[%s7597 + $0x8] sm:$0xff] %vm5115, %v7584
        %7600 = vst.msk [vmem:[%s7597 + $0x10] sm:$0xff] %vm5115, %v7589
        %7601 = vst.msk [vmem:[%s7597 + $0x18] sm:$0xff] %vm5115, %v7594
        %s7602 = sand.u32 %s225, 1
        %s7603 = scalar_lea.sflag [#allocation4], %s7602
        %s7604 = sand.u32 %s225, 1
        %s7605 = smul.addr %s7604, 512
        %s7606 = scalar_lea.vmem [#allocation3], %s7605
        // Predicated region
        $region57: #{tpu_custom_call.1} parent=55 // pred_check
          %p7607 = pneg %p235
        $region58: #{tpu_custom_call.1} parent=55 // pred_check_branch
          %7609 = sbr.rel (%p7607) target = $region60
        $region59: #{tpu_custom_call.1} parent=55 // pred_region
          %s7611 = ssub.s32 8192, 8192
          %7612 = vsyncadd %s7603, %s7611
          %s7613 = smul.addr %s23, 64
          %s7614 = smul.addr %s7613, 128
          %s7615 = scalar_lea.hbm %s9, %s7614
          %s7616 = sshll.u32 %s7606, 4
          %s7617 = int_to_ptr.vmem [resolvable:$true] %s7616
          %7622 = dma.vmem_to_hbm [thread:$0]  %s7617, 8192, %s7615, %s7603, 128, 128, 8
        $region60: #{tpu_custom_call.1} parent=55 // pred_fallthru
          _
      $region56: #{tpu_custom_call.1} parent=5 // pred_fallthru
        _
      %p7623 = scmp.le.s32.totalorder 2, %s18
      // Predicated region
      $region61: #{tpu_custom_call.1} parent=5 // pred_check
        %p7624 = pneg %p7623
      $region62: #{tpu_custom_call.1} parent=5 // pred_check_branch
        %7626 = sbr.rel (%p7624) target = $region64
      $region63: #{tpu_custom_call.1} parent=5 // pred_region
        %s7627 = ssub.s32 %s18, 2
        // Predicated region
        $region65: #{tpu_custom_call.1} parent=63 // pred_check
          %p7628 = pneg %p241
        $region66: #{tpu_custom_call.1} parent=63 // pred_check_branch
          %7630 = sbr.rel (%p7628) target = $region68
        $region67: #{tpu_custom_call.1} parent=63 // pred_region
          %s7631 = sand.u32 %s226, 1
          %s7632 = scalar_lea.sflag [#allocation4], %s7631
          %s7633 = sand.u32 %s226, 1
          %s7634 = smul.addr %s7633, 512
          %s7635 = scalar_lea.vmem [#allocation3], %s7634
          %7636 = dma.done %s7632, 8192
        $region68: #{tpu_custom_call.1} parent=63 // pred_fallthru
          _
      $region64: #{tpu_custom_call.1} parent=5 // pred_fallthru
        _
    $region6: #{tpu_custom_call.1} parent=1 // loop_footer
      %s22 = sadd.s32 1, %s18
    $region7: #{tpu_custom_call.1} parent=1 // loop_footer_branch
      %17 = sbr.rel target = $region3
    $region8: #{tpu_custom_call.1} parent=1 // loop_exit
      _
    %7637 = vsyncpa [#allocation4], 1
    %s7638 = scalar_lea.sflag [#allocation4], 1
    %7639 = vsyncpa %s7638, 1

</llo_original>
